<compile_context>
chip_gen: v6e
topology: v6e:2x2x1
jax: 0.10.0
libtpu: 0.0.40
codegen_flags: <defaults>
</compile_context>

<pallas_src>
from functools import partial

import numpy as np
import jax
import jax.numpy as jnp
from jax.experimental import pallas as pl
from jax.experimental.pallas import tpu as pltpu

EPS = 1e-5


def _pad128(n):
    return ((n + 127) // 128) * 128


def _bn_relu(y, gamma, beta):
    """Training-mode BatchNorm2d + ReLU over rows of a (rows, C) f32 array.

    Single pass: var = E[y^2] - E[y]^2 (biased), all math in f32.
    TODO(synk): switch to a shifted/two-pass (or Gram-based) reduction when the
    grid is tiled, both for global batch stats and better cancellation.
    """
    inv_n = 1.0 / y.shape[0]
    s1 = jnp.sum(y, axis=0, keepdims=True)
    s2 = jnp.sum(y * y, axis=0, keepdims=True)
    mean = s1 * inv_n
    var = s2 * inv_n - mean * mean
    yn = (y - mean) * jax.lax.rsqrt(var + EPS)
    return jnp.maximum(yn * gamma + beta, 0.0)


def bottleneck_kernel(x_ref, w13_ref, g13_ref, b13_ref,
                      w2_ref, g2_ref, b2_ref, o_ref,
                      *, N, H, W, Cmid_p, Cout_p):
    # x_ref   : (N*H*W, Cin_p)              bf16   flattened NHWC input (padded)
    # w13_ref : (Cin_p, Cmid_p + Cout_p)    bf16   [conv1 | conv3] fused 1x1 weights
    # g13/b13 : (1, Cmid_p + Cout_p)        f32    fused BN affine for conv1|conv3
    # w2_ref  : (9*Cmid_p, Cout_p)          bf16   3x3 HWIO weight, taps flattened
    # g2/b2   : (1, Cout_p)                 f32
    # o_ref   : (N*H*W, Cout_p)             f32    lane-dense output
    rows = N * H * W

    # ---- conv1 + conv3 (both 1x1, shared input): one MXU pass, f32 acc ------
    y13 = jnp.dot(x_ref[...], w13_ref[...],
                  preferred_element_type=jnp.float32)        # (rows, Cmid_p+Cout_p)
    y13 = _bn_relu(y13, g13_ref[...], b13_ref[...])          # joint BN + ReLU
    h = y13[:, :Cmid_p].astype(jnp.bfloat16)                 # conv1 branch (bf16 now)
    res = y13[:, Cmid_p:]                                    # conv3 residual (f32)

    # ---- conv2: 3x3, pad=1, tap-wise MXU accumulation (bf16 halo) -----------
    h4 = h.reshape(N, H, W, Cmid_p)
    zc = jnp.zeros((N, H, 1, Cmid_p), jnp.bfloat16)                  # W halo
    hw = jnp.concatenate([zc, h4, zc], axis=2)                       # (N, H,   W+2, C)
    zr = jnp.zeros((N, 1, W + 2, Cmid_p), jnp.bfloat16)              # H halo
    hp = jnp.concatenate([zr, hw, zr], axis=1)                       # (N, H+2, W+2, C)

    acc = jnp.zeros((rows, Cout_p), jnp.float32)
    for dy in range(3):                      # static taps, fully unrolled at trace
        for dx in range(3):
            tap = hp[:, dy:dy + H, dx:dx + W, :].reshape(rows, Cmid_p)
            wk = w2_ref[pl.ds((dy * 3 + dx) * Cmid_p, Cmid_p), :]
            acc = acc + jnp.dot(tap, wk, preferred_element_type=jnp.float32)

    out = _bn_relu(acc, g2_ref[...], b2_ref[...])

    # ---- residual add, lane-dense (rows, Cout_p) store (no reshape) ---------
    o_ref[...] = out + res


def _full_spec(shape):
    zeros = (0,) * len(shape)
    return pl.BlockSpec(shape, lambda i, z=zeros: z)


def bottleneck_pallas(x_nchw, params):
    w1, g1, b1, w2, g2, b2, w3, g3, b3 = params
    N, Cin, H, W = x_nchw.shape
    Cmid = w1.shape[1]
    Cout = w3.shape[1]
    Cin_p, Cmid_p, Cout_p = _pad128(Cin), _pad128(Cmid), _pad128(Cout)
    rows = N * H * W

    # bf16 BEFORE the layout transpose (halves the bytes of the XLA transpose).
    x2d = jnp.transpose(x_nchw.astype(jnp.bfloat16), (0, 2, 3, 1)).reshape(rows, Cin)
    x2d = jnp.pad(x2d, ((0, 0), (0, Cin_p - Cin)))

    # [conv1 | conv3] fused; each branch padded so the split is 128-aligned.
    w1p = jnp.pad(w1, ((0, Cin_p - Cin), (0, Cmid_p - Cmid)))
    w3p = jnp.pad(w3, ((0, Cin_p - Cin), (0, Cout_p - Cout)))
    w13 = jnp.concatenate([w1p, w3p], axis=1).astype(jnp.bfloat16)   # (Cin_p, Cmid_p+Cout_p)

    def pad_gb(g, b, cp):
        gp = jnp.pad(g.astype(jnp.float32), ((0, 0), (0, cp - g.shape[1])),
                     constant_values=1.0)
        bp = jnp.pad(b.astype(jnp.float32), ((0, 0), (0, cp - b.shape[1])))
        return gp, bp

    g1p, b1p = pad_gb(g1, b1, Cmid_p)
    g3p, b3p = pad_gb(g3, b3, Cout_p)
    g2p, b2p = pad_gb(g2, b2, Cout_p)
    g13 = jnp.concatenate([g1p, g3p], axis=1)
    b13 = jnp.concatenate([b1p, b3p], axis=1)

    # 3x3 weight: HWIO, padded, taps flattened -> (9*Cmid_p, Cout_p);
    # row order (dy, dx, cin) matches the kernel's (dy*3+dx)*Cmid_p + cin.
    w2p = jnp.pad(w2, ((0, 0), (0, 0), (0, Cmid_p - Cmid), (0, Cout_p - Cout)))
    w2f = w2p.reshape(9 * Cmid_p, Cout_p).astype(jnp.bfloat16)

    operands = (x2d, w13, g13, b13, w2f, g2p, b2p)
    kernel = partial(bottleneck_kernel, N=N, H=H, W=W, Cmid_p=Cmid_p, Cout_p=Cout_p)

    out2d = pl.pallas_call(
        kernel,
        out_shape=jax.ShapeDtypeStruct((rows, Cout_p), jnp.float32),
        grid_spec=pltpu.PrefetchScalarGridSpec(
            num_scalar_prefetch=0,
            grid=(1,),
            in_specs=[_full_spec(a.shape) for a in operands],
            out_specs=_full_spec((rows, Cout_p)),
        ),
        compiler_params=pltpu.CompilerParams(
            dimension_semantics=("arbitrary",),
            vmem_limit_bytes=48 * 1024 * 1024),   # fits v7x's 64 MiB physical VMEM
    )(*operands)

    out = out2d[:, :Cout].reshape(N, H, W, Cout)
    return jnp.transpose(out, (0, 3, 1, 2))                           # NHWC -> NCHW


def bottleneck_ref(x_nchw, params):
    """Pure-JAX reference (lax.conv). Conv operands go through bf16 with f32
    accumulation — exactly the kernel's MXU precision — so the correctness
    check can stay tight; all BN / ReLU math is f32."""
    w1, g1, b1, w2, g2, b2, w3, g3, b3 = params
    x = jnp.transpose(x_nchw, (0, 2, 3, 1))

    def conv(inp, w_hwio, pad):
        return jax.lax.conv_general_dilated(
            inp.astype(jnp.bfloat16), w_hwio.astype(jnp.bfloat16),
            window_strides=(1, 1), padding=pad,
            dimension_numbers=('NHWC', 'HWIO', 'NHWC'),
            preferred_element_type=jnp.float32)

    def bn_relu(y, g, b):
        mean = jnp.mean(y, axis=(0, 1, 2), keepdims=True)
        var = jnp.mean((y - mean) ** 2, axis=(0, 1, 2), keepdims=True)
        yn = (y - mean) * jax.lax.rsqrt(var + EPS)
        return jnp.maximum(yn * g.reshape(1, 1, 1, -1) + b.reshape(1, 1, 1, -1), 0.0)

    res = bn_relu(conv(x, w3.reshape(1, 1, *w3.shape), [(0, 0), (0, 0)]), g3, b3)
    h = bn_relu(conv(x, w1.reshape(1, 1, *w1.shape), [(0, 0), (0, 0)]), g1, b1)
    out = bn_relu(conv(h, w2, [(1, 1), (1, 1)]), g2, b2)
    return jnp.transpose(out + res, (0, 3, 1, 2))


def make_params(key, in_f, mid_f, out_f):
    ks = jax.random.split(key, 9)
    # PyTorch Conv2d weights are OIHW; build there then convert.
    w1_oihw = 0.2 * jax.random.normal(ks[0], (mid_f, in_f, 1, 1), jnp.float32)
    w2_oihw = 0.2 * jax.random.normal(ks[1], (out_f, mid_f, 3, 3), jnp.float32)
    w3_oihw = 0.2 * jax.random.normal(ks[2], (out_f, in_f, 1, 1), jnp.float32)
    w1 = w1_oihw[:, :, 0, 0].T                       # (Cin,  Cmid)
    w2 = jnp.transpose(w2_oihw, (2, 3, 1, 0))        # (3, 3, Cmid, Cout) == HWIO
    w3 = w3_oihw[:, :, 0, 0].T                       # (Cin,  Cout)
    g1 = 1.0 + 0.1 * jax.random.normal(ks[3], (1, mid_f), jnp.float32)
    b1 = 0.1 * jax.random.normal(ks[4], (1, mid_f), jnp.float32)
    g2 = 1.0 + 0.1 * jax.random.normal(ks[5], (1, out_f), jnp.float32)
    b2 = 0.1 * jax.random.normal(ks[6], (1, out_f), jnp.float32)
    g3 = 1.0 + 0.1 * jax.random.normal(ks[7], (1, out_f), jnp.float32)
    b3 = 0.1 * jax.random.normal(ks[8], (1, out_f), jnp.float32)
    return (w1, g1, b1, w2, g2, b2, w3, g3, b3)


if __name__ == "__main__":
    key = jax.random.PRNGKey(0)
    kx, kp = jax.random.split(key)

    N, in_f, H, W = 2, 4, 16, 16
    mid_f, out_f = 8, 16

    x = jax.random.normal(kx, (N, in_f, H, W), jnp.float32)     # PyTorch NCHW input
    params = make_params(kp, in_f, mid_f, out_f)

    out = jax.jit(bottleneck_pallas)(x, params)
    jax.block_until_ready(out)

    ref = bottleneck_ref(x, params)
    # bf16 MXU operands in both kernel and reference -> only summation-order /
    # single-pass-variance differences remain.
    np.testing.assert_allclose(np.asarray(out), np.asarray(ref),
                               rtol=5e-3, atol=5e-3)
    print("KERNEL_OK")
</pallas_src>

<mosaic_0001>
module attributes {stable_mosaic.version = 11 : i64} {
  func.func @bottleneck_kernel(%arg0: i32, %arg1: memref<512x128xbf16, #tpu.memory_space<vmem>>, %arg2: memref<128x256xbf16, #tpu.memory_space<vmem>>, %arg3: memref<1x256xf32, #tpu.memory_space<vmem>>, %arg4: memref<1x256xf32, #tpu.memory_space<vmem>>, %arg5: memref<1152x128xbf16, #tpu.memory_space<vmem>>, %arg6: memref<1x128xf32, #tpu.memory_space<vmem>>, %arg7: memref<1x128xf32, #tpu.memory_space<vmem>>, %arg8: memref<512x128xf32, #tpu.memory_space<vmem>>) attributes {dimension_semantics = [#tpu.dimension_semantics<arbitrary>], iteration_bounds = array<i64: 1>, scalar_prefetch = 0 : i64, scratch_operands = 0 : i64, tpu.core_type = #tpu.core_type<tc>, window_params = [{pipeline_mode = #tpu.pipeline_mode<synchronous>, transform_indices = @transform_0, window_bounds = array<i64: 512, 128>}, {pipeline_mode = #tpu.pipeline_mode<synchronous>, transform_indices = @transform_1, window_bounds = array<i64: 128, 256>}, {pipeline_mode = #tpu.pipeline_mode<synchronous>, transform_indices = @transform_2, window_bounds = array<i64: 1, 256>}, {pipeline_mode = #tpu.pipeline_mode<synchronous>, transform_indices = @transform_3, window_bounds = array<i64: 1, 256>}, {pipeline_mode = #tpu.pipeline_mode<synchronous>, transform_indices = @transform_4, window_bounds = array<i64: 1152, 128>}, {pipeline_mode = #tpu.pipeline_mode<synchronous>, transform_indices = @transform_5, window_bounds = array<i64: 1, 128>}, {pipeline_mode = #tpu.pipeline_mode<synchronous>, transform_indices = @transform_6, window_bounds = array<i64: 1, 128>}, {pipeline_mode = #tpu.pipeline_mode<synchronous>, transform_indices = @transform_7, window_bounds = array<i64: 512, 128>}]} {
    %c0 = arith.constant 0 : index
    %c0_0 = arith.constant 0 : index
    %0 = vector.load %arg1[%c0, %c0_0] : memref<512x128xbf16, #tpu.memory_space<vmem>>, vector<512x128xbf16>
    %c0_1 = arith.constant 0 : index
    %c0_2 = arith.constant 0 : index
    %1 = vector.load %arg2[%c0_1, %c0_2] : memref<128x256xbf16, #tpu.memory_space<vmem>>, vector<128x256xbf16>
    %cst = arith.constant dense<0.000000e+00> : vector<512x256xf32>
    %2 = tpu.matmul %0, %1, %cst {dimension_numbers = #tpu.dot_dimension_numbers<[1], [0], [0], [1], [0, 0, 1, 1], [], []>} : vector<512x128xbf16>, vector<128x256xbf16>, vector<512x256xf32> -> vector<512x256xf32>
    %c0_3 = arith.constant 0 : index
    %c0_4 = arith.constant 0 : index
    %3 = vector.load %arg3[%c0_3, %c0_4] : memref<1x256xf32, #tpu.memory_space<vmem>>, vector<1x256xf32>
    %c0_5 = arith.constant 0 : index
    %c0_6 = arith.constant 0 : index
    %4 = vector.load %arg4[%c0_5, %c0_6] : memref<1x256xf32, #tpu.memory_space<vmem>>, vector<1x256xf32>
    %cst_7 = arith.constant dense<0.000000e+00> : vector<256xf32>
    %5 = vector.multi_reduction <add>, %2, %cst_7 [0] : vector<512x256xf32> to vector<256xf32>
    %6 = vector.shape_cast %5 : vector<256xf32> to vector<1x256xf32>
    %7 = arith.mulf %2, %2 : vector<512x256xf32>
    %cst_8 = arith.constant dense<0.000000e+00> : vector<256xf32>
    %8 = vector.multi_reduction <add>, %7, %cst_8 [0] : vector<512x256xf32> to vector<256xf32>
    %9 = vector.shape_cast %8 : vector<256xf32> to vector<1x256xf32>
    %cst_9 = arith.constant 0.001953125 : f32
    %10 = vector.broadcast %cst_9 : f32 to vector<1x256xf32>
    %11 = arith.mulf %6, %10 : vector<1x256xf32>
    %cst_10 = arith.constant 0.001953125 : f32
    %12 = vector.broadcast %cst_10 : f32 to vector<1x256xf32>
    %13 = arith.mulf %9, %12 : vector<1x256xf32>
    %14 = arith.mulf %11, %11 : vector<1x256xf32>
    %15 = arith.subf %13, %14 : vector<1x256xf32>
    %16 = vector.broadcast %11 : vector<1x256xf32> to vector<512x256xf32>
    %17 = arith.subf %2, %16 : vector<512x256xf32>
    %cst_11 = arith.constant 9.99999974E-6 : f32
    %18 = vector.broadcast %cst_11 : f32 to vector<1x256xf32>
    %19 = arith.addf %15, %18 : vector<1x256xf32>
    %20 = math.rsqrt %19 : vector<1x256xf32>
    %21 = vector.broadcast %20 : vector<1x256xf32> to vector<512x256xf32>
    %22 = arith.mulf %17, %21 : vector<512x256xf32>
    %23 = vector.broadcast %3 : vector<1x256xf32> to vector<512x256xf32>
    %24 = arith.mulf %22, %23 : vector<512x256xf32>
    %25 = vector.broadcast %4 : vector<1x256xf32> to vector<512x256xf32>
    %26 = arith.addf %24, %25 : vector<512x256xf32>
    %cst_12 = arith.constant 0.000000e+00 : f32
    %27 = vector.broadcast %cst_12 : f32 to vector<512x256xf32>
    %28 = arith.maximumf %26, %27 : vector<512x256xf32>
    %29 = vector.extract_strided_slice %28 {offsets = [0, 0], sizes = [512, 128], strides = [1, 1]} : vector<512x256xf32> to vector<512x128xf32>
    %30 = arith.truncf %29 : vector<512x128xf32> to vector<512x128xbf16>
    %31 = vector.extract_strided_slice %28 {offsets = [0, 128], sizes = [512, 128], strides = [1, 1]} : vector<512x256xf32> to vector<512x128xf32>
    %32 = vector.shape_cast %30 : vector<512x128xbf16> to vector<2x16x16x128xbf16>
    %cst_13 = arith.constant 0.000000e+00 : bf16
    %33 = vector.broadcast %cst_13 : bf16 to vector<2x16x1x128xbf16>
    %34 = tpu.concatenate %33, %32, %33 in 2 : vector<2x16x1x128xbf16>, vector<2x16x16x128xbf16>, vector<2x16x1x128xbf16> -> vector<2x16x18x128xbf16>
    %cst_14 = arith.constant 0.000000e+00 : bf16
    %35 = vector.broadcast %cst_14 : bf16 to vector<2x1x18x128xbf16>
    %36 = tpu.concatenate %35, %34, %35 in 1 : vector<2x1x18x128xbf16>, vector<2x16x18x128xbf16>, vector<2x1x18x128xbf16> -> vector<2x18x18x128xbf16>
    %cst_15 = arith.constant 0.000000e+00 : f32
    %37 = vector.broadcast %cst_15 : f32 to vector<512x128xf32>
    %38 = vector.extract_strided_slice %36 {offsets = [0, 0, 0, 0], sizes = [2, 16, 16, 128], strides = [1, 1, 1, 1]} : vector<2x18x18x128xbf16> to vector<2x16x16x128xbf16>
    %39 = vector.shape_cast %38 : vector<2x16x16x128xbf16> to vector<512x128xbf16>
    %c0_16 = arith.constant 0 : index
    %c0_17 = arith.constant 0 : index
    %40 = vector.load %arg5[%c0_16, %c0_17] : memref<1152x128xbf16, #tpu.memory_space<vmem>>, vector<128x128xbf16>
    %cst_18 = arith.constant dense<0.000000e+00> : vector<512x128xf32>
    %41 = tpu.matmul %39, %40, %cst_18 {dimension_numbers = #tpu.dot_dimension_numbers<[1], [0], [0], [1], [0, 0, 1, 1], [], []>} : vector<512x128xbf16>, vector<128x128xbf16>, vector<512x128xf32> -> vector<512x128xf32>
    %42 = arith.addf %37, %41 : vector<512x128xf32>
    %43 = vector.extract_strided_slice %36 {offsets = [0, 0, 1, 0], sizes = [2, 16, 16, 128], strides = [1, 1, 1, 1]} : vector<2x18x18x128xbf16> to vector<2x16x16x128xbf16>
    %44 = vector.shape_cast %43 : vector<2x16x16x128xbf16> to vector<512x128xbf16>
    %c128 = arith.constant 128 : index
    %c0_19 = arith.constant 0 : index
    %45 = vector.load %arg5[%c128, %c0_19] : memref<1152x128xbf16, #tpu.memory_space<vmem>>, vector<128x128xbf16>
    %cst_20 = arith.constant dense<0.000000e+00> : vector<512x128xf32>
    %46 = tpu.matmul %44, %45, %cst_20 {dimension_numbers = #tpu.dot_dimension_numbers<[1], [0], [0], [1], [0, 0, 1, 1], [], []>} : vector<512x128xbf16>, vector<128x128xbf16>, vector<512x128xf32> -> vector<512x128xf32>
    %47 = arith.addf %42, %46 : vector<512x128xf32>
    %48 = vector.extract_strided_slice %36 {offsets = [0, 0, 2, 0], sizes = [2, 16, 16, 128], strides = [1, 1, 1, 1]} : vector<2x18x18x128xbf16> to vector<2x16x16x128xbf16>
    %49 = vector.shape_cast %48 : vector<2x16x16x128xbf16> to vector<512x128xbf16>
    %c256 = arith.constant 256 : index
    %c0_21 = arith.constant 0 : index
    %50 = vector.load %arg5[%c256, %c0_21] : memref<1152x128xbf16, #tpu.memory_space<vmem>>, vector<128x128xbf16>
    %cst_22 = arith.constant dense<0.000000e+00> : vector<512x128xf32>
    %51 = tpu.matmul %49, %50, %cst_22 {dimension_numbers = #tpu.dot_dimension_numbers<[1], [0], [0], [1], [0, 0, 1, 1], [], []>} : vector<512x128xbf16>, vector<128x128xbf16>, vector<512x128xf32> -> vector<512x128xf32>
    %52 = arith.addf %47, %51 : vector<512x128xf32>
    %53 = vector.extract_strided_slice %36 {offsets = [0, 1, 0, 0], sizes = [2, 16, 16, 128], strides = [1, 1, 1, 1]} : vector<2x18x18x128xbf16> to vector<2x16x16x128xbf16>
    %54 = vector.shape_cast %53 : vector<2x16x16x128xbf16> to vector<512x128xbf16>
    %c384 = arith.constant 384 : index
    %c0_23 = arith.constant 0 : index
    %55 = vector.load %arg5[%c384, %c0_23] : memref<1152x128xbf16, #tpu.memory_space<vmem>>, vector<128x128xbf16>
    %cst_24 = arith.constant dense<0.000000e+00> : vector<512x128xf32>
    %56 = tpu.matmul %54, %55, %cst_24 {dimension_numbers = #tpu.dot_dimension_numbers<[1], [0], [0], [1], [0, 0, 1, 1], [], []>} : vector<512x128xbf16>, vector<128x128xbf16>, vector<512x128xf32> -> vector<512x128xf32>
    %57 = arith.addf %52, %56 : vector<512x128xf32>
    %58 = vector.extract_strided_slice %36 {offsets = [0, 1, 1, 0], sizes = [2, 16, 16, 128], strides = [1, 1, 1, 1]} : vector<2x18x18x128xbf16> to vector<2x16x16x128xbf16>
    %59 = vector.shape_cast %58 : vector<2x16x16x128xbf16> to vector<512x128xbf16>
    %c512 = arith.constant 512 : index
    %c0_25 = arith.constant 0 : index
    %60 = vector.load %arg5[%c512, %c0_25] : memref<1152x128xbf16, #tpu.memory_space<vmem>>, vector<128x128xbf16>
    %cst_26 = arith.constant dense<0.000000e+00> : vector<512x128xf32>
    %61 = tpu.matmul %59, %60, %cst_26 {dimension_numbers = #tpu.dot_dimension_numbers<[1], [0], [0], [1], [0, 0, 1, 1], [], []>} : vector<512x128xbf16>, vector<128x128xbf16>, vector<512x128xf32> -> vector<512x128xf32>
    %62 = arith.addf %57, %61 : vector<512x128xf32>
    %63 = vector.extract_strided_slice %36 {offsets = [0, 1, 2, 0], sizes = [2, 16, 16, 128], strides = [1, 1, 1, 1]} : vector<2x18x18x128xbf16> to vector<2x16x16x128xbf16>
    %64 = vector.shape_cast %63 : vector<2x16x16x128xbf16> to vector<512x128xbf16>
    %c640 = arith.constant 640 : index
    %c0_27 = arith.constant 0 : index
    %65 = vector.load %arg5[%c640, %c0_27] : memref<1152x128xbf16, #tpu.memory_space<vmem>>, vector<128x128xbf16>
    %cst_28 = arith.constant dense<0.000000e+00> : vector<512x128xf32>
    %66 = tpu.matmul %64, %65, %cst_28 {dimension_numbers = #tpu.dot_dimension_numbers<[1], [0], [0], [1], [0, 0, 1, 1], [], []>} : vector<512x128xbf16>, vector<128x128xbf16>, vector<512x128xf32> -> vector<512x128xf32>
    %67 = arith.addf %62, %66 : vector<512x128xf32>
    %68 = vector.extract_strided_slice %36 {offsets = [0, 2, 0, 0], sizes = [2, 16, 16, 128], strides = [1, 1, 1, 1]} : vector<2x18x18x128xbf16> to vector<2x16x16x128xbf16>
    %69 = vector.shape_cast %68 : vector<2x16x16x128xbf16> to vector<512x128xbf16>
    %c768 = arith.constant 768 : index
    %c0_29 = arith.constant 0 : index
    %70 = vector.load %arg5[%c768, %c0_29] : memref<1152x128xbf16, #tpu.memory_space<vmem>>, vector<128x128xbf16>
    %cst_30 = arith.constant dense<0.000000e+00> : vector<512x128xf32>
    %71 = tpu.matmul %69, %70, %cst_30 {dimension_numbers = #tpu.dot_dimension_numbers<[1], [0], [0], [1], [0, 0, 1, 1], [], []>} : vector<512x128xbf16>, vector<128x128xbf16>, vector<512x128xf32> -> vector<512x128xf32>
    %72 = arith.addf %67, %71 : vector<512x128xf32>
    %73 = vector.extract_strided_slice %36 {offsets = [0, 2, 1, 0], sizes = [2, 16, 16, 128], strides = [1, 1, 1, 1]} : vector<2x18x18x128xbf16> to vector<2x16x16x128xbf16>
    %74 = vector.shape_cast %73 : vector<2x16x16x128xbf16> to vector<512x128xbf16>
    %c896 = arith.constant 896 : index
    %c0_31 = arith.constant 0 : index
    %75 = vector.load %arg5[%c896, %c0_31] : memref<1152x128xbf16, #tpu.memory_space<vmem>>, vector<128x128xbf16>
    %cst_32 = arith.constant dense<0.000000e+00> : vector<512x128xf32>
    %76 = tpu.matmul %74, %75, %cst_32 {dimension_numbers = #tpu.dot_dimension_numbers<[1], [0], [0], [1], [0, 0, 1, 1], [], []>} : vector<512x128xbf16>, vector<128x128xbf16>, vector<512x128xf32> -> vector<512x128xf32>
    %77 = arith.addf %72, %76 : vector<512x128xf32>
    %78 = vector.extract_strided_slice %36 {offsets = [0, 2, 2, 0], sizes = [2, 16, 16, 128], strides = [1, 1, 1, 1]} : vector<2x18x18x128xbf16> to vector<2x16x16x128xbf16>
    %79 = vector.shape_cast %78 : vector<2x16x16x128xbf16> to vector<512x128xbf16>
    %c1024 = arith.constant 1024 : index
    %c0_33 = arith.constant 0 : index
    %80 = vector.load %arg5[%c1024, %c0_33] : memref<1152x128xbf16, #tpu.memory_space<vmem>>, vector<128x128xbf16>
    %cst_34 = arith.constant dense<0.000000e+00> : vector<512x128xf32>
    %81 = tpu.matmul %79, %80, %cst_34 {dimension_numbers = #tpu.dot_dimension_numbers<[1], [0], [0], [1], [0, 0, 1, 1], [], []>} : vector<512x128xbf16>, vector<128x128xbf16>, vector<512x128xf32> -> vector<512x128xf32>
    %82 = arith.addf %77, %81 : vector<512x128xf32>
    %c0_35 = arith.constant 0 : index
    %c0_36 = arith.constant 0 : index
    %83 = vector.load %arg6[%c0_35, %c0_36] : memref<1x128xf32, #tpu.memory_space<vmem>>, vector<1x128xf32>
    %c0_37 = arith.constant 0 : index
    %c0_38 = arith.constant 0 : index
    %84 = vector.load %arg7[%c0_37, %c0_38] : memref<1x128xf32, #tpu.memory_space<vmem>>, vector<1x128xf32>
    %cst_39 = arith.constant dense<0.000000e+00> : vector<128xf32>
    %85 = vector.multi_reduction <add>, %82, %cst_39 [0] : vector<512x128xf32> to vector<128xf32>
    %86 = vector.shape_cast %85 : vector<128xf32> to vector<1x128xf32>
    %87 = arith.mulf %82, %82 : vector<512x128xf32>
    %cst_40 = arith.constant dense<0.000000e+00> : vector<128xf32>
    %88 = vector.multi_reduction <add>, %87, %cst_40 [0] : vector<512x128xf32> to vector<128xf32>
    %89 = vector.shape_cast %88 : vector<128xf32> to vector<1x128xf32>
    %cst_41 = arith.constant 0.001953125 : f32
    %90 = vector.broadcast %cst_41 : f32 to vector<1x128xf32>
    %91 = arith.mulf %86, %90 : vector<1x128xf32>
    %cst_42 = arith.constant 0.001953125 : f32
    %92 = vector.broadcast %cst_42 : f32 to vector<1x128xf32>
    %93 = arith.mulf %89, %92 : vector<1x128xf32>
    %94 = arith.mulf %91, %91 : vector<1x128xf32>
    %95 = arith.subf %93, %94 : vector<1x128xf32>
    %96 = vector.broadcast %91 : vector<1x128xf32> to vector<512x128xf32>
    %97 = arith.subf %82, %96 : vector<512x128xf32>
    %cst_43 = arith.constant 9.99999974E-6 : f32
    %98 = vector.broadcast %cst_43 : f32 to vector<1x128xf32>
    %99 = arith.addf %95, %98 : vector<1x128xf32>
    %100 = math.rsqrt %99 : vector<1x128xf32>
    %101 = vector.broadcast %100 : vector<1x128xf32> to vector<512x128xf32>
    %102 = arith.mulf %97, %101 : vector<512x128xf32>
    %103 = vector.broadcast %83 : vector<1x128xf32> to vector<512x128xf32>
    %104 = arith.mulf %102, %103 : vector<512x128xf32>
    %105 = vector.broadcast %84 : vector<1x128xf32> to vector<512x128xf32>
    %106 = arith.addf %104, %105 : vector<512x128xf32>
    %cst_44 = arith.constant 0.000000e+00 : f32
    %107 = vector.broadcast %cst_44 : f32 to vector<512x128xf32>
    %108 = arith.maximumf %106, %107 : vector<512x128xf32>
    %109 = arith.addf %108, %31 : vector<512x128xf32>
    %c0_45 = arith.constant 0 : index
    %c0_46 = arith.constant 0 : index
    %110 = vector.load %arg8[%c0_45, %c0_46] : memref<512x128xf32, #tpu.memory_space<vmem>>, vector<512x128xf32>
    tpu.vector_store %arg8[%c0_45, %c0_46], %109 {strides = array<i32>} : memref<512x128xf32, #tpu.memory_space<vmem>>, vector<512x128xf32>,
    return
  }
  func.func @transform_0(%arg0: i32) -> (i32, i32) {
    %c0_i32 = arith.constant 0 : i32
    %c0_i32_0 = arith.constant 0 : i32
    %c0_i32_1 = arith.constant 0 : i32
    return %c0_i32, %c0_i32_0 : i32, i32
  }
  func.func @transform_1(%arg0: i32) -> (i32, i32) {
    %c0_i32 = arith.constant 0 : i32
    %c0_i32_0 = arith.constant 0 : i32
    %c0_i32_1 = arith.constant 0 : i32
    return %c0_i32, %c0_i32_0 : i32, i32
  }
  func.func @transform_2(%arg0: i32) -> (i32, i32) {
    %c0_i32 = arith.constant 0 : i32
    %c0_i32_0 = arith.constant 0 : i32
    %c0_i32_1 = arith.constant 0 : i32
    return %c0_i32, %c0_i32_0 : i32, i32
  }
  func.func @transform_3(%arg0: i32) -> (i32, i32) {
    %c0_i32 = arith.constant 0 : i32
    %c0_i32_0 = arith.constant 0 : i32
    %c0_i32_1 = arith.constant 0 : i32
    return %c0_i32, %c0_i32_0 : i32, i32
  }
  func.func @transform_4(%arg0: i32) -> (i32, i32) {
    %c0_i32 = arith.constant 0 : i32
    %c0_i32_0 = arith.constant 0 : i32
    %c0_i32_1 = arith.constant 0 : i32
    return %c0_i32, %c0_i32_0 : i32, i32
  }
  func.func @transform_5(%arg0: i32) -> (i32, i32) {
    %c0_i32 = arith.constant 0 : i32
    %c0_i32_0 = arith.constant 0 : i32
    %c0_i32_1 = arith.constant 0 : i32
    return %c0_i32, %c0_i32_0 : i32, i32
  }
  func.func @transform_6(%arg0: i32) -> (i32, i32) {
    %c0_i32 = arith.constant 0 : i32
    %c0_i32_0 = arith.constant 0 : i32
    %c0_i32_1 = arith.constant 0 : i32
    return %c0_i32, %c0_i32_0 : i32, i32
  }
  func.func @transform_7(%arg0: i32) -> (i32, i32) {
    %c0_i32 = arith.constant 0 : i32
    %c0_i32_0 = arith.constant 0 : i32
    %c0_i32_1 = arith.constant 0 : i32
    return %c0_i32, %c0_i32_0 : i32, i32
  }
}

</mosaic_0001>

<llo_original>
// kernel: bottleneck_pallas.1
$region0: #{bottleneck_pallas.1}
  #allocation0 [shape = 'u32[]', space=smem, size = 0x4, offset = 0x4, fixed_abs, tag = 'smem constant byte address 0x4 - core index']
  #allocation1 [shape = 'u32[144,128]{1,0:T(1,128)}', space=vmem, size = 0x12000, scoped, tag = 'internal scratch']
  %s0 = inlined_call_operand.vmem [shape: bf16[512,128], index: 0, kind: input, shape index: {}]
  %s1 = inlined_call_operand.vmem [shape: bf16[128,256], index: 1, kind: input, shape index: {}]
  %s2 = inlined_call_operand.vmem [shape: f32[1,256], index: 2, kind: input, shape index: {}]
  %s3 = inlined_call_operand.vmem [shape: f32[1,256], index: 3, kind: input, shape index: {}]
  %s4 = inlined_call_operand.vmem [shape: bf16[1152,128], index: 4, kind: input, shape index: {}]
  %s5 = inlined_call_operand.vmem [shape: f32[1,128], index: 5, kind: input, shape index: {}]
  %s6 = inlined_call_operand.vmem [shape: f32[1,128], index: 6, kind: input, shape index: {}]
  %s7 = inlined_call_operand.vmem [shape: f32[512,128], index: 7, kind: output, shape index: {}]
  %s8 = sld [smem:[#allocation0]]
  $region38: #{bottleneck_pallas.1} parent=0
    _
  %s10 = ssub.s32 1, %s8
  %s11 = scalar_select 0, %s10, %s8
  // Predicated region
  $region2: #{bottleneck_pallas.1} parent=0 // pred_check
    _
  $region3: #{bottleneck_pallas.1} parent=0 // pred_check_branch
    %13 = sbr.rel (0) target = $region5
  $region4: #{bottleneck_pallas.1} parent=0 // pred_region
    _
  $region5: #{bottleneck_pallas.1} parent=0 // pred_fallthru
    _
  // Predicated region
  $region6: #{bottleneck_pallas.1} parent=0 // pred_check
    _
  $region7: #{bottleneck_pallas.1} parent=0 // pred_check_branch
    %15 = sbr.rel (0) target = $region9
  $region8: #{bottleneck_pallas.1} parent=0 // pred_region
    _
  $region9: #{bottleneck_pallas.1} parent=0 // pred_fallthru
    _
  // Predicated region
  $region10: #{bottleneck_pallas.1} parent=0 // pred_check
    _
  $region11: #{bottleneck_pallas.1} parent=0 // pred_check_branch
    %17 = sbr.rel (0) target = $region13
  $region12: #{bottleneck_pallas.1} parent=0 // pred_region
    _
  $region13: #{bottleneck_pallas.1} parent=0 // pred_fallthru
    _
  // Predicated region
  $region14: #{bottleneck_pallas.1} parent=0 // pred_check
    _
  $region15: #{bottleneck_pallas.1} parent=0 // pred_check_branch
    %19 = sbr.rel (0) target = $region17
  $region16: #{bottleneck_pallas.1} parent=0 // pred_region
    _
  $region17: #{bottleneck_pallas.1} parent=0 // pred_fallthru
    _
  // Predicated region
  $region18: #{bottleneck_pallas.1} parent=0 // pred_check
    _
  $region19: #{bottleneck_pallas.1} parent=0 // pred_check_branch
    %21 = sbr.rel (0) target = $region21
  $region20: #{bottleneck_pallas.1} parent=0 // pred_region
    _
  $region21: #{bottleneck_pallas.1} parent=0 // pred_fallthru
    _
  // Predicated region
  $region22: #{bottleneck_pallas.1} parent=0 // pred_check
    _
  $region23: #{bottleneck_pallas.1} parent=0 // pred_check_branch
    %23 = sbr.rel (0) target = $region25
  $region24: #{bottleneck_pallas.1} parent=0 // pred_region
    _
  $region25: #{bottleneck_pallas.1} parent=0 // pred_fallthru
    _
  // Predicated region
  $region26: #{bottleneck_pallas.1} parent=0 // pred_check
    _
  $region27: #{bottleneck_pallas.1} parent=0 // pred_check_branch
    %25 = sbr.rel (0) target = $region29
  $region28: #{bottleneck_pallas.1} parent=0 // pred_region
    _
  $region29: #{bottleneck_pallas.1} parent=0 // pred_fallthru
    _
  %v27 = vld [vmem:[%s0] sm:$0xf]
  %v28 = vld [vmem:[%s0 + $0x4] sm:$0xf]
  %v29 = vld [vmem:[%s0 + $0x8] sm:$0xf]
  %v30 = vld [vmem:[%s0 + $0xc] sm:$0xf]
  %v31 = vld [vmem:[%s0 + $0x10] sm:$0xf]
  %v32 = vld [vmem:[%s0 + $0x14] sm:$0xf]
  %v33 = vld [vmem:[%s0 + $0x18] sm:$0xf]
  %v34 = vld [vmem:[%s0 + $0x1c] sm:$0xf]
  %v35 = vld [vmem:[%s0 + $0x20] sm:$0xf]
  %v36 = vld [vmem:[%s0 + $0x24] sm:$0xf]
  %v37 = vld [vmem:[%s0 + $0x28] sm:$0xf]
  %v38 = vld [vmem:[%s0 + $0x2c] sm:$0xf]
  %v39 = vld [vmem:[%s0 + $0x30] sm:$0xf]
  %v40 = vld [vmem:[%s0 + $0x34] sm:$0xf]
  %v41 = vld [vmem:[%s0 + $0x38] sm:$0xf]
  %v42 = vld [vmem:[%s0 + $0x3c] sm:$0xf]
  %v43 = vld [vmem:[%s0 + $0x40] sm:$0xf]
  %v44 = vld [vmem:[%s0 + $0x44] sm:$0xf]
  %v45 = vld [vmem:[%s0 + $0x48] sm:$0xf]
  %v46 = vld [vmem:[%s0 + $0x4c] sm:$0xf]
  %v47 = vld [vmem:[%s0 + $0x50] sm:$0xf]
  %v48 = vld [vmem:[%s0 + $0x54] sm:$0xf]
  %v49 = vld [vmem:[%s0 + $0x58] sm:$0xf]
  %v50 = vld [vmem:[%s0 + $0x5c] sm:$0xf]
  %v51 = vld [vmem:[%s0 + $0x60] sm:$0xf]
  %v52 = vld [vmem:[%s0 + $0x64] sm:$0xf]
  %v53 = vld [vmem:[%s0 + $0x68] sm:$0xf]
  %v54 = vld [vmem:[%s0 + $0x6c] sm:$0xf]
  %v55 = vld [vmem:[%s0 + $0x70] sm:$0xf]
  %v56 = vld [vmem:[%s0 + $0x74] sm:$0xf]
  %v57 = vld [vmem:[%s0 + $0x78] sm:$0xf]
  %v58 = vld [vmem:[%s0 + $0x7c] sm:$0xf]
  %v59 = vld [vmem:[%s0 + $0x80] sm:$0xf]
  %v60 = vld [vmem:[%s0 + $0x84] sm:$0xf]
  %v61 = vld [vmem:[%s0 + $0x88] sm:$0xf]
  %v62 = vld [vmem:[%s0 + $0x8c] sm:$0xf]
  %v63 = vld [vmem:[%s0 + $0x90] sm:$0xf]
  %v64 = vld [vmem:[%s0 + $0x94] sm:$0xf]
  %v65 = vld [vmem:[%s0 + $0x98] sm:$0xf]
  %v66 = vld [vmem:[%s0 + $0x9c] sm:$0xf]
  %v67 = vld [vmem:[%s0 + $0xa0] sm:$0xf]
  %v68 = vld [vmem:[%s0 + $0xa4] sm:$0xf]
  %v69 = vld [vmem:[%s0 + $0xa8] sm:$0xf]
  %v70 = vld [vmem:[%s0 + $0xac] sm:$0xf]
  %v71 = vld [vmem:[%s0 + $0xb0] sm:$0xf]
  %v72 = vld [vmem:[%s0 + $0xb4] sm:$0xf]
  %v73 = vld [vmem:[%s0 + $0xb8] sm:$0xf]
  %v74 = vld [vmem:[%s0 + $0xbc] sm:$0xf]
  %v75 = vld [vmem:[%s0 + $0xc0] sm:$0xf]
  %v76 = vld [vmem:[%s0 + $0xc4] sm:$0xf]
  %v77 = vld [vmem:[%s0 + $0xc8] sm:$0xf]
  %v78 = vld [vmem:[%s0 + $0xcc] sm:$0xf]
  %v79 = vld [vmem:[%s0 + $0xd0] sm:$0xf]
  %v80 = vld [vmem:[%s0 + $0xd4] sm:$0xf]
  %v81 = vld [vmem:[%s0 + $0xd8] sm:$0xf]
  %v82 = vld [vmem:[%s0 + $0xdc] sm:$0xf]
  %v83 = vld [vmem:[%s0 + $0xe0] sm:$0xf]
  %v84 = vld [vmem:[%s0 + $0xe4] sm:$0xf]
  %v85 = vld [vmem:[%s0 + $0xe8] sm:$0xf]
  %v86 = vld [vmem:[%s0 + $0xec] sm:$0xf]
  %v87 = vld [vmem:[%s0 + $0xf0] sm:$0xf]
  %v88 = vld [vmem:[%s0 + $0xf4] sm:$0xf]
  %v89 = vld [vmem:[%s0 + $0xf8] sm:$0xf]
  %v90 = vld [vmem:[%s0 + $0xfc] sm:$0xf]
  %v91 = vld [vmem:[%s1] sm:$0xff]
  %v92 = vld [vmem:[%s1 + $0x8] sm:$0xff]
  %v93 = vld [vmem:[%s1 + $0x10] sm:$0xff]
  %v94 = vld [vmem:[%s1 + $0x18] sm:$0xff]
  %v95 = vld [vmem:[%s1 + $0x20] sm:$0xff]
  %v96 = vld [vmem:[%s1 + $0x28] sm:$0xff]
  %v97 = vld [vmem:[%s1 + $0x30] sm:$0xff]
  %v98 = vld [vmem:[%s1 + $0x38] sm:$0xff]
  %v99 = vld [vmem:[%s1 + $0x40] sm:$0xff]
  %v100 = vld [vmem:[%s1 + $0x48] sm:$0xff]
  %v101 = vld [vmem:[%s1 + $0x50] sm:$0xff]
  %v102 = vld [vmem:[%s1 + $0x58] sm:$0xff]
  %v103 = vld [vmem:[%s1 + $0x60] sm:$0xff]
  %v104 = vld [vmem:[%s1 + $0x68] sm:$0xff]
  %v105 = vld [vmem:[%s1 + $0x70] sm:$0xff]
  %v106 = vld [vmem:[%s1 + $0x78] sm:$0xff]
  %v171 = vunpack.c.l.b16 %v27
  %v172 = vunpack.c.l.b16 %v28
  %v173 = vunpack.c.l.b16 %v29
  %v174 = vunpack.c.l.b16 %v30
  %v175 = vunpack.c.l.b16 %v31
  %v176 = vunpack.c.l.b16 %v32
  %v177 = vunpack.c.l.b16 %v33
  %v178 = vunpack.c.l.b16 %v34
  %v179 = vunpack.c.l.b16 %v35
  %v180 = vunpack.c.l.b16 %v36
  %v181 = vunpack.c.l.b16 %v37
  %v182 = vunpack.c.l.b16 %v38
  %v183 = vunpack.c.l.b16 %v39
  %v184 = vunpack.c.l.b16 %v40
  %v185 = vunpack.c.l.b16 %v41
  %v186 = vunpack.c.l.b16 %v42
  %v187 = vunpack.c.l.b16 %v43
  %v188 = vunpack.c.l.b16 %v44
  %v189 = vunpack.c.l.b16 %v45
  %v190 = vunpack.c.l.b16 %v46
  %v191 = vunpack.c.l.b16 %v47
  %v192 = vunpack.c.l.b16 %v48
  %v193 = vunpack.c.l.b16 %v49
  %v194 = vunpack.c.l.b16 %v50
  %v195 = vunpack.c.l.b16 %v51
  %v196 = vunpack.c.l.b16 %v52
  %v197 = vunpack.c.l.b16 %v53
  %v198 = vunpack.c.l.b16 %v54
  %v199 = vunpack.c.l.b16 %v55
  %v200 = vunpack.c.l.b16 %v56
  %v201 = vunpack.c.l.b16 %v57
  %v202 = vunpack.c.l.b16 %v58
  %v203 = vunpack.c.l.b16 %v59
  %v204 = vunpack.c.l.b16 %v60
  %v205 = vunpack.c.l.b16 %v61
  %v206 = vunpack.c.l.b16 %v62
  %v207 = vunpack.c.l.b16 %v63
  %v208 = vunpack.c.l.b16 %v64
  %v209 = vunpack.c.l.b16 %v65
  %v210 = vunpack.c.l.b16 %v66
  %v211 = vunpack.c.l.b16 %v67
  %v212 = vunpack.c.l.b16 %v68
  %v213 = vunpack.c.l.b16 %v69
  %v214 = vunpack.c.l.b16 %v70
  %v215 = vunpack.c.l.b16 %v71
  %v216 = vunpack.c.l.b16 %v72
  %v217 = vunpack.c.l.b16 %v73
  %v218 = vunpack.c.l.b16 %v74
  %v219 = vunpack.c.l.b16 %v75
  %v220 = vunpack.c.l.b16 %v76
  %v221 = vunpack.c.l.b16 %v77
  %v222 = vunpack.c.l.b16 %v78
  %v223 = vunpack.c.l.b16 %v79
  %v224 = vunpack.c.l.b16 %v80
  %v225 = vunpack.c.l.b16 %v81
  %v226 = vunpack.c.l.b16 %v82
  %v227 = vunpack.c.l.b16 %v83
  %v228 = vunpack.c.l.b16 %v84
  %v229 = vunpack.c.l.b16 %v85
  %v230 = vunpack.c.l.b16 %v86
  %v231 = vunpack.c.l.b16 %v87
  %v232 = vunpack.c.l.b16 %v88
  %v233 = vunpack.c.l.b16 %v89
  %v234 = vunpack.c.l.b16 %v90
  %v235 = vpack.c.b16 %v172, %v171
  %v236 = vpack.c.b16 %v174, %v173
  %v237 = vpack.c.b16 %v176, %v175
  %v238 = vpack.c.b16 %v178, %v177
  %v239 = vpack.c.b16 %v180, %v179
  %v240 = vpack.c.b16 %v182, %v181
  %v241 = vpack.c.b16 %v184, %v183
  %v242 = vpack.c.b16 %v186, %v185
  %v243 = vpack.c.b16 %v188, %v187
  %v244 = vpack.c.b16 %v190, %v189
  %v245 = vpack.c.b16 %v192, %v191
  %v246 = vpack.c.b16 %v194, %v193
  %v247 = vpack.c.b16 %v196, %v195
  %v248 = vpack.c.b16 %v198, %v197
  %v249 = vpack.c.b16 %v200, %v199
  %v250 = vpack.c.b16 %v202, %v201
  %v251 = vpack.c.b16 %v204, %v203
  %v252 = vpack.c.b16 %v206, %v205
  %v253 = vpack.c.b16 %v208, %v207
  %v254 = vpack.c.b16 %v210, %v209
  %v255 = vpack.c.b16 %v212, %v211
  %v256 = vpack.c.b16 %v214, %v213
  %v257 = vpack.c.b16 %v216, %v215
  %v258 = vpack.c.b16 %v218, %v217
  %v259 = vpack.c.b16 %v220, %v219
  %v260 = vpack.c.b16 %v222, %v221
  %v261 = vpack.c.b16 %v224, %v223
  %v262 = vpack.c.b16 %v226, %v225
  %v263 = vpack.c.b16 %v228, %v227
  %v264 = vpack.c.b16 %v230, %v229
  %v265 = vpack.c.b16 %v232, %v231
  %v266 = vpack.c.b16 %v234, %v233
  %v315 = vunpack.c.l.b16 %v91
  %v316 = vunpack.c.h.b16 %v91
  %v317 = vunpack.c.l.b16 %v92
  %v318 = vunpack.c.h.b16 %v92
  %v319 = vunpack.c.l.b16 %v93
  %v320 = vunpack.c.h.b16 %v93
  %v321 = vunpack.c.l.b16 %v94
  %v322 = vunpack.c.h.b16 %v94
  %v323 = vunpack.c.l.b16 %v95
  %v324 = vunpack.c.h.b16 %v95
  %v325 = vunpack.c.l.b16 %v96
  %v326 = vunpack.c.h.b16 %v96
  %v327 = vunpack.c.l.b16 %v97
  %v328 = vunpack.c.h.b16 %v97
  %v329 = vunpack.c.l.b16 %v98
  %v330 = vunpack.c.h.b16 %v98
  %v331 = vunpack.c.l.b16 %v99
  %v332 = vunpack.c.h.b16 %v99
  %v333 = vunpack.c.l.b16 %v100
  %v334 = vunpack.c.h.b16 %v100
  %v335 = vunpack.c.l.b16 %v101
  %v336 = vunpack.c.h.b16 %v101
  %v337 = vunpack.c.l.b16 %v102
  %v338 = vunpack.c.h.b16 %v102
  %v339 = vunpack.c.l.b16 %v103
  %v340 = vunpack.c.h.b16 %v103
  %v341 = vunpack.c.l.b16 %v104
  %v342 = vunpack.c.h.b16 %v104
  %v343 = vunpack.c.l.b16 %v105
  %v344 = vunpack.c.h.b16 %v105
  %v345 = vunpack.c.l.b16 %v106
  %v346 = vunpack.c.h.b16 %v106
  %v347 = vpack.c.b16 %v317, %v315
  %v348 = vpack.c.b16 %v318, %v316
  %v349 = vpack.c.b16 %v321, %v319
  %v350 = vpack.c.b16 %v322, %v320
  %v351 = vpack.c.b16 %v325, %v323
  %v352 = vpack.c.b16 %v326, %v324
  %v353 = vpack.c.b16 %v329, %v327
  %v354 = vpack.c.b16 %v330, %v328
  %v355 = vpack.c.b16 %v333, %v331
  %v356 = vpack.c.b16 %v334, %v332
  %v357 = vpack.c.b16 %v337, %v335
  %v358 = vpack.c.b16 %v338, %v336
  %v359 = vpack.c.b16 %v341, %v339
  %v360 = vpack.c.b16 %v342, %v340
  %v361 = vpack.c.b16 %v345, %v343
  %v362 = vpack.c.b16 %v346, %v344
  %379 = vmatprep.subr.bf16.mxu0 %v362
  %380 = vmatpush1.bf16.msra.mxu0 %v361
  %381 = vmatprep.subr.bf16.mxu0 %v360
  %382 = vmatpush1.bf16.msra.mxu0 %v359
  %383 = vmatprep.subr.bf16.mxu0 %v358
  %384 = vmatpush1.bf16.msra.mxu0 %v357
  %385 = vmatprep.subr.bf16.mxu0 %v356
  %386 = vmatpush1.bf16.msra.mxu0 %v355
  %387 = vmatprep.subr.bf16.mxu0 %v354
  %388 = vmatpush1.bf16.msra.mxu0 %v353
  %389 = vmatprep.subr.bf16.mxu0 %v352
  %390 = vmatpush1.bf16.msra.mxu0 %v351
  %391 = vmatprep.subr.bf16.mxu0 %v350
  %392 = vmatpush1.bf16.msra.mxu0 %v349
  %393 = vmatprep.subr.bf16.mxu0 %v348
  %394 = vmatpush1.bf16.msra.mxu0 %v347
  %395 = vmatprep.subr.bf16.mxu0 0
  %396 = vmatpush2.bf16.msra.mxu0 0
  %397 = vmatprep.subr.bf16.mxu0 0
  %398 = vmatpush2.bf16.msra.mxu0 0
  %399 = vmatprep.subr.bf16.mxu0 0
  %400 = vmatpush2.bf16.msra.mxu0 0
  %401 = vmatprep.subr.bf16.mxu0 0
  %402 = vmatpush2.bf16.msra.mxu0 0
  %403 = vmatprep.subr.bf16.mxu0 0
  %404 = vmatpush2.bf16.msra.mxu0 0
  %405 = vmatprep.subr.bf16.mxu0 0
  %406 = vmatpush2.bf16.msra.mxu0 0
  %407 = vmatprep.subr.bf16.mxu0 0
  %408 = vmatpush2.bf16.msra.mxu0 0
  %409 = vmatprep.subr.bf16.mxu0 0
  %410 = vmatpush2.bf16.msra.mxu0 0
  %411 = vmatprep.mubr.bf16.mxu0 0
  %412 = vmatmul.mubr.bf16.gmra.mxu0 %v235
  %v413 = vpop.f32.mrf.mxu0
  %v414 = vadd.f32 0.0, %v413
  %v415 = vpop.f32.mrf.mxu0
  %v416 = vadd.f32 0.0, %v415
  %v417 = vpop.f32.mrf.mxu0
  %v418 = vadd.f32 0.0, %v417
  %v419 = vpop.f32.mrf.mxu0
  %v420 = vadd.f32 0.0, %v419
  %421 = vmatprep.mubr.bf16.mxu0 0
  %422 = vmatmul.mubr.bf16.gmra.mxu0 %v236
  %v423 = vpop.f32.mrf.mxu0
  %v424 = vadd.f32 0.0, %v423
  %v425 = vpop.f32.mrf.mxu0
  %v426 = vadd.f32 0.0, %v425
  %v427 = vpop.f32.mrf.mxu0
  %v428 = vadd.f32 0.0, %v427
  %v429 = vpop.f32.mrf.mxu0
  %v430 = vadd.f32 0.0, %v429
  %431 = vmatprep.mubr.bf16.mxu0 0
  %432 = vmatmul.mubr.bf16.gmra.mxu0 %v237
  %v433 = vpop.f32.mrf.mxu0
  %v434 = vadd.f32 0.0, %v433
  %v435 = vpop.f32.mrf.mxu0
  %v436 = vadd.f32 0.0, %v435
  %v437 = vpop.f32.mrf.mxu0
  %v438 = vadd.f32 0.0, %v437
  %v439 = vpop.f32.mrf.mxu0
  %v440 = vadd.f32 0.0, %v439
  %441 = vmatprep.mubr.bf16.mxu0 0
  %442 = vmatmul.mubr.bf16.gmra.mxu0 %v238
  %v443 = vpop.f32.mrf.mxu0
  %v444 = vadd.f32 0.0, %v443
  %v445 = vpop.f32.mrf.mxu0
  %v446 = vadd.f32 0.0, %v445
  %v447 = vpop.f32.mrf.mxu0
  %v448 = vadd.f32 0.0, %v447
  %v449 = vpop.f32.mrf.mxu0
  %v450 = vadd.f32 0.0, %v449
  %451 = vmatprep.mubr.bf16.mxu0 0
  %452 = vmatmul.mubr.bf16.gmra.mxu0 %v239
  %v453 = vpop.f32.mrf.mxu0
  %v454 = vadd.f32 0.0, %v453
  %v455 = vpop.f32.mrf.mxu0
  %v456 = vadd.f32 0.0, %v455
  %v457 = vpop.f32.mrf.mxu0
  %v458 = vadd.f32 0.0, %v457
  %v459 = vpop.f32.mrf.mxu0
  %v460 = vadd.f32 0.0, %v459
  %461 = vmatprep.mubr.bf16.mxu0 0
  %462 = vmatmul.mubr.bf16.gmra.mxu0 %v240
  %v463 = vpop.f32.mrf.mxu0
  %v464 = vadd.f32 0.0, %v463
  %v465 = vpop.f32.mrf.mxu0
  %v466 = vadd.f32 0.0, %v465
  %v467 = vpop.f32.mrf.mxu0
  %v468 = vadd.f32 0.0, %v467
  %v469 = vpop.f32.mrf.mxu0
  %v470 = vadd.f32 0.0, %v469
  %471 = vmatprep.mubr.bf16.mxu0 0
  %472 = vmatmul.mubr.bf16.gmra.mxu0 %v241
  %v473 = vpop.f32.mrf.mxu0
  %v474 = vadd.f32 0.0, %v473
  %v475 = vpop.f32.mrf.mxu0
  %v476 = vadd.f32 0.0, %v475
  %v477 = vpop.f32.mrf.mxu0
  %v478 = vadd.f32 0.0, %v477
  %v479 = vpop.f32.mrf.mxu0
  %v480 = vadd.f32 0.0, %v479
  %481 = vmatprep.mubr.bf16.mxu0 0
  %482 = vmatmul.mubr.bf16.gmra.mxu0 %v242
  %v483 = vpop.f32.mrf.mxu0
  %v484 = vadd.f32 0.0, %v483
  %v485 = vpop.f32.mrf.mxu0
  %v486 = vadd.f32 0.0, %v485
  %v487 = vpop.f32.mrf.mxu0
  %v488 = vadd.f32 0.0, %v487
  %v489 = vpop.f32.mrf.mxu0
  %v490 = vadd.f32 0.0, %v489
  %491 = vmatprep.mubr.bf16.mxu0 0
  %492 = vmatmul.mubr.bf16.gmra.mxu0 %v243
  %v493 = vpop.f32.mrf.mxu0
  %v494 = vadd.f32 0.0, %v493
  %v495 = vpop.f32.mrf.mxu0
  %v496 = vadd.f32 0.0, %v495
  %v497 = vpop.f32.mrf.mxu0
  %v498 = vadd.f32 0.0, %v497
  %v499 = vpop.f32.mrf.mxu0
  %v500 = vadd.f32 0.0, %v499
  %501 = vmatprep.mubr.bf16.mxu0 0
  %502 = vmatmul.mubr.bf16.gmra.mxu0 %v244
  %v503 = vpop.f32.mrf.mxu0
  %v504 = vadd.f32 0.0, %v503
  %v505 = vpop.f32.mrf.mxu0
  %v506 = vadd.f32 0.0, %v505
  %v507 = vpop.f32.mrf.mxu0
  %v508 = vadd.f32 0.0, %v507
  %v509 = vpop.f32.mrf.mxu0
  %v510 = vadd.f32 0.0, %v509
  %511 = vmatprep.mubr.bf16.mxu0 0
  %512 = vmatmul.mubr.bf16.gmra.mxu0 %v245
  %v513 = vpop.f32.mrf.mxu0
  %v514 = vadd.f32 0.0, %v513
  %v515 = vpop.f32.mrf.mxu0
  %v516 = vadd.f32 0.0, %v515
  %v517 = vpop.f32.mrf.mxu0
  %v518 = vadd.f32 0.0, %v517
  %v519 = vpop.f32.mrf.mxu0
  %v520 = vadd.f32 0.0, %v519
  %521 = vmatprep.mubr.bf16.mxu0 0
  %522 = vmatmul.mubr.bf16.gmra.mxu0 %v246
  %v523 = vpop.f32.mrf.mxu0
  %v524 = vadd.f32 0.0, %v523
  %v525 = vpop.f32.mrf.mxu0
  %v526 = vadd.f32 0.0, %v525
  %v527 = vpop.f32.mrf.mxu0
  %v528 = vadd.f32 0.0, %v527
  %v529 = vpop.f32.mrf.mxu0
  %v530 = vadd.f32 0.0, %v529
  %531 = vmatprep.mubr.bf16.mxu0 0
  %532 = vmatmul.mubr.bf16.gmra.mxu0 %v247
  %v533 = vpop.f32.mrf.mxu0
  %v534 = vadd.f32 0.0, %v533
  %v535 = vpop.f32.mrf.mxu0
  %v536 = vadd.f32 0.0, %v535
  %v537 = vpop.f32.mrf.mxu0
  %v538 = vadd.f32 0.0, %v537
  %v539 = vpop.f32.mrf.mxu0
  %v540 = vadd.f32 0.0, %v539
  %541 = vmatprep.mubr.bf16.mxu0 0
  %542 = vmatmul.mubr.bf16.gmra.mxu0 %v248
  %v543 = vpop.f32.mrf.mxu0
  %v544 = vadd.f32 0.0, %v543
  %v545 = vpop.f32.mrf.mxu0
  %v546 = vadd.f32 0.0, %v545
  %v547 = vpop.f32.mrf.mxu0
  %v548 = vadd.f32 0.0, %v547
  %v549 = vpop.f32.mrf.mxu0
  %v550 = vadd.f32 0.0, %v549
  %551 = vmatprep.mubr.bf16.mxu0 0
  %552 = vmatmul.mubr.bf16.gmra.mxu0 %v249
  %v553 = vpop.f32.mrf.mxu0
  %v554 = vadd.f32 0.0, %v553
  %v555 = vpop.f32.mrf.mxu0
  %v556 = vadd.f32 0.0, %v555
  %v557 = vpop.f32.mrf.mxu0
  %v558 = vadd.f32 0.0, %v557
  %v559 = vpop.f32.mrf.mxu0
  %v560 = vadd.f32 0.0, %v559
  %561 = vmatprep.mubr.bf16.mxu0 0
  %562 = vmatmul.mubr.bf16.gmra.mxu0 %v250
  %v563 = vpop.f32.mrf.mxu0
  %v564 = vadd.f32 0.0, %v563
  %v565 = vpop.f32.mrf.mxu0
  %v566 = vadd.f32 0.0, %v565
  %v567 = vpop.f32.mrf.mxu0
  %v568 = vadd.f32 0.0, %v567
  %v569 = vpop.f32.mrf.mxu0
  %v570 = vadd.f32 0.0, %v569
  %571 = vmatprep.mubr.bf16.mxu0 0
  %572 = vmatmul.mubr.bf16.gmra.mxu0 %v251
  %v573 = vpop.f32.mrf.mxu0
  %v574 = vadd.f32 0.0, %v573
  %v575 = vpop.f32.mrf.mxu0
  %v576 = vadd.f32 0.0, %v575
  %v577 = vpop.f32.mrf.mxu0
  %v578 = vadd.f32 0.0, %v577
  %v579 = vpop.f32.mrf.mxu0
  %v580 = vadd.f32 0.0, %v579
  %581 = vmatprep.mubr.bf16.mxu0 0
  %582 = vmatmul.mubr.bf16.gmra.mxu0 %v252
  %v583 = vpop.f32.mrf.mxu0
  %v584 = vadd.f32 0.0, %v583
  %v585 = vpop.f32.mrf.mxu0
  %v586 = vadd.f32 0.0, %v585
  %v587 = vpop.f32.mrf.mxu0
  %v588 = vadd.f32 0.0, %v587
  %v589 = vpop.f32.mrf.mxu0
  %v590 = vadd.f32 0.0, %v589
  %591 = vmatprep.mubr.bf16.mxu0 0
  %592 = vmatmul.mubr.bf16.gmra.mxu0 %v253
  %v593 = vpop.f32.mrf.mxu0
  %v594 = vadd.f32 0.0, %v593
  %v595 = vpop.f32.mrf.mxu0
  %v596 = vadd.f32 0.0, %v595
  %v597 = vpop.f32.mrf.mxu0
  %v598 = vadd.f32 0.0, %v597
  %v599 = vpop.f32.mrf.mxu0
  %v600 = vadd.f32 0.0, %v599
  %601 = vmatprep.mubr.bf16.mxu0 0
  %602 = vmatmul.mubr.bf16.gmra.mxu0 %v254
  %v603 = vpop.f32.mrf.mxu0
  %v604 = vadd.f32 0.0, %v603
  %v605 = vpop.f32.mrf.mxu0
  %v606 = vadd.f32 0.0, %v605
  %v607 = vpop.f32.mrf.mxu0
  %v608 = vadd.f32 0.0, %v607
  %v609 = vpop.f32.mrf.mxu0
  %v610 = vadd.f32 0.0, %v609
  %611 = vmatprep.mubr.bf16.mxu0 0
  %612 = vmatmul.mubr.bf16.gmra.mxu0 %v255
  %v613 = vpop.f32.mrf.mxu0
  %v614 = vadd.f32 0.0, %v613
  %v615 = vpop.f32.mrf.mxu0
  %v616 = vadd.f32 0.0, %v615
  %v617 = vpop.f32.mrf.mxu0
  %v618 = vadd.f32 0.0, %v617
  %v619 = vpop.f32.mrf.mxu0
  %v620 = vadd.f32 0.0, %v619
  %621 = vmatprep.mubr.bf16.mxu0 0
  %622 = vmatmul.mubr.bf16.gmra.mxu0 %v256
  %v623 = vpop.f32.mrf.mxu0
  %v624 = vadd.f32 0.0, %v623
  %v625 = vpop.f32.mrf.mxu0
  %v626 = vadd.f32 0.0, %v625
  %v627 = vpop.f32.mrf.mxu0
  %v628 = vadd.f32 0.0, %v627
  %v629 = vpop.f32.mrf.mxu0
  %v630 = vadd.f32 0.0, %v629
  %631 = vmatprep.mubr.bf16.mxu0 0
  %632 = vmatmul.mubr.bf16.gmra.mxu0 %v257
  %v633 = vpop.f32.mrf.mxu0
  %v634 = vadd.f32 0.0, %v633
  %v635 = vpop.f32.mrf.mxu0
  %v636 = vadd.f32 0.0, %v635
  %v637 = vpop.f32.mrf.mxu0
  %v638 = vadd.f32 0.0, %v637
  %v639 = vpop.f32.mrf.mxu0
  %v640 = vadd.f32 0.0, %v639
  %641 = vmatprep.mubr.bf16.mxu0 0
  %642 = vmatmul.mubr.bf16.gmra.mxu0 %v258
  %v643 = vpop.f32.mrf.mxu0
  %v644 = vadd.f32 0.0, %v643
  %v645 = vpop.f32.mrf.mxu0
  %v646 = vadd.f32 0.0, %v645
  %v647 = vpop.f32.mrf.mxu0
  %v648 = vadd.f32 0.0, %v647
  %v649 = vpop.f32.mrf.mxu0
  %v650 = vadd.f32 0.0, %v649
  %651 = vmatprep.mubr.bf16.mxu0 0
  %652 = vmatmul.mubr.bf16.gmra.mxu0 %v259
  %v653 = vpop.f32.mrf.mxu0
  %v654 = vadd.f32 0.0, %v653
  %v655 = vpop.f32.mrf.mxu0
  %v656 = vadd.f32 0.0, %v655
  %v657 = vpop.f32.mrf.mxu0
  %v658 = vadd.f32 0.0, %v657
  %v659 = vpop.f32.mrf.mxu0
  %v660 = vadd.f32 0.0, %v659
  %661 = vmatprep.mubr.bf16.mxu0 0
  %662 = vmatmul.mubr.bf16.gmra.mxu0 %v260
  %v663 = vpop.f32.mrf.mxu0
  %v664 = vadd.f32 0.0, %v663
  %v665 = vpop.f32.mrf.mxu0
  %v666 = vadd.f32 0.0, %v665
  %v667 = vpop.f32.mrf.mxu0
  %v668 = vadd.f32 0.0, %v667
  %v669 = vpop.f32.mrf.mxu0
  %v670 = vadd.f32 0.0, %v669
  %671 = vmatprep.mubr.bf16.mxu0 0
  %672 = vmatmul.mubr.bf16.gmra.mxu0 %v261
  %v673 = vpop.f32.mrf.mxu0
  %v674 = vadd.f32 0.0, %v673
  %v675 = vpop.f32.mrf.mxu0
  %v676 = vadd.f32 0.0, %v675
  %v677 = vpop.f32.mrf.mxu0
  %v678 = vadd.f32 0.0, %v677
  %v679 = vpop.f32.mrf.mxu0
  %v680 = vadd.f32 0.0, %v679
  %681 = vmatprep.mubr.bf16.mxu0 0
  %682 = vmatmul.mubr.bf16.gmra.mxu0 %v262
  %v683 = vpop.f32.mrf.mxu0
  %v684 = vadd.f32 0.0, %v683
  %v685 = vpop.f32.mrf.mxu0
  %v686 = vadd.f32 0.0, %v685
  %v687 = vpop.f32.mrf.mxu0
  %v688 = vadd.f32 0.0, %v687
  %v689 = vpop.f32.mrf.mxu0
  %v690 = vadd.f32 0.0, %v689
  %691 = vmatprep.mubr.bf16.mxu0 0
  %692 = vmatmul.mubr.bf16.gmra.mxu0 %v263
  %v693 = vpop.f32.mrf.mxu0
  %v694 = vadd.f32 0.0, %v693
  %v695 = vpop.f32.mrf.mxu0
  %v696 = vadd.f32 0.0, %v695
  %v697 = vpop.f32.mrf.mxu0
  %v698 = vadd.f32 0.0, %v697
  %v699 = vpop.f32.mrf.mxu0
  %v700 = vadd.f32 0.0, %v699
  %701 = vmatprep.mubr.bf16.mxu0 0
  %702 = vmatmul.mubr.bf16.gmra.mxu0 %v264
  %v703 = vpop.f32.mrf.mxu0
  %v704 = vadd.f32 0.0, %v703
  %v705 = vpop.f32.mrf.mxu0
  %v706 = vadd.f32 0.0, %v705
  %v707 = vpop.f32.mrf.mxu0
  %v708 = vadd.f32 0.0, %v707
  %v709 = vpop.f32.mrf.mxu0
  %v710 = vadd.f32 0.0, %v709
  %711 = vmatprep.mubr.bf16.mxu0 0
  %712 = vmatmul.mubr.bf16.gmra.mxu0 %v265
  %v713 = vpop.f32.mrf.mxu0
  %v714 = vadd.f32 0.0, %v713
  %v715 = vpop.f32.mrf.mxu0
  %v716 = vadd.f32 0.0, %v715
  %v717 = vpop.f32.mrf.mxu0
  %v718 = vadd.f32 0.0, %v717
  %v719 = vpop.f32.mrf.mxu0
  %v720 = vadd.f32 0.0, %v719
  %721 = vmatprep.mubr.bf16.mxu0 0
  %722 = vmatmul.mubr.bf16.gmra.mxu0 %v266
  %v723 = vpop.f32.mrf.mxu0
  %v724 = vadd.f32 0.0, %v723
  %v725 = vpop.f32.mrf.mxu0
  %v726 = vadd.f32 0.0, %v725
  %v727 = vpop.f32.mrf.mxu0
  %v728 = vadd.f32 0.0, %v727
  %v729 = vpop.f32.mrf.mxu0
  %v730 = vadd.f32 0.0, %v729
  %731 = vdwg.mxu0
  %v732 = vld [vmem:[%s2] sm:$0x3]
  %v733 = vld [vmem:[%s3] sm:$0x3]
  %v734 = vadd.f32 %v414, %v418
  %v735 = vadd.f32 %v734, %v424
  %v736 = vadd.f32 %v735, %v428
  %v737 = vadd.f32 %v736, %v434
  %v738 = vadd.f32 %v737, %v438
  %v739 = vadd.f32 %v738, %v444
  %v740 = vadd.f32 %v739, %v448
  %v741 = vadd.f32 %v740, %v454
  %v742 = vadd.f32 %v741, %v458
  %v743 = vadd.f32 %v742, %v464
  %v744 = vadd.f32 %v743, %v468
  %v745 = vadd.f32 %v744, %v474
  %v746 = vadd.f32 %v745, %v478
  %v747 = vadd.f32 %v746, %v484
  %v748 = vadd.f32 %v747, %v488
  %v749 = vadd.f32 %v748, %v494
  %v750 = vadd.f32 %v749, %v498
  %v751 = vadd.f32 %v750, %v504
  %v752 = vadd.f32 %v751, %v508
  %v753 = vadd.f32 %v752, %v514
  %v754 = vadd.f32 %v753, %v518
  %v755 = vadd.f32 %v754, %v524
  %v756 = vadd.f32 %v755, %v528
  %v757 = vadd.f32 %v756, %v534
  %v758 = vadd.f32 %v757, %v538
  %v759 = vadd.f32 %v758, %v544
  %v760 = vadd.f32 %v759, %v548
  %v761 = vadd.f32 %v760, %v554
  %v762 = vadd.f32 %v761, %v558
  %v763 = vadd.f32 %v762, %v564
  %v764 = vadd.f32 %v763, %v568
  %v765 = vadd.f32 %v764, %v574
  %v766 = vadd.f32 %v765, %v578
  %v767 = vadd.f32 %v766, %v584
  %v768 = vadd.f32 %v767, %v588
  %v769 = vadd.f32 %v768, %v594
  %v770 = vadd.f32 %v769, %v598
  %v771 = vadd.f32 %v770, %v604
  %v772 = vadd.f32 %v771, %v608
  %v773 = vadd.f32 %v772, %v614
  %v774 = vadd.f32 %v773, %v618
  %v775 = vadd.f32 %v774, %v624
  %v776 = vadd.f32 %v775, %v628
  %v777 = vadd.f32 %v776, %v634
  %v778 = vadd.f32 %v777, %v638
  %v779 = vadd.f32 %v778, %v644
  %v780 = vadd.f32 %v779, %v648
  %v781 = vadd.f32 %v780, %v654
  %v782 = vadd.f32 %v781, %v658
  %v783 = vadd.f32 %v782, %v664
  %v784 = vadd.f32 %v783, %v668
  %v785 = vadd.f32 %v784, %v674
  %v786 = vadd.f32 %v785, %v678
  %v787 = vadd.f32 %v786, %v684
  %v788 = vadd.f32 %v787, %v688
  %v789 = vadd.f32 %v788, %v694
  %v790 = vadd.f32 %v789, %v698
  %v791 = vadd.f32 %v790, %v704
  %v792 = vadd.f32 %v791, %v708
  %v793 = vadd.f32 %v792, %v714
  %v794 = vadd.f32 %v793, %v718
  %v795 = vadd.f32 %v794, %v724
  %v796 = vadd.f32 %v795, %v728
  %v797 = vrot.slane %v796, 4
  %v798 = vadd.f32 %v796, %v797
  %v799 = vrot.slane %v798, 2
  %v800 = vadd.f32 %v798, %v799
  %v801 = vrot.slane %v800, 1
  %v802 = vadd.f32 %v800, %v801
  %v803 = vadd.f32 %v416, %v420
  %v804 = vadd.f32 %v803, %v426
  %v805 = vadd.f32 %v804, %v430
  %v806 = vadd.f32 %v805, %v436
  %v807 = vadd.f32 %v806, %v440
  %v808 = vadd.f32 %v807, %v446
  %v809 = vadd.f32 %v808, %v450
  %v810 = vadd.f32 %v809, %v456
  %v811 = vadd.f32 %v810, %v460
  %v812 = vadd.f32 %v811, %v466
  %v813 = vadd.f32 %v812, %v470
  %v814 = vadd.f32 %v813, %v476
  %v815 = vadd.f32 %v814, %v480
  %v816 = vadd.f32 %v815, %v486
  %v817 = vadd.f32 %v816, %v490
  %v818 = vadd.f32 %v817, %v496
  %v819 = vadd.f32 %v818, %v500
  %v820 = vadd.f32 %v819, %v506
  %v821 = vadd.f32 %v820, %v510
  %v822 = vadd.f32 %v821, %v516
  %v823 = vadd.f32 %v822, %v520
  %v824 = vadd.f32 %v823, %v526
  %v825 = vadd.f32 %v824, %v530
  %v826 = vadd.f32 %v825, %v536
  %v827 = vadd.f32 %v826, %v540
  %v828 = vadd.f32 %v827, %v546
  %v829 = vadd.f32 %v828, %v550
  %v830 = vadd.f32 %v829, %v556
  %v831 = vadd.f32 %v830, %v560
  %v832 = vadd.f32 %v831, %v566
  %v833 = vadd.f32 %v832, %v570
  %v834 = vadd.f32 %v833, %v576
  %v835 = vadd.f32 %v834, %v580
  %v836 = vadd.f32 %v835, %v586
  %v837 = vadd.f32 %v836, %v590
  %v838 = vadd.f32 %v837, %v596
  %v839 = vadd.f32 %v838, %v600
  %v840 = vadd.f32 %v839, %v606
  %v841 = vadd.f32 %v840, %v610
  %v842 = vadd.f32 %v841, %v616
  %v843 = vadd.f32 %v842, %v620
  %v844 = vadd.f32 %v843, %v626
  %v845 = vadd.f32 %v844, %v630
  %v846 = vadd.f32 %v845, %v636
  %v847 = vadd.f32 %v846, %v640
  %v848 = vadd.f32 %v847, %v646
  %v849 = vadd.f32 %v848, %v650
  %v850 = vadd.f32 %v849, %v656
  %v851 = vadd.f32 %v850, %v660
  %v852 = vadd.f32 %v851, %v666
  %v853 = vadd.f32 %v852, %v670
  %v854 = vadd.f32 %v853, %v676
  %v855 = vadd.f32 %v854, %v680
  %v856 = vadd.f32 %v855, %v686
  %v857 = vadd.f32 %v856, %v690
  %v858 = vadd.f32 %v857, %v696
  %v859 = vadd.f32 %v858, %v700
  %v860 = vadd.f32 %v859, %v706
  %v861 = vadd.f32 %v860, %v710
  %v862 = vadd.f32 %v861, %v716
  %v863 = vadd.f32 %v862, %v720
  %v864 = vadd.f32 %v863, %v726
  %v865 = vadd.f32 %v864, %v730
  %v866 = vrot.slane %v865, 4
  %v867 = vadd.f32 %v865, %v866
  %v868 = vrot.slane %v867, 2
  %v869 = vadd.f32 %v867, %v868
  %v870 = vrot.slane %v869, 1
  %v871 = vadd.f32 %v869, %v870
  %v872 = vmul.f32 %v414, %v414
  %v873 = vmul.f32 %v416, %v416
  %v874 = vmul.f32 %v418, %v418
  %v875 = vmul.f32 %v420, %v420
  %v876 = vmul.f32 %v424, %v424
  %v877 = vmul.f32 %v426, %v426
  %v878 = vmul.f32 %v428, %v428
  %v879 = vmul.f32 %v430, %v430
  %v880 = vmul.f32 %v434, %v434
  %v881 = vmul.f32 %v436, %v436
  %v882 = vmul.f32 %v438, %v438
  %v883 = vmul.f32 %v440, %v440
  %v884 = vmul.f32 %v444, %v444
  %v885 = vmul.f32 %v446, %v446
  %v886 = vmul.f32 %v448, %v448
  %v887 = vmul.f32 %v450, %v450
  %v888 = vmul.f32 %v454, %v454
  %v889 = vmul.f32 %v456, %v456
  %v890 = vmul.f32 %v458, %v458
  %v891 = vmul.f32 %v460, %v460
  %v892 = vmul.f32 %v464, %v464
  %v893 = vmul.f32 %v466, %v466
  %v894 = vmul.f32 %v468, %v468
  %v895 = vmul.f32 %v470, %v470
  %v896 = vmul.f32 %v474, %v474
  %v897 = vmul.f32 %v476, %v476
  %v898 = vmul.f32 %v478, %v478
  %v899 = vmul.f32 %v480, %v480
  %v900 = vmul.f32 %v484, %v484
  %v901 = vmul.f32 %v486, %v486
  %v902 = vmul.f32 %v488, %v488
  %v903 = vmul.f32 %v490, %v490
  %v904 = vmul.f32 %v494, %v494
  %v905 = vmul.f32 %v496, %v496
  %v906 = vmul.f32 %v498, %v498
  %v907 = vmul.f32 %v500, %v500
  %v908 = vmul.f32 %v504, %v504
  %v909 = vmul.f32 %v506, %v506
  %v910 = vmul.f32 %v508, %v508
  %v911 = vmul.f32 %v510, %v510
  %v912 = vmul.f32 %v514, %v514
  %v913 = vmul.f32 %v516, %v516
  %v914 = vmul.f32 %v518, %v518
  %v915 = vmul.f32 %v520, %v520
  %v916 = vmul.f32 %v524, %v524
  %v917 = vmul.f32 %v526, %v526
  %v918 = vmul.f32 %v528, %v528
  %v919 = vmul.f32 %v530, %v530
  %v920 = vmul.f32 %v534, %v534
  %v921 = vmul.f32 %v536, %v536
  %v922 = vmul.f32 %v538, %v538
  %v923 = vmul.f32 %v540, %v540
  %v924 = vmul.f32 %v544, %v544
  %v925 = vmul.f32 %v546, %v546
  %v926 = vmul.f32 %v548, %v548
  %v927 = vmul.f32 %v550, %v550
  %v928 = vmul.f32 %v554, %v554
  %v929 = vmul.f32 %v556, %v556
  %v930 = vmul.f32 %v558, %v558
  %v931 = vmul.f32 %v560, %v560
  %v932 = vmul.f32 %v564, %v564
  %v933 = vmul.f32 %v566, %v566
  %v934 = vmul.f32 %v568, %v568
  %v935 = vmul.f32 %v570, %v570
  %v936 = vmul.f32 %v574, %v574
  %v937 = vmul.f32 %v576, %v576
  %v938 = vmul.f32 %v578, %v578
  %v939 = vmul.f32 %v580, %v580
  %v940 = vmul.f32 %v584, %v584
  %v941 = vmul.f32 %v586, %v586
  %v942 = vmul.f32 %v588, %v588
  %v943 = vmul.f32 %v590, %v590
  %v944 = vmul.f32 %v594, %v594
  %v945 = vmul.f32 %v596, %v596
  %v946 = vmul.f32 %v598, %v598
  %v947 = vmul.f32 %v600, %v600
  %v948 = vmul.f32 %v604, %v604
  %v949 = vmul.f32 %v606, %v606
  %v950 = vmul.f32 %v608, %v608
  %v951 = vmul.f32 %v610, %v610
  %v952 = vmul.f32 %v614, %v614
  %v953 = vmul.f32 %v616, %v616
  %v954 = vmul.f32 %v618, %v618
  %v955 = vmul.f32 %v620, %v620
  %v956 = vmul.f32 %v624, %v624
  %v957 = vmul.f32 %v626, %v626
  %v958 = vmul.f32 %v628, %v628
  %v959 = vmul.f32 %v630, %v630
  %v960 = vmul.f32 %v634, %v634
  %v961 = vmul.f32 %v636, %v636
  %v962 = vmul.f32 %v638, %v638
  %v963 = vmul.f32 %v640, %v640
  %v964 = vmul.f32 %v644, %v644
  %v965 = vmul.f32 %v646, %v646
  %v966 = vmul.f32 %v648, %v648
  %v967 = vmul.f32 %v650, %v650
  %v968 = vmul.f32 %v654, %v654
  %v969 = vmul.f32 %v656, %v656
  %v970 = vmul.f32 %v658, %v658
  %v971 = vmul.f32 %v660, %v660
  %v972 = vmul.f32 %v664, %v664
  %v973 = vmul.f32 %v666, %v666
  %v974 = vmul.f32 %v668, %v668
  %v975 = vmul.f32 %v670, %v670
  %v976 = vmul.f32 %v674, %v674
  %v977 = vmul.f32 %v676, %v676
  %v978 = vmul.f32 %v678, %v678
  %v979 = vmul.f32 %v680, %v680
  %v980 = vmul.f32 %v684, %v684
  %v981 = vmul.f32 %v686, %v686
  %v982 = vmul.f32 %v688, %v688
  %v983 = vmul.f32 %v690, %v690
  %v984 = vmul.f32 %v694, %v694
  %v985 = vmul.f32 %v696, %v696
  %v986 = vmul.f32 %v698, %v698
  %v987 = vmul.f32 %v700, %v700
  %v988 = vmul.f32 %v704, %v704
  %v989 = vmul.f32 %v706, %v706
  %v990 = vmul.f32 %v708, %v708
  %v991 = vmul.f32 %v710, %v710
  %v992 = vmul.f32 %v714, %v714
  %v993 = vmul.f32 %v716, %v716
  %v994 = vmul.f32 %v718, %v718
  %v995 = vmul.f32 %v720, %v720
  %v996 = vmul.f32 %v724, %v724
  %v997 = vmul.f32 %v726, %v726
  %v998 = vmul.f32 %v728, %v728
  %v999 = vmul.f32 %v730, %v730
  %v1000 = vadd.f32 %v872, %v874
  %v1001 = vadd.f32 %v1000, %v876
  %v1002 = vadd.f32 %v1001, %v878
  %v1003 = vadd.f32 %v1002, %v880
  %v1004 = vadd.f32 %v1003, %v882
  %v1005 = vadd.f32 %v1004, %v884
  %v1006 = vadd.f32 %v1005, %v886
  %v1007 = vadd.f32 %v1006, %v888
  %v1008 = vadd.f32 %v1007, %v890
  %v1009 = vadd.f32 %v1008, %v892
  %v1010 = vadd.f32 %v1009, %v894
  %v1011 = vadd.f32 %v1010, %v896
  %v1012 = vadd.f32 %v1011, %v898
  %v1013 = vadd.f32 %v1012, %v900
  %v1014 = vadd.f32 %v1013, %v902
  %v1015 = vadd.f32 %v1014, %v904
  %v1016 = vadd.f32 %v1015, %v906
  %v1017 = vadd.f32 %v1016, %v908
  %v1018 = vadd.f32 %v1017, %v910
  %v1019 = vadd.f32 %v1018, %v912
  %v1020 = vadd.f32 %v1019, %v914
  %v1021 = vadd.f32 %v1020, %v916
  %v1022 = vadd.f32 %v1021, %v918
  %v1023 = vadd.f32 %v1022, %v920
  %v1024 = vadd.f32 %v1023, %v922
  %v1025 = vadd.f32 %v1024, %v924
  %v1026 = vadd.f32 %v1025, %v926
  %v1027 = vadd.f32 %v1026, %v928
  %v1028 = vadd.f32 %v1027, %v930
  %v1029 = vadd.f32 %v1028, %v932
  %v1030 = vadd.f32 %v1029, %v934
  %v1031 = vadd.f32 %v1030, %v936
  %v1032 = vadd.f32 %v1031, %v938
  %v1033 = vadd.f32 %v1032, %v940
  %v1034 = vadd.f32 %v1033, %v942
  %v1035 = vadd.f32 %v1034, %v944
  %v1036 = vadd.f32 %v1035, %v946
  %v1037 = vadd.f32 %v1036, %v948
  %v1038 = vadd.f32 %v1037, %v950
  %v1039 = vadd.f32 %v1038, %v952
  %v1040 = vadd.f32 %v1039, %v954
  %v1041 = vadd.f32 %v1040, %v956
  %v1042 = vadd.f32 %v1041, %v958
  %v1043 = vadd.f32 %v1042, %v960
  %v1044 = vadd.f32 %v1043, %v962
  %v1045 = vadd.f32 %v1044, %v964
  %v1046 = vadd.f32 %v1045, %v966
  %v1047 = vadd.f32 %v1046, %v968
  %v1048 = vadd.f32 %v1047, %v970
  %v1049 = vadd.f32 %v1048, %v972
  %v1050 = vadd.f32 %v1049, %v974
  %v1051 = vadd.f32 %v1050, %v976
  %v1052 = vadd.f32 %v1051, %v978
  %v1053 = vadd.f32 %v1052, %v980
  %v1054 = vadd.f32 %v1053, %v982
  %v1055 = vadd.f32 %v1054, %v984
  %v1056 = vadd.f32 %v1055, %v986
  %v1057 = vadd.f32 %v1056, %v988
  %v1058 = vadd.f32 %v1057, %v990
  %v1059 = vadd.f32 %v1058, %v992
  %v1060 = vadd.f32 %v1059, %v994
  %v1061 = vadd.f32 %v1060, %v996
  %v1062 = vadd.f32 %v1061, %v998
  %v1063 = vrot.slane %v1062, 4
  %v1064 = vadd.f32 %v1062, %v1063
  %v1065 = vrot.slane %v1064, 2
  %v1066 = vadd.f32 %v1064, %v1065
  %v1067 = vrot.slane %v1066, 1
  %v1068 = vadd.f32 %v1066, %v1067
  %v1069 = vadd.f32 %v873, %v875
  %v1070 = vadd.f32 %v1069, %v877
  %v1071 = vadd.f32 %v1070, %v879
  %v1072 = vadd.f32 %v1071, %v881
  %v1073 = vadd.f32 %v1072, %v883
  %v1074 = vadd.f32 %v1073, %v885
  %v1075 = vadd.f32 %v1074, %v887
  %v1076 = vadd.f32 %v1075, %v889
  %v1077 = vadd.f32 %v1076, %v891
  %v1078 = vadd.f32 %v1077, %v893
  %v1079 = vadd.f32 %v1078, %v895
  %v1080 = vadd.f32 %v1079, %v897
  %v1081 = vadd.f32 %v1080, %v899
  %v1082 = vadd.f32 %v1081, %v901
  %v1083 = vadd.f32 %v1082, %v903
  %v1084 = vadd.f32 %v1083, %v905
  %v1085 = vadd.f32 %v1084, %v907
  %v1086 = vadd.f32 %v1085, %v909
  %v1087 = vadd.f32 %v1086, %v911
  %v1088 = vadd.f32 %v1087, %v913
  %v1089 = vadd.f32 %v1088, %v915
  %v1090 = vadd.f32 %v1089, %v917
  %v1091 = vadd.f32 %v1090, %v919
  %v1092 = vadd.f32 %v1091, %v921
  %v1093 = vadd.f32 %v1092, %v923
  %v1094 = vadd.f32 %v1093, %v925
  %v1095 = vadd.f32 %v1094, %v927
  %v1096 = vadd.f32 %v1095, %v929
  %v1097 = vadd.f32 %v1096, %v931
  %v1098 = vadd.f32 %v1097, %v933
  %v1099 = vadd.f32 %v1098, %v935
  %v1100 = vadd.f32 %v1099, %v937
  %v1101 = vadd.f32 %v1100, %v939
  %v1102 = vadd.f32 %v1101, %v941
  %v1103 = vadd.f32 %v1102, %v943
  %v1104 = vadd.f32 %v1103, %v945
  %v1105 = vadd.f32 %v1104, %v947
  %v1106 = vadd.f32 %v1105, %v949
  %v1107 = vadd.f32 %v1106, %v951
  %v1108 = vadd.f32 %v1107, %v953
  %v1109 = vadd.f32 %v1108, %v955
  %v1110 = vadd.f32 %v1109, %v957
  %v1111 = vadd.f32 %v1110, %v959
  %v1112 = vadd.f32 %v1111, %v961
  %v1113 = vadd.f32 %v1112, %v963
  %v1114 = vadd.f32 %v1113, %v965
  %v1115 = vadd.f32 %v1114, %v967
  %v1116 = vadd.f32 %v1115, %v969
  %v1117 = vadd.f32 %v1116, %v971
  %v1118 = vadd.f32 %v1117, %v973
  %v1119 = vadd.f32 %v1118, %v975
  %v1120 = vadd.f32 %v1119, %v977
  %v1121 = vadd.f32 %v1120, %v979
  %v1122 = vadd.f32 %v1121, %v981
  %v1123 = vadd.f32 %v1122, %v983
  %v1124 = vadd.f32 %v1123, %v985
  %v1125 = vadd.f32 %v1124, %v987
  %v1126 = vadd.f32 %v1125, %v989
  %v1127 = vadd.f32 %v1126, %v991
  %v1128 = vadd.f32 %v1127, %v993
  %v1129 = vadd.f32 %v1128, %v995
  %v1130 = vadd.f32 %v1129, %v997
  %v1131 = vadd.f32 %v1130, %v999
  %v1132 = vrot.slane %v1131, 4
  %v1133 = vadd.f32 %v1131, %v1132
  %v1134 = vrot.slane %v1133, 2
  %v1135 = vadd.f32 %v1133, %v1134
  %v1136 = vrot.slane %v1135, 1
  %v1137 = vadd.f32 %v1135, %v1136
  %v1138 = vmul.f32 %v802, 0.001953125
  %v1139 = vmul.f32 %v871, 0.001953125
  %v1140 = vmul.f32 %v1068, 0.001953125
  %v1141 = vmul.f32 %v1137, 0.001953125
  %v1142 = vmul.f32 %v1138, %v1138
  %v1143 = vmul.f32 %v1139, %v1139
  %v1144 = vsub.f32 %v1140, %v1142
  %v1145 = vsub.f32 %v1141, %v1143
  %v1146 = vsub.f32 %v414, %v1138
  %v1147 = vsub.f32 %v416, %v1139
  %v1148 = vsub.f32 %v418, %v1138
  %v1149 = vsub.f32 %v420, %v1139
  %v1150 = vsub.f32 %v424, %v1138
  %v1151 = vsub.f32 %v426, %v1139
  %v1152 = vsub.f32 %v428, %v1138
  %v1153 = vsub.f32 %v430, %v1139
  %v1154 = vsub.f32 %v434, %v1138
  %v1155 = vsub.f32 %v436, %v1139
  %v1156 = vsub.f32 %v438, %v1138
  %v1157 = vsub.f32 %v440, %v1139
  %v1158 = vsub.f32 %v444, %v1138
  %v1159 = vsub.f32 %v446, %v1139
  %v1160 = vsub.f32 %v448, %v1138
  %v1161 = vsub.f32 %v450, %v1139
  %v1162 = vsub.f32 %v454, %v1138
  %v1163 = vsub.f32 %v456, %v1139
  %v1164 = vsub.f32 %v458, %v1138
  %v1165 = vsub.f32 %v460, %v1139
  %v1166 = vsub.f32 %v464, %v1138
  %v1167 = vsub.f32 %v466, %v1139
  %v1168 = vsub.f32 %v468, %v1138
  %v1169 = vsub.f32 %v470, %v1139
  %v1170 = vsub.f32 %v474, %v1138
  %v1171 = vsub.f32 %v476, %v1139
  %v1172 = vsub.f32 %v478, %v1138
  %v1173 = vsub.f32 %v480, %v1139
  %v1174 = vsub.f32 %v484, %v1138
  %v1175 = vsub.f32 %v486, %v1139
  %v1176 = vsub.f32 %v488, %v1138
  %v1177 = vsub.f32 %v490, %v1139
  %v1178 = vsub.f32 %v494, %v1138
  %v1179 = vsub.f32 %v496, %v1139
  %v1180 = vsub.f32 %v498, %v1138
  %v1181 = vsub.f32 %v500, %v1139
  %v1182 = vsub.f32 %v504, %v1138
  %v1183 = vsub.f32 %v506, %v1139
  %v1184 = vsub.f32 %v508, %v1138
  %v1185 = vsub.f32 %v510, %v1139
  %v1186 = vsub.f32 %v514, %v1138
  %v1187 = vsub.f32 %v516, %v1139
  %v1188 = vsub.f32 %v518, %v1138
  %v1189 = vsub.f32 %v520, %v1139
  %v1190 = vsub.f32 %v524, %v1138
  %v1191 = vsub.f32 %v526, %v1139
  %v1192 = vsub.f32 %v528, %v1138
  %v1193 = vsub.f32 %v530, %v1139
  %v1194 = vsub.f32 %v534, %v1138
  %v1195 = vsub.f32 %v536, %v1139
  %v1196 = vsub.f32 %v538, %v1138
  %v1197 = vsub.f32 %v540, %v1139
  %v1198 = vsub.f32 %v544, %v1138
  %v1199 = vsub.f32 %v546, %v1139
  %v1200 = vsub.f32 %v548, %v1138
  %v1201 = vsub.f32 %v550, %v1139
  %v1202 = vsub.f32 %v554, %v1138
  %v1203 = vsub.f32 %v556, %v1139
  %v1204 = vsub.f32 %v558, %v1138
  %v1205 = vsub.f32 %v560, %v1139
  %v1206 = vsub.f32 %v564, %v1138
  %v1207 = vsub.f32 %v566, %v1139
  %v1208 = vsub.f32 %v568, %v1138
  %v1209 = vsub.f32 %v570, %v1139
  %v1210 = vsub.f32 %v574, %v1138
  %v1211 = vsub.f32 %v576, %v1139
  %v1212 = vsub.f32 %v578, %v1138
  %v1213 = vsub.f32 %v580, %v1139
  %v1214 = vsub.f32 %v584, %v1138
  %v1215 = vsub.f32 %v586, %v1139
  %v1216 = vsub.f32 %v588, %v1138
  %v1217 = vsub.f32 %v590, %v1139
  %v1218 = vsub.f32 %v594, %v1138
  %v1219 = vsub.f32 %v596, %v1139
  %v1220 = vsub.f32 %v598, %v1138
  %v1221 = vsub.f32 %v600, %v1139
  %v1222 = vsub.f32 %v604, %v1138
  %v1223 = vsub.f32 %v606, %v1139
  %v1224 = vsub.f32 %v608, %v1138
  %v1225 = vsub.f32 %v610, %v1139
  %v1226 = vsub.f32 %v614, %v1138
  %v1227 = vsub.f32 %v616, %v1139
  %v1228 = vsub.f32 %v618, %v1138
  %v1229 = vsub.f32 %v620, %v1139
  %v1230 = vsub.f32 %v624, %v1138
  %v1231 = vsub.f32 %v626, %v1139
  %v1232 = vsub.f32 %v628, %v1138
  %v1233 = vsub.f32 %v630, %v1139
  %v1234 = vsub.f32 %v634, %v1138
  %v1235 = vsub.f32 %v636, %v1139
  %v1236 = vsub.f32 %v638, %v1138
  %v1237 = vsub.f32 %v640, %v1139
  %v1238 = vsub.f32 %v644, %v1138
  %v1239 = vsub.f32 %v646, %v1139
  %v1240 = vsub.f32 %v648, %v1138
  %v1241 = vsub.f32 %v650, %v1139
  %v1242 = vsub.f32 %v654, %v1138
  %v1243 = vsub.f32 %v656, %v1139
  %v1244 = vsub.f32 %v658, %v1138
  %v1245 = vsub.f32 %v660, %v1139
  %v1246 = vsub.f32 %v664, %v1138
  %v1247 = vsub.f32 %v666, %v1139
  %v1248 = vsub.f32 %v668, %v1138
  %v1249 = vsub.f32 %v670, %v1139
  %v1250 = vsub.f32 %v674, %v1138
  %v1251 = vsub.f32 %v676, %v1139
  %v1252 = vsub.f32 %v678, %v1138
  %v1253 = vsub.f32 %v680, %v1139
  %v1254 = vsub.f32 %v684, %v1138
  %v1255 = vsub.f32 %v686, %v1139
  %v1256 = vsub.f32 %v688, %v1138
  %v1257 = vsub.f32 %v690, %v1139
  %v1258 = vsub.f32 %v694, %v1138
  %v1259 = vsub.f32 %v696, %v1139
  %v1260 = vsub.f32 %v698, %v1138
  %v1261 = vsub.f32 %v700, %v1139
  %v1262 = vsub.f32 %v704, %v1138
  %v1263 = vsub.f32 %v706, %v1139
  %v1264 = vsub.f32 %v708, %v1138
  %v1265 = vsub.f32 %v710, %v1139
  %v1266 = vsub.f32 %v714, %v1138
  %v1267 = vsub.f32 %v716, %v1139
  %v1268 = vsub.f32 %v718, %v1138
  %v1269 = vsub.f32 %v720, %v1139
  %v1270 = vsub.f32 %v724, %v1138
  %v1271 = vsub.f32 %v726, %v1139
  %v1272 = vsub.f32 %v728, %v1138
  %v1273 = vsub.f32 %v730, %v1139
  %v1274 = vadd.f32 %v1144, 1e-05
  %v1275 = vadd.f32 %v1145, 1e-05
  %v1276 = vrsqrt.pop %v1274
  %v1277 = vrsqrt.pop %v1275
  %v1278 = vmul.f32 %v1146, %v1276
  %v1279 = vmul.f32 %v1147, %v1277
  %v1280 = vmul.f32 %v1148, %v1276
  %v1281 = vmul.f32 %v1149, %v1277
  %v1282 = vmul.f32 %v1150, %v1276
  %v1283 = vmul.f32 %v1151, %v1277
  %v1284 = vmul.f32 %v1152, %v1276
  %v1285 = vmul.f32 %v1153, %v1277
  %v1286 = vmul.f32 %v1154, %v1276
  %v1287 = vmul.f32 %v1155, %v1277
  %v1288 = vmul.f32 %v1156, %v1276
  %v1289 = vmul.f32 %v1157, %v1277
  %v1290 = vmul.f32 %v1158, %v1276
  %v1291 = vmul.f32 %v1159, %v1277
  %v1292 = vmul.f32 %v1160, %v1276
  %v1293 = vmul.f32 %v1161, %v1277
  %v1294 = vmul.f32 %v1162, %v1276
  %v1295 = vmul.f32 %v1163, %v1277
  %v1296 = vmul.f32 %v1164, %v1276
  %v1297 = vmul.f32 %v1165, %v1277
  %v1298 = vmul.f32 %v1166, %v1276
  %v1299 = vmul.f32 %v1167, %v1277
  %v1300 = vmul.f32 %v1168, %v1276
  %v1301 = vmul.f32 %v1169, %v1277
  %v1302 = vmul.f32 %v1170, %v1276
  %v1303 = vmul.f32 %v1171, %v1277
  %v1304 = vmul.f32 %v1172, %v1276
  %v1305 = vmul.f32 %v1173, %v1277
  %v1306 = vmul.f32 %v1174, %v1276
  %v1307 = vmul.f32 %v1175, %v1277
  %v1308 = vmul.f32 %v1176, %v1276
  %v1309 = vmul.f32 %v1177, %v1277
  %v1310 = vmul.f32 %v1178, %v1276
  %v1311 = vmul.f32 %v1179, %v1277
  %v1312 = vmul.f32 %v1180, %v1276
  %v1313 = vmul.f32 %v1181, %v1277
  %v1314 = vmul.f32 %v1182, %v1276
  %v1315 = vmul.f32 %v1183, %v1277
  %v1316 = vmul.f32 %v1184, %v1276
  %v1317 = vmul.f32 %v1185, %v1277
  %v1318 = vmul.f32 %v1186, %v1276
  %v1319 = vmul.f32 %v1187, %v1277
  %v1320 = vmul.f32 %v1188, %v1276
  %v1321 = vmul.f32 %v1189, %v1277
  %v1322 = vmul.f32 %v1190, %v1276
  %v1323 = vmul.f32 %v1191, %v1277
  %v1324 = vmul.f32 %v1192, %v1276
  %v1325 = vmul.f32 %v1193, %v1277
  %v1326 = vmul.f32 %v1194, %v1276
  %v1327 = vmul.f32 %v1195, %v1277
  %v1328 = vmul.f32 %v1196, %v1276
  %v1329 = vmul.f32 %v1197, %v1277
  %v1330 = vmul.f32 %v1198, %v1276
  %v1331 = vmul.f32 %v1199, %v1277
  %v1332 = vmul.f32 %v1200, %v1276
  %v1333 = vmul.f32 %v1201, %v1277
  %v1334 = vmul.f32 %v1202, %v1276
  %v1335 = vmul.f32 %v1203, %v1277
  %v1336 = vmul.f32 %v1204, %v1276
  %v1337 = vmul.f32 %v1205, %v1277
  %v1338 = vmul.f32 %v1206, %v1276
  %v1339 = vmul.f32 %v1207, %v1277
  %v1340 = vmul.f32 %v1208, %v1276
  %v1341 = vmul.f32 %v1209, %v1277
  %v1342 = vmul.f32 %v1210, %v1276
  %v1343 = vmul.f32 %v1211, %v1277
  %v1344 = vmul.f32 %v1212, %v1276
  %v1345 = vmul.f32 %v1213, %v1277
  %v1346 = vmul.f32 %v1214, %v1276
  %v1347 = vmul.f32 %v1215, %v1277
  %v1348 = vmul.f32 %v1216, %v1276
  %v1349 = vmul.f32 %v1217, %v1277
  %v1350 = vmul.f32 %v1218, %v1276
  %v1351 = vmul.f32 %v1219, %v1277
  %v1352 = vmul.f32 %v1220, %v1276
  %v1353 = vmul.f32 %v1221, %v1277
  %v1354 = vmul.f32 %v1222, %v1276
  %v1355 = vmul.f32 %v1223, %v1277
  %v1356 = vmul.f32 %v1224, %v1276
  %v1357 = vmul.f32 %v1225, %v1277
  %v1358 = vmul.f32 %v1226, %v1276
  %v1359 = vmul.f32 %v1227, %v1277
  %v1360 = vmul.f32 %v1228, %v1276
  %v1361 = vmul.f32 %v1229, %v1277
  %v1362 = vmul.f32 %v1230, %v1276
  %v1363 = vmul.f32 %v1231, %v1277
  %v1364 = vmul.f32 %v1232, %v1276
  %v1365 = vmul.f32 %v1233, %v1277
  %v1366 = vmul.f32 %v1234, %v1276
  %v1367 = vmul.f32 %v1235, %v1277
  %v1368 = vmul.f32 %v1236, %v1276
  %v1369 = vmul.f32 %v1237, %v1277
  %v1370 = vmul.f32 %v1238, %v1276
  %v1371 = vmul.f32 %v1239, %v1277
  %v1372 = vmul.f32 %v1240, %v1276
  %v1373 = vmul.f32 %v1241, %v1277
  %v1374 = vmul.f32 %v1242, %v1276
  %v1375 = vmul.f32 %v1243, %v1277
  %v1376 = vmul.f32 %v1244, %v1276
  %v1377 = vmul.f32 %v1245, %v1277
  %v1378 = vmul.f32 %v1246, %v1276
  %v1379 = vmul.f32 %v1247, %v1277
  %v1380 = vmul.f32 %v1248, %v1276
  %v1381 = vmul.f32 %v1249, %v1277
  %v1382 = vmul.f32 %v1250, %v1276
  %v1383 = vmul.f32 %v1251, %v1277
  %v1384 = vmul.f32 %v1252, %v1276
  %v1385 = vmul.f32 %v1253, %v1277
  %v1386 = vmul.f32 %v1254, %v1276
  %v1387 = vmul.f32 %v1255, %v1277
  %v1388 = vmul.f32 %v1256, %v1276
  %v1389 = vmul.f32 %v1257, %v1277
  %v1390 = vmul.f32 %v1258, %v1276
  %v1391 = vmul.f32 %v1259, %v1277
  %v1392 = vmul.f32 %v1260, %v1276
  %v1393 = vmul.f32 %v1261, %v1277
  %v1394 = vmul.f32 %v1262, %v1276
  %v1395 = vmul.f32 %v1263, %v1277
  %v1396 = vmul.f32 %v1264, %v1276
  %v1397 = vmul.f32 %v1265, %v1277
  %v1398 = vmul.f32 %v1266, %v1276
  %v1399 = vmul.f32 %v1267, %v1277
  %v1400 = vmul.f32 %v1268, %v1276
  %v1401 = vmul.f32 %v1269, %v1277
  %v1402 = vmul.f32 %v1270, %v1276
  %v1403 = vmul.f32 %v1271, %v1277
  %v1404 = vmul.f32 %v1272, %v1276
  %v1405 = vmul.f32 %v1273, %v1277
  %v1407 = vlaneseq
  %v1408 = vshrl.u32 %v1407, 7
  %v1409 = vsub.s32 0, %v1408
  %v1410 = vrot.slane %v732, %v1409
  %v1411 = vlaneseq
  %v1412 = vshrl.u32 %v1411, 7
  %v1413 = vsub.s32 1, %v1412
  %v1414 = vrot.slane %v732, %v1413
  %v1417 = vmul.f32 %v1278, %v1410
  %v1418 = vmul.f32 %v1279, %v1414
  %v1419 = vmul.f32 %v1280, %v1410
  %v1420 = vmul.f32 %v1281, %v1414
  %v1421 = vmul.f32 %v1282, %v1410
  %v1422 = vmul.f32 %v1283, %v1414
  %v1423 = vmul.f32 %v1284, %v1410
  %v1424 = vmul.f32 %v1285, %v1414
  %v1425 = vmul.f32 %v1286, %v1410
  %v1426 = vmul.f32 %v1287, %v1414
  %v1427 = vmul.f32 %v1288, %v1410
  %v1428 = vmul.f32 %v1289, %v1414
  %v1429 = vmul.f32 %v1290, %v1410
  %v1430 = vmul.f32 %v1291, %v1414
  %v1431 = vmul.f32 %v1292, %v1410
  %v1432 = vmul.f32 %v1293, %v1414
  %v1433 = vmul.f32 %v1294, %v1410
  %v1434 = vmul.f32 %v1295, %v1414
  %v1435 = vmul.f32 %v1296, %v1410
  %v1436 = vmul.f32 %v1297, %v1414
  %v1437 = vmul.f32 %v1298, %v1410
  %v1438 = vmul.f32 %v1299, %v1414
  %v1439 = vmul.f32 %v1300, %v1410
  %v1440 = vmul.f32 %v1301, %v1414
  %v1441 = vmul.f32 %v1302, %v1410
  %v1442 = vmul.f32 %v1303, %v1414
  %v1443 = vmul.f32 %v1304, %v1410
  %v1444 = vmul.f32 %v1305, %v1414
  %v1445 = vmul.f32 %v1306, %v1410
  %v1446 = vmul.f32 %v1307, %v1414
  %v1447 = vmul.f32 %v1308, %v1410
  %v1448 = vmul.f32 %v1309, %v1414
  %v1449 = vmul.f32 %v1310, %v1410
  %v1450 = vmul.f32 %v1311, %v1414
  %v1451 = vmul.f32 %v1312, %v1410
  %v1452 = vmul.f32 %v1313, %v1414
  %v1453 = vmul.f32 %v1314, %v1410
  %v1454 = vmul.f32 %v1315, %v1414
  %v1455 = vmul.f32 %v1316, %v1410
  %v1456 = vmul.f32 %v1317, %v1414
  %v1457 = vmul.f32 %v1318, %v1410
  %v1458 = vmul.f32 %v1319, %v1414
  %v1459 = vmul.f32 %v1320, %v1410
  %v1460 = vmul.f32 %v1321, %v1414
  %v1461 = vmul.f32 %v1322, %v1410
  %v1462 = vmul.f32 %v1323, %v1414
  %v1463 = vmul.f32 %v1324, %v1410
  %v1464 = vmul.f32 %v1325, %v1414
  %v1465 = vmul.f32 %v1326, %v1410
  %v1466 = vmul.f32 %v1327, %v1414
  %v1467 = vmul.f32 %v1328, %v1410
  %v1468 = vmul.f32 %v1329, %v1414
  %v1469 = vmul.f32 %v1330, %v1410
  %v1470 = vmul.f32 %v1331, %v1414
  %v1471 = vmul.f32 %v1332, %v1410
  %v1472 = vmul.f32 %v1333, %v1414
  %v1473 = vmul.f32 %v1334, %v1410
  %v1474 = vmul.f32 %v1335, %v1414
  %v1475 = vmul.f32 %v1336, %v1410
  %v1476 = vmul.f32 %v1337, %v1414
  %v1477 = vmul.f32 %v1338, %v1410
  %v1478 = vmul.f32 %v1339, %v1414
  %v1479 = vmul.f32 %v1340, %v1410
  %v1480 = vmul.f32 %v1341, %v1414
  %v1481 = vmul.f32 %v1342, %v1410
  %v1482 = vmul.f32 %v1343, %v1414
  %v1483 = vmul.f32 %v1344, %v1410
  %v1484 = vmul.f32 %v1345, %v1414
  %v1485 = vmul.f32 %v1346, %v1410
  %v1486 = vmul.f32 %v1347, %v1414
  %v1487 = vmul.f32 %v1348, %v1410
  %v1488 = vmul.f32 %v1349, %v1414
  %v1489 = vmul.f32 %v1350, %v1410
  %v1490 = vmul.f32 %v1351, %v1414
  %v1491 = vmul.f32 %v1352, %v1410
  %v1492 = vmul.f32 %v1353, %v1414
  %v1493 = vmul.f32 %v1354, %v1410
  %v1494 = vmul.f32 %v1355, %v1414
  %v1495 = vmul.f32 %v1356, %v1410
  %v1496 = vmul.f32 %v1357, %v1414
  %v1497 = vmul.f32 %v1358, %v1410
  %v1498 = vmul.f32 %v1359, %v1414
  %v1499 = vmul.f32 %v1360, %v1410
  %v1500 = vmul.f32 %v1361, %v1414
  %v1501 = vmul.f32 %v1362, %v1410
  %v1502 = vmul.f32 %v1363, %v1414
  %v1503 = vmul.f32 %v1364, %v1410
  %v1504 = vmul.f32 %v1365, %v1414
  %v1505 = vmul.f32 %v1366, %v1410
  %v1506 = vmul.f32 %v1367, %v1414
  %v1507 = vmul.f32 %v1368, %v1410
  %v1508 = vmul.f32 %v1369, %v1414
  %v1509 = vmul.f32 %v1370, %v1410
  %v1510 = vmul.f32 %v1371, %v1414
  %v1511 = vmul.f32 %v1372, %v1410
  %v1512 = vmul.f32 %v1373, %v1414
  %v1513 = vmul.f32 %v1374, %v1410
  %v1514 = vmul.f32 %v1375, %v1414
  %v1515 = vmul.f32 %v1376, %v1410
  %v1516 = vmul.f32 %v1377, %v1414
  %v1517 = vmul.f32 %v1378, %v1410
  %v1518 = vmul.f32 %v1379, %v1414
  %v1519 = vmul.f32 %v1380, %v1410
  %v1520 = vmul.f32 %v1381, %v1414
  %v1521 = vmul.f32 %v1382, %v1410
  %v1522 = vmul.f32 %v1383, %v1414
  %v1523 = vmul.f32 %v1384, %v1410
  %v1524 = vmul.f32 %v1385, %v1414
  %v1525 = vmul.f32 %v1386, %v1410
  %v1526 = vmul.f32 %v1387, %v1414
  %v1527 = vmul.f32 %v1388, %v1410
  %v1528 = vmul.f32 %v1389, %v1414
  %v1529 = vmul.f32 %v1390, %v1410
  %v1530 = vmul.f32 %v1391, %v1414
  %v1531 = vmul.f32 %v1392, %v1410
  %v1532 = vmul.f32 %v1393, %v1414
  %v1533 = vmul.f32 %v1394, %v1410
  %v1534 = vmul.f32 %v1395, %v1414
  %v1535 = vmul.f32 %v1396, %v1410
  %v1536 = vmul.f32 %v1397, %v1414
  %v1537 = vmul.f32 %v1398, %v1410
  %v1538 = vmul.f32 %v1399, %v1414
  %v1539 = vmul.f32 %v1400, %v1410
  %v1540 = vmul.f32 %v1401, %v1414
  %v1541 = vmul.f32 %v1402, %v1410
  %v1542 = vmul.f32 %v1403, %v1414
  %v1543 = vmul.f32 %v1404, %v1410
  %v1544 = vmul.f32 %v1405, %v1414
  %v1546 = vlaneseq
  %v1547 = vshrl.u32 %v1546, 7
  %v1548 = vsub.s32 0, %v1547
  %v1549 = vrot.slane %v733, %v1548
  %v1550 = vlaneseq
  %v1551 = vshrl.u32 %v1550, 7
  %v1552 = vsub.s32 1, %v1551
  %v1553 = vrot.slane %v733, %v1552
  %v1556 = vadd.f32 %v1417, %v1549
  %v1557 = vadd.f32 %v1418, %v1553
  %v1558 = vadd.f32 %v1419, %v1549
  %v1559 = vadd.f32 %v1420, %v1553
  %v1560 = vadd.f32 %v1421, %v1549
  %v1561 = vadd.f32 %v1422, %v1553
  %v1562 = vadd.f32 %v1423, %v1549
  %v1563 = vadd.f32 %v1424, %v1553
  %v1564 = vadd.f32 %v1425, %v1549
  %v1565 = vadd.f32 %v1426, %v1553
  %v1566 = vadd.f32 %v1427, %v1549
  %v1567 = vadd.f32 %v1428, %v1553
  %v1568 = vadd.f32 %v1429, %v1549
  %v1569 = vadd.f32 %v1430, %v1553
  %v1570 = vadd.f32 %v1431, %v1549
  %v1571 = vadd.f32 %v1432, %v1553
  %v1572 = vadd.f32 %v1433, %v1549
  %v1573 = vadd.f32 %v1434, %v1553
  %v1574 = vadd.f32 %v1435, %v1549
  %v1575 = vadd.f32 %v1436, %v1553
  %v1576 = vadd.f32 %v1437, %v1549
  %v1577 = vadd.f32 %v1438, %v1553
  %v1578 = vadd.f32 %v1439, %v1549
  %v1579 = vadd.f32 %v1440, %v1553
  %v1580 = vadd.f32 %v1441, %v1549
  %v1581 = vadd.f32 %v1442, %v1553
  %v1582 = vadd.f32 %v1443, %v1549
  %v1583 = vadd.f32 %v1444, %v1553
  %v1584 = vadd.f32 %v1445, %v1549
  %v1585 = vadd.f32 %v1446, %v1553
  %v1586 = vadd.f32 %v1447, %v1549
  %v1587 = vadd.f32 %v1448, %v1553
  %v1588 = vadd.f32 %v1449, %v1549
  %v1589 = vadd.f32 %v1450, %v1553
  %v1590 = vadd.f32 %v1451, %v1549
  %v1591 = vadd.f32 %v1452, %v1553
  %v1592 = vadd.f32 %v1453, %v1549
  %v1593 = vadd.f32 %v1454, %v1553
  %v1594 = vadd.f32 %v1455, %v1549
  %v1595 = vadd.f32 %v1456, %v1553
  %v1596 = vadd.f32 %v1457, %v1549
  %v1597 = vadd.f32 %v1458, %v1553
  %v1598 = vadd.f32 %v1459, %v1549
  %v1599 = vadd.f32 %v1460, %v1553
  %v1600 = vadd.f32 %v1461, %v1549
  %v1601 = vadd.f32 %v1462, %v1553
  %v1602 = vadd.f32 %v1463, %v1549
  %v1603 = vadd.f32 %v1464, %v1553
  %v1604 = vadd.f32 %v1465, %v1549
  %v1605 = vadd.f32 %v1466, %v1553
  %v1606 = vadd.f32 %v1467, %v1549
  %v1607 = vadd.f32 %v1468, %v1553
  %v1608 = vadd.f32 %v1469, %v1549
  %v1609 = vadd.f32 %v1470, %v1553
  %v1610 = vadd.f32 %v1471, %v1549
  %v1611 = vadd.f32 %v1472, %v1553
  %v1612 = vadd.f32 %v1473, %v1549
  %v1613 = vadd.f32 %v1474, %v1553
  %v1614 = vadd.f32 %v1475, %v1549
  %v1615 = vadd.f32 %v1476, %v1553
  %v1616 = vadd.f32 %v1477, %v1549
  %v1617 = vadd.f32 %v1478, %v1553
  %v1618 = vadd.f32 %v1479, %v1549
  %v1619 = vadd.f32 %v1480, %v1553
  %v1620 = vadd.f32 %v1481, %v1549
  %v1621 = vadd.f32 %v1482, %v1553
  %v1622 = vadd.f32 %v1483, %v1549
  %v1623 = vadd.f32 %v1484, %v1553
  %v1624 = vadd.f32 %v1485, %v1549
  %v1625 = vadd.f32 %v1486, %v1553
  %v1626 = vadd.f32 %v1487, %v1549
  %v1627 = vadd.f32 %v1488, %v1553
  %v1628 = vadd.f32 %v1489, %v1549
  %v1629 = vadd.f32 %v1490, %v1553
  %v1630 = vadd.f32 %v1491, %v1549
  %v1631 = vadd.f32 %v1492, %v1553
  %v1632 = vadd.f32 %v1493, %v1549
  %v1633 = vadd.f32 %v1494, %v1553
  %v1634 = vadd.f32 %v1495, %v1549
  %v1635 = vadd.f32 %v1496, %v1553
  %v1636 = vadd.f32 %v1497, %v1549
  %v1637 = vadd.f32 %v1498, %v1553
  %v1638 = vadd.f32 %v1499, %v1549
  %v1639 = vadd.f32 %v1500, %v1553
  %v1640 = vadd.f32 %v1501, %v1549
  %v1641 = vadd.f32 %v1502, %v1553
  %v1642 = vadd.f32 %v1503, %v1549
  %v1643 = vadd.f32 %v1504, %v1553
  %v1644 = vadd.f32 %v1505, %v1549
  %v1645 = vadd.f32 %v1506, %v1553
  %v1646 = vadd.f32 %v1507, %v1549
  %v1647 = vadd.f32 %v1508, %v1553
  %v1648 = vadd.f32 %v1509, %v1549
  %v1649 = vadd.f32 %v1510, %v1553
  %v1650 = vadd.f32 %v1511, %v1549
  %v1651 = vadd.f32 %v1512, %v1553
  %v1652 = vadd.f32 %v1513, %v1549
  %v1653 = vadd.f32 %v1514, %v1553
  %v1654 = vadd.f32 %v1515, %v1549
  %v1655 = vadd.f32 %v1516, %v1553
  %v1656 = vadd.f32 %v1517, %v1549
  %v1657 = vadd.f32 %v1518, %v1553
  %v1658 = vadd.f32 %v1519, %v1549
  %v1659 = vadd.f32 %v1520, %v1553
  %v1660 = vadd.f32 %v1521, %v1549
  %v1661 = vadd.f32 %v1522, %v1553
  %v1662 = vadd.f32 %v1523, %v1549
  %v1663 = vadd.f32 %v1524, %v1553
  %v1664 = vadd.f32 %v1525, %v1549
  %v1665 = vadd.f32 %v1526, %v1553
  %v1666 = vadd.f32 %v1527, %v1549
  %v1667 = vadd.f32 %v1528, %v1553
  %v1668 = vadd.f32 %v1529, %v1549
  %v1669 = vadd.f32 %v1530, %v1553
  %v1670 = vadd.f32 %v1531, %v1549
  %v1671 = vadd.f32 %v1532, %v1553
  %v1672 = vadd.f32 %v1533, %v1549
  %v1673 = vadd.f32 %v1534, %v1553
  %v1674 = vadd.f32 %v1535, %v1549
  %v1675 = vadd.f32 %v1536, %v1553
  %v1676 = vadd.f32 %v1537, %v1549
  %v1677 = vadd.f32 %v1538, %v1553
  %v1678 = vadd.f32 %v1539, %v1549
  %v1679 = vadd.f32 %v1540, %v1553
  %v1680 = vadd.f32 %v1541, %v1549
  %v1681 = vadd.f32 %v1542, %v1553
  %v1682 = vadd.f32 %v1543, %v1549
  %v1683 = vadd.f32 %v1544, %v1553
  %v1684 = vmax.f32 %v1556, 0.0
  %v1685 = vmax.f32 %v1557, 0.0
  %v1686 = vmax.f32 %v1558, 0.0
  %v1687 = vmax.f32 %v1559, 0.0
  %v1688 = vmax.f32 %v1560, 0.0
  %v1689 = vmax.f32 %v1561, 0.0
  %v1690 = vmax.f32 %v1562, 0.0
  %v1691 = vmax.f32 %v1563, 0.0
  %v1692 = vmax.f32 %v1564, 0.0
  %v1693 = vmax.f32 %v1565, 0.0
  %v1694 = vmax.f32 %v1566, 0.0
  %v1695 = vmax.f32 %v1567, 0.0
  %v1696 = vmax.f32 %v1568, 0.0
  %v1697 = vmax.f32 %v1569, 0.0
  %v1698 = vmax.f32 %v1570, 0.0
  %v1699 = vmax.f32 %v1571, 0.0
  %v1700 = vmax.f32 %v1572, 0.0
  %v1701 = vmax.f32 %v1573, 0.0
  %v1702 = vmax.f32 %v1574, 0.0
  %v1703 = vmax.f32 %v1575, 0.0
  %v1704 = vmax.f32 %v1576, 0.0
  %v1705 = vmax.f32 %v1577, 0.0
  %v1706 = vmax.f32 %v1578, 0.0
  %v1707 = vmax.f32 %v1579, 0.0
  %v1708 = vmax.f32 %v1580, 0.0
  %v1709 = vmax.f32 %v1581, 0.0
  %v1710 = vmax.f32 %v1582, 0.0
  %v1711 = vmax.f32 %v1583, 0.0
  %v1712 = vmax.f32 %v1584, 0.0
  %v1713 = vmax.f32 %v1585, 0.0
  %v1714 = vmax.f32 %v1586, 0.0
  %v1715 = vmax.f32 %v1587, 0.0
  %v1716 = vmax.f32 %v1588, 0.0
  %v1717 = vmax.f32 %v1589, 0.0
  %v1718 = vmax.f32 %v1590, 0.0
  %v1719 = vmax.f32 %v1591, 0.0
  %v1720 = vmax.f32 %v1592, 0.0
  %v1721 = vmax.f32 %v1593, 0.0
  %v1722 = vmax.f32 %v1594, 0.0
  %v1723 = vmax.f32 %v1595, 0.0
  %v1724 = vmax.f32 %v1596, 0.0
  %v1725 = vmax.f32 %v1597, 0.0
  %v1726 = vmax.f32 %v1598, 0.0
  %v1727 = vmax.f32 %v1599, 0.0
  %v1728 = vmax.f32 %v1600, 0.0
  %v1729 = vmax.f32 %v1601, 0.0
  %v1730 = vmax.f32 %v1602, 0.0
  %v1731 = vmax.f32 %v1603, 0.0
  %v1732 = vmax.f32 %v1604, 0.0
  %v1733 = vmax.f32 %v1605, 0.0
  %v1734 = vmax.f32 %v1606, 0.0
  %v1735 = vmax.f32 %v1607, 0.0
  %v1736 = vmax.f32 %v1608, 0.0
  %v1737 = vmax.f32 %v1609, 0.0
  %v1738 = vmax.f32 %v1610, 0.0
  %v1739 = vmax.f32 %v1611, 0.0
  %v1740 = vmax.f32 %v1612, 0.0
  %v1741 = vmax.f32 %v1613, 0.0
  %v1742 = vmax.f32 %v1614, 0.0
  %v1743 = vmax.f32 %v1615, 0.0
  %v1744 = vmax.f32 %v1616, 0.0
  %v1745 = vmax.f32 %v1617, 0.0
  %v1746 = vmax.f32 %v1618, 0.0
  %v1747 = vmax.f32 %v1619, 0.0
  %v1748 = vmax.f32 %v1620, 0.0
  %v1749 = vmax.f32 %v1621, 0.0
  %v1750 = vmax.f32 %v1622, 0.0
  %v1751 = vmax.f32 %v1623, 0.0
  %v1752 = vmax.f32 %v1624, 0.0
  %v1753 = vmax.f32 %v1625, 0.0
  %v1754 = vmax.f32 %v1626, 0.0
  %v1755 = vmax.f32 %v1627, 0.0
  %v1756 = vmax.f32 %v1628, 0.0
  %v1757 = vmax.f32 %v1629, 0.0
  %v1758 = vmax.f32 %v1630, 0.0
  %v1759 = vmax.f32 %v1631, 0.0
  %v1760 = vmax.f32 %v1632, 0.0
  %v1761 = vmax.f32 %v1633, 0.0
  %v1762 = vmax.f32 %v1634, 0.0
  %v1763 = vmax.f32 %v1635, 0.0
  %v1764 = vmax.f32 %v1636, 0.0
  %v1765 = vmax.f32 %v1637, 0.0
  %v1766 = vmax.f32 %v1638, 0.0
  %v1767 = vmax.f32 %v1639, 0.0
  %v1768 = vmax.f32 %v1640, 0.0
  %v1769 = vmax.f32 %v1641, 0.0
  %v1770 = vmax.f32 %v1642, 0.0
  %v1771 = vmax.f32 %v1643, 0.0
  %v1772 = vmax.f32 %v1644, 0.0
  %v1773 = vmax.f32 %v1645, 0.0
  %v1774 = vmax.f32 %v1646, 0.0
  %v1775 = vmax.f32 %v1647, 0.0
  %v1776 = vmax.f32 %v1648, 0.0
  %v1777 = vmax.f32 %v1649, 0.0
  %v1778 = vmax.f32 %v1650, 0.0
  %v1779 = vmax.f32 %v1651, 0.0
  %v1780 = vmax.f32 %v1652, 0.0
  %v1781 = vmax.f32 %v1653, 0.0
  %v1782 = vmax.f32 %v1654, 0.0
  %v1783 = vmax.f32 %v1655, 0.0
  %v1784 = vmax.f32 %v1656, 0.0
  %v1785 = vmax.f32 %v1657, 0.0
  %v1786 = vmax.f32 %v1658, 0.0
  %v1787 = vmax.f32 %v1659, 0.0
  %v1788 = vmax.f32 %v1660, 0.0
  %v1789 = vmax.f32 %v1661, 0.0
  %v1790 = vmax.f32 %v1662, 0.0
  %v1791 = vmax.f32 %v1663, 0.0
  %v1792 = vmax.f32 %v1664, 0.0
  %v1793 = vmax.f32 %v1665, 0.0
  %v1794 = vmax.f32 %v1666, 0.0
  %v1795 = vmax.f32 %v1667, 0.0
  %v1796 = vmax.f32 %v1668, 0.0
  %v1797 = vmax.f32 %v1669, 0.0
  %v1798 = vmax.f32 %v1670, 0.0
  %v1799 = vmax.f32 %v1671, 0.0
  %v1800 = vmax.f32 %v1672, 0.0
  %v1801 = vmax.f32 %v1673, 0.0
  %v1802 = vmax.f32 %v1674, 0.0
  %v1803 = vmax.f32 %v1675, 0.0
  %v1804 = vmax.f32 %v1676, 0.0
  %v1805 = vmax.f32 %v1677, 0.0
  %v1806 = vmax.f32 %v1678, 0.0
  %v1807 = vmax.f32 %v1679, 0.0
  %v1808 = vmax.f32 %v1680, 0.0
  %v1809 = vmax.f32 %v1681, 0.0
  %v1810 = vmax.f32 %v1682, 0.0
  %v1811 = vmax.f32 %v1683, 0.0
  %v1812 = vpack.c.bf16 %v1686, %v1684
  %v1813 = vpack.c.bf16 %v1690, %v1688
  %v1814 = vpack.c.bf16 %v1694, %v1692
  %v1815 = vpack.c.bf16 %v1698, %v1696
  %v1816 = vpack.c.bf16 %v1702, %v1700
  %v1817 = vpack.c.bf16 %v1706, %v1704
  %v1818 = vpack.c.bf16 %v1710, %v1708
  %v1819 = vpack.c.bf16 %v1714, %v1712
  %v1820 = vpack.c.bf16 %v1718, %v1716
  %v1821 = vpack.c.bf16 %v1722, %v1720
  %v1822 = vpack.c.bf16 %v1726, %v1724
  %v1823 = vpack.c.bf16 %v1730, %v1728
  %v1824 = vpack.c.bf16 %v1734, %v1732
  %v1825 = vpack.c.bf16 %v1738, %v1736
  %v1826 = vpack.c.bf16 %v1742, %v1740
  %v1827 = vpack.c.bf16 %v1746, %v1744
  %v1828 = vpack.c.bf16 %v1750, %v1748
  %v1829 = vpack.c.bf16 %v1754, %v1752
  %v1830 = vpack.c.bf16 %v1758, %v1756
  %v1831 = vpack.c.bf16 %v1762, %v1760
  %v1832 = vpack.c.bf16 %v1766, %v1764
  %v1833 = vpack.c.bf16 %v1770, %v1768
  %v1834 = vpack.c.bf16 %v1774, %v1772
  %v1835 = vpack.c.bf16 %v1778, %v1776
  %v1836 = vpack.c.bf16 %v1782, %v1780
  %v1837 = vpack.c.bf16 %v1786, %v1784
  %v1838 = vpack.c.bf16 %v1790, %v1788
  %v1839 = vpack.c.bf16 %v1794, %v1792
  %v1840 = vpack.c.bf16 %v1798, %v1796
  %v1841 = vpack.c.bf16 %v1802, %v1800
  %v1842 = vpack.c.bf16 %v1806, %v1804
  %v1843 = vpack.c.bf16 %v1810, %v1808
  %v1845 = vshrl.u32 %v1812, 16
  %v1847 = vrot.slane %v1845, 7
  %v1848 = vshll.u32 %v1812, 16
  %v1850 = vor.u32 %v1847, %v1848
  %v1852 = vshrl.u32 %v1813, 16
  %v1854 = vrot.slane %v1852, 7
  %v1855 = vshll.u32 %v1813, 16
  %v1857 = vor.u32 %v1854, %v1855
  %v1859 = vshrl.u32 %v1814, 16
  %v1861 = vrot.slane %v1859, 7
  %v1862 = vshll.u32 %v1814, 16
  %v1864 = vor.u32 %v1861, %v1862
  %v1866 = vshrl.u32 %v1815, 16
  %v1868 = vrot.slane %v1866, 7
  %v1869 = vshll.u32 %v1815, 16
  %v1871 = vor.u32 %v1868, %v1869
  %v1873 = vshrl.u32 %v1816, 16
  %v1875 = vrot.slane %v1873, 7
  %v1876 = vshll.u32 %v1816, 16
  %v1878 = vor.u32 %v1875, %v1876
  %v1880 = vshrl.u32 %v1817, 16
  %v1882 = vrot.slane %v1880, 7
  %v1883 = vshll.u32 %v1817, 16
  %v1885 = vor.u32 %v1882, %v1883
  %v1887 = vshrl.u32 %v1818, 16
  %v1889 = vrot.slane %v1887, 7
  %v1890 = vshll.u32 %v1818, 16
  %v1892 = vor.u32 %v1889, %v1890
  %v1894 = vshrl.u32 %v1819, 16
  %v1896 = vrot.slane %v1894, 7
  %v1897 = vshll.u32 %v1819, 16
  %v1899 = vor.u32 %v1896, %v1897
  %v1901 = vshrl.u32 %v1820, 16
  %v1903 = vrot.slane %v1901, 7
  %v1904 = vshll.u32 %v1820, 16
  %v1906 = vor.u32 %v1903, %v1904
  %v1908 = vshrl.u32 %v1821, 16
  %v1910 = vrot.slane %v1908, 7
  %v1911 = vshll.u32 %v1821, 16
  %v1913 = vor.u32 %v1910, %v1911
  %v1915 = vshrl.u32 %v1822, 16
  %v1917 = vrot.slane %v1915, 7
  %v1918 = vshll.u32 %v1822, 16
  %v1920 = vor.u32 %v1917, %v1918
  %v1922 = vshrl.u32 %v1823, 16
  %v1924 = vrot.slane %v1922, 7
  %v1925 = vshll.u32 %v1823, 16
  %v1927 = vor.u32 %v1924, %v1925
  %v1929 = vshrl.u32 %v1824, 16
  %v1931 = vrot.slane %v1929, 7
  %v1932 = vshll.u32 %v1824, 16
  %v1934 = vor.u32 %v1931, %v1932
  %v1936 = vshrl.u32 %v1825, 16
  %v1938 = vrot.slane %v1936, 7
  %v1939 = vshll.u32 %v1825, 16
  %v1941 = vor.u32 %v1938, %v1939
  %v1943 = vshrl.u32 %v1826, 16
  %v1945 = vrot.slane %v1943, 7
  %v1946 = vshll.u32 %v1826, 16
  %v1948 = vor.u32 %v1945, %v1946
  %v1950 = vshrl.u32 %v1827, 16
  %v1952 = vrot.slane %v1950, 7
  %v1953 = vshll.u32 %v1827, 16
  %v1955 = vor.u32 %v1952, %v1953
  %v1957 = vshrl.u32 %v1828, 16
  %v1959 = vrot.slane %v1957, 7
  %v1960 = vshll.u32 %v1828, 16
  %v1962 = vor.u32 %v1959, %v1960
  %v1964 = vshrl.u32 %v1829, 16
  %v1966 = vrot.slane %v1964, 7
  %v1967 = vshll.u32 %v1829, 16
  %v1969 = vor.u32 %v1966, %v1967
  %v1971 = vshrl.u32 %v1830, 16
  %v1973 = vrot.slane %v1971, 7
  %v1974 = vshll.u32 %v1830, 16
  %v1976 = vor.u32 %v1973, %v1974
  %v1978 = vshrl.u32 %v1831, 16
  %v1980 = vrot.slane %v1978, 7
  %v1981 = vshll.u32 %v1831, 16
  %v1983 = vor.u32 %v1980, %v1981
  %v1985 = vshrl.u32 %v1832, 16
  %v1987 = vrot.slane %v1985, 7
  %v1988 = vshll.u32 %v1832, 16
  %v1990 = vor.u32 %v1987, %v1988
  %v1992 = vshrl.u32 %v1833, 16
  %v1994 = vrot.slane %v1992, 7
  %v1995 = vshll.u32 %v1833, 16
  %v1997 = vor.u32 %v1994, %v1995
  %v1999 = vshrl.u32 %v1834, 16
  %v2001 = vrot.slane %v1999, 7
  %v2002 = vshll.u32 %v1834, 16
  %v2004 = vor.u32 %v2001, %v2002
  %v2006 = vshrl.u32 %v1835, 16
  %v2008 = vrot.slane %v2006, 7
  %v2009 = vshll.u32 %v1835, 16
  %v2011 = vor.u32 %v2008, %v2009
  %v2013 = vshrl.u32 %v1836, 16
  %v2015 = vrot.slane %v2013, 7
  %v2016 = vshll.u32 %v1836, 16
  %v2018 = vor.u32 %v2015, %v2016
  %v2020 = vshrl.u32 %v1837, 16
  %v2022 = vrot.slane %v2020, 7
  %v2023 = vshll.u32 %v1837, 16
  %v2025 = vor.u32 %v2022, %v2023
  %v2027 = vshrl.u32 %v1838, 16
  %v2029 = vrot.slane %v2027, 7
  %v2030 = vshll.u32 %v1838, 16
  %v2032 = vor.u32 %v2029, %v2030
  %v2034 = vshrl.u32 %v1839, 16
  %v2036 = vrot.slane %v2034, 7
  %v2037 = vshll.u32 %v1839, 16
  %v2039 = vor.u32 %v2036, %v2037
  %v2041 = vshrl.u32 %v1840, 16
  %v2043 = vrot.slane %v2041, 7
  %v2044 = vshll.u32 %v1840, 16
  %v2046 = vor.u32 %v2043, %v2044
  %v2048 = vshrl.u32 %v1841, 16
  %v2050 = vrot.slane %v2048, 7
  %v2051 = vshll.u32 %v1841, 16
  %v2053 = vor.u32 %v2050, %v2051
  %v2055 = vshrl.u32 %v1842, 16
  %v2057 = vrot.slane %v2055, 7
  %v2058 = vshll.u32 %v1842, 16
  %v2060 = vor.u32 %v2057, %v2058
  %v2062 = vshrl.u32 %v1843, 16
  %v2064 = vrot.slane %v2062, 7
  %v2065 = vshll.u32 %v1843, 16
  %v2067 = vor.u32 %v2064, %v2065
  %vm2132 = vcmask 1040384
  %vm2133 = vsmask.f32 256
  %vm2134 = vmand %vm2132, %vm2133
  %v2135 = vsel %vm2134, 0, %v1850
  %v2136 = vsel %vm2134, 0, %v1857
  %v2137 = vsel %vm2134, 0, %v1864
  %v2138 = vsel %vm2134, 0, %v1871
  %v2139 = vsel %vm2134, 0, %v1878
  %v2140 = vsel %vm2134, 0, %v1885
  %v2141 = vsel %vm2134, 0, %v1892
  %v2142 = vsel %vm2134, 0, %v1899
  %v2143 = vsel %vm2134, 0, %v1906
  %v2144 = vsel %vm2134, 0, %v1913
  %v2145 = vsel %vm2134, 0, %v1920
  %v2146 = vsel %vm2134, 0, %v1927
  %v2147 = vsel %vm2134, 0, %v1934
  %v2148 = vsel %vm2134, 0, %v1941
  %v2149 = vsel %vm2134, 0, %v1948
  %v2150 = vsel %vm2134, 0, %v1955
  %v2151 = vsel %vm2134, 0, %v1962
  %v2152 = vsel %vm2134, 0, %v1969
  %v2153 = vsel %vm2134, 0, %v1976
  %v2154 = vsel %vm2134, 0, %v1983
  %v2155 = vsel %vm2134, 0, %v1990
  %v2156 = vsel %vm2134, 0, %v1997
  %v2157 = vsel %vm2134, 0, %v2004
  %v2158 = vsel %vm2134, 0, %v2011
  %v2159 = vsel %vm2134, 0, %v2018
  %v2160 = vsel %vm2134, 0, %v2025
  %v2161 = vsel %vm2134, 0, %v2032
  %v2162 = vsel %vm2134, 0, %v2039
  %v2163 = vsel %vm2134, 0, %v2046
  %v2164 = vsel %vm2134, 0, %v2053
  %v2165 = vsel %vm2134, 0, %v2060
  %v2166 = vsel %vm2134, 0, %v2067
  %v2167 = vsel %vm2134, %v1847, 0
  %v2168 = vsel %vm2134, %v1854, 0
  %v2169 = vsel %vm2134, %v1861, 0
  %v2170 = vsel %vm2134, %v1868, 0
  %v2171 = vsel %vm2134, %v1875, 0
  %v2172 = vsel %vm2134, %v1882, 0
  %v2173 = vsel %vm2134, %v1889, 0
  %v2174 = vsel %vm2134, %v1896, 0
  %v2175 = vsel %vm2134, %v1903, 0
  %v2176 = vsel %vm2134, %v1910, 0
  %v2177 = vsel %vm2134, %v1917, 0
  %v2178 = vsel %vm2134, %v1924, 0
  %v2179 = vsel %vm2134, %v1931, 0
  %v2180 = vsel %vm2134, %v1938, 0
  %v2181 = vsel %vm2134, %v1945, 0
  %v2182 = vsel %vm2134, %v1952, 0
  %v2183 = vsel %vm2134, %v1959, 0
  %v2184 = vsel %vm2134, %v1966, 0
  %v2185 = vsel %vm2134, %v1973, 0
  %v2186 = vsel %vm2134, %v1980, 0
  %v2187 = vsel %vm2134, %v1987, 0
  %v2188 = vsel %vm2134, %v1994, 0
  %v2189 = vsel %vm2134, %v2001, 0
  %v2190 = vsel %vm2134, %v2008, 0
  %v2191 = vsel %vm2134, %v2015, 0
  %v2192 = vsel %vm2134, %v2022, 0
  %v2193 = vsel %vm2134, %v2029, 0
  %v2194 = vsel %vm2134, %v2036, 0
  %v2195 = vsel %vm2134, %v2043, 0
  %v2196 = vsel %vm2134, %v2050, 0
  %v2197 = vsel %vm2134, %v2057, 0
  %v2198 = vsel %vm2134, %v2064, 0
  %v2199 = vld [vmem:[%s4] sm:$0xf]
  %v2200 = vld [vmem:[%s4 + $0x4] sm:$0xf]
  %v2201 = vld [vmem:[%s4 + $0x8] sm:$0xf]
  %v2202 = vld [vmem:[%s4 + $0xc] sm:$0xf]
  %v2203 = vld [vmem:[%s4 + $0x10] sm:$0xf]
  %v2204 = vld [vmem:[%s4 + $0x14] sm:$0xf]
  %v2205 = vld [vmem:[%s4 + $0x18] sm:$0xf]
  %v2206 = vld [vmem:[%s4 + $0x1c] sm:$0xf]
  %v2207 = vld [vmem:[%s4 + $0x20] sm:$0xf]
  %v2208 = vld [vmem:[%s4 + $0x24] sm:$0xf]
  %v2209 = vld [vmem:[%s4 + $0x28] sm:$0xf]
  %v2210 = vld [vmem:[%s4 + $0x2c] sm:$0xf]
  %v2211 = vld [vmem:[%s4 + $0x30] sm:$0xf]
  %v2212 = vld [vmem:[%s4 + $0x34] sm:$0xf]
  %v2213 = vld [vmem:[%s4 + $0x38] sm:$0xf]
  %v2214 = vld [vmem:[%s4 + $0x3c] sm:$0xf]
  %vm2215 = vsmask.f32 7424
  %v2217 = vshrl.u32 0, 16
  %v2219 = vshll.u32 0, 16
  %v2221 = vrot.slane %v2219, 1
  %v2222 = vor.u32 %v2217, %v2221
  %v2223 = vsel %vm2215, %v2222, %v2221
  %v2225 = vshrl.u32 %v2135, 16
  %v2227 = vshll.u32 %v2135, 16
  %v2229 = vrot.slane %v2227, 1
  %v2230 = vor.u32 %v2225, %v2229
  %v2232 = vshll.u32 %v2167, 16
  %v2234 = vrot.slane %v2232, 1
  %v2235 = vsel %vm2215, %v2230, %v2234
  %v2237 = vshrl.u32 %v2136, 16
  %v2239 = vshll.u32 %v2136, 16
  %v2241 = vrot.slane %v2239, 1
  %v2242 = vor.u32 %v2237, %v2241
  %v2244 = vshll.u32 %v2168, 16
  %v2246 = vrot.slane %v2244, 1
  %v2247 = vsel %vm2215, %v2242, %v2246
  %v2249 = vshrl.u32 %v2137, 16
  %v2251 = vshll.u32 %v2137, 16
  %v2253 = vrot.slane %v2251, 1
  %v2254 = vor.u32 %v2249, %v2253
  %v2256 = vshll.u32 %v2169, 16
  %v2258 = vrot.slane %v2256, 1
  %v2259 = vsel %vm2215, %v2254, %v2258
  %v2261 = vshrl.u32 %v2138, 16
  %v2263 = vshll.u32 %v2138, 16
  %v2265 = vrot.slane %v2263, 1
  %v2266 = vor.u32 %v2261, %v2265
  %v2268 = vshll.u32 %v2170, 16
  %v2270 = vrot.slane %v2268, 1
  %v2271 = vsel %vm2215, %v2266, %v2270
  %v2273 = vshrl.u32 %v2139, 16
  %v2275 = vshll.u32 %v2139, 16
  %v2277 = vrot.slane %v2275, 1
  %v2278 = vor.u32 %v2273, %v2277
  %v2280 = vshll.u32 %v2171, 16
  %v2282 = vrot.slane %v2280, 1
  %v2283 = vsel %vm2215, %v2278, %v2282
  %v2285 = vshrl.u32 %v2140, 16
  %v2287 = vshll.u32 %v2140, 16
  %v2289 = vrot.slane %v2287, 1
  %v2290 = vor.u32 %v2285, %v2289
  %v2292 = vshll.u32 %v2172, 16
  %v2294 = vrot.slane %v2292, 1
  %v2295 = vsel %vm2215, %v2290, %v2294
  %v2297 = vshrl.u32 %v2141, 16
  %v2299 = vshll.u32 %v2141, 16
  %v2301 = vrot.slane %v2299, 1
  %v2302 = vor.u32 %v2297, %v2301
  %v2304 = vshll.u32 %v2173, 16
  %v2306 = vrot.slane %v2304, 1
  %v2307 = vsel %vm2215, %v2302, %v2306
  %v2309 = vshrl.u32 %v2142, 16
  %v2311 = vshll.u32 %v2142, 16
  %v2313 = vrot.slane %v2311, 1
  %v2314 = vor.u32 %v2309, %v2313
  %v2316 = vshll.u32 %v2174, 16
  %v2318 = vrot.slane %v2316, 1
  %v2319 = vsel %vm2215, %v2314, %v2318
  %v2321 = vshrl.u32 %v2143, 16
  %v2323 = vshll.u32 %v2143, 16
  %v2325 = vrot.slane %v2323, 1
  %v2326 = vor.u32 %v2321, %v2325
  %v2328 = vshll.u32 %v2175, 16
  %v2330 = vrot.slane %v2328, 1
  %v2331 = vsel %vm2215, %v2326, %v2330
  %v2333 = vshrl.u32 %v2144, 16
  %v2335 = vshll.u32 %v2144, 16
  %v2337 = vrot.slane %v2335, 1
  %v2338 = vor.u32 %v2333, %v2337
  %v2340 = vshll.u32 %v2176, 16
  %v2342 = vrot.slane %v2340, 1
  %v2343 = vsel %vm2215, %v2338, %v2342
  %v2345 = vshrl.u32 %v2145, 16
  %v2347 = vshll.u32 %v2145, 16
  %v2349 = vrot.slane %v2347, 1
  %v2350 = vor.u32 %v2345, %v2349
  %v2352 = vshll.u32 %v2177, 16
  %v2354 = vrot.slane %v2352, 1
  %v2355 = vsel %vm2215, %v2350, %v2354
  %v2357 = vshrl.u32 %v2146, 16
  %v2359 = vshll.u32 %v2146, 16
  %v2361 = vrot.slane %v2359, 1
  %v2362 = vor.u32 %v2357, %v2361
  %v2364 = vshll.u32 %v2178, 16
  %v2366 = vrot.slane %v2364, 1
  %v2367 = vsel %vm2215, %v2362, %v2366
  %v2369 = vshrl.u32 %v2147, 16
  %v2371 = vshll.u32 %v2147, 16
  %v2373 = vrot.slane %v2371, 1
  %v2374 = vor.u32 %v2369, %v2373
  %v2376 = vshll.u32 %v2179, 16
  %v2378 = vrot.slane %v2376, 1
  %v2379 = vsel %vm2215, %v2374, %v2378
  %v2381 = vshrl.u32 %v2148, 16
  %v2383 = vshll.u32 %v2148, 16
  %v2385 = vrot.slane %v2383, 1
  %v2386 = vor.u32 %v2381, %v2385
  %v2388 = vshll.u32 %v2180, 16
  %v2390 = vrot.slane %v2388, 1
  %v2391 = vsel %vm2215, %v2386, %v2390
  %v2393 = vshrl.u32 %v2149, 16
  %v2395 = vshll.u32 %v2149, 16
  %v2397 = vrot.slane %v2395, 1
  %v2398 = vor.u32 %v2393, %v2397
  %v2400 = vshll.u32 %v2181, 16
  %v2402 = vrot.slane %v2400, 1
  %v2403 = vsel %vm2215, %v2398, %v2402
  %v2405 = vshrl.u32 %v2151, 16
  %v2407 = vshll.u32 %v2151, 16
  %v2409 = vrot.slane %v2407, 1
  %v2410 = vor.u32 %v2405, %v2409
  %v2412 = vshll.u32 %v2183, 16
  %v2414 = vrot.slane %v2412, 1
  %v2415 = vsel %vm2215, %v2410, %v2414
  %v2417 = vshrl.u32 %v2152, 16
  %v2419 = vshll.u32 %v2152, 16
  %v2421 = vrot.slane %v2419, 1
  %v2422 = vor.u32 %v2417, %v2421
  %v2424 = vshll.u32 %v2184, 16
  %v2426 = vrot.slane %v2424, 1
  %v2427 = vsel %vm2215, %v2422, %v2426
  %v2429 = vshrl.u32 %v2153, 16
  %v2431 = vshll.u32 %v2153, 16
  %v2433 = vrot.slane %v2431, 1
  %v2434 = vor.u32 %v2429, %v2433
  %v2436 = vshll.u32 %v2185, 16
  %v2438 = vrot.slane %v2436, 1
  %v2439 = vsel %vm2215, %v2434, %v2438
  %v2441 = vshrl.u32 %v2154, 16
  %v2443 = vshll.u32 %v2154, 16
  %v2445 = vrot.slane %v2443, 1
  %v2446 = vor.u32 %v2441, %v2445
  %v2448 = vshll.u32 %v2186, 16
  %v2450 = vrot.slane %v2448, 1
  %v2451 = vsel %vm2215, %v2446, %v2450
  %v2453 = vshrl.u32 %v2155, 16
  %v2455 = vshll.u32 %v2155, 16
  %v2457 = vrot.slane %v2455, 1
  %v2458 = vor.u32 %v2453, %v2457
  %v2460 = vshll.u32 %v2187, 16
  %v2462 = vrot.slane %v2460, 1
  %v2463 = vsel %vm2215, %v2458, %v2462
  %v2465 = vshrl.u32 %v2156, 16
  %v2467 = vshll.u32 %v2156, 16
  %v2469 = vrot.slane %v2467, 1
  %v2470 = vor.u32 %v2465, %v2469
  %v2472 = vshll.u32 %v2188, 16
  %v2474 = vrot.slane %v2472, 1
  %v2475 = vsel %vm2215, %v2470, %v2474
  %v2477 = vshrl.u32 %v2157, 16
  %v2479 = vshll.u32 %v2157, 16
  %v2481 = vrot.slane %v2479, 1
  %v2482 = vor.u32 %v2477, %v2481
  %v2484 = vshll.u32 %v2189, 16
  %v2486 = vrot.slane %v2484, 1
  %v2487 = vsel %vm2215, %v2482, %v2486
  %v2489 = vshrl.u32 %v2158, 16
  %v2491 = vshll.u32 %v2158, 16
  %v2493 = vrot.slane %v2491, 1
  %v2494 = vor.u32 %v2489, %v2493
  %v2496 = vshll.u32 %v2190, 16
  %v2498 = vrot.slane %v2496, 1
  %v2499 = vsel %vm2215, %v2494, %v2498
  %v2501 = vshrl.u32 %v2159, 16
  %v2503 = vshll.u32 %v2159, 16
  %v2505 = vrot.slane %v2503, 1
  %v2506 = vor.u32 %v2501, %v2505
  %v2508 = vshll.u32 %v2191, 16
  %v2510 = vrot.slane %v2508, 1
  %v2511 = vsel %vm2215, %v2506, %v2510
  %v2513 = vshrl.u32 %v2160, 16
  %v2515 = vshll.u32 %v2160, 16
  %v2517 = vrot.slane %v2515, 1
  %v2518 = vor.u32 %v2513, %v2517
  %v2520 = vshll.u32 %v2192, 16
  %v2522 = vrot.slane %v2520, 1
  %v2523 = vsel %vm2215, %v2518, %v2522
  %v2525 = vshrl.u32 %v2161, 16
  %v2527 = vshll.u32 %v2161, 16
  %v2529 = vrot.slane %v2527, 1
  %v2530 = vor.u32 %v2525, %v2529
  %v2532 = vshll.u32 %v2193, 16
  %v2534 = vrot.slane %v2532, 1
  %v2535 = vsel %vm2215, %v2530, %v2534
  %v2537 = vshrl.u32 %v2162, 16
  %v2539 = vshll.u32 %v2162, 16
  %v2541 = vrot.slane %v2539, 1
  %v2542 = vor.u32 %v2537, %v2541
  %v2544 = vshll.u32 %v2194, 16
  %v2546 = vrot.slane %v2544, 1
  %v2547 = vsel %vm2215, %v2542, %v2546
  %v2549 = vshrl.u32 %v2163, 16
  %v2551 = vshll.u32 %v2163, 16
  %v2553 = vrot.slane %v2551, 1
  %v2554 = vor.u32 %v2549, %v2553
  %v2556 = vshll.u32 %v2195, 16
  %v2558 = vrot.slane %v2556, 1
  %v2559 = vsel %vm2215, %v2554, %v2558
  %v2561 = vshrl.u32 %v2164, 16
  %v2563 = vshll.u32 %v2164, 16
  %v2565 = vrot.slane %v2563, 1
  %v2566 = vor.u32 %v2561, %v2565
  %v2568 = vshll.u32 %v2196, 16
  %v2570 = vrot.slane %v2568, 1
  %v2571 = vsel %vm2215, %v2566, %v2570
  %v2573 = vshrl.u32 %v2165, 16
  %v2575 = vshll.u32 %v2165, 16
  %v2577 = vrot.slane %v2575, 1
  %v2578 = vor.u32 %v2573, %v2577
  %v2580 = vshll.u32 %v2197, 16
  %v2582 = vrot.slane %v2580, 1
  %v2583 = vsel %vm2215, %v2578, %v2582
  %v2615 = vld [vmem:[%s4 + $0x40] sm:$0xf]
  %v2616 = vld [vmem:[%s4 + $0x44] sm:$0xf]
  %v2617 = vld [vmem:[%s4 + $0x48] sm:$0xf]
  %v2618 = vld [vmem:[%s4 + $0x4c] sm:$0xf]
  %v2619 = vld [vmem:[%s4 + $0x50] sm:$0xf]
  %v2620 = vld [vmem:[%s4 + $0x54] sm:$0xf]
  %v2621 = vld [vmem:[%s4 + $0x58] sm:$0xf]
  %v2622 = vld [vmem:[%s4 + $0x5c] sm:$0xf]
  %v2623 = vld [vmem:[%s4 + $0x60] sm:$0xf]
  %v2624 = vld [vmem:[%s4 + $0x64] sm:$0xf]
  %v2625 = vld [vmem:[%s4 + $0x68] sm:$0xf]
  %v2626 = vld [vmem:[%s4 + $0x6c] sm:$0xf]
  %v2627 = vld [vmem:[%s4 + $0x70] sm:$0xf]
  %v2628 = vld [vmem:[%s4 + $0x74] sm:$0xf]
  %v2629 = vld [vmem:[%s4 + $0x78] sm:$0xf]
  %v2630 = vld [vmem:[%s4 + $0x7c] sm:$0xf]
  %v2647 = vunpack.c.l.b16 %v2615
  %v2648 = vunpack.c.l.b16 %v2616
  %v2649 = vunpack.c.l.b16 %v2617
  %v2650 = vunpack.c.l.b16 %v2618
  %v2651 = vunpack.c.l.b16 %v2619
  %v2652 = vunpack.c.l.b16 %v2620
  %v2653 = vunpack.c.l.b16 %v2621
  %v2654 = vunpack.c.l.b16 %v2622
  %v2655 = vunpack.c.l.b16 %v2623
  %v2656 = vunpack.c.l.b16 %v2624
  %v2657 = vunpack.c.l.b16 %v2625
  %v2658 = vunpack.c.l.b16 %v2626
  %v2659 = vunpack.c.l.b16 %v2627
  %v2660 = vunpack.c.l.b16 %v2628
  %v2661 = vunpack.c.l.b16 %v2629
  %v2662 = vunpack.c.l.b16 %v2630
  %v2663 = vpack.c.b16 %v2648, %v2647
  %v2664 = vpack.c.b16 %v2650, %v2649
  %v2665 = vpack.c.b16 %v2652, %v2651
  %v2666 = vpack.c.b16 %v2654, %v2653
  %v2667 = vpack.c.b16 %v2656, %v2655
  %v2668 = vpack.c.b16 %v2658, %v2657
  %v2669 = vpack.c.b16 %v2660, %v2659
  %v2670 = vpack.c.b16 %v2662, %v2661
  %2679 = vmatprep.subr.bf16.mxu0 0
  %2680 = vmatpush1.bf16.msra.mxu0 %v2670
  %2681 = vmatprep.subr.bf16.mxu0 0
  %2682 = vmatpush1.bf16.msra.mxu0 %v2669
  %2683 = vmatprep.subr.bf16.mxu0 0
  %2684 = vmatpush1.bf16.msra.mxu0 %v2668
  %2685 = vmatprep.subr.bf16.mxu0 0
  %2686 = vmatpush1.bf16.msra.mxu0 %v2667
  %2687 = vmatprep.subr.bf16.mxu0 0
  %2688 = vmatpush1.bf16.msra.mxu0 %v2666
  %2689 = vmatprep.subr.bf16.mxu0 0
  %2690 = vmatpush1.bf16.msra.mxu0 %v2665
  %2691 = vmatprep.subr.bf16.mxu0 0
  %2692 = vmatpush1.bf16.msra.mxu0 %v2664
  %2693 = vmatprep.subr.bf16.mxu0 0
  %2694 = vmatpush1.bf16.msra.mxu0 %v2663
  %2695 = vmatprep.subr.bf16.mxu0 0
  %2696 = vmatpush2.bf16.msra.mxu0 0
  %2697 = vmatprep.subr.bf16.mxu0 0
  %2698 = vmatpush2.bf16.msra.mxu0 0
  %2699 = vmatprep.subr.bf16.mxu0 0
  %2700 = vmatpush2.bf16.msra.mxu0 0
  %2701 = vmatprep.subr.bf16.mxu0 0
  %2702 = vmatpush2.bf16.msra.mxu0 0
  %2703 = vmatprep.subr.bf16.mxu0 0
  %2704 = vmatpush2.bf16.msra.mxu0 0
  %2705 = vmatprep.subr.bf16.mxu0 0
  %2706 = vmatpush2.bf16.msra.mxu0 0
  %2707 = vmatprep.subr.bf16.mxu0 0
  %2708 = vmatpush2.bf16.msra.mxu0 0
  %2709 = vmatprep.subr.bf16.mxu0 0
  %2710 = vmatpush2.bf16.msra.mxu0 0
  %2711 = vmatprep.mubr.bf16.mxu0 0
  %2712 = vmatmul.mubr.bf16.gmra.mxu0 %v2223
  %v2713 = vpop.f32.mrf.mxu0
  %v2714 = vadd.f32 0.0, %v2713
  %v2715 = vpop.f32.mrf.mxu0
  %v2716 = vpop.f32.mrf.mxu0
  %v2717 = vadd.f32 0.0, %v2716
  %v2718 = vpop.f32.mrf.mxu0
  %2719 = vmatprep.mubr.bf16.mxu0 0
  %2720 = vmatmul.mubr.bf16.gmra.mxu0 %v2235
  %v2721 = vpop.f32.mrf.mxu0
  %v2722 = vadd.f32 0.0, %v2721
  %v2723 = vpop.f32.mrf.mxu0
  %v2724 = vpop.f32.mrf.mxu0
  %v2725 = vadd.f32 0.0, %v2724
  %v2726 = vpop.f32.mrf.mxu0
  %2727 = vmatprep.mubr.bf16.mxu0 0
  %2728 = vmatmul.mubr.bf16.gmra.mxu0 %v2247
  %v2729 = vpop.f32.mrf.mxu0
  %v2730 = vadd.f32 0.0, %v2729
  %v2731 = vpop.f32.mrf.mxu0
  %v2732 = vpop.f32.mrf.mxu0
  %v2733 = vadd.f32 0.0, %v2732
  %v2734 = vpop.f32.mrf.mxu0
  %2735 = vmatprep.mubr.bf16.mxu0 0
  %2736 = vmatmul.mubr.bf16.gmra.mxu0 %v2259
  %v2737 = vpop.f32.mrf.mxu0
  %v2738 = vadd.f32 0.0, %v2737
  %v2739 = vpop.f32.mrf.mxu0
  %v2740 = vpop.f32.mrf.mxu0
  %v2741 = vadd.f32 0.0, %v2740
  %v2742 = vpop.f32.mrf.mxu0
  %2743 = vmatprep.mubr.bf16.mxu0 0
  %2744 = vmatmul.mubr.bf16.gmra.mxu0 %v2271
  %v2745 = vpop.f32.mrf.mxu0
  %v2746 = vadd.f32 0.0, %v2745
  %v2747 = vpop.f32.mrf.mxu0
  %v2748 = vpop.f32.mrf.mxu0
  %v2749 = vadd.f32 0.0, %v2748
  %v2750 = vpop.f32.mrf.mxu0
  %2751 = vmatprep.mubr.bf16.mxu0 0
  %2752 = vmatmul.mubr.bf16.gmra.mxu0 %v2283
  %v2753 = vpop.f32.mrf.mxu0
  %v2754 = vadd.f32 0.0, %v2753
  %v2755 = vpop.f32.mrf.mxu0
  %v2756 = vpop.f32.mrf.mxu0
  %v2757 = vadd.f32 0.0, %v2756
  %v2758 = vpop.f32.mrf.mxu0
  %2759 = vmatprep.mubr.bf16.mxu0 0
  %2760 = vmatmul.mubr.bf16.gmra.mxu0 %v2295
  %v2761 = vpop.f32.mrf.mxu0
  %v2762 = vadd.f32 0.0, %v2761
  %v2763 = vpop.f32.mrf.mxu0
  %v2764 = vpop.f32.mrf.mxu0
  %v2765 = vadd.f32 0.0, %v2764
  %v2766 = vpop.f32.mrf.mxu0
  %2767 = vmatprep.mubr.bf16.mxu0 0
  %2768 = vmatmul.mubr.bf16.gmra.mxu0 %v2307
  %v2769 = vpop.f32.mrf.mxu0
  %v2770 = vadd.f32 0.0, %v2769
  %v2771 = vpop.f32.mrf.mxu0
  %v2772 = vpop.f32.mrf.mxu0
  %v2773 = vadd.f32 0.0, %v2772
  %v2774 = vpop.f32.mrf.mxu0
  %2775 = vmatprep.mubr.bf16.mxu0 0
  %2776 = vmatmul.mubr.bf16.gmra.mxu0 %v2319
  %v2777 = vpop.f32.mrf.mxu0
  %v2778 = vadd.f32 0.0, %v2777
  %v2779 = vpop.f32.mrf.mxu0
  %v2780 = vpop.f32.mrf.mxu0
  %v2781 = vadd.f32 0.0, %v2780
  %v2782 = vpop.f32.mrf.mxu0
  %2783 = vmatprep.mubr.bf16.mxu0 0
  %2784 = vmatmul.mubr.bf16.gmra.mxu0 %v2331
  %v2785 = vpop.f32.mrf.mxu0
  %v2786 = vadd.f32 0.0, %v2785
  %v2787 = vpop.f32.mrf.mxu0
  %v2788 = vpop.f32.mrf.mxu0
  %v2789 = vadd.f32 0.0, %v2788
  %v2790 = vpop.f32.mrf.mxu0
  %2791 = vmatprep.mubr.bf16.mxu0 0
  %2792 = vmatmul.mubr.bf16.gmra.mxu0 %v2343
  %v2793 = vpop.f32.mrf.mxu0
  %v2794 = vadd.f32 0.0, %v2793
  %v2795 = vpop.f32.mrf.mxu0
  %v2796 = vpop.f32.mrf.mxu0
  %v2797 = vadd.f32 0.0, %v2796
  %v2798 = vpop.f32.mrf.mxu0
  %2799 = vmatprep.mubr.bf16.mxu0 0
  %2800 = vmatmul.mubr.bf16.gmra.mxu0 %v2355
  %v2801 = vpop.f32.mrf.mxu0
  %v2802 = vadd.f32 0.0, %v2801
  %v2803 = vpop.f32.mrf.mxu0
  %v2804 = vpop.f32.mrf.mxu0
  %v2805 = vadd.f32 0.0, %v2804
  %v2806 = vpop.f32.mrf.mxu0
  %2807 = vmatprep.mubr.bf16.mxu0 0
  %2808 = vmatmul.mubr.bf16.gmra.mxu0 %v2367
  %v2809 = vpop.f32.mrf.mxu0
  %v2810 = vadd.f32 0.0, %v2809
  %v2811 = vpop.f32.mrf.mxu0
  %v2812 = vpop.f32.mrf.mxu0
  %v2813 = vadd.f32 0.0, %v2812
  %v2814 = vpop.f32.mrf.mxu0
  %2815 = vmatprep.mubr.bf16.mxu0 0
  %2816 = vmatmul.mubr.bf16.gmra.mxu0 %v2379
  %v2817 = vpop.f32.mrf.mxu0
  %v2818 = vadd.f32 0.0, %v2817
  %v2819 = vpop.f32.mrf.mxu0
  %v2820 = vpop.f32.mrf.mxu0
  %v2821 = vadd.f32 0.0, %v2820
  %v2822 = vpop.f32.mrf.mxu0
  %2823 = vmatprep.mubr.bf16.mxu0 0
  %2824 = vmatmul.mubr.bf16.gmra.mxu0 %v2391
  %v2825 = vpop.f32.mrf.mxu0
  %v2826 = vadd.f32 0.0, %v2825
  %v2827 = vpop.f32.mrf.mxu0
  %v2828 = vpop.f32.mrf.mxu0
  %v2829 = vadd.f32 0.0, %v2828
  %v2830 = vpop.f32.mrf.mxu0
  %2831 = vmatprep.mubr.bf16.mxu0 0
  %2832 = vmatmul.mubr.bf16.gmra.mxu0 %v2403
  %v2833 = vpop.f32.mrf.mxu0
  %v2834 = vadd.f32 0.0, %v2833
  %v2835 = vpop.f32.mrf.mxu0
  %v2836 = vpop.f32.mrf.mxu0
  %v2837 = vadd.f32 0.0, %v2836
  %v2838 = vpop.f32.mrf.mxu0
  %2839 = vmatprep.mubr.bf16.mxu0 0
  %2840 = vmatmul.mubr.bf16.gmra.mxu0 %v2223
  %v2841 = vpop.f32.mrf.mxu0
  %v2842 = vadd.f32 0.0, %v2841
  %v2843 = vpop.f32.mrf.mxu0
  %v2844 = vpop.f32.mrf.mxu0
  %v2845 = vadd.f32 0.0, %v2844
  %v2846 = vpop.f32.mrf.mxu0
  %2847 = vmatprep.mubr.bf16.mxu0 0
  %2848 = vmatmul.mubr.bf16.gmra.mxu0 %v2415
  %v2849 = vpop.f32.mrf.mxu0
  %v2850 = vadd.f32 0.0, %v2849
  %v2851 = vpop.f32.mrf.mxu0
  %v2852 = vpop.f32.mrf.mxu0
  %v2853 = vadd.f32 0.0, %v2852
  %v2854 = vpop.f32.mrf.mxu0
  %2855 = vmatprep.mubr.bf16.mxu0 0
  %2856 = vmatmul.mubr.bf16.gmra.mxu0 %v2427
  %v2857 = vpop.f32.mrf.mxu0
  %v2858 = vadd.f32 0.0, %v2857
  %v2859 = vpop.f32.mrf.mxu0
  %v2860 = vpop.f32.mrf.mxu0
  %v2861 = vadd.f32 0.0, %v2860
  %v2862 = vpop.f32.mrf.mxu0
  %2863 = vmatprep.mubr.bf16.mxu0 0
  %2864 = vmatmul.mubr.bf16.gmra.mxu0 %v2439
  %v2865 = vpop.f32.mrf.mxu0
  %v2866 = vadd.f32 0.0, %v2865
  %v2867 = vpop.f32.mrf.mxu0
  %v2868 = vpop.f32.mrf.mxu0
  %v2869 = vadd.f32 0.0, %v2868
  %v2870 = vpop.f32.mrf.mxu0
  %2871 = vmatprep.mubr.bf16.mxu0 0
  %2872 = vmatmul.mubr.bf16.gmra.mxu0 %v2451
  %v2873 = vpop.f32.mrf.mxu0
  %v2874 = vadd.f32 0.0, %v2873
  %v2875 = vpop.f32.mrf.mxu0
  %v2876 = vpop.f32.mrf.mxu0
  %v2877 = vadd.f32 0.0, %v2876
  %v2878 = vpop.f32.mrf.mxu0
  %2879 = vmatprep.mubr.bf16.mxu0 0
  %2880 = vmatmul.mubr.bf16.gmra.mxu0 %v2463
  %v2881 = vpop.f32.mrf.mxu0
  %v2882 = vadd.f32 0.0, %v2881
  %v2883 = vpop.f32.mrf.mxu0
  %v2884 = vpop.f32.mrf.mxu0
  %v2885 = vadd.f32 0.0, %v2884
  %v2886 = vpop.f32.mrf.mxu0
  %2887 = vmatprep.mubr.bf16.mxu0 0
  %2888 = vmatmul.mubr.bf16.gmra.mxu0 %v2475
  %v2889 = vpop.f32.mrf.mxu0
  %v2890 = vadd.f32 0.0, %v2889
  %v2891 = vpop.f32.mrf.mxu0
  %v2892 = vpop.f32.mrf.mxu0
  %v2893 = vadd.f32 0.0, %v2892
  %v2894 = vpop.f32.mrf.mxu0
  %2895 = vmatprep.mubr.bf16.mxu0 0
  %2896 = vmatmul.mubr.bf16.gmra.mxu0 %v2487
  %v2897 = vpop.f32.mrf.mxu0
  %v2898 = vadd.f32 0.0, %v2897
  %v2899 = vpop.f32.mrf.mxu0
  %v2900 = vpop.f32.mrf.mxu0
  %v2901 = vadd.f32 0.0, %v2900
  %v2902 = vpop.f32.mrf.mxu0
  %2903 = vmatprep.mubr.bf16.mxu0 0
  %2904 = vmatmul.mubr.bf16.gmra.mxu0 %v2499
  %v2905 = vpop.f32.mrf.mxu0
  %v2906 = vadd.f32 0.0, %v2905
  %v2907 = vpop.f32.mrf.mxu0
  %v2908 = vpop.f32.mrf.mxu0
  %v2909 = vadd.f32 0.0, %v2908
  %v2910 = vpop.f32.mrf.mxu0
  %2911 = vmatprep.mubr.bf16.mxu0 0
  %2912 = vmatmul.mubr.bf16.gmra.mxu0 %v2511
  %v2913 = vpop.f32.mrf.mxu0
  %v2914 = vadd.f32 0.0, %v2913
  %v2915 = vpop.f32.mrf.mxu0
  %v2916 = vpop.f32.mrf.mxu0
  %v2917 = vadd.f32 0.0, %v2916
  %v2918 = vpop.f32.mrf.mxu0
  %2919 = vmatprep.mubr.bf16.mxu0 0
  %2920 = vmatmul.mubr.bf16.gmra.mxu0 %v2523
  %v2921 = vpop.f32.mrf.mxu0
  %v2922 = vadd.f32 0.0, %v2921
  %v2923 = vpop.f32.mrf.mxu0
  %v2924 = vpop.f32.mrf.mxu0
  %v2925 = vadd.f32 0.0, %v2924
  %v2926 = vpop.f32.mrf.mxu0
  %2927 = vmatprep.mubr.bf16.mxu0 0
  %2928 = vmatmul.mubr.bf16.gmra.mxu0 %v2535
  %v2929 = vpop.f32.mrf.mxu0
  %v2930 = vadd.f32 0.0, %v2929
  %v2931 = vpop.f32.mrf.mxu0
  %v2932 = vpop.f32.mrf.mxu0
  %v2933 = vadd.f32 0.0, %v2932
  %v2934 = vpop.f32.mrf.mxu0
  %2935 = vmatprep.mubr.bf16.mxu0 0
  %2936 = vmatmul.mubr.bf16.gmra.mxu0 %v2547
  %v2937 = vpop.f32.mrf.mxu0
  %v2938 = vadd.f32 0.0, %v2937
  %v2939 = vpop.f32.mrf.mxu0
  %v2940 = vpop.f32.mrf.mxu0
  %v2941 = vadd.f32 0.0, %v2940
  %v2942 = vpop.f32.mrf.mxu0
  %2943 = vmatprep.mubr.bf16.mxu0 0
  %2944 = vmatmul.mubr.bf16.gmra.mxu0 %v2559
  %v2945 = vpop.f32.mrf.mxu0
  %v2946 = vadd.f32 0.0, %v2945
  %v2947 = vpop.f32.mrf.mxu0
  %v2948 = vpop.f32.mrf.mxu0
  %v2949 = vadd.f32 0.0, %v2948
  %v2950 = vpop.f32.mrf.mxu0
  %2951 = vmatprep.mubr.bf16.mxu0 0
  %2952 = vmatmul.mubr.bf16.gmra.mxu0 %v2571
  %v2953 = vpop.f32.mrf.mxu0
  %v2954 = vadd.f32 0.0, %v2953
  %v2955 = vpop.f32.mrf.mxu0
  %v2956 = vpop.f32.mrf.mxu0
  %v2957 = vadd.f32 0.0, %v2956
  %v2958 = vpop.f32.mrf.mxu0
  %2959 = vmatprep.mubr.bf16.mxu0 0
  %2960 = vmatmul.mubr.bf16.gmra.mxu0 %v2583
  %v2961 = vpop.f32.mrf.mxu0
  %v2962 = vadd.f32 0.0, %v2961
  %v2963 = vpop.f32.mrf.mxu0
  %v2964 = vpop.f32.mrf.mxu0
  %v2965 = vadd.f32 0.0, %v2964
  %v2966 = vpop.f32.mrf.mxu0
  %2967 = vdwg.mxu0
  %v2984 = vunpack.c.l.b16 %v2199
  %v2985 = vunpack.c.l.b16 %v2200
  %v2986 = vunpack.c.l.b16 %v2201
  %v2987 = vunpack.c.l.b16 %v2202
  %v2988 = vunpack.c.l.b16 %v2203
  %v2989 = vunpack.c.l.b16 %v2204
  %v2990 = vunpack.c.l.b16 %v2205
  %v2991 = vunpack.c.l.b16 %v2206
  %v2992 = vunpack.c.l.b16 %v2207
  %v2993 = vunpack.c.l.b16 %v2208
  %v2994 = vunpack.c.l.b16 %v2209
  %v2995 = vunpack.c.l.b16 %v2210
  %v2996 = vunpack.c.l.b16 %v2211
  %v2997 = vunpack.c.l.b16 %v2212
  %v2998 = vunpack.c.l.b16 %v2213
  %v2999 = vunpack.c.l.b16 %v2214
  %v3000 = vpack.c.b16 %v2985, %v2984
  %v3001 = vpack.c.b16 %v2987, %v2986
  %v3002 = vpack.c.b16 %v2989, %v2988
  %v3003 = vpack.c.b16 %v2991, %v2990
  %v3004 = vpack.c.b16 %v2993, %v2992
  %v3005 = vpack.c.b16 %v2995, %v2994
  %v3006 = vpack.c.b16 %v2997, %v2996
  %v3007 = vpack.c.b16 %v2999, %v2998
  %3016 = vmatprep.subr.bf16.mxu0 0
  %3017 = vmatpush1.bf16.msra.mxu0 %v3007
  %3018 = vmatprep.subr.bf16.mxu0 0
  %3019 = vmatpush1.bf16.msra.mxu0 %v3006
  %3020 = vmatprep.subr.bf16.mxu0 0
  %3021 = vmatpush1.bf16.msra.mxu0 %v3005
  %3022 = vmatprep.subr.bf16.mxu0 0
  %3023 = vmatpush1.bf16.msra.mxu0 %v3004
  %3024 = vmatprep.subr.bf16.mxu0 0
  %3025 = vmatpush1.bf16.msra.mxu0 %v3003
  %3026 = vmatprep.subr.bf16.mxu0 0
  %3027 = vmatpush1.bf16.msra.mxu0 %v3002
  %3028 = vmatprep.subr.bf16.mxu0 0
  %3029 = vmatpush1.bf16.msra.mxu0 %v3001
  %3030 = vmatprep.subr.bf16.mxu0 0
  %3031 = vmatpush1.bf16.msra.mxu0 %v3000
  %3032 = vmatprep.subr.bf16.mxu0 0
  %3033 = vmatpush2.bf16.msra.mxu0 0
  %3034 = vmatprep.subr.bf16.mxu0 0
  %3035 = vmatpush2.bf16.msra.mxu0 0
  %3036 = vmatprep.subr.bf16.mxu0 0
  %3037 = vmatpush2.bf16.msra.mxu0 0
  %3038 = vmatprep.subr.bf16.mxu0 0
  %3039 = vmatpush2.bf16.msra.mxu0 0
  %3040 = vmatprep.subr.bf16.mxu0 0
  %3041 = vmatpush2.bf16.msra.mxu0 0
  %3042 = vmatprep.subr.bf16.mxu0 0
  %3043 = vmatpush2.bf16.msra.mxu0 0
  %3044 = vmatprep.subr.bf16.mxu0 0
  %3045 = vmatpush2.bf16.msra.mxu0 0
  %3046 = vmatprep.subr.bf16.mxu0 0
  %3047 = vmatpush2.bf16.msra.mxu0 0
  %3048 = vmatprep.mubr.bf16.mxu0 0
  %3049 = vmatmul.mubr.bf16.gmra.mxu0 0
  %v3050 = vpop.f32.mrf.mxu0
  %v3051 = vadd.f32 %v2714, %v3050
  %v3052 = vpop.f32.mrf.mxu0
  %v3053 = vpop.f32.mrf.mxu0
  %v3054 = vadd.f32 %v2717, %v3053
  %v3055 = vpop.f32.mrf.mxu0
  %3056 = vmatprep.mubr.bf16.mxu0 0
  %3057 = vmatmul.mubr.bf16.gmra.mxu0 %v2135
  %v3058 = vpop.f32.mrf.mxu0
  %v3059 = vadd.f32 %v2722, %v3058
  %v3060 = vpop.f32.mrf.mxu0
  %v3061 = vpop.f32.mrf.mxu0
  %v3062 = vadd.f32 %v2725, %v3061
  %v3063 = vpop.f32.mrf.mxu0
  %3064 = vmatprep.mubr.bf16.mxu0 0
  %3065 = vmatmul.mubr.bf16.gmra.mxu0 %v2136
  %v3066 = vpop.f32.mrf.mxu0
  %v3067 = vadd.f32 %v2730, %v3066
  %v3068 = vpop.f32.mrf.mxu0
  %v3069 = vpop.f32.mrf.mxu0
  %v3070 = vadd.f32 %v2733, %v3069
  %v3071 = vpop.f32.mrf.mxu0
  %3072 = vmatprep.mubr.bf16.mxu0 0
  %3073 = vmatmul.mubr.bf16.gmra.mxu0 %v2137
  %v3074 = vpop.f32.mrf.mxu0
  %v3075 = vadd.f32 %v2738, %v3074
  %v3076 = vpop.f32.mrf.mxu0
  %v3077 = vpop.f32.mrf.mxu0
  %v3078 = vadd.f32 %v2741, %v3077
  %v3079 = vpop.f32.mrf.mxu0
  %3080 = vmatprep.mubr.bf16.mxu0 0
  %3081 = vmatmul.mubr.bf16.gmra.mxu0 %v2138
  %v3082 = vpop.f32.mrf.mxu0
  %v3083 = vadd.f32 %v2746, %v3082
  %v3084 = vpop.f32.mrf.mxu0
  %v3085 = vpop.f32.mrf.mxu0
  %v3086 = vadd.f32 %v2749, %v3085
  %v3087 = vpop.f32.mrf.mxu0
  %3088 = vmatprep.mubr.bf16.mxu0 0
  %3089 = vmatmul.mubr.bf16.gmra.mxu0 %v2139
  %v3090 = vpop.f32.mrf.mxu0
  %v3091 = vadd.f32 %v2754, %v3090
  %v3092 = vpop.f32.mrf.mxu0
  %v3093 = vpop.f32.mrf.mxu0
  %v3094 = vadd.f32 %v2757, %v3093
  %v3095 = vpop.f32.mrf.mxu0
  %3096 = vmatprep.mubr.bf16.mxu0 0
  %3097 = vmatmul.mubr.bf16.gmra.mxu0 %v2140
  %v3098 = vpop.f32.mrf.mxu0
  %v3099 = vadd.f32 %v2762, %v3098
  %v3100 = vpop.f32.mrf.mxu0
  %v3101 = vpop.f32.mrf.mxu0
  %v3102 = vadd.f32 %v2765, %v3101
  %v3103 = vpop.f32.mrf.mxu0
  %3104 = vmatprep.mubr.bf16.mxu0 0
  %3105 = vmatmul.mubr.bf16.gmra.mxu0 %v2141
  %v3106 = vpop.f32.mrf.mxu0
  %v3107 = vadd.f32 %v2770, %v3106
  %v3108 = vpop.f32.mrf.mxu0
  %v3109 = vpop.f32.mrf.mxu0
  %v3110 = vadd.f32 %v2773, %v3109
  %v3111 = vpop.f32.mrf.mxu0
  %3112 = vmatprep.mubr.bf16.mxu0 0
  %3113 = vmatmul.mubr.bf16.gmra.mxu0 %v2142
  %v3114 = vpop.f32.mrf.mxu0
  %v3115 = vadd.f32 %v2778, %v3114
  %v3116 = vpop.f32.mrf.mxu0
  %v3117 = vpop.f32.mrf.mxu0
  %v3118 = vadd.f32 %v2781, %v3117
  %v3119 = vpop.f32.mrf.mxu0
  %3120 = vmatprep.mubr.bf16.mxu0 0
  %3121 = vmatmul.mubr.bf16.gmra.mxu0 %v2143
  %v3122 = vpop.f32.mrf.mxu0
  %v3123 = vadd.f32 %v2786, %v3122
  %v3124 = vpop.f32.mrf.mxu0
  %v3125 = vpop.f32.mrf.mxu0
  %v3126 = vadd.f32 %v2789, %v3125
  %v3127 = vpop.f32.mrf.mxu0
  %3128 = vmatprep.mubr.bf16.mxu0 0
  %3129 = vmatmul.mubr.bf16.gmra.mxu0 %v2144
  %v3130 = vpop.f32.mrf.mxu0
  %v3131 = vadd.f32 %v2794, %v3130
  %v3132 = vpop.f32.mrf.mxu0
  %v3133 = vpop.f32.mrf.mxu0
  %v3134 = vadd.f32 %v2797, %v3133
  %v3135 = vpop.f32.mrf.mxu0
  %3136 = vmatprep.mubr.bf16.mxu0 0
  %3137 = vmatmul.mubr.bf16.gmra.mxu0 %v2145
  %v3138 = vpop.f32.mrf.mxu0
  %v3139 = vadd.f32 %v2802, %v3138
  %v3140 = vpop.f32.mrf.mxu0
  %v3141 = vpop.f32.mrf.mxu0
  %v3142 = vadd.f32 %v2805, %v3141
  %v3143 = vpop.f32.mrf.mxu0
  %3144 = vmatprep.mubr.bf16.mxu0 0
  %3145 = vmatmul.mubr.bf16.gmra.mxu0 %v2146
  %v3146 = vpop.f32.mrf.mxu0
  %v3147 = vadd.f32 %v2810, %v3146
  %v3148 = vpop.f32.mrf.mxu0
  %v3149 = vpop.f32.mrf.mxu0
  %v3150 = vadd.f32 %v2813, %v3149
  %v3151 = vpop.f32.mrf.mxu0
  %3152 = vmatprep.mubr.bf16.mxu0 0
  %3153 = vmatmul.mubr.bf16.gmra.mxu0 %v2147
  %v3154 = vpop.f32.mrf.mxu0
  %v3155 = vadd.f32 %v2818, %v3154
  %v3156 = vpop.f32.mrf.mxu0
  %v3157 = vpop.f32.mrf.mxu0
  %v3158 = vadd.f32 %v2821, %v3157
  %v3159 = vpop.f32.mrf.mxu0
  %3160 = vmatprep.mubr.bf16.mxu0 0
  %3161 = vmatmul.mubr.bf16.gmra.mxu0 %v2148
  %v3162 = vpop.f32.mrf.mxu0
  %v3163 = vadd.f32 %v2826, %v3162
  %v3164 = vpop.f32.mrf.mxu0
  %v3165 = vpop.f32.mrf.mxu0
  %v3166 = vadd.f32 %v2829, %v3165
  %v3167 = vpop.f32.mrf.mxu0
  %3168 = vmatprep.mubr.bf16.mxu0 0
  %3169 = vmatmul.mubr.bf16.gmra.mxu0 %v2149
  %v3170 = vpop.f32.mrf.mxu0
  %v3171 = vadd.f32 %v2834, %v3170
  %v3172 = vpop.f32.mrf.mxu0
  %v3173 = vpop.f32.mrf.mxu0
  %v3174 = vadd.f32 %v2837, %v3173
  %v3175 = vpop.f32.mrf.mxu0
  %3176 = vmatprep.mubr.bf16.mxu0 0
  %3177 = vmatmul.mubr.bf16.gmra.mxu0 0
  %v3178 = vpop.f32.mrf.mxu0
  %v3179 = vadd.f32 %v2842, %v3178
  %v3180 = vpop.f32.mrf.mxu0
  %v3181 = vpop.f32.mrf.mxu0
  %v3182 = vadd.f32 %v2845, %v3181
  %v3183 = vpop.f32.mrf.mxu0
  %3184 = vmatprep.mubr.bf16.mxu0 0
  %3185 = vmatmul.mubr.bf16.gmra.mxu0 %v2151
  %v3186 = vpop.f32.mrf.mxu0
  %v3187 = vadd.f32 %v2850, %v3186
  %v3188 = vpop.f32.mrf.mxu0
  %v3189 = vpop.f32.mrf.mxu0
  %v3190 = vadd.f32 %v2853, %v3189
  %v3191 = vpop.f32.mrf.mxu0
  %3192 = vmatprep.mubr.bf16.mxu0 0
  %3193 = vmatmul.mubr.bf16.gmra.mxu0 %v2152
  %v3194 = vpop.f32.mrf.mxu0
  %v3195 = vadd.f32 %v2858, %v3194
  %v3196 = vpop.f32.mrf.mxu0
  %v3197 = vpop.f32.mrf.mxu0
  %v3198 = vadd.f32 %v2861, %v3197
  %v3199 = vpop.f32.mrf.mxu0
  %3200 = vmatprep.mubr.bf16.mxu0 0
  %3201 = vmatmul.mubr.bf16.gmra.mxu0 %v2153
  %v3202 = vpop.f32.mrf.mxu0
  %v3203 = vadd.f32 %v2866, %v3202
  %v3204 = vpop.f32.mrf.mxu0
  %v3205 = vpop.f32.mrf.mxu0
  %v3206 = vadd.f32 %v2869, %v3205
  %v3207 = vpop.f32.mrf.mxu0
  %3208 = vmatprep.mubr.bf16.mxu0 0
  %3209 = vmatmul.mubr.bf16.gmra.mxu0 %v2154
  %v3210 = vpop.f32.mrf.mxu0
  %v3211 = vadd.f32 %v2874, %v3210
  %v3212 = vpop.f32.mrf.mxu0
  %v3213 = vpop.f32.mrf.mxu0
  %v3214 = vadd.f32 %v2877, %v3213
  %v3215 = vpop.f32.mrf.mxu0
  %3216 = vmatprep.mubr.bf16.mxu0 0
  %3217 = vmatmul.mubr.bf16.gmra.mxu0 %v2155
  %v3218 = vpop.f32.mrf.mxu0
  %v3219 = vadd.f32 %v2882, %v3218
  %v3220 = vpop.f32.mrf.mxu0
  %v3221 = vpop.f32.mrf.mxu0
  %v3222 = vadd.f32 %v2885, %v3221
  %v3223 = vpop.f32.mrf.mxu0
  %3224 = vmatprep.mubr.bf16.mxu0 0
  %3225 = vmatmul.mubr.bf16.gmra.mxu0 %v2156
  %v3226 = vpop.f32.mrf.mxu0
  %v3227 = vadd.f32 %v2890, %v3226
  %v3228 = vpop.f32.mrf.mxu0
  %v3229 = vpop.f32.mrf.mxu0
  %v3230 = vadd.f32 %v2893, %v3229
  %v3231 = vpop.f32.mrf.mxu0
  %3232 = vmatprep.mubr.bf16.mxu0 0
  %3233 = vmatmul.mubr.bf16.gmra.mxu0 %v2157
  %v3234 = vpop.f32.mrf.mxu0
  %v3235 = vadd.f32 %v2898, %v3234
  %v3236 = vpop.f32.mrf.mxu0
  %v3237 = vpop.f32.mrf.mxu0
  %v3238 = vadd.f32 %v2901, %v3237
  %v3239 = vpop.f32.mrf.mxu0
  %3240 = vmatprep.mubr.bf16.mxu0 0
  %3241 = vmatmul.mubr.bf16.gmra.mxu0 %v2158
  %v3242 = vpop.f32.mrf.mxu0
  %v3243 = vadd.f32 %v2906, %v3242
  %v3244 = vpop.f32.mrf.mxu0
  %v3245 = vpop.f32.mrf.mxu0
  %v3246 = vadd.f32 %v2909, %v3245
  %v3247 = vpop.f32.mrf.mxu0
  %3248 = vmatprep.mubr.bf16.mxu0 0
  %3249 = vmatmul.mubr.bf16.gmra.mxu0 %v2159
  %v3250 = vpop.f32.mrf.mxu0
  %v3251 = vadd.f32 %v2914, %v3250
  %v3252 = vpop.f32.mrf.mxu0
  %v3253 = vpop.f32.mrf.mxu0
  %v3254 = vadd.f32 %v2917, %v3253
  %v3255 = vpop.f32.mrf.mxu0
  %3256 = vmatprep.mubr.bf16.mxu0 0
  %3257 = vmatmul.mubr.bf16.gmra.mxu0 %v2160
  %v3258 = vpop.f32.mrf.mxu0
  %v3259 = vadd.f32 %v2922, %v3258
  %v3260 = vpop.f32.mrf.mxu0
  %v3261 = vpop.f32.mrf.mxu0
  %v3262 = vadd.f32 %v2925, %v3261
  %v3263 = vpop.f32.mrf.mxu0
  %3264 = vmatprep.mubr.bf16.mxu0 0
  %3265 = vmatmul.mubr.bf16.gmra.mxu0 %v2161
  %v3266 = vpop.f32.mrf.mxu0
  %v3267 = vadd.f32 %v2930, %v3266
  %v3268 = vpop.f32.mrf.mxu0
  %v3269 = vpop.f32.mrf.mxu0
  %v3270 = vadd.f32 %v2933, %v3269
  %v3271 = vpop.f32.mrf.mxu0
  %3272 = vmatprep.mubr.bf16.mxu0 0
  %3273 = vmatmul.mubr.bf16.gmra.mxu0 %v2162
  %v3274 = vpop.f32.mrf.mxu0
  %v3275 = vadd.f32 %v2938, %v3274
  %v3276 = vpop.f32.mrf.mxu0
  %v3277 = vpop.f32.mrf.mxu0
  %v3278 = vadd.f32 %v2941, %v3277
  %v3279 = vpop.f32.mrf.mxu0
  %3280 = vmatprep.mubr.bf16.mxu0 0
  %3281 = vmatmul.mubr.bf16.gmra.mxu0 %v2163
  %v3282 = vpop.f32.mrf.mxu0
  %v3283 = vadd.f32 %v2946, %v3282
  %v3284 = vpop.f32.mrf.mxu0
  %v3285 = vpop.f32.mrf.mxu0
  %v3286 = vadd.f32 %v2949, %v3285
  %v3287 = vpop.f32.mrf.mxu0
  %3288 = vmatprep.mubr.bf16.mxu0 0
  %3289 = vmatmul.mubr.bf16.gmra.mxu0 %v2164
  %v3290 = vpop.f32.mrf.mxu0
  %v3291 = vadd.f32 %v2954, %v3290
  %v3292 = vpop.f32.mrf.mxu0
  %v3293 = vpop.f32.mrf.mxu0
  %v3294 = vadd.f32 %v2957, %v3293
  %v3295 = vpop.f32.mrf.mxu0
  %3296 = vmatprep.mubr.bf16.mxu0 0
  %3297 = vmatmul.mubr.bf16.gmra.mxu0 %v2165
  %v3298 = vpop.f32.mrf.mxu0
  %v3299 = vadd.f32 %v2962, %v3298
  %v3300 = vpop.f32.mrf.mxu0
  %v3301 = vpop.f32.mrf.mxu0
  %v3302 = vadd.f32 %v2965, %v3301
  %v3303 = vpop.f32.mrf.mxu0
  %3304 = vdwg.mxu0
  %vm3366 = vcmask 1046528
  %v3367 = vrot.slane 0, 1
  %v3368 = vsel %vm3366, %v3367, %v3367
  %v3369 = vrot.slane %v2135, 1
  %v3370 = vrot.slane %v2167, 1
  %v3371 = vsel %vm3366, %v3369, %v3370
  %v3372 = vrot.slane %v2136, 1
  %v3373 = vrot.slane %v2168, 1
  %v3374 = vsel %vm3366, %v3372, %v3373
  %v3375 = vrot.slane %v2137, 1
  %v3376 = vrot.slane %v2169, 1
  %v3377 = vsel %vm3366, %v3375, %v3376
  %v3378 = vrot.slane %v2138, 1
  %v3379 = vrot.slane %v2170, 1
  %v3380 = vsel %vm3366, %v3378, %v3379
  %v3381 = vrot.slane %v2139, 1
  %v3382 = vrot.slane %v2171, 1
  %v3383 = vsel %vm3366, %v3381, %v3382
  %v3384 = vrot.slane %v2140, 1
  %v3385 = vrot.slane %v2172, 1
  %v3386 = vsel %vm3366, %v3384, %v3385
  %v3387 = vrot.slane %v2141, 1
  %v3388 = vrot.slane %v2173, 1
  %v3389 = vsel %vm3366, %v3387, %v3388
  %v3390 = vrot.slane %v2142, 1
  %v3391 = vrot.slane %v2174, 1
  %v3392 = vsel %vm3366, %v3390, %v3391
  %v3393 = vrot.slane %v2143, 1
  %v3394 = vrot.slane %v2175, 1
  %v3395 = vsel %vm3366, %v3393, %v3394
  %v3396 = vrot.slane %v2144, 1
  %v3397 = vrot.slane %v2176, 1
  %v3398 = vsel %vm3366, %v3396, %v3397
  %v3399 = vrot.slane %v2145, 1
  %v3400 = vrot.slane %v2177, 1
  %v3401 = vsel %vm3366, %v3399, %v3400
  %v3402 = vrot.slane %v2146, 1
  %v3403 = vrot.slane %v2178, 1
  %v3404 = vsel %vm3366, %v3402, %v3403
  %v3405 = vrot.slane %v2147, 1
  %v3406 = vrot.slane %v2179, 1
  %v3407 = vsel %vm3366, %v3405, %v3406
  %v3408 = vrot.slane %v2148, 1
  %v3409 = vrot.slane %v2180, 1
  %v3410 = vsel %vm3366, %v3408, %v3409
  %v3411 = vrot.slane %v2149, 1
  %v3412 = vrot.slane %v2181, 1
  %v3413 = vsel %vm3366, %v3411, %v3412
  %v3414 = vrot.slane %v2151, 1
  %v3415 = vrot.slane %v2183, 1
  %v3416 = vsel %vm3366, %v3414, %v3415
  %v3417 = vrot.slane %v2152, 1
  %v3418 = vrot.slane %v2184, 1
  %v3419 = vsel %vm3366, %v3417, %v3418
  %v3420 = vrot.slane %v2153, 1
  %v3421 = vrot.slane %v2185, 1
  %v3422 = vsel %vm3366, %v3420, %v3421
  %v3423 = vrot.slane %v2154, 1
  %v3424 = vrot.slane %v2186, 1
  %v3425 = vsel %vm3366, %v3423, %v3424
  %v3426 = vrot.slane %v2155, 1
  %v3427 = vrot.slane %v2187, 1
  %v3428 = vsel %vm3366, %v3426, %v3427
  %v3429 = vrot.slane %v2156, 1
  %v3430 = vrot.slane %v2188, 1
  %v3431 = vsel %vm3366, %v3429, %v3430
  %v3432 = vrot.slane %v2157, 1
  %v3433 = vrot.slane %v2189, 1
  %v3434 = vsel %vm3366, %v3432, %v3433
  %v3435 = vrot.slane %v2158, 1
  %v3436 = vrot.slane %v2190, 1
  %v3437 = vsel %vm3366, %v3435, %v3436
  %v3438 = vrot.slane %v2159, 1
  %v3439 = vrot.slane %v2191, 1
  %v3440 = vsel %vm3366, %v3438, %v3439
  %v3441 = vrot.slane %v2160, 1
  %v3442 = vrot.slane %v2192, 1
  %v3443 = vsel %vm3366, %v3441, %v3442
  %v3444 = vrot.slane %v2161, 1
  %v3445 = vrot.slane %v2193, 1
  %v3446 = vsel %vm3366, %v3444, %v3445
  %v3447 = vrot.slane %v2162, 1
  %v3448 = vrot.slane %v2194, 1
  %v3449 = vsel %vm3366, %v3447, %v3448
  %v3450 = vrot.slane %v2163, 1
  %v3451 = vrot.slane %v2195, 1
  %v3452 = vsel %vm3366, %v3450, %v3451
  %v3453 = vrot.slane %v2164, 1
  %v3454 = vrot.slane %v2196, 1
  %v3455 = vsel %vm3366, %v3453, %v3454
  %v3456 = vrot.slane %v2165, 1
  %v3457 = vrot.slane %v2197, 1
  %v3458 = vsel %vm3366, %v3456, %v3457
  %v3490 = vld [vmem:[%s4 + $0x80] sm:$0xf]
  %v3491 = vld [vmem:[%s4 + $0x84] sm:$0xf]
  %v3492 = vld [vmem:[%s4 + $0x88] sm:$0xf]
  %v3493 = vld [vmem:[%s4 + $0x8c] sm:$0xf]
  %v3494 = vld [vmem:[%s4 + $0x90] sm:$0xf]
  %v3495 = vld [vmem:[%s4 + $0x94] sm:$0xf]
  %v3496 = vld [vmem:[%s4 + $0x98] sm:$0xf]
  %v3497 = vld [vmem:[%s4 + $0x9c] sm:$0xf]
  %v3498 = vld [vmem:[%s4 + $0xa0] sm:$0xf]
  %v3499 = vld [vmem:[%s4 + $0xa4] sm:$0xf]
  %v3500 = vld [vmem:[%s4 + $0xa8] sm:$0xf]
  %v3501 = vld [vmem:[%s4 + $0xac] sm:$0xf]
  %v3502 = vld [vmem:[%s4 + $0xb0] sm:$0xf]
  %v3503 = vld [vmem:[%s4 + $0xb4] sm:$0xf]
  %v3504 = vld [vmem:[%s4 + $0xb8] sm:$0xf]
  %v3505 = vld [vmem:[%s4 + $0xbc] sm:$0xf]
  %v3522 = vunpack.c.l.b16 %v3490
  %v3523 = vunpack.c.l.b16 %v3491
  %v3524 = vunpack.c.l.b16 %v3492
  %v3525 = vunpack.c.l.b16 %v3493
  %v3526 = vunpack.c.l.b16 %v3494
  %v3527 = vunpack.c.l.b16 %v3495
  %v3528 = vunpack.c.l.b16 %v3496
  %v3529 = vunpack.c.l.b16 %v3497
  %v3530 = vunpack.c.l.b16 %v3498
  %v3531 = vunpack.c.l.b16 %v3499
  %v3532 = vunpack.c.l.b16 %v3500
  %v3533 = vunpack.c.l.b16 %v3501
  %v3534 = vunpack.c.l.b16 %v3502
  %v3535 = vunpack.c.l.b16 %v3503
  %v3536 = vunpack.c.l.b16 %v3504
  %v3537 = vunpack.c.l.b16 %v3505
  %v3538 = vpack.c.b16 %v3523, %v3522
  %v3539 = vpack.c.b16 %v3525, %v3524
  %v3540 = vpack.c.b16 %v3527, %v3526
  %v3541 = vpack.c.b16 %v3529, %v3528
  %v3542 = vpack.c.b16 %v3531, %v3530
  %v3543 = vpack.c.b16 %v3533, %v3532
  %v3544 = vpack.c.b16 %v3535, %v3534
  %v3545 = vpack.c.b16 %v3537, %v3536
  %3554 = vmatprep.subr.bf16.mxu0 0
  %3555 = vmatpush1.bf16.msra.mxu0 %v3545
  %3556 = vmatprep.subr.bf16.mxu0 0
  %3557 = vmatpush1.bf16.msra.mxu0 %v3544
  %3558 = vmatprep.subr.bf16.mxu0 0
  %3559 = vmatpush1.bf16.msra.mxu0 %v3543
  %3560 = vmatprep.subr.bf16.mxu0 0
  %3561 = vmatpush1.bf16.msra.mxu0 %v3542
  %3562 = vmatprep.subr.bf16.mxu0 0
  %3563 = vmatpush1.bf16.msra.mxu0 %v3541
  %3564 = vmatprep.subr.bf16.mxu0 0
  %3565 = vmatpush1.bf16.msra.mxu0 %v3540
  %3566 = vmatprep.subr.bf16.mxu0 0
  %3567 = vmatpush1.bf16.msra.mxu0 %v3539
  %3568 = vmatprep.subr.bf16.mxu0 0
  %3569 = vmatpush1.bf16.msra.mxu0 %v3538
  %3570 = vmatprep.subr.bf16.mxu0 0
  %3571 = vmatpush2.bf16.msra.mxu0 0
  %3572 = vmatprep.subr.bf16.mxu0 0
  %3573 = vmatpush2.bf16.msra.mxu0 0
  %3574 = vmatprep.subr.bf16.mxu0 0
  %3575 = vmatpush2.bf16.msra.mxu0 0
  %3576 = vmatprep.subr.bf16.mxu0 0
  %3577 = vmatpush2.bf16.msra.mxu0 0
  %3578 = vmatprep.subr.bf16.mxu0 0
  %3579 = vmatpush2.bf16.msra.mxu0 0
  %3580 = vmatprep.subr.bf16.mxu0 0
  %3581 = vmatpush2.bf16.msra.mxu0 0
  %3582 = vmatprep.subr.bf16.mxu0 0
  %3583 = vmatpush2.bf16.msra.mxu0 0
  %3584 = vmatprep.subr.bf16.mxu0 0
  %3585 = vmatpush2.bf16.msra.mxu0 0
  %3586 = vmatprep.mubr.bf16.mxu0 0
  %3587 = vmatmul.mubr.bf16.gmra.mxu0 %v3368
  %v3588 = vpop.f32.mrf.mxu0
  %v3589 = vadd.f32 0.0, %v3588
  %v3590 = vpop.f32.mrf.mxu0
  %v3591 = vpop.f32.mrf.mxu0
  %v3592 = vadd.f32 0.0, %v3591
  %v3593 = vpop.f32.mrf.mxu0
  %3594 = vmatprep.mubr.bf16.mxu0 0
  %3595 = vmatmul.mubr.bf16.gmra.mxu0 %v3371
  %v3596 = vpop.f32.mrf.mxu0
  %v3597 = vadd.f32 0.0, %v3596
  %v3598 = vpop.f32.mrf.mxu0
  %v3599 = vpop.f32.mrf.mxu0
  %v3600 = vadd.f32 0.0, %v3599
  %v3601 = vpop.f32.mrf.mxu0
  %3602 = vmatprep.mubr.bf16.mxu0 0
  %3603 = vmatmul.mubr.bf16.gmra.mxu0 %v3374
  %v3604 = vpop.f32.mrf.mxu0
  %v3605 = vadd.f32 0.0, %v3604
  %v3606 = vpop.f32.mrf.mxu0
  %v3607 = vpop.f32.mrf.mxu0
  %v3608 = vadd.f32 0.0, %v3607
  %v3609 = vpop.f32.mrf.mxu0
  %3610 = vmatprep.mubr.bf16.mxu0 0
  %3611 = vmatmul.mubr.bf16.gmra.mxu0 %v3377
  %v3612 = vpop.f32.mrf.mxu0
  %v3613 = vadd.f32 0.0, %v3612
  %v3614 = vpop.f32.mrf.mxu0
  %v3615 = vpop.f32.mrf.mxu0
  %v3616 = vadd.f32 0.0, %v3615
  %v3617 = vpop.f32.mrf.mxu0
  %3618 = vmatprep.mubr.bf16.mxu0 0
  %3619 = vmatmul.mubr.bf16.gmra.mxu0 %v3380
  %v3620 = vpop.f32.mrf.mxu0
  %v3621 = vadd.f32 0.0, %v3620
  %v3622 = vpop.f32.mrf.mxu0
  %v3623 = vpop.f32.mrf.mxu0
  %v3624 = vadd.f32 0.0, %v3623
  %v3625 = vpop.f32.mrf.mxu0
  %3626 = vmatprep.mubr.bf16.mxu0 0
  %3627 = vmatmul.mubr.bf16.gmra.mxu0 %v3383
  %v3628 = vpop.f32.mrf.mxu0
  %v3629 = vadd.f32 0.0, %v3628
  %v3630 = vpop.f32.mrf.mxu0
  %v3631 = vpop.f32.mrf.mxu0
  %v3632 = vadd.f32 0.0, %v3631
  %v3633 = vpop.f32.mrf.mxu0
  %3634 = vmatprep.mubr.bf16.mxu0 0
  %3635 = vmatmul.mubr.bf16.gmra.mxu0 %v3386
  %v3636 = vpop.f32.mrf.mxu0
  %v3637 = vadd.f32 0.0, %v3636
  %v3638 = vpop.f32.mrf.mxu0
  %v3639 = vpop.f32.mrf.mxu0
  %v3640 = vadd.f32 0.0, %v3639
  %v3641 = vpop.f32.mrf.mxu0
  %3642 = vmatprep.mubr.bf16.mxu0 0
  %3643 = vmatmul.mubr.bf16.gmra.mxu0 %v3389
  %v3644 = vpop.f32.mrf.mxu0
  %v3645 = vadd.f32 0.0, %v3644
  %v3646 = vpop.f32.mrf.mxu0
  %v3647 = vpop.f32.mrf.mxu0
  %v3648 = vadd.f32 0.0, %v3647
  %v3649 = vpop.f32.mrf.mxu0
  %3650 = vmatprep.mubr.bf16.mxu0 0
  %3651 = vmatmul.mubr.bf16.gmra.mxu0 %v3392
  %v3652 = vpop.f32.mrf.mxu0
  %v3653 = vadd.f32 0.0, %v3652
  %v3654 = vpop.f32.mrf.mxu0
  %v3655 = vpop.f32.mrf.mxu0
  %v3656 = vadd.f32 0.0, %v3655
  %v3657 = vpop.f32.mrf.mxu0
  %3658 = vmatprep.mubr.bf16.mxu0 0
  %3659 = vmatmul.mubr.bf16.gmra.mxu0 %v3395
  %v3660 = vpop.f32.mrf.mxu0
  %v3661 = vadd.f32 0.0, %v3660
  %v3662 = vpop.f32.mrf.mxu0
  %v3663 = vpop.f32.mrf.mxu0
  %v3664 = vadd.f32 0.0, %v3663
  %v3665 = vpop.f32.mrf.mxu0
  %3666 = vmatprep.mubr.bf16.mxu0 0
  %3667 = vmatmul.mubr.bf16.gmra.mxu0 %v3398
  %v3668 = vpop.f32.mrf.mxu0
  %v3669 = vadd.f32 0.0, %v3668
  %v3670 = vpop.f32.mrf.mxu0
  %v3671 = vpop.f32.mrf.mxu0
  %v3672 = vadd.f32 0.0, %v3671
  %v3673 = vpop.f32.mrf.mxu0
  %3674 = vmatprep.mubr.bf16.mxu0 0
  %3675 = vmatmul.mubr.bf16.gmra.mxu0 %v3401
  %v3676 = vpop.f32.mrf.mxu0
  %v3677 = vadd.f32 0.0, %v3676
  %v3678 = vpop.f32.mrf.mxu0
  %v3679 = vpop.f32.mrf.mxu0
  %v3680 = vadd.f32 0.0, %v3679
  %v3681 = vpop.f32.mrf.mxu0
  %3682 = vmatprep.mubr.bf16.mxu0 0
  %3683 = vmatmul.mubr.bf16.gmra.mxu0 %v3404
  %v3684 = vpop.f32.mrf.mxu0
  %v3685 = vadd.f32 0.0, %v3684
  %v3686 = vpop.f32.mrf.mxu0
  %v3687 = vpop.f32.mrf.mxu0
  %v3688 = vadd.f32 0.0, %v3687
  %v3689 = vpop.f32.mrf.mxu0
  %3690 = vmatprep.mubr.bf16.mxu0 0
  %3691 = vmatmul.mubr.bf16.gmra.mxu0 %v3407
  %v3692 = vpop.f32.mrf.mxu0
  %v3693 = vadd.f32 0.0, %v3692
  %v3694 = vpop.f32.mrf.mxu0
  %v3695 = vpop.f32.mrf.mxu0
  %v3696 = vadd.f32 0.0, %v3695
  %v3697 = vpop.f32.mrf.mxu0
  %3698 = vmatprep.mubr.bf16.mxu0 0
  %3699 = vmatmul.mubr.bf16.gmra.mxu0 %v3410
  %v3700 = vpop.f32.mrf.mxu0
  %v3701 = vadd.f32 0.0, %v3700
  %v3702 = vpop.f32.mrf.mxu0
  %v3703 = vpop.f32.mrf.mxu0
  %v3704 = vadd.f32 0.0, %v3703
  %v3705 = vpop.f32.mrf.mxu0
  %3706 = vmatprep.mubr.bf16.mxu0 0
  %3707 = vmatmul.mubr.bf16.gmra.mxu0 %v3413
  %v3708 = vpop.f32.mrf.mxu0
  %v3709 = vadd.f32 0.0, %v3708
  %v3710 = vpop.f32.mrf.mxu0
  %v3711 = vpop.f32.mrf.mxu0
  %v3712 = vadd.f32 0.0, %v3711
  %v3713 = vpop.f32.mrf.mxu0
  %3714 = vmatprep.mubr.bf16.mxu0 0
  %3715 = vmatmul.mubr.bf16.gmra.mxu0 %v3368
  %v3716 = vpop.f32.mrf.mxu0
  %v3717 = vadd.f32 0.0, %v3716
  %v3718 = vpop.f32.mrf.mxu0
  %v3719 = vpop.f32.mrf.mxu0
  %v3720 = vadd.f32 0.0, %v3719
  %v3721 = vpop.f32.mrf.mxu0
  %3722 = vmatprep.mubr.bf16.mxu0 0
  %3723 = vmatmul.mubr.bf16.gmra.mxu0 %v3416
  %v3724 = vpop.f32.mrf.mxu0
  %v3725 = vadd.f32 0.0, %v3724
  %v3726 = vpop.f32.mrf.mxu0
  %v3727 = vpop.f32.mrf.mxu0
  %v3728 = vadd.f32 0.0, %v3727
  %v3729 = vpop.f32.mrf.mxu0
  %3730 = vmatprep.mubr.bf16.mxu0 0
  %3731 = vmatmul.mubr.bf16.gmra.mxu0 %v3419
  %v3732 = vpop.f32.mrf.mxu0
  %v3733 = vadd.f32 0.0, %v3732
  %v3734 = vpop.f32.mrf.mxu0
  %v3735 = vpop.f32.mrf.mxu0
  %v3736 = vadd.f32 0.0, %v3735
  %v3737 = vpop.f32.mrf.mxu0
  %3738 = vmatprep.mubr.bf16.mxu0 0
  %3739 = vmatmul.mubr.bf16.gmra.mxu0 %v3422
  %v3740 = vpop.f32.mrf.mxu0
  %v3741 = vadd.f32 0.0, %v3740
  %v3742 = vpop.f32.mrf.mxu0
  %v3743 = vpop.f32.mrf.mxu0
  %v3744 = vadd.f32 0.0, %v3743
  %v3745 = vpop.f32.mrf.mxu0
  %3746 = vmatprep.mubr.bf16.mxu0 0
  %3747 = vmatmul.mubr.bf16.gmra.mxu0 %v3425
  %v3748 = vpop.f32.mrf.mxu0
  %v3749 = vadd.f32 0.0, %v3748
  %v3750 = vpop.f32.mrf.mxu0
  %v3751 = vpop.f32.mrf.mxu0
  %v3752 = vadd.f32 0.0, %v3751
  %v3753 = vpop.f32.mrf.mxu0
  %3754 = vmatprep.mubr.bf16.mxu0 0
  %3755 = vmatmul.mubr.bf16.gmra.mxu0 %v3428
  %v3756 = vpop.f32.mrf.mxu0
  %v3757 = vadd.f32 0.0, %v3756
  %v3758 = vpop.f32.mrf.mxu0
  %v3759 = vpop.f32.mrf.mxu0
  %v3760 = vadd.f32 0.0, %v3759
  %v3761 = vpop.f32.mrf.mxu0
  %3762 = vmatprep.mubr.bf16.mxu0 0
  %3763 = vmatmul.mubr.bf16.gmra.mxu0 %v3431
  %v3764 = vpop.f32.mrf.mxu0
  %v3765 = vadd.f32 0.0, %v3764
  %v3766 = vpop.f32.mrf.mxu0
  %v3767 = vpop.f32.mrf.mxu0
  %v3768 = vadd.f32 0.0, %v3767
  %v3769 = vpop.f32.mrf.mxu0
  %3770 = vmatprep.mubr.bf16.mxu0 0
  %3771 = vmatmul.mubr.bf16.gmra.mxu0 %v3434
  %v3772 = vpop.f32.mrf.mxu0
  %v3773 = vadd.f32 0.0, %v3772
  %v3774 = vpop.f32.mrf.mxu0
  %v3775 = vpop.f32.mrf.mxu0
  %v3776 = vadd.f32 0.0, %v3775
  %v3777 = vpop.f32.mrf.mxu0
  %3778 = vmatprep.mubr.bf16.mxu0 0
  %3779 = vmatmul.mubr.bf16.gmra.mxu0 %v3437
  %v3780 = vpop.f32.mrf.mxu0
  %v3781 = vadd.f32 0.0, %v3780
  %v3782 = vpop.f32.mrf.mxu0
  %v3783 = vpop.f32.mrf.mxu0
  %v3784 = vadd.f32 0.0, %v3783
  %v3785 = vpop.f32.mrf.mxu0
  %3786 = vmatprep.mubr.bf16.mxu0 0
  %3787 = vmatmul.mubr.bf16.gmra.mxu0 %v3440
  %v3788 = vpop.f32.mrf.mxu0
  %v3789 = vadd.f32 0.0, %v3788
  %v3790 = vpop.f32.mrf.mxu0
  %v3791 = vpop.f32.mrf.mxu0
  %v3792 = vadd.f32 0.0, %v3791
  %v3793 = vpop.f32.mrf.mxu0
  %3794 = vmatprep.mubr.bf16.mxu0 0
  %3795 = vmatmul.mubr.bf16.gmra.mxu0 %v3443
  %v3796 = vpop.f32.mrf.mxu0
  %v3797 = vadd.f32 0.0, %v3796
  %v3798 = vpop.f32.mrf.mxu0
  %v3799 = vpop.f32.mrf.mxu0
  %v3800 = vadd.f32 0.0, %v3799
  %v3801 = vpop.f32.mrf.mxu0
  %3802 = vmatprep.mubr.bf16.mxu0 0
  %3803 = vmatmul.mubr.bf16.gmra.mxu0 %v3446
  %v3804 = vpop.f32.mrf.mxu0
  %v3805 = vadd.f32 0.0, %v3804
  %v3806 = vpop.f32.mrf.mxu0
  %v3807 = vpop.f32.mrf.mxu0
  %v3808 = vadd.f32 0.0, %v3807
  %v3809 = vpop.f32.mrf.mxu0
  %3810 = vmatprep.mubr.bf16.mxu0 0
  %3811 = vmatmul.mubr.bf16.gmra.mxu0 %v3449
  %v3812 = vpop.f32.mrf.mxu0
  %v3813 = vadd.f32 0.0, %v3812
  %v3814 = vpop.f32.mrf.mxu0
  %v3815 = vpop.f32.mrf.mxu0
  %v3816 = vadd.f32 0.0, %v3815
  %v3817 = vpop.f32.mrf.mxu0
  %3818 = vmatprep.mubr.bf16.mxu0 0
  %3819 = vmatmul.mubr.bf16.gmra.mxu0 %v3452
  %v3820 = vpop.f32.mrf.mxu0
  %v3821 = vadd.f32 0.0, %v3820
  %v3822 = vpop.f32.mrf.mxu0
  %v3823 = vpop.f32.mrf.mxu0
  %v3824 = vadd.f32 0.0, %v3823
  %v3825 = vpop.f32.mrf.mxu0
  %3826 = vmatprep.mubr.bf16.mxu0 0
  %3827 = vmatmul.mubr.bf16.gmra.mxu0 %v3455
  %v3828 = vpop.f32.mrf.mxu0
  %v3829 = vadd.f32 0.0, %v3828
  %v3830 = vpop.f32.mrf.mxu0
  %v3831 = vpop.f32.mrf.mxu0
  %v3832 = vadd.f32 0.0, %v3831
  %v3833 = vpop.f32.mrf.mxu0
  %3834 = vmatprep.mubr.bf16.mxu0 0
  %3835 = vmatmul.mubr.bf16.gmra.mxu0 %v3458
  %v3836 = vpop.f32.mrf.mxu0
  %v3837 = vadd.f32 0.0, %v3836
  %v3838 = vpop.f32.mrf.mxu0
  %v3839 = vpop.f32.mrf.mxu0
  %v3840 = vadd.f32 0.0, %v3839
  %v3841 = vpop.f32.mrf.mxu0
  %3842 = vdwg.mxu0
  %v3843 = vadd.f32 %v3051, %v3589
  %v3844 = vadd.f32 %v3054, %v3592
  %v3845 = vadd.f32 %v3059, %v3597
  %v3846 = vadd.f32 %v3062, %v3600
  %v3847 = vadd.f32 %v3067, %v3605
  %v3848 = vadd.f32 %v3070, %v3608
  %v3849 = vadd.f32 %v3075, %v3613
  %v3850 = vadd.f32 %v3078, %v3616
  %v3851 = vadd.f32 %v3083, %v3621
  %v3852 = vadd.f32 %v3086, %v3624
  %v3853 = vadd.f32 %v3091, %v3629
  %v3854 = vadd.f32 %v3094, %v3632
  %v3855 = vadd.f32 %v3099, %v3637
  %v3856 = vadd.f32 %v3102, %v3640
  %v3857 = vadd.f32 %v3107, %v3645
  %v3858 = vadd.f32 %v3110, %v3648
  %v3859 = vadd.f32 %v3115, %v3653
  %v3860 = vadd.f32 %v3118, %v3656
  %v3861 = vadd.f32 %v3123, %v3661
  %v3862 = vadd.f32 %v3126, %v3664
  %v3863 = vadd.f32 %v3131, %v3669
  %v3864 = vadd.f32 %v3134, %v3672
  %v3865 = vadd.f32 %v3139, %v3677
  %v3866 = vadd.f32 %v3142, %v3680
  %v3867 = vadd.f32 %v3147, %v3685
  %v3868 = vadd.f32 %v3150, %v3688
  %v3869 = vadd.f32 %v3155, %v3693
  %v3870 = vadd.f32 %v3158, %v3696
  %v3871 = vadd.f32 %v3163, %v3701
  %v3872 = vadd.f32 %v3166, %v3704
  %v3873 = vadd.f32 %v3171, %v3709
  %v3874 = vadd.f32 %v3174, %v3712
  %v3875 = vadd.f32 %v3179, %v3717
  %v3876 = vadd.f32 %v3182, %v3720
  %v3877 = vadd.f32 %v3187, %v3725
  %v3878 = vadd.f32 %v3190, %v3728
  %v3879 = vadd.f32 %v3195, %v3733
  %v3880 = vadd.f32 %v3198, %v3736
  %v3881 = vadd.f32 %v3203, %v3741
  %v3882 = vadd.f32 %v3206, %v3744
  %v3883 = vadd.f32 %v3211, %v3749
  %v3884 = vadd.f32 %v3214, %v3752
  %v3885 = vadd.f32 %v3219, %v3757
  %v3886 = vadd.f32 %v3222, %v3760
  %v3887 = vadd.f32 %v3227, %v3765
  %v3888 = vadd.f32 %v3230, %v3768
  %v3889 = vadd.f32 %v3235, %v3773
  %v3890 = vadd.f32 %v3238, %v3776
  %v3891 = vadd.f32 %v3243, %v3781
  %v3892 = vadd.f32 %v3246, %v3784
  %v3893 = vadd.f32 %v3251, %v3789
  %v3894 = vadd.f32 %v3254, %v3792
  %v3895 = vadd.f32 %v3259, %v3797
  %v3896 = vadd.f32 %v3262, %v3800
  %v3897 = vadd.f32 %v3267, %v3805
  %v3898 = vadd.f32 %v3270, %v3808
  %v3899 = vadd.f32 %v3275, %v3813
  %v3900 = vadd.f32 %v3278, %v3816
  %v3901 = vadd.f32 %v3283, %v3821
  %v3902 = vadd.f32 %v3286, %v3824
  %v3903 = vadd.f32 %v3291, %v3829
  %v3904 = vadd.f32 %v3294, %v3832
  %v3905 = vadd.f32 %v3299, %v3837
  %v3906 = vadd.f32 %v3302, %v3840
  %v3907 = vld [vmem:[%s4 + $0xc0] sm:$0xf]
  %v3908 = vld [vmem:[%s4 + $0xc4] sm:$0xf]
  %v3909 = vld [vmem:[%s4 + $0xc8] sm:$0xf]
  %v3910 = vld [vmem:[%s4 + $0xcc] sm:$0xf]
  %v3911 = vld [vmem:[%s4 + $0xd0] sm:$0xf]
  %v3912 = vld [vmem:[%s4 + $0xd4] sm:$0xf]
  %v3913 = vld [vmem:[%s4 + $0xd8] sm:$0xf]
  %v3914 = vld [vmem:[%s4 + $0xdc] sm:$0xf]
  %v3915 = vld [vmem:[%s4 + $0xe0] sm:$0xf]
  %v3916 = vld [vmem:[%s4 + $0xe4] sm:$0xf]
  %v3917 = vld [vmem:[%s4 + $0xe8] sm:$0xf]
  %v3918 = vld [vmem:[%s4 + $0xec] sm:$0xf]
  %v3919 = vld [vmem:[%s4 + $0xf0] sm:$0xf]
  %v3920 = vld [vmem:[%s4 + $0xf4] sm:$0xf]
  %v3921 = vld [vmem:[%s4 + $0xf8] sm:$0xf]
  %v3922 = vld [vmem:[%s4 + $0xfc] sm:$0xf]
  %v3939 = vunpack.c.l.b16 %v3907
  %v3940 = vunpack.c.l.b16 %v3908
  %v3941 = vunpack.c.l.b16 %v3909
  %v3942 = vunpack.c.l.b16 %v3910
  %v3943 = vunpack.c.l.b16 %v3911
  %v3944 = vunpack.c.l.b16 %v3912
  %v3945 = vunpack.c.l.b16 %v3913
  %v3946 = vunpack.c.l.b16 %v3914
  %v3947 = vunpack.c.l.b16 %v3915
  %v3948 = vunpack.c.l.b16 %v3916
  %v3949 = vunpack.c.l.b16 %v3917
  %v3950 = vunpack.c.l.b16 %v3918
  %v3951 = vunpack.c.l.b16 %v3919
  %v3952 = vunpack.c.l.b16 %v3920
  %v3953 = vunpack.c.l.b16 %v3921
  %v3954 = vunpack.c.l.b16 %v3922
  %v3955 = vpack.c.b16 %v3940, %v3939
  %v3956 = vpack.c.b16 %v3942, %v3941
  %v3957 = vpack.c.b16 %v3944, %v3943
  %v3958 = vpack.c.b16 %v3946, %v3945
  %v3959 = vpack.c.b16 %v3948, %v3947
  %v3960 = vpack.c.b16 %v3950, %v3949
  %v3961 = vpack.c.b16 %v3952, %v3951
  %v3962 = vpack.c.b16 %v3954, %v3953
  %3971 = vmatprep.subr.bf16.mxu0 0
  %3972 = vmatpush1.bf16.msra.mxu0 %v3962
  %3973 = vmatprep.subr.bf16.mxu0 0
  %3974 = vmatpush1.bf16.msra.mxu0 %v3961
  %3975 = vmatprep.subr.bf16.mxu0 0
  %3976 = vmatpush1.bf16.msra.mxu0 %v3960
  %3977 = vmatprep.subr.bf16.mxu0 0
  %3978 = vmatpush1.bf16.msra.mxu0 %v3959
  %3979 = vmatprep.subr.bf16.mxu0 0
  %3980 = vmatpush1.bf16.msra.mxu0 %v3958
  %3981 = vmatprep.subr.bf16.mxu0 0
  %3982 = vmatpush1.bf16.msra.mxu0 %v3957
  %3983 = vmatprep.subr.bf16.mxu0 0
  %3984 = vmatpush1.bf16.msra.mxu0 %v3956
  %3985 = vmatprep.subr.bf16.mxu0 0
  %3986 = vmatpush1.bf16.msra.mxu0 %v3955
  %3987 = vmatprep.subr.bf16.mxu0 0
  %3988 = vmatpush2.bf16.msra.mxu0 0
  %3989 = vmatprep.subr.bf16.mxu0 0
  %3990 = vmatpush2.bf16.msra.mxu0 0
  %3991 = vmatprep.subr.bf16.mxu0 0
  %3992 = vmatpush2.bf16.msra.mxu0 0
  %3993 = vmatprep.subr.bf16.mxu0 0
  %3994 = vmatpush2.bf16.msra.mxu0 0
  %3995 = vmatprep.subr.bf16.mxu0 0
  %3996 = vmatpush2.bf16.msra.mxu0 0
  %3997 = vmatprep.subr.bf16.mxu0 0
  %3998 = vmatpush2.bf16.msra.mxu0 0
  %3999 = vmatprep.subr.bf16.mxu0 0
  %4000 = vmatpush2.bf16.msra.mxu0 0
  %4001 = vmatprep.subr.bf16.mxu0 0
  %4002 = vmatpush2.bf16.msra.mxu0 0
  %4003 = vmatprep.mubr.bf16.mxu0 0
  %4004 = vmatmul.mubr.bf16.gmra.mxu0 %v2135
  %v4005 = vpop.f32.mrf.mxu0
  %v4006 = vadd.f32 0.0, %v4005
  %v4007 = vpop.f32.mrf.mxu0
  %v4008 = vpop.f32.mrf.mxu0
  %v4009 = vadd.f32 0.0, %v4008
  %v4010 = vpop.f32.mrf.mxu0
  %4011 = vmatprep.mubr.bf16.mxu0 0
  %4012 = vmatmul.mubr.bf16.gmra.mxu0 %v2136
  %v4013 = vpop.f32.mrf.mxu0
  %v4014 = vadd.f32 0.0, %v4013
  %v4015 = vpop.f32.mrf.mxu0
  %v4016 = vpop.f32.mrf.mxu0
  %v4017 = vadd.f32 0.0, %v4016
  %v4018 = vpop.f32.mrf.mxu0
  %4019 = vmatprep.mubr.bf16.mxu0 0
  %4020 = vmatmul.mubr.bf16.gmra.mxu0 %v2137
  %v4021 = vpop.f32.mrf.mxu0
  %v4022 = vadd.f32 0.0, %v4021
  %v4023 = vpop.f32.mrf.mxu0
  %v4024 = vpop.f32.mrf.mxu0
  %v4025 = vadd.f32 0.0, %v4024
  %v4026 = vpop.f32.mrf.mxu0
  %4027 = vmatprep.mubr.bf16.mxu0 0
  %4028 = vmatmul.mubr.bf16.gmra.mxu0 %v2138
  %v4029 = vpop.f32.mrf.mxu0
  %v4030 = vadd.f32 0.0, %v4029
  %v4031 = vpop.f32.mrf.mxu0
  %v4032 = vpop.f32.mrf.mxu0
  %v4033 = vadd.f32 0.0, %v4032
  %v4034 = vpop.f32.mrf.mxu0
  %4035 = vmatprep.mubr.bf16.mxu0 0
  %4036 = vmatmul.mubr.bf16.gmra.mxu0 %v2139
  %v4037 = vpop.f32.mrf.mxu0
  %v4038 = vadd.f32 0.0, %v4037
  %v4039 = vpop.f32.mrf.mxu0
  %v4040 = vpop.f32.mrf.mxu0
  %v4041 = vadd.f32 0.0, %v4040
  %v4042 = vpop.f32.mrf.mxu0
  %4043 = vmatprep.mubr.bf16.mxu0 0
  %4044 = vmatmul.mubr.bf16.gmra.mxu0 %v2140
  %v4045 = vpop.f32.mrf.mxu0
  %v4046 = vadd.f32 0.0, %v4045
  %v4047 = vpop.f32.mrf.mxu0
  %v4048 = vpop.f32.mrf.mxu0
  %v4049 = vadd.f32 0.0, %v4048
  %v4050 = vpop.f32.mrf.mxu0
  %4051 = vmatprep.mubr.bf16.mxu0 0
  %4052 = vmatmul.mubr.bf16.gmra.mxu0 %v2141
  %v4053 = vpop.f32.mrf.mxu0
  %v4054 = vadd.f32 0.0, %v4053
  %v4055 = vpop.f32.mrf.mxu0
  %v4056 = vpop.f32.mrf.mxu0
  %v4057 = vadd.f32 0.0, %v4056
  %v4058 = vpop.f32.mrf.mxu0
  %4059 = vmatprep.mubr.bf16.mxu0 0
  %4060 = vmatmul.mubr.bf16.gmra.mxu0 %v2142
  %v4061 = vpop.f32.mrf.mxu0
  %v4062 = vadd.f32 0.0, %v4061
  %v4063 = vpop.f32.mrf.mxu0
  %v4064 = vpop.f32.mrf.mxu0
  %v4065 = vadd.f32 0.0, %v4064
  %v4066 = vpop.f32.mrf.mxu0
  %4067 = vmatprep.mubr.bf16.mxu0 0
  %4068 = vmatmul.mubr.bf16.gmra.mxu0 %v2143
  %v4069 = vpop.f32.mrf.mxu0
  %v4070 = vadd.f32 0.0, %v4069
  %v4071 = vpop.f32.mrf.mxu0
  %v4072 = vpop.f32.mrf.mxu0
  %v4073 = vadd.f32 0.0, %v4072
  %v4074 = vpop.f32.mrf.mxu0
  %4075 = vmatprep.mubr.bf16.mxu0 0
  %4076 = vmatmul.mubr.bf16.gmra.mxu0 %v2144
  %v4077 = vpop.f32.mrf.mxu0
  %v4078 = vadd.f32 0.0, %v4077
  %v4079 = vpop.f32.mrf.mxu0
  %v4080 = vpop.f32.mrf.mxu0
  %v4081 = vadd.f32 0.0, %v4080
  %v4082 = vpop.f32.mrf.mxu0
  %4083 = vmatprep.mubr.bf16.mxu0 0
  %4084 = vmatmul.mubr.bf16.gmra.mxu0 %v2145
  %v4085 = vpop.f32.mrf.mxu0
  %v4086 = vadd.f32 0.0, %v4085
  %v4087 = vpop.f32.mrf.mxu0
  %v4088 = vpop.f32.mrf.mxu0
  %v4089 = vadd.f32 0.0, %v4088
  %v4090 = vpop.f32.mrf.mxu0
  %4091 = vmatprep.mubr.bf16.mxu0 0
  %4092 = vmatmul.mubr.bf16.gmra.mxu0 %v2146
  %v4093 = vpop.f32.mrf.mxu0
  %v4094 = vadd.f32 0.0, %v4093
  %v4095 = vpop.f32.mrf.mxu0
  %v4096 = vpop.f32.mrf.mxu0
  %v4097 = vadd.f32 0.0, %v4096
  %v4098 = vpop.f32.mrf.mxu0
  %4099 = vmatprep.mubr.bf16.mxu0 0
  %4100 = vmatmul.mubr.bf16.gmra.mxu0 %v2147
  %v4101 = vpop.f32.mrf.mxu0
  %v4102 = vadd.f32 0.0, %v4101
  %v4103 = vpop.f32.mrf.mxu0
  %v4104 = vpop.f32.mrf.mxu0
  %v4105 = vadd.f32 0.0, %v4104
  %v4106 = vpop.f32.mrf.mxu0
  %4107 = vmatprep.mubr.bf16.mxu0 0
  %4108 = vmatmul.mubr.bf16.gmra.mxu0 %v2148
  %v4109 = vpop.f32.mrf.mxu0
  %v4110 = vadd.f32 0.0, %v4109
  %v4111 = vpop.f32.mrf.mxu0
  %v4112 = vpop.f32.mrf.mxu0
  %v4113 = vadd.f32 0.0, %v4112
  %v4114 = vpop.f32.mrf.mxu0
  %4115 = vmatprep.mubr.bf16.mxu0 0
  %4116 = vmatmul.mubr.bf16.gmra.mxu0 %v2149
  %v4117 = vpop.f32.mrf.mxu0
  %v4118 = vadd.f32 0.0, %v4117
  %v4119 = vpop.f32.mrf.mxu0
  %v4120 = vpop.f32.mrf.mxu0
  %v4121 = vadd.f32 0.0, %v4120
  %v4122 = vpop.f32.mrf.mxu0
  %4123 = vmatprep.mubr.bf16.mxu0 0
  %4124 = vmatmul.mubr.bf16.gmra.mxu0 %v2150
  %v4125 = vpop.f32.mrf.mxu0
  %v4126 = vadd.f32 0.0, %v4125
  %v4127 = vpop.f32.mrf.mxu0
  %v4128 = vpop.f32.mrf.mxu0
  %v4129 = vadd.f32 0.0, %v4128
  %v4130 = vpop.f32.mrf.mxu0
  %4131 = vmatprep.mubr.bf16.mxu0 0
  %4132 = vmatmul.mubr.bf16.gmra.mxu0 %v2151
  %v4133 = vpop.f32.mrf.mxu0
  %v4134 = vadd.f32 0.0, %v4133
  %v4135 = vpop.f32.mrf.mxu0
  %v4136 = vpop.f32.mrf.mxu0
  %v4137 = vadd.f32 0.0, %v4136
  %v4138 = vpop.f32.mrf.mxu0
  %4139 = vmatprep.mubr.bf16.mxu0 0
  %4140 = vmatmul.mubr.bf16.gmra.mxu0 %v2152
  %v4141 = vpop.f32.mrf.mxu0
  %v4142 = vadd.f32 0.0, %v4141
  %v4143 = vpop.f32.mrf.mxu0
  %v4144 = vpop.f32.mrf.mxu0
  %v4145 = vadd.f32 0.0, %v4144
  %v4146 = vpop.f32.mrf.mxu0
  %4147 = vmatprep.mubr.bf16.mxu0 0
  %4148 = vmatmul.mubr.bf16.gmra.mxu0 %v2153
  %v4149 = vpop.f32.mrf.mxu0
  %v4150 = vadd.f32 0.0, %v4149
  %v4151 = vpop.f32.mrf.mxu0
  %v4152 = vpop.f32.mrf.mxu0
  %v4153 = vadd.f32 0.0, %v4152
  %v4154 = vpop.f32.mrf.mxu0
  %4155 = vmatprep.mubr.bf16.mxu0 0
  %4156 = vmatmul.mubr.bf16.gmra.mxu0 %v2154
  %v4157 = vpop.f32.mrf.mxu0
  %v4158 = vadd.f32 0.0, %v4157
  %v4159 = vpop.f32.mrf.mxu0
  %v4160 = vpop.f32.mrf.mxu0
  %v4161 = vadd.f32 0.0, %v4160
  %v4162 = vpop.f32.mrf.mxu0
  %4163 = vmatprep.mubr.bf16.mxu0 0
  %4164 = vmatmul.mubr.bf16.gmra.mxu0 %v2155
  %v4165 = vpop.f32.mrf.mxu0
  %v4166 = vadd.f32 0.0, %v4165
  %v4167 = vpop.f32.mrf.mxu0
  %v4168 = vpop.f32.mrf.mxu0
  %v4169 = vadd.f32 0.0, %v4168
  %v4170 = vpop.f32.mrf.mxu0
  %4171 = vmatprep.mubr.bf16.mxu0 0
  %4172 = vmatmul.mubr.bf16.gmra.mxu0 %v2156
  %v4173 = vpop.f32.mrf.mxu0
  %v4174 = vadd.f32 0.0, %v4173
  %v4175 = vpop.f32.mrf.mxu0
  %v4176 = vpop.f32.mrf.mxu0
  %v4177 = vadd.f32 0.0, %v4176
  %v4178 = vpop.f32.mrf.mxu0
  %4179 = vmatprep.mubr.bf16.mxu0 0
  %4180 = vmatmul.mubr.bf16.gmra.mxu0 %v2157
  %v4181 = vpop.f32.mrf.mxu0
  %v4182 = vadd.f32 0.0, %v4181
  %v4183 = vpop.f32.mrf.mxu0
  %v4184 = vpop.f32.mrf.mxu0
  %v4185 = vadd.f32 0.0, %v4184
  %v4186 = vpop.f32.mrf.mxu0
  %4187 = vmatprep.mubr.bf16.mxu0 0
  %4188 = vmatmul.mubr.bf16.gmra.mxu0 %v2158
  %v4189 = vpop.f32.mrf.mxu0
  %v4190 = vadd.f32 0.0, %v4189
  %v4191 = vpop.f32.mrf.mxu0
  %v4192 = vpop.f32.mrf.mxu0
  %v4193 = vadd.f32 0.0, %v4192
  %v4194 = vpop.f32.mrf.mxu0
  %4195 = vmatprep.mubr.bf16.mxu0 0
  %4196 = vmatmul.mubr.bf16.gmra.mxu0 %v2159
  %v4197 = vpop.f32.mrf.mxu0
  %v4198 = vadd.f32 0.0, %v4197
  %v4199 = vpop.f32.mrf.mxu0
  %v4200 = vpop.f32.mrf.mxu0
  %v4201 = vadd.f32 0.0, %v4200
  %v4202 = vpop.f32.mrf.mxu0
  %4203 = vmatprep.mubr.bf16.mxu0 0
  %4204 = vmatmul.mubr.bf16.gmra.mxu0 %v2160
  %v4205 = vpop.f32.mrf.mxu0
  %v4206 = vadd.f32 0.0, %v4205
  %v4207 = vpop.f32.mrf.mxu0
  %v4208 = vpop.f32.mrf.mxu0
  %v4209 = vadd.f32 0.0, %v4208
  %v4210 = vpop.f32.mrf.mxu0
  %4211 = vmatprep.mubr.bf16.mxu0 0
  %4212 = vmatmul.mubr.bf16.gmra.mxu0 %v2161
  %v4213 = vpop.f32.mrf.mxu0
  %v4214 = vadd.f32 0.0, %v4213
  %v4215 = vpop.f32.mrf.mxu0
  %v4216 = vpop.f32.mrf.mxu0
  %v4217 = vadd.f32 0.0, %v4216
  %v4218 = vpop.f32.mrf.mxu0
  %4219 = vmatprep.mubr.bf16.mxu0 0
  %4220 = vmatmul.mubr.bf16.gmra.mxu0 %v2162
  %v4221 = vpop.f32.mrf.mxu0
  %v4222 = vadd.f32 0.0, %v4221
  %v4223 = vpop.f32.mrf.mxu0
  %v4224 = vpop.f32.mrf.mxu0
  %v4225 = vadd.f32 0.0, %v4224
  %v4226 = vpop.f32.mrf.mxu0
  %4227 = vmatprep.mubr.bf16.mxu0 0
  %4228 = vmatmul.mubr.bf16.gmra.mxu0 %v2163
  %v4229 = vpop.f32.mrf.mxu0
  %v4230 = vadd.f32 0.0, %v4229
  %v4231 = vpop.f32.mrf.mxu0
  %v4232 = vpop.f32.mrf.mxu0
  %v4233 = vadd.f32 0.0, %v4232
  %v4234 = vpop.f32.mrf.mxu0
  %4235 = vmatprep.mubr.bf16.mxu0 0
  %4236 = vmatmul.mubr.bf16.gmra.mxu0 %v2164
  %v4237 = vpop.f32.mrf.mxu0
  %v4238 = vadd.f32 0.0, %v4237
  %v4239 = vpop.f32.mrf.mxu0
  %v4240 = vpop.f32.mrf.mxu0
  %v4241 = vadd.f32 0.0, %v4240
  %v4242 = vpop.f32.mrf.mxu0
  %4243 = vmatprep.mubr.bf16.mxu0 0
  %4244 = vmatmul.mubr.bf16.gmra.mxu0 %v2165
  %v4245 = vpop.f32.mrf.mxu0
  %v4246 = vadd.f32 0.0, %v4245
  %v4247 = vpop.f32.mrf.mxu0
  %v4248 = vpop.f32.mrf.mxu0
  %v4249 = vadd.f32 0.0, %v4248
  %v4250 = vpop.f32.mrf.mxu0
  %4251 = vmatprep.mubr.bf16.mxu0 0
  %4252 = vmatmul.mubr.bf16.gmra.mxu0 %v2166
  %v4253 = vpop.f32.mrf.mxu0
  %v4254 = vadd.f32 0.0, %v4253
  %v4255 = vpop.f32.mrf.mxu0
  %v4256 = vpop.f32.mrf.mxu0
  %v4257 = vadd.f32 0.0, %v4256
  %v4258 = vpop.f32.mrf.mxu0
  %4259 = vdwg.mxu0
  %v4260 = vadd.f32 %v3843, %v4006
  %v4261 = vadd.f32 %v3844, %v4009
  %v4262 = vadd.f32 %v3845, %v4014
  %v4263 = vadd.f32 %v3846, %v4017
  %v4264 = vadd.f32 %v3847, %v4022
  %v4265 = vadd.f32 %v3848, %v4025
  %v4266 = vadd.f32 %v3849, %v4030
  %v4267 = vadd.f32 %v3850, %v4033
  %v4268 = vadd.f32 %v3851, %v4038
  %v4269 = vadd.f32 %v3852, %v4041
  %v4270 = vadd.f32 %v3853, %v4046
  %v4271 = vadd.f32 %v3854, %v4049
  %v4272 = vadd.f32 %v3855, %v4054
  %v4273 = vadd.f32 %v3856, %v4057
  %v4274 = vadd.f32 %v3857, %v4062
  %v4275 = vadd.f32 %v3858, %v4065
  %v4276 = vadd.f32 %v3859, %v4070
  %v4277 = vadd.f32 %v3860, %v4073
  %v4278 = vadd.f32 %v3861, %v4078
  %v4279 = vadd.f32 %v3862, %v4081
  %v4280 = vadd.f32 %v3863, %v4086
  %v4281 = vadd.f32 %v3864, %v4089
  %v4282 = vadd.f32 %v3865, %v4094
  %v4283 = vadd.f32 %v3866, %v4097
  %v4284 = vadd.f32 %v3867, %v4102
  %v4285 = vadd.f32 %v3868, %v4105
  %v4286 = vadd.f32 %v3869, %v4110
  %v4287 = vadd.f32 %v3870, %v4113
  %v4288 = vadd.f32 %v3871, %v4118
  %v4289 = vadd.f32 %v3872, %v4121
  %v4290 = vadd.f32 %v3873, %v4126
  %v4291 = vadd.f32 %v3874, %v4129
  %v4292 = vadd.f32 %v3875, %v4134
  %v4293 = vadd.f32 %v3876, %v4137
  %v4294 = vadd.f32 %v3877, %v4142
  %v4295 = vadd.f32 %v3878, %v4145
  %v4296 = vadd.f32 %v3879, %v4150
  %v4297 = vadd.f32 %v3880, %v4153
  %v4298 = vadd.f32 %v3881, %v4158
  %v4299 = vadd.f32 %v3882, %v4161
  %v4300 = vadd.f32 %v3883, %v4166
  %v4301 = vadd.f32 %v3884, %v4169
  %v4302 = vadd.f32 %v3885, %v4174
  %v4303 = vadd.f32 %v3886, %v4177
  %v4304 = vadd.f32 %v3887, %v4182
  %v4305 = vadd.f32 %v3888, %v4185
  %v4306 = vadd.f32 %v3889, %v4190
  %v4307 = vadd.f32 %v3890, %v4193
  %v4308 = vadd.f32 %v3891, %v4198
  %v4309 = vadd.f32 %v3892, %v4201
  %v4310 = vadd.f32 %v3893, %v4206
  %v4311 = vadd.f32 %v3894, %v4209
  %v4312 = vadd.f32 %v3895, %v4214
  %v4313 = vadd.f32 %v3896, %v4217
  %v4314 = vadd.f32 %v3897, %v4222
  %v4315 = vadd.f32 %v3898, %v4225
  %v4316 = vadd.f32 %v3899, %v4230
  %v4317 = vadd.f32 %v3900, %v4233
  %v4318 = vadd.f32 %v3901, %v4238
  %v4319 = vadd.f32 %v3902, %v4241
  %v4320 = vadd.f32 %v3903, %v4246
  %v4321 = vadd.f32 %v3904, %v4249
  %v4322 = vadd.f32 %v3905, %v4254
  %v4323 = vadd.f32 %v3906, %v4257
  %v4325 = vshrl.u32 %v2150, 16
  %v4327 = vshll.u32 %v2150, 16
  %v4329 = vrot.slane %v4327, 1
  %v4330 = vor.u32 %v4325, %v4329
  %v4332 = vshll.u32 %v2182, 16
  %v4334 = vrot.slane %v4332, 1
  %v4335 = vsel %vm2215, %v4330, %v4334
  %v4337 = vshrl.u32 %v2166, 16
  %v4339 = vshll.u32 %v2166, 16
  %v4341 = vrot.slane %v4339, 1
  %v4342 = vor.u32 %v4337, %v4341
  %v4344 = vshll.u32 %v2198, 16
  %v4346 = vrot.slane %v4344, 1
  %v4347 = vsel %vm2215, %v4342, %v4346
  %v4350 = vld [vmem:[%s4 + $0x100] sm:$0xf]
  %v4351 = vld [vmem:[%s4 + $0x104] sm:$0xf]
  %v4352 = vld [vmem:[%s4 + $0x108] sm:$0xf]
  %v4353 = vld [vmem:[%s4 + $0x10c] sm:$0xf]
  %v4354 = vld [vmem:[%s4 + $0x110] sm:$0xf]
  %v4355 = vld [vmem:[%s4 + $0x114] sm:$0xf]
  %v4356 = vld [vmem:[%s4 + $0x118] sm:$0xf]
  %v4357 = vld [vmem:[%s4 + $0x11c] sm:$0xf]
  %v4358 = vld [vmem:[%s4 + $0x120] sm:$0xf]
  %v4359 = vld [vmem:[%s4 + $0x124] sm:$0xf]
  %v4360 = vld [vmem:[%s4 + $0x128] sm:$0xf]
  %v4361 = vld [vmem:[%s4 + $0x12c] sm:$0xf]
  %v4362 = vld [vmem:[%s4 + $0x130] sm:$0xf]
  %v4363 = vld [vmem:[%s4 + $0x134] sm:$0xf]
  %v4364 = vld [vmem:[%s4 + $0x138] sm:$0xf]
  %v4365 = vld [vmem:[%s4 + $0x13c] sm:$0xf]
  %v4382 = vunpack.c.l.b16 %v4350
  %v4383 = vunpack.c.l.b16 %v4351
  %v4384 = vunpack.c.l.b16 %v4352
  %v4385 = vunpack.c.l.b16 %v4353
  %v4386 = vunpack.c.l.b16 %v4354
  %v4387 = vunpack.c.l.b16 %v4355
  %v4388 = vunpack.c.l.b16 %v4356
  %v4389 = vunpack.c.l.b16 %v4357
  %v4390 = vunpack.c.l.b16 %v4358
  %v4391 = vunpack.c.l.b16 %v4359
  %v4392 = vunpack.c.l.b16 %v4360
  %v4393 = vunpack.c.l.b16 %v4361
  %v4394 = vunpack.c.l.b16 %v4362
  %v4395 = vunpack.c.l.b16 %v4363
  %v4396 = vunpack.c.l.b16 %v4364
  %v4397 = vunpack.c.l.b16 %v4365
  %v4398 = vpack.c.b16 %v4383, %v4382
  %v4399 = vpack.c.b16 %v4385, %v4384
  %v4400 = vpack.c.b16 %v4387, %v4386
  %v4401 = vpack.c.b16 %v4389, %v4388
  %v4402 = vpack.c.b16 %v4391, %v4390
  %v4403 = vpack.c.b16 %v4393, %v4392
  %v4404 = vpack.c.b16 %v4395, %v4394
  %v4405 = vpack.c.b16 %v4397, %v4396
  %4414 = vmatprep.subr.bf16.mxu0 0
  %4415 = vmatpush1.bf16.msra.mxu0 %v4405
  %4416 = vmatprep.subr.bf16.mxu0 0
  %4417 = vmatpush1.bf16.msra.mxu0 %v4404
  %4418 = vmatprep.subr.bf16.mxu0 0
  %4419 = vmatpush1.bf16.msra.mxu0 %v4403
  %4420 = vmatprep.subr.bf16.mxu0 0
  %4421 = vmatpush1.bf16.msra.mxu0 %v4402
  %4422 = vmatprep.subr.bf16.mxu0 0
  %4423 = vmatpush1.bf16.msra.mxu0 %v4401
  %4424 = vmatprep.subr.bf16.mxu0 0
  %4425 = vmatpush1.bf16.msra.mxu0 %v4400
  %4426 = vmatprep.subr.bf16.mxu0 0
  %4427 = vmatpush1.bf16.msra.mxu0 %v4399
  %4428 = vmatprep.subr.bf16.mxu0 0
  %4429 = vmatpush1.bf16.msra.mxu0 %v4398
  %4430 = vmatprep.subr.bf16.mxu0 0
  %4431 = vmatpush2.bf16.msra.mxu0 0
  %4432 = vmatprep.subr.bf16.mxu0 0
  %4433 = vmatpush2.bf16.msra.mxu0 0
  %4434 = vmatprep.subr.bf16.mxu0 0
  %4435 = vmatpush2.bf16.msra.mxu0 0
  %4436 = vmatprep.subr.bf16.mxu0 0
  %4437 = vmatpush2.bf16.msra.mxu0 0
  %4438 = vmatprep.subr.bf16.mxu0 0
  %4439 = vmatpush2.bf16.msra.mxu0 0
  %4440 = vmatprep.subr.bf16.mxu0 0
  %4441 = vmatpush2.bf16.msra.mxu0 0
  %4442 = vmatprep.subr.bf16.mxu0 0
  %4443 = vmatpush2.bf16.msra.mxu0 0
  %4444 = vmatprep.subr.bf16.mxu0 0
  %4445 = vmatpush2.bf16.msra.mxu0 0
  %4446 = vmatprep.mubr.bf16.mxu0 0
  %4447 = vmatmul.mubr.bf16.gmra.mxu0 %v2235
  %v4448 = vpop.f32.mrf.mxu0
  %v4449 = vadd.f32 0.0, %v4448
  %v4450 = vpop.f32.mrf.mxu0
  %v4451 = vpop.f32.mrf.mxu0
  %v4452 = vadd.f32 0.0, %v4451
  %v4453 = vpop.f32.mrf.mxu0
  %4454 = vmatprep.mubr.bf16.mxu0 0
  %4455 = vmatmul.mubr.bf16.gmra.mxu0 %v2247
  %v4456 = vpop.f32.mrf.mxu0
  %v4457 = vadd.f32 0.0, %v4456
  %v4458 = vpop.f32.mrf.mxu0
  %v4459 = vpop.f32.mrf.mxu0
  %v4460 = vadd.f32 0.0, %v4459
  %v4461 = vpop.f32.mrf.mxu0
  %4462 = vmatprep.mubr.bf16.mxu0 0
  %4463 = vmatmul.mubr.bf16.gmra.mxu0 %v2259
  %v4464 = vpop.f32.mrf.mxu0
  %v4465 = vadd.f32 0.0, %v4464
  %v4466 = vpop.f32.mrf.mxu0
  %v4467 = vpop.f32.mrf.mxu0
  %v4468 = vadd.f32 0.0, %v4467
  %v4469 = vpop.f32.mrf.mxu0
  %4470 = vmatprep.mubr.bf16.mxu0 0
  %4471 = vmatmul.mubr.bf16.gmra.mxu0 %v2271
  %v4472 = vpop.f32.mrf.mxu0
  %v4473 = vadd.f32 0.0, %v4472
  %v4474 = vpop.f32.mrf.mxu0
  %v4475 = vpop.f32.mrf.mxu0
  %v4476 = vadd.f32 0.0, %v4475
  %v4477 = vpop.f32.mrf.mxu0
  %4478 = vmatprep.mubr.bf16.mxu0 0
  %4479 = vmatmul.mubr.bf16.gmra.mxu0 %v2283
  %v4480 = vpop.f32.mrf.mxu0
  %v4481 = vadd.f32 0.0, %v4480
  %v4482 = vpop.f32.mrf.mxu0
  %v4483 = vpop.f32.mrf.mxu0
  %v4484 = vadd.f32 0.0, %v4483
  %v4485 = vpop.f32.mrf.mxu0
  %4486 = vmatprep.mubr.bf16.mxu0 0
  %4487 = vmatmul.mubr.bf16.gmra.mxu0 %v2295
  %v4488 = vpop.f32.mrf.mxu0
  %v4489 = vadd.f32 0.0, %v4488
  %v4490 = vpop.f32.mrf.mxu0
  %v4491 = vpop.f32.mrf.mxu0
  %v4492 = vadd.f32 0.0, %v4491
  %v4493 = vpop.f32.mrf.mxu0
  %4494 = vmatprep.mubr.bf16.mxu0 0
  %4495 = vmatmul.mubr.bf16.gmra.mxu0 %v2307
  %v4496 = vpop.f32.mrf.mxu0
  %v4497 = vadd.f32 0.0, %v4496
  %v4498 = vpop.f32.mrf.mxu0
  %v4499 = vpop.f32.mrf.mxu0
  %v4500 = vadd.f32 0.0, %v4499
  %v4501 = vpop.f32.mrf.mxu0
  %4502 = vmatprep.mubr.bf16.mxu0 0
  %4503 = vmatmul.mubr.bf16.gmra.mxu0 %v2319
  %v4504 = vpop.f32.mrf.mxu0
  %v4505 = vadd.f32 0.0, %v4504
  %v4506 = vpop.f32.mrf.mxu0
  %v4507 = vpop.f32.mrf.mxu0
  %v4508 = vadd.f32 0.0, %v4507
  %v4509 = vpop.f32.mrf.mxu0
  %4510 = vmatprep.mubr.bf16.mxu0 0
  %4511 = vmatmul.mubr.bf16.gmra.mxu0 %v2331
  %v4512 = vpop.f32.mrf.mxu0
  %v4513 = vadd.f32 0.0, %v4512
  %v4514 = vpop.f32.mrf.mxu0
  %v4515 = vpop.f32.mrf.mxu0
  %v4516 = vadd.f32 0.0, %v4515
  %v4517 = vpop.f32.mrf.mxu0
  %4518 = vmatprep.mubr.bf16.mxu0 0
  %4519 = vmatmul.mubr.bf16.gmra.mxu0 %v2343
  %v4520 = vpop.f32.mrf.mxu0
  %v4521 = vadd.f32 0.0, %v4520
  %v4522 = vpop.f32.mrf.mxu0
  %v4523 = vpop.f32.mrf.mxu0
  %v4524 = vadd.f32 0.0, %v4523
  %v4525 = vpop.f32.mrf.mxu0
  %4526 = vmatprep.mubr.bf16.mxu0 0
  %4527 = vmatmul.mubr.bf16.gmra.mxu0 %v2355
  %v4528 = vpop.f32.mrf.mxu0
  %v4529 = vadd.f32 0.0, %v4528
  %v4530 = vpop.f32.mrf.mxu0
  %v4531 = vpop.f32.mrf.mxu0
  %v4532 = vadd.f32 0.0, %v4531
  %v4533 = vpop.f32.mrf.mxu0
  %4534 = vmatprep.mubr.bf16.mxu0 0
  %4535 = vmatmul.mubr.bf16.gmra.mxu0 %v2367
  %v4536 = vpop.f32.mrf.mxu0
  %v4537 = vadd.f32 0.0, %v4536
  %v4538 = vpop.f32.mrf.mxu0
  %v4539 = vpop.f32.mrf.mxu0
  %v4540 = vadd.f32 0.0, %v4539
  %v4541 = vpop.f32.mrf.mxu0
  %4542 = vmatprep.mubr.bf16.mxu0 0
  %4543 = vmatmul.mubr.bf16.gmra.mxu0 %v2379
  %v4544 = vpop.f32.mrf.mxu0
  %v4545 = vadd.f32 0.0, %v4544
  %v4546 = vpop.f32.mrf.mxu0
  %v4547 = vpop.f32.mrf.mxu0
  %v4548 = vadd.f32 0.0, %v4547
  %v4549 = vpop.f32.mrf.mxu0
  %4550 = vmatprep.mubr.bf16.mxu0 0
  %4551 = vmatmul.mubr.bf16.gmra.mxu0 %v2391
  %v4552 = vpop.f32.mrf.mxu0
  %v4553 = vadd.f32 0.0, %v4552
  %v4554 = vpop.f32.mrf.mxu0
  %v4555 = vpop.f32.mrf.mxu0
  %v4556 = vadd.f32 0.0, %v4555
  %v4557 = vpop.f32.mrf.mxu0
  %4558 = vmatprep.mubr.bf16.mxu0 0
  %4559 = vmatmul.mubr.bf16.gmra.mxu0 %v2403
  %v4560 = vpop.f32.mrf.mxu0
  %v4561 = vadd.f32 0.0, %v4560
  %v4562 = vpop.f32.mrf.mxu0
  %v4563 = vpop.f32.mrf.mxu0
  %v4564 = vadd.f32 0.0, %v4563
  %v4565 = vpop.f32.mrf.mxu0
  %4566 = vmatprep.mubr.bf16.mxu0 0
  %4567 = vmatmul.mubr.bf16.gmra.mxu0 %v4335
  %v4568 = vpop.f32.mrf.mxu0
  %v4569 = vadd.f32 0.0, %v4568
  %v4570 = vpop.f32.mrf.mxu0
  %v4571 = vpop.f32.mrf.mxu0
  %v4572 = vadd.f32 0.0, %v4571
  %v4573 = vpop.f32.mrf.mxu0
  %4574 = vmatprep.mubr.bf16.mxu0 0
  %4575 = vmatmul.mubr.bf16.gmra.mxu0 %v2415
  %v4576 = vpop.f32.mrf.mxu0
  %v4577 = vadd.f32 0.0, %v4576
  %v4578 = vpop.f32.mrf.mxu0
  %v4579 = vpop.f32.mrf.mxu0
  %v4580 = vadd.f32 0.0, %v4579
  %v4581 = vpop.f32.mrf.mxu0
  %4582 = vmatprep.mubr.bf16.mxu0 0
  %4583 = vmatmul.mubr.bf16.gmra.mxu0 %v2427
  %v4584 = vpop.f32.mrf.mxu0
  %v4585 = vadd.f32 0.0, %v4584
  %v4586 = vpop.f32.mrf.mxu0
  %v4587 = vpop.f32.mrf.mxu0
  %v4588 = vadd.f32 0.0, %v4587
  %v4589 = vpop.f32.mrf.mxu0
  %4590 = vmatprep.mubr.bf16.mxu0 0
  %4591 = vmatmul.mubr.bf16.gmra.mxu0 %v2439
  %v4592 = vpop.f32.mrf.mxu0
  %v4593 = vadd.f32 0.0, %v4592
  %v4594 = vpop.f32.mrf.mxu0
  %v4595 = vpop.f32.mrf.mxu0
  %v4596 = vadd.f32 0.0, %v4595
  %v4597 = vpop.f32.mrf.mxu0
  %4598 = vmatprep.mubr.bf16.mxu0 0
  %4599 = vmatmul.mubr.bf16.gmra.mxu0 %v2451
  %v4600 = vpop.f32.mrf.mxu0
  %v4601 = vadd.f32 0.0, %v4600
  %v4602 = vpop.f32.mrf.mxu0
  %v4603 = vpop.f32.mrf.mxu0
  %v4604 = vadd.f32 0.0, %v4603
  %v4605 = vpop.f32.mrf.mxu0
  %4606 = vmatprep.mubr.bf16.mxu0 0
  %4607 = vmatmul.mubr.bf16.gmra.mxu0 %v2463
  %v4608 = vpop.f32.mrf.mxu0
  %v4609 = vadd.f32 0.0, %v4608
  %v4610 = vpop.f32.mrf.mxu0
  %v4611 = vpop.f32.mrf.mxu0
  %v4612 = vadd.f32 0.0, %v4611
  %v4613 = vpop.f32.mrf.mxu0
  %4614 = vmatprep.mubr.bf16.mxu0 0
  %4615 = vmatmul.mubr.bf16.gmra.mxu0 %v2475
  %v4616 = vpop.f32.mrf.mxu0
  %v4617 = vadd.f32 0.0, %v4616
  %v4618 = vpop.f32.mrf.mxu0
  %v4619 = vpop.f32.mrf.mxu0
  %v4620 = vadd.f32 0.0, %v4619
  %v4621 = vpop.f32.mrf.mxu0
  %4622 = vmatprep.mubr.bf16.mxu0 0
  %4623 = vmatmul.mubr.bf16.gmra.mxu0 %v2487
  %v4624 = vpop.f32.mrf.mxu0
  %v4625 = vadd.f32 0.0, %v4624
  %v4626 = vpop.f32.mrf.mxu0
  %v4627 = vpop.f32.mrf.mxu0
  %v4628 = vadd.f32 0.0, %v4627
  %v4629 = vpop.f32.mrf.mxu0
  %4630 = vmatprep.mubr.bf16.mxu0 0
  %4631 = vmatmul.mubr.bf16.gmra.mxu0 %v2499
  %v4632 = vpop.f32.mrf.mxu0
  %v4633 = vadd.f32 0.0, %v4632
  %v4634 = vpop.f32.mrf.mxu0
  %v4635 = vpop.f32.mrf.mxu0
  %v4636 = vadd.f32 0.0, %v4635
  %v4637 = vpop.f32.mrf.mxu0
  %4638 = vmatprep.mubr.bf16.mxu0 0
  %4639 = vmatmul.mubr.bf16.gmra.mxu0 %v2511
  %v4640 = vpop.f32.mrf.mxu0
  %v4641 = vadd.f32 0.0, %v4640
  %v4642 = vpop.f32.mrf.mxu0
  %v4643 = vpop.f32.mrf.mxu0
  %v4644 = vadd.f32 0.0, %v4643
  %v4645 = vpop.f32.mrf.mxu0
  %4646 = vmatprep.mubr.bf16.mxu0 0
  %4647 = vmatmul.mubr.bf16.gmra.mxu0 %v2523
  %v4648 = vpop.f32.mrf.mxu0
  %v4649 = vadd.f32 0.0, %v4648
  %v4650 = vpop.f32.mrf.mxu0
  %v4651 = vpop.f32.mrf.mxu0
  %v4652 = vadd.f32 0.0, %v4651
  %v4653 = vpop.f32.mrf.mxu0
  %4654 = vmatprep.mubr.bf16.mxu0 0
  %4655 = vmatmul.mubr.bf16.gmra.mxu0 %v2535
  %v4656 = vpop.f32.mrf.mxu0
  %v4657 = vadd.f32 0.0, %v4656
  %v4658 = vpop.f32.mrf.mxu0
  %v4659 = vpop.f32.mrf.mxu0
  %v4660 = vadd.f32 0.0, %v4659
  %v4661 = vpop.f32.mrf.mxu0
  %4662 = vmatprep.mubr.bf16.mxu0 0
  %4663 = vmatmul.mubr.bf16.gmra.mxu0 %v2547
  %v4664 = vpop.f32.mrf.mxu0
  %v4665 = vadd.f32 0.0, %v4664
  %v4666 = vpop.f32.mrf.mxu0
  %v4667 = vpop.f32.mrf.mxu0
  %v4668 = vadd.f32 0.0, %v4667
  %v4669 = vpop.f32.mrf.mxu0
  %4670 = vmatprep.mubr.bf16.mxu0 0
  %4671 = vmatmul.mubr.bf16.gmra.mxu0 %v2559
  %v4672 = vpop.f32.mrf.mxu0
  %v4673 = vadd.f32 0.0, %v4672
  %v4674 = vpop.f32.mrf.mxu0
  %v4675 = vpop.f32.mrf.mxu0
  %v4676 = vadd.f32 0.0, %v4675
  %v4677 = vpop.f32.mrf.mxu0
  %4678 = vmatprep.mubr.bf16.mxu0 0
  %4679 = vmatmul.mubr.bf16.gmra.mxu0 %v2571
  %v4680 = vpop.f32.mrf.mxu0
  %v4681 = vadd.f32 0.0, %v4680
  %v4682 = vpop.f32.mrf.mxu0
  %v4683 = vpop.f32.mrf.mxu0
  %v4684 = vadd.f32 0.0, %v4683
  %v4685 = vpop.f32.mrf.mxu0
  %4686 = vmatprep.mubr.bf16.mxu0 0
  %4687 = vmatmul.mubr.bf16.gmra.mxu0 %v2583
  %v4688 = vpop.f32.mrf.mxu0
  %v4689 = vadd.f32 0.0, %v4688
  %v4690 = vpop.f32.mrf.mxu0
  %v4691 = vpop.f32.mrf.mxu0
  %v4692 = vadd.f32 0.0, %v4691
  %v4693 = vpop.f32.mrf.mxu0
  %4694 = vmatprep.mubr.bf16.mxu0 0
  %4695 = vmatmul.mubr.bf16.gmra.mxu0 %v4347
  %v4696 = vpop.f32.mrf.mxu0
  %v4697 = vadd.f32 0.0, %v4696
  %v4698 = vpop.f32.mrf.mxu0
  %v4699 = vpop.f32.mrf.mxu0
  %v4700 = vadd.f32 0.0, %v4699
  %v4701 = vpop.f32.mrf.mxu0
  %4702 = vdwg.mxu0
  %v4703 = vadd.f32 %v4260, %v4449
  %v4704 = vadd.f32 %v4261, %v4452
  %v4705 = vadd.f32 %v4262, %v4457
  %v4706 = vadd.f32 %v4263, %v4460
  %v4707 = vadd.f32 %v4264, %v4465
  %v4708 = vadd.f32 %v4265, %v4468
  %v4709 = vadd.f32 %v4266, %v4473
  %v4710 = vadd.f32 %v4267, %v4476
  %v4711 = vadd.f32 %v4268, %v4481
  %v4712 = vadd.f32 %v4269, %v4484
  %v4713 = vadd.f32 %v4270, %v4489
  %v4714 = vadd.f32 %v4271, %v4492
  %v4715 = vadd.f32 %v4272, %v4497
  %v4716 = vadd.f32 %v4273, %v4500
  %v4717 = vadd.f32 %v4274, %v4505
  %v4718 = vadd.f32 %v4275, %v4508
  %v4719 = vadd.f32 %v4276, %v4513
  %v4720 = vadd.f32 %v4277, %v4516
  %v4721 = vadd.f32 %v4278, %v4521
  %v4722 = vadd.f32 %v4279, %v4524
  %v4723 = vadd.f32 %v4280, %v4529
  %v4724 = vadd.f32 %v4281, %v4532
  %v4725 = vadd.f32 %v4282, %v4537
  %v4726 = vadd.f32 %v4283, %v4540
  %v4727 = vadd.f32 %v4284, %v4545
  %v4728 = vadd.f32 %v4285, %v4548
  %v4729 = vadd.f32 %v4286, %v4553
  %v4730 = vadd.f32 %v4287, %v4556
  %v4731 = vadd.f32 %v4288, %v4561
  %v4732 = vadd.f32 %v4289, %v4564
  %v4733 = vadd.f32 %v4290, %v4569
  %v4734 = vadd.f32 %v4291, %v4572
  %v4735 = vadd.f32 %v4292, %v4577
  %v4736 = vadd.f32 %v4293, %v4580
  %v4737 = vadd.f32 %v4294, %v4585
  %v4738 = vadd.f32 %v4295, %v4588
  %v4739 = vadd.f32 %v4296, %v4593
  %v4740 = vadd.f32 %v4297, %v4596
  %v4741 = vadd.f32 %v4298, %v4601
  %v4742 = vadd.f32 %v4299, %v4604
  %v4743 = vadd.f32 %v4300, %v4609
  %v4744 = vadd.f32 %v4301, %v4612
  %v4745 = vadd.f32 %v4302, %v4617
  %v4746 = vadd.f32 %v4303, %v4620
  %v4747 = vadd.f32 %v4304, %v4625
  %v4748 = vadd.f32 %v4305, %v4628
  %v4749 = vadd.f32 %v4306, %v4633
  %v4750 = vadd.f32 %v4307, %v4636
  %v4751 = vadd.f32 %v4308, %v4641
  %v4752 = vadd.f32 %v4309, %v4644
  %v4753 = vadd.f32 %v4310, %v4649
  %v4754 = vadd.f32 %v4311, %v4652
  %v4755 = vadd.f32 %v4312, %v4657
  %v4756 = vadd.f32 %v4313, %v4660
  %v4757 = vadd.f32 %v4314, %v4665
  %v4758 = vadd.f32 %v4315, %v4668
  %v4759 = vadd.f32 %v4316, %v4673
  %v4760 = vadd.f32 %v4317, %v4676
  %v4761 = vadd.f32 %v4318, %v4681
  %v4762 = vadd.f32 %v4319, %v4684
  %v4763 = vadd.f32 %v4320, %v4689
  %v4764 = vadd.f32 %v4321, %v4692
  %v4765 = vadd.f32 %v4322, %v4697
  %v4766 = vadd.f32 %v4323, %v4700
  %v4771 = vrot.slane %v2150, 1
  %v4772 = vrot.slane %v2182, 1
  %v4773 = vsel %vm3366, %v4771, %v4772
  %v4774 = vrot.slane %v2166, 1
  %v4775 = vrot.slane %v2198, 1
  %v4776 = vsel %vm3366, %v4774, %v4775
  %v4779 = vld [vmem:[%s4 + $0x140] sm:$0xf]
  %v4780 = vld [vmem:[%s4 + $0x144] sm:$0xf]
  %v4781 = vld [vmem:[%s4 + $0x148] sm:$0xf]
  %v4782 = vld [vmem:[%s4 + $0x14c] sm:$0xf]
  %v4783 = vld [vmem:[%s4 + $0x150] sm:$0xf]
  %v4784 = vld [vmem:[%s4 + $0x154] sm:$0xf]
  %v4785 = vld [vmem:[%s4 + $0x158] sm:$0xf]
  %v4786 = vld [vmem:[%s4 + $0x15c] sm:$0xf]
  %v4787 = vld [vmem:[%s4 + $0x160] sm:$0xf]
  %v4788 = vld [vmem:[%s4 + $0x164] sm:$0xf]
  %v4789 = vld [vmem:[%s4 + $0x168] sm:$0xf]
  %v4790 = vld [vmem:[%s4 + $0x16c] sm:$0xf]
  %v4791 = vld [vmem:[%s4 + $0x170] sm:$0xf]
  %v4792 = vld [vmem:[%s4 + $0x174] sm:$0xf]
  %v4793 = vld [vmem:[%s4 + $0x178] sm:$0xf]
  %v4794 = vld [vmem:[%s4 + $0x17c] sm:$0xf]
  %v4811 = vunpack.c.l.b16 %v4779
  %v4812 = vunpack.c.l.b16 %v4780
  %v4813 = vunpack.c.l.b16 %v4781
  %v4814 = vunpack.c.l.b16 %v4782
  %v4815 = vunpack.c.l.b16 %v4783
  %v4816 = vunpack.c.l.b16 %v4784
  %v4817 = vunpack.c.l.b16 %v4785
  %v4818 = vunpack.c.l.b16 %v4786
  %v4819 = vunpack.c.l.b16 %v4787
  %v4820 = vunpack.c.l.b16 %v4788
  %v4821 = vunpack.c.l.b16 %v4789
  %v4822 = vunpack.c.l.b16 %v4790
  %v4823 = vunpack.c.l.b16 %v4791
  %v4824 = vunpack.c.l.b16 %v4792
  %v4825 = vunpack.c.l.b16 %v4793
  %v4826 = vunpack.c.l.b16 %v4794
  %v4827 = vpack.c.b16 %v4812, %v4811
  %v4828 = vpack.c.b16 %v4814, %v4813
  %v4829 = vpack.c.b16 %v4816, %v4815
  %v4830 = vpack.c.b16 %v4818, %v4817
  %v4831 = vpack.c.b16 %v4820, %v4819
  %v4832 = vpack.c.b16 %v4822, %v4821
  %v4833 = vpack.c.b16 %v4824, %v4823
  %v4834 = vpack.c.b16 %v4826, %v4825
  %4843 = vmatprep.subr.bf16.mxu0 0
  %4844 = vmatpush1.bf16.msra.mxu0 %v4834
  %4845 = vmatprep.subr.bf16.mxu0 0
  %4846 = vmatpush1.bf16.msra.mxu0 %v4833
  %4847 = vmatprep.subr.bf16.mxu0 0
  %4848 = vmatpush1.bf16.msra.mxu0 %v4832
  %4849 = vmatprep.subr.bf16.mxu0 0
  %4850 = vmatpush1.bf16.msra.mxu0 %v4831
  %4851 = vmatprep.subr.bf16.mxu0 0
  %4852 = vmatpush1.bf16.msra.mxu0 %v4830
  %4853 = vmatprep.subr.bf16.mxu0 0
  %4854 = vmatpush1.bf16.msra.mxu0 %v4829
  %4855 = vmatprep.subr.bf16.mxu0 0
  %4856 = vmatpush1.bf16.msra.mxu0 %v4828
  %4857 = vmatprep.subr.bf16.mxu0 0
  %4858 = vmatpush1.bf16.msra.mxu0 %v4827
  %4859 = vmatprep.subr.bf16.mxu0 0
  %4860 = vmatpush2.bf16.msra.mxu0 0
  %4861 = vmatprep.subr.bf16.mxu0 0
  %4862 = vmatpush2.bf16.msra.mxu0 0
  %4863 = vmatprep.subr.bf16.mxu0 0
  %4864 = vmatpush2.bf16.msra.mxu0 0
  %4865 = vmatprep.subr.bf16.mxu0 0
  %4866 = vmatpush2.bf16.msra.mxu0 0
  %4867 = vmatprep.subr.bf16.mxu0 0
  %4868 = vmatpush2.bf16.msra.mxu0 0
  %4869 = vmatprep.subr.bf16.mxu0 0
  %4870 = vmatpush2.bf16.msra.mxu0 0
  %4871 = vmatprep.subr.bf16.mxu0 0
  %4872 = vmatpush2.bf16.msra.mxu0 0
  %4873 = vmatprep.subr.bf16.mxu0 0
  %4874 = vmatpush2.bf16.msra.mxu0 0
  %4875 = vmatprep.mubr.bf16.mxu0 0
  %4876 = vmatmul.mubr.bf16.gmra.mxu0 %v3371
  %v4877 = vpop.f32.mrf.mxu0
  %v4878 = vadd.f32 0.0, %v4877
  %v4879 = vpop.f32.mrf.mxu0
  %v4880 = vpop.f32.mrf.mxu0
  %v4881 = vadd.f32 0.0, %v4880
  %v4882 = vpop.f32.mrf.mxu0
  %4883 = vmatprep.mubr.bf16.mxu0 0
  %4884 = vmatmul.mubr.bf16.gmra.mxu0 %v3374
  %v4885 = vpop.f32.mrf.mxu0
  %v4886 = vadd.f32 0.0, %v4885
  %v4887 = vpop.f32.mrf.mxu0
  %v4888 = vpop.f32.mrf.mxu0
  %v4889 = vadd.f32 0.0, %v4888
  %v4890 = vpop.f32.mrf.mxu0
  %4891 = vmatprep.mubr.bf16.mxu0 0
  %4892 = vmatmul.mubr.bf16.gmra.mxu0 %v3377
  %v4893 = vpop.f32.mrf.mxu0
  %v4894 = vadd.f32 0.0, %v4893
  %v4895 = vpop.f32.mrf.mxu0
  %v4896 = vpop.f32.mrf.mxu0
  %v4897 = vadd.f32 0.0, %v4896
  %v4898 = vpop.f32.mrf.mxu0
  %4899 = vmatprep.mubr.bf16.mxu0 0
  %4900 = vmatmul.mubr.bf16.gmra.mxu0 %v3380
  %v4901 = vpop.f32.mrf.mxu0
  %v4902 = vadd.f32 0.0, %v4901
  %v4903 = vpop.f32.mrf.mxu0
  %v4904 = vpop.f32.mrf.mxu0
  %v4905 = vadd.f32 0.0, %v4904
  %v4906 = vpop.f32.mrf.mxu0
  %4907 = vmatprep.mubr.bf16.mxu0 0
  %4908 = vmatmul.mubr.bf16.gmra.mxu0 %v3383
  %v4909 = vpop.f32.mrf.mxu0
  %v4910 = vadd.f32 0.0, %v4909
  %v4911 = vpop.f32.mrf.mxu0
  %v4912 = vpop.f32.mrf.mxu0
  %v4913 = vadd.f32 0.0, %v4912
  %v4914 = vpop.f32.mrf.mxu0
  %4915 = vmatprep.mubr.bf16.mxu0 0
  %4916 = vmatmul.mubr.bf16.gmra.mxu0 %v3386
  %v4917 = vpop.f32.mrf.mxu0
  %v4918 = vadd.f32 0.0, %v4917
  %v4919 = vpop.f32.mrf.mxu0
  %v4920 = vpop.f32.mrf.mxu0
  %v4921 = vadd.f32 0.0, %v4920
  %v4922 = vpop.f32.mrf.mxu0
  %4923 = vmatprep.mubr.bf16.mxu0 0
  %4924 = vmatmul.mubr.bf16.gmra.mxu0 %v3389
  %v4925 = vpop.f32.mrf.mxu0
  %v4926 = vadd.f32 0.0, %v4925
  %v4927 = vpop.f32.mrf.mxu0
  %v4928 = vpop.f32.mrf.mxu0
  %v4929 = vadd.f32 0.0, %v4928
  %v4930 = vpop.f32.mrf.mxu0
  %4931 = vmatprep.mubr.bf16.mxu0 0
  %4932 = vmatmul.mubr.bf16.gmra.mxu0 %v3392
  %v4933 = vpop.f32.mrf.mxu0
  %v4934 = vadd.f32 0.0, %v4933
  %v4935 = vpop.f32.mrf.mxu0
  %v4936 = vpop.f32.mrf.mxu0
  %v4937 = vadd.f32 0.0, %v4936
  %v4938 = vpop.f32.mrf.mxu0
  %4939 = vmatprep.mubr.bf16.mxu0 0
  %4940 = vmatmul.mubr.bf16.gmra.mxu0 %v3395
  %v4941 = vpop.f32.mrf.mxu0
  %v4942 = vadd.f32 0.0, %v4941
  %v4943 = vpop.f32.mrf.mxu0
  %v4944 = vpop.f32.mrf.mxu0
  %v4945 = vadd.f32 0.0, %v4944
  %v4946 = vpop.f32.mrf.mxu0
  %4947 = vmatprep.mubr.bf16.mxu0 0
  %4948 = vmatmul.mubr.bf16.gmra.mxu0 %v3398
  %v4949 = vpop.f32.mrf.mxu0
  %v4950 = vadd.f32 0.0, %v4949
  %v4951 = vpop.f32.mrf.mxu0
  %v4952 = vpop.f32.mrf.mxu0
  %v4953 = vadd.f32 0.0, %v4952
  %v4954 = vpop.f32.mrf.mxu0
  %4955 = vmatprep.mubr.bf16.mxu0 0
  %4956 = vmatmul.mubr.bf16.gmra.mxu0 %v3401
  %v4957 = vpop.f32.mrf.mxu0
  %v4958 = vadd.f32 0.0, %v4957
  %v4959 = vpop.f32.mrf.mxu0
  %v4960 = vpop.f32.mrf.mxu0
  %v4961 = vadd.f32 0.0, %v4960
  %v4962 = vpop.f32.mrf.mxu0
  %4963 = vmatprep.mubr.bf16.mxu0 0
  %4964 = vmatmul.mubr.bf16.gmra.mxu0 %v3404
  %v4965 = vpop.f32.mrf.mxu0
  %v4966 = vadd.f32 0.0, %v4965
  %v4967 = vpop.f32.mrf.mxu0
  %v4968 = vpop.f32.mrf.mxu0
  %v4969 = vadd.f32 0.0, %v4968
  %v4970 = vpop.f32.mrf.mxu0
  %4971 = vmatprep.mubr.bf16.mxu0 0
  %4972 = vmatmul.mubr.bf16.gmra.mxu0 %v3407
  %v4973 = vpop.f32.mrf.mxu0
  %v4974 = vadd.f32 0.0, %v4973
  %v4975 = vpop.f32.mrf.mxu0
  %v4976 = vpop.f32.mrf.mxu0
  %v4977 = vadd.f32 0.0, %v4976
  %v4978 = vpop.f32.mrf.mxu0
  %4979 = vmatprep.mubr.bf16.mxu0 0
  %4980 = vmatmul.mubr.bf16.gmra.mxu0 %v3410
  %v4981 = vpop.f32.mrf.mxu0
  %v4982 = vadd.f32 0.0, %v4981
  %v4983 = vpop.f32.mrf.mxu0
  %v4984 = vpop.f32.mrf.mxu0
  %v4985 = vadd.f32 0.0, %v4984
  %v4986 = vpop.f32.mrf.mxu0
  %4987 = vmatprep.mubr.bf16.mxu0 0
  %4988 = vmatmul.mubr.bf16.gmra.mxu0 %v3413
  %v4989 = vpop.f32.mrf.mxu0
  %v4990 = vadd.f32 0.0, %v4989
  %v4991 = vpop.f32.mrf.mxu0
  %v4992 = vpop.f32.mrf.mxu0
  %v4993 = vadd.f32 0.0, %v4992
  %v4994 = vpop.f32.mrf.mxu0
  %4995 = vmatprep.mubr.bf16.mxu0 0
  %4996 = vmatmul.mubr.bf16.gmra.mxu0 %v4773
  %v4997 = vpop.f32.mrf.mxu0
  %v4998 = vadd.f32 0.0, %v4997
  %v4999 = vpop.f32.mrf.mxu0
  %v5000 = vpop.f32.mrf.mxu0
  %v5001 = vadd.f32 0.0, %v5000
  %v5002 = vpop.f32.mrf.mxu0
  %5003 = vmatprep.mubr.bf16.mxu0 0
  %5004 = vmatmul.mubr.bf16.gmra.mxu0 %v3416
  %v5005 = vpop.f32.mrf.mxu0
  %v5006 = vadd.f32 0.0, %v5005
  %v5007 = vpop.f32.mrf.mxu0
  %v5008 = vpop.f32.mrf.mxu0
  %v5009 = vadd.f32 0.0, %v5008
  %v5010 = vpop.f32.mrf.mxu0
  %5011 = vmatprep.mubr.bf16.mxu0 0
  %5012 = vmatmul.mubr.bf16.gmra.mxu0 %v3419
  %v5013 = vpop.f32.mrf.mxu0
  %v5014 = vadd.f32 0.0, %v5013
  %v5015 = vpop.f32.mrf.mxu0
  %v5016 = vpop.f32.mrf.mxu0
  %v5017 = vadd.f32 0.0, %v5016
  %v5018 = vpop.f32.mrf.mxu0
  %5019 = vmatprep.mubr.bf16.mxu0 0
  %5020 = vmatmul.mubr.bf16.gmra.mxu0 %v3422
  %v5021 = vpop.f32.mrf.mxu0
  %v5022 = vadd.f32 0.0, %v5021
  %v5023 = vpop.f32.mrf.mxu0
  %v5024 = vpop.f32.mrf.mxu0
  %v5025 = vadd.f32 0.0, %v5024
  %v5026 = vpop.f32.mrf.mxu0
  %5027 = vmatprep.mubr.bf16.mxu0 0
  %5028 = vmatmul.mubr.bf16.gmra.mxu0 %v3425
  %v5029 = vpop.f32.mrf.mxu0
  %v5030 = vadd.f32 0.0, %v5029
  %v5031 = vpop.f32.mrf.mxu0
  %v5032 = vpop.f32.mrf.mxu0
  %v5033 = vadd.f32 0.0, %v5032
  %v5034 = vpop.f32.mrf.mxu0
  %5035 = vmatprep.mubr.bf16.mxu0 0
  %5036 = vmatmul.mubr.bf16.gmra.mxu0 %v3428
  %v5037 = vpop.f32.mrf.mxu0
  %v5038 = vadd.f32 0.0, %v5037
  %v5039 = vpop.f32.mrf.mxu0
  %v5040 = vpop.f32.mrf.mxu0
  %v5041 = vadd.f32 0.0, %v5040
  %v5042 = vpop.f32.mrf.mxu0
  %5043 = vmatprep.mubr.bf16.mxu0 0
  %5044 = vmatmul.mubr.bf16.gmra.mxu0 %v3431
  %v5045 = vpop.f32.mrf.mxu0
  %v5046 = vadd.f32 0.0, %v5045
  %v5047 = vpop.f32.mrf.mxu0
  %v5048 = vpop.f32.mrf.mxu0
  %v5049 = vadd.f32 0.0, %v5048
  %v5050 = vpop.f32.mrf.mxu0
  %5051 = vmatprep.mubr.bf16.mxu0 0
  %5052 = vmatmul.mubr.bf16.gmra.mxu0 %v3434
  %v5053 = vpop.f32.mrf.mxu0
  %v5054 = vadd.f32 0.0, %v5053
  %v5055 = vpop.f32.mrf.mxu0
  %v5056 = vpop.f32.mrf.mxu0
  %v5057 = vadd.f32 0.0, %v5056
  %v5058 = vpop.f32.mrf.mxu0
  %5059 = vmatprep.mubr.bf16.mxu0 0
  %5060 = vmatmul.mubr.bf16.gmra.mxu0 %v3437
  %v5061 = vpop.f32.mrf.mxu0
  %v5062 = vadd.f32 0.0, %v5061
  %v5063 = vpop.f32.mrf.mxu0
  %v5064 = vpop.f32.mrf.mxu0
  %v5065 = vadd.f32 0.0, %v5064
  %v5066 = vpop.f32.mrf.mxu0
  %5067 = vmatprep.mubr.bf16.mxu0 0
  %5068 = vmatmul.mubr.bf16.gmra.mxu0 %v3440
  %v5069 = vpop.f32.mrf.mxu0
  %v5070 = vadd.f32 0.0, %v5069
  %v5071 = vpop.f32.mrf.mxu0
  %v5072 = vpop.f32.mrf.mxu0
  %v5073 = vadd.f32 0.0, %v5072
  %v5074 = vpop.f32.mrf.mxu0
  %5075 = vmatprep.mubr.bf16.mxu0 0
  %5076 = vmatmul.mubr.bf16.gmra.mxu0 %v3443
  %v5077 = vpop.f32.mrf.mxu0
  %v5078 = vadd.f32 0.0, %v5077
  %v5079 = vpop.f32.mrf.mxu0
  %v5080 = vpop.f32.mrf.mxu0
  %v5081 = vadd.f32 0.0, %v5080
  %v5082 = vpop.f32.mrf.mxu0
  %5083 = vmatprep.mubr.bf16.mxu0 0
  %5084 = vmatmul.mubr.bf16.gmra.mxu0 %v3446
  %v5085 = vpop.f32.mrf.mxu0
  %v5086 = vadd.f32 0.0, %v5085
  %v5087 = vpop.f32.mrf.mxu0
  %v5088 = vpop.f32.mrf.mxu0
  %v5089 = vadd.f32 0.0, %v5088
  %v5090 = vpop.f32.mrf.mxu0
  %5091 = vmatprep.mubr.bf16.mxu0 0
  %5092 = vmatmul.mubr.bf16.gmra.mxu0 %v3449
  %v5093 = vpop.f32.mrf.mxu0
  %v5094 = vadd.f32 0.0, %v5093
  %v5095 = vpop.f32.mrf.mxu0
  %v5096 = vpop.f32.mrf.mxu0
  %v5097 = vadd.f32 0.0, %v5096
  %v5098 = vpop.f32.mrf.mxu0
  %5099 = vmatprep.mubr.bf16.mxu0 0
  %5100 = vmatmul.mubr.bf16.gmra.mxu0 %v3452
  %v5101 = vpop.f32.mrf.mxu0
  %v5102 = vadd.f32 0.0, %v5101
  %v5103 = vpop.f32.mrf.mxu0
  %v5104 = vpop.f32.mrf.mxu0
  %v5105 = vadd.f32 0.0, %v5104
  %v5106 = vpop.f32.mrf.mxu0
  %5107 = vmatprep.mubr.bf16.mxu0 0
  %5108 = vmatmul.mubr.bf16.gmra.mxu0 %v3455
  %v5109 = vpop.f32.mrf.mxu0
  %v5110 = vadd.f32 0.0, %v5109
  %v5111 = vpop.f32.mrf.mxu0
  %v5112 = vpop.f32.mrf.mxu0
  %v5113 = vadd.f32 0.0, %v5112
  %v5114 = vpop.f32.mrf.mxu0
  %5115 = vmatprep.mubr.bf16.mxu0 0
  %5116 = vmatmul.mubr.bf16.gmra.mxu0 %v3458
  %v5117 = vpop.f32.mrf.mxu0
  %v5118 = vadd.f32 0.0, %v5117
  %v5119 = vpop.f32.mrf.mxu0
  %v5120 = vpop.f32.mrf.mxu0
  %v5121 = vadd.f32 0.0, %v5120
  %v5122 = vpop.f32.mrf.mxu0
  %5123 = vmatprep.mubr.bf16.mxu0 0
  %5124 = vmatmul.mubr.bf16.gmra.mxu0 %v4776
  %v5125 = vpop.f32.mrf.mxu0
  %v5126 = vadd.f32 0.0, %v5125
  %v5127 = vpop.f32.mrf.mxu0
  %v5128 = vpop.f32.mrf.mxu0
  %v5129 = vadd.f32 0.0, %v5128
  %v5130 = vpop.f32.mrf.mxu0
  %5131 = vdwg.mxu0
  %v5132 = vadd.f32 %v4703, %v4878
  %v5133 = vadd.f32 %v4704, %v4881
  %v5134 = vadd.f32 %v4705, %v4886
  %v5135 = vadd.f32 %v4706, %v4889
  %v5136 = vadd.f32 %v4707, %v4894
  %v5137 = vadd.f32 %v4708, %v4897
  %v5138 = vadd.f32 %v4709, %v4902
  %v5139 = vadd.f32 %v4710, %v4905
  %v5140 = vadd.f32 %v4711, %v4910
  %v5141 = vadd.f32 %v4712, %v4913
  %v5142 = vadd.f32 %v4713, %v4918
  %v5143 = vadd.f32 %v4714, %v4921
  %v5144 = vadd.f32 %v4715, %v4926
  %v5145 = vadd.f32 %v4716, %v4929
  %v5146 = vadd.f32 %v4717, %v4934
  %v5147 = vadd.f32 %v4718, %v4937
  %v5148 = vadd.f32 %v4719, %v4942
  %v5149 = vadd.f32 %v4720, %v4945
  %v5150 = vadd.f32 %v4721, %v4950
  %v5151 = vadd.f32 %v4722, %v4953
  %v5152 = vadd.f32 %v4723, %v4958
  %v5153 = vadd.f32 %v4724, %v4961
  %v5154 = vadd.f32 %v4725, %v4966
  %v5155 = vadd.f32 %v4726, %v4969
  %v5156 = vadd.f32 %v4727, %v4974
  %v5157 = vadd.f32 %v4728, %v4977
  %v5158 = vadd.f32 %v4729, %v4982
  %v5159 = vadd.f32 %v4730, %v4985
  %v5160 = vadd.f32 %v4731, %v4990
  %v5161 = vadd.f32 %v4732, %v4993
  %v5162 = vadd.f32 %v4733, %v4998
  %v5163 = vadd.f32 %v4734, %v5001
  %v5164 = vadd.f32 %v4735, %v5006
  %v5165 = vadd.f32 %v4736, %v5009
  %v5166 = vadd.f32 %v4737, %v5014
  %v5167 = vadd.f32 %v4738, %v5017
  %v5168 = vadd.f32 %v4739, %v5022
  %v5169 = vadd.f32 %v4740, %v5025
  %v5170 = vadd.f32 %v4741, %v5030
  %v5171 = vadd.f32 %v4742, %v5033
  %v5172 = vadd.f32 %v4743, %v5038
  %v5173 = vadd.f32 %v4744, %v5041
  %v5174 = vadd.f32 %v4745, %v5046
  %v5175 = vadd.f32 %v4746, %v5049
  %v5176 = vadd.f32 %v4747, %v5054
  %v5177 = vadd.f32 %v4748, %v5057
  %v5178 = vadd.f32 %v4749, %v5062
  %v5179 = vadd.f32 %v4750, %v5065
  %v5180 = vadd.f32 %v4751, %v5070
  %v5181 = vadd.f32 %v4752, %v5073
  %v5182 = vadd.f32 %v4753, %v5078
  %v5183 = vadd.f32 %v4754, %v5081
  %v5184 = vadd.f32 %v4755, %v5086
  %v5185 = vadd.f32 %v4756, %v5089
  %v5186 = vadd.f32 %v4757, %v5094
  %v5187 = vadd.f32 %v4758, %v5097
  %v5188 = vadd.f32 %v4759, %v5102
  %v5189 = vadd.f32 %v4760, %v5105
  %v5190 = vadd.f32 %v4761, %v5110
  %v5191 = vadd.f32 %v4762, %v5113
  %v5192 = vadd.f32 %v4763, %v5118
  %v5193 = vadd.f32 %v4764, %v5121
  %v5194 = vadd.f32 %v4765, %v5126
  %v5195 = vadd.f32 %v4766, %v5129
  %v5196 = vld [vmem:[%s4 + $0x180] sm:$0xf]
  %v5197 = vld [vmem:[%s4 + $0x184] sm:$0xf]
  %v5198 = vld [vmem:[%s4 + $0x188] sm:$0xf]
  %v5199 = vld [vmem:[%s4 + $0x18c] sm:$0xf]
  %v5200 = vld [vmem:[%s4 + $0x190] sm:$0xf]
  %v5201 = vld [vmem:[%s4 + $0x194] sm:$0xf]
  %v5202 = vld [vmem:[%s4 + $0x198] sm:$0xf]
  %v5203 = vld [vmem:[%s4 + $0x19c] sm:$0xf]
  %v5204 = vld [vmem:[%s4 + $0x1a0] sm:$0xf]
  %v5205 = vld [vmem:[%s4 + $0x1a4] sm:$0xf]
  %v5206 = vld [vmem:[%s4 + $0x1a8] sm:$0xf]
  %v5207 = vld [vmem:[%s4 + $0x1ac] sm:$0xf]
  %v5208 = vld [vmem:[%s4 + $0x1b0] sm:$0xf]
  %v5209 = vld [vmem:[%s4 + $0x1b4] sm:$0xf]
  %v5210 = vld [vmem:[%s4 + $0x1b8] sm:$0xf]
  %v5211 = vld [vmem:[%s4 + $0x1bc] sm:$0xf]
  %v5228 = vunpack.c.l.b16 %v5196
  %v5229 = vunpack.c.l.b16 %v5197
  %v5230 = vunpack.c.l.b16 %v5198
  %v5231 = vunpack.c.l.b16 %v5199
  %v5232 = vunpack.c.l.b16 %v5200
  %v5233 = vunpack.c.l.b16 %v5201
  %v5234 = vunpack.c.l.b16 %v5202
  %v5235 = vunpack.c.l.b16 %v5203
  %v5236 = vunpack.c.l.b16 %v5204
  %v5237 = vunpack.c.l.b16 %v5205
  %v5238 = vunpack.c.l.b16 %v5206
  %v5239 = vunpack.c.l.b16 %v5207
  %v5240 = vunpack.c.l.b16 %v5208
  %v5241 = vunpack.c.l.b16 %v5209
  %v5242 = vunpack.c.l.b16 %v5210
  %v5243 = vunpack.c.l.b16 %v5211
  %v5244 = vpack.c.b16 %v5229, %v5228
  %v5245 = vpack.c.b16 %v5231, %v5230
  %v5246 = vpack.c.b16 %v5233, %v5232
  %v5247 = vpack.c.b16 %v5235, %v5234
  %v5248 = vpack.c.b16 %v5237, %v5236
  %v5249 = vpack.c.b16 %v5239, %v5238
  %v5250 = vpack.c.b16 %v5241, %v5240
  %v5251 = vpack.c.b16 %v5243, %v5242
  %5260 = vmatprep.subr.bf16.mxu0 0
  %5261 = vmatpush1.bf16.msra.mxu0 %v5251
  %5262 = vmatprep.subr.bf16.mxu0 0
  %5263 = vmatpush1.bf16.msra.mxu0 %v5250
  %5264 = vmatprep.subr.bf16.mxu0 0
  %5265 = vmatpush1.bf16.msra.mxu0 %v5249
  %5266 = vmatprep.subr.bf16.mxu0 0
  %5267 = vmatpush1.bf16.msra.mxu0 %v5248
  %5268 = vmatprep.subr.bf16.mxu0 0
  %5269 = vmatpush1.bf16.msra.mxu0 %v5247
  %5270 = vmatprep.subr.bf16.mxu0 0
  %5271 = vmatpush1.bf16.msra.mxu0 %v5246
  %5272 = vmatprep.subr.bf16.mxu0 0
  %5273 = vmatpush1.bf16.msra.mxu0 %v5245
  %5274 = vmatprep.subr.bf16.mxu0 0
  %5275 = vmatpush1.bf16.msra.mxu0 %v5244
  %5276 = vmatprep.subr.bf16.mxu0 0
  %5277 = vmatpush2.bf16.msra.mxu0 0
  %5278 = vmatprep.subr.bf16.mxu0 0
  %5279 = vmatpush2.bf16.msra.mxu0 0
  %5280 = vmatprep.subr.bf16.mxu0 0
  %5281 = vmatpush2.bf16.msra.mxu0 0
  %5282 = vmatprep.subr.bf16.mxu0 0
  %5283 = vmatpush2.bf16.msra.mxu0 0
  %5284 = vmatprep.subr.bf16.mxu0 0
  %5285 = vmatpush2.bf16.msra.mxu0 0
  %5286 = vmatprep.subr.bf16.mxu0 0
  %5287 = vmatpush2.bf16.msra.mxu0 0
  %5288 = vmatprep.subr.bf16.mxu0 0
  %5289 = vmatpush2.bf16.msra.mxu0 0
  %5290 = vmatprep.subr.bf16.mxu0 0
  %5291 = vmatpush2.bf16.msra.mxu0 0
  %5292 = vmatprep.mubr.bf16.mxu0 0
  %5293 = vmatmul.mubr.bf16.gmra.mxu0 %v2136
  %v5294 = vpop.f32.mrf.mxu0
  %v5295 = vadd.f32 0.0, %v5294
  %v5296 = vpop.f32.mrf.mxu0
  %v5297 = vpop.f32.mrf.mxu0
  %v5298 = vadd.f32 0.0, %v5297
  %v5299 = vpop.f32.mrf.mxu0
  %5300 = vmatprep.mubr.bf16.mxu0 0
  %5301 = vmatmul.mubr.bf16.gmra.mxu0 %v2137
  %v5302 = vpop.f32.mrf.mxu0
  %v5303 = vadd.f32 0.0, %v5302
  %v5304 = vpop.f32.mrf.mxu0
  %v5305 = vpop.f32.mrf.mxu0
  %v5306 = vadd.f32 0.0, %v5305
  %v5307 = vpop.f32.mrf.mxu0
  %5308 = vmatprep.mubr.bf16.mxu0 0
  %5309 = vmatmul.mubr.bf16.gmra.mxu0 %v2138
  %v5310 = vpop.f32.mrf.mxu0
  %v5311 = vadd.f32 0.0, %v5310
  %v5312 = vpop.f32.mrf.mxu0
  %v5313 = vpop.f32.mrf.mxu0
  %v5314 = vadd.f32 0.0, %v5313
  %v5315 = vpop.f32.mrf.mxu0
  %5316 = vmatprep.mubr.bf16.mxu0 0
  %5317 = vmatmul.mubr.bf16.gmra.mxu0 %v2139
  %v5318 = vpop.f32.mrf.mxu0
  %v5319 = vadd.f32 0.0, %v5318
  %v5320 = vpop.f32.mrf.mxu0
  %v5321 = vpop.f32.mrf.mxu0
  %v5322 = vadd.f32 0.0, %v5321
  %v5323 = vpop.f32.mrf.mxu0
  %5324 = vmatprep.mubr.bf16.mxu0 0
  %5325 = vmatmul.mubr.bf16.gmra.mxu0 %v2140
  %v5326 = vpop.f32.mrf.mxu0
  %v5327 = vadd.f32 0.0, %v5326
  %v5328 = vpop.f32.mrf.mxu0
  %v5329 = vpop.f32.mrf.mxu0
  %v5330 = vadd.f32 0.0, %v5329
  %v5331 = vpop.f32.mrf.mxu0
  %5332 = vmatprep.mubr.bf16.mxu0 0
  %5333 = vmatmul.mubr.bf16.gmra.mxu0 %v2141
  %v5334 = vpop.f32.mrf.mxu0
  %v5335 = vadd.f32 0.0, %v5334
  %v5336 = vpop.f32.mrf.mxu0
  %v5337 = vpop.f32.mrf.mxu0
  %v5338 = vadd.f32 0.0, %v5337
  %v5339 = vpop.f32.mrf.mxu0
  %5340 = vmatprep.mubr.bf16.mxu0 0
  %5341 = vmatmul.mubr.bf16.gmra.mxu0 %v2142
  %v5342 = vpop.f32.mrf.mxu0
  %v5343 = vadd.f32 0.0, %v5342
  %v5344 = vpop.f32.mrf.mxu0
  %v5345 = vpop.f32.mrf.mxu0
  %v5346 = vadd.f32 0.0, %v5345
  %v5347 = vpop.f32.mrf.mxu0
  %5348 = vmatprep.mubr.bf16.mxu0 0
  %5349 = vmatmul.mubr.bf16.gmra.mxu0 %v2143
  %v5350 = vpop.f32.mrf.mxu0
  %v5351 = vadd.f32 0.0, %v5350
  %v5352 = vpop.f32.mrf.mxu0
  %v5353 = vpop.f32.mrf.mxu0
  %v5354 = vadd.f32 0.0, %v5353
  %v5355 = vpop.f32.mrf.mxu0
  %5356 = vmatprep.mubr.bf16.mxu0 0
  %5357 = vmatmul.mubr.bf16.gmra.mxu0 %v2144
  %v5358 = vpop.f32.mrf.mxu0
  %v5359 = vadd.f32 0.0, %v5358
  %v5360 = vpop.f32.mrf.mxu0
  %v5361 = vpop.f32.mrf.mxu0
  %v5362 = vadd.f32 0.0, %v5361
  %v5363 = vpop.f32.mrf.mxu0
  %5364 = vmatprep.mubr.bf16.mxu0 0
  %5365 = vmatmul.mubr.bf16.gmra.mxu0 %v2145
  %v5366 = vpop.f32.mrf.mxu0
  %v5367 = vadd.f32 0.0, %v5366
  %v5368 = vpop.f32.mrf.mxu0
  %v5369 = vpop.f32.mrf.mxu0
  %v5370 = vadd.f32 0.0, %v5369
  %v5371 = vpop.f32.mrf.mxu0
  %5372 = vmatprep.mubr.bf16.mxu0 0
  %5373 = vmatmul.mubr.bf16.gmra.mxu0 %v2146
  %v5374 = vpop.f32.mrf.mxu0
  %v5375 = vadd.f32 0.0, %v5374
  %v5376 = vpop.f32.mrf.mxu0
  %v5377 = vpop.f32.mrf.mxu0
  %v5378 = vadd.f32 0.0, %v5377
  %v5379 = vpop.f32.mrf.mxu0
  %5380 = vmatprep.mubr.bf16.mxu0 0
  %5381 = vmatmul.mubr.bf16.gmra.mxu0 %v2147
  %v5382 = vpop.f32.mrf.mxu0
  %v5383 = vadd.f32 0.0, %v5382
  %v5384 = vpop.f32.mrf.mxu0
  %v5385 = vpop.f32.mrf.mxu0
  %v5386 = vadd.f32 0.0, %v5385
  %v5387 = vpop.f32.mrf.mxu0
  %5388 = vmatprep.mubr.bf16.mxu0 0
  %5389 = vmatmul.mubr.bf16.gmra.mxu0 %v2148
  %v5390 = vpop.f32.mrf.mxu0
  %v5391 = vadd.f32 0.0, %v5390
  %v5392 = vpop.f32.mrf.mxu0
  %v5393 = vpop.f32.mrf.mxu0
  %v5394 = vadd.f32 0.0, %v5393
  %v5395 = vpop.f32.mrf.mxu0
  %5396 = vmatprep.mubr.bf16.mxu0 0
  %5397 = vmatmul.mubr.bf16.gmra.mxu0 %v2149
  %v5398 = vpop.f32.mrf.mxu0
  %v5399 = vadd.f32 0.0, %v5398
  %v5400 = vpop.f32.mrf.mxu0
  %v5401 = vpop.f32.mrf.mxu0
  %v5402 = vadd.f32 0.0, %v5401
  %v5403 = vpop.f32.mrf.mxu0
  %5404 = vmatprep.mubr.bf16.mxu0 0
  %5405 = vmatmul.mubr.bf16.gmra.mxu0 %v2150
  %v5406 = vpop.f32.mrf.mxu0
  %v5407 = vadd.f32 0.0, %v5406
  %v5408 = vpop.f32.mrf.mxu0
  %v5409 = vpop.f32.mrf.mxu0
  %v5410 = vadd.f32 0.0, %v5409
  %v5411 = vpop.f32.mrf.mxu0
  %5412 = vmatprep.mubr.bf16.mxu0 0
  %5413 = vmatmul.mubr.bf16.gmra.mxu0 0
  %v5414 = vpop.f32.mrf.mxu0
  %v5415 = vadd.f32 0.0, %v5414
  %v5416 = vpop.f32.mrf.mxu0
  %v5417 = vpop.f32.mrf.mxu0
  %v5418 = vadd.f32 0.0, %v5417
  %v5419 = vpop.f32.mrf.mxu0
  %5420 = vmatprep.mubr.bf16.mxu0 0
  %5421 = vmatmul.mubr.bf16.gmra.mxu0 %v2152
  %v5422 = vpop.f32.mrf.mxu0
  %v5423 = vadd.f32 0.0, %v5422
  %v5424 = vpop.f32.mrf.mxu0
  %v5425 = vpop.f32.mrf.mxu0
  %v5426 = vadd.f32 0.0, %v5425
  %v5427 = vpop.f32.mrf.mxu0
  %5428 = vmatprep.mubr.bf16.mxu0 0
  %5429 = vmatmul.mubr.bf16.gmra.mxu0 %v2153
  %v5430 = vpop.f32.mrf.mxu0
  %v5431 = vadd.f32 0.0, %v5430
  %v5432 = vpop.f32.mrf.mxu0
  %v5433 = vpop.f32.mrf.mxu0
  %v5434 = vadd.f32 0.0, %v5433
  %v5435 = vpop.f32.mrf.mxu0
  %5436 = vmatprep.mubr.bf16.mxu0 0
  %5437 = vmatmul.mubr.bf16.gmra.mxu0 %v2154
  %v5438 = vpop.f32.mrf.mxu0
  %v5439 = vadd.f32 0.0, %v5438
  %v5440 = vpop.f32.mrf.mxu0
  %v5441 = vpop.f32.mrf.mxu0
  %v5442 = vadd.f32 0.0, %v5441
  %v5443 = vpop.f32.mrf.mxu0
  %5444 = vmatprep.mubr.bf16.mxu0 0
  %5445 = vmatmul.mubr.bf16.gmra.mxu0 %v2155
  %v5446 = vpop.f32.mrf.mxu0
  %v5447 = vadd.f32 0.0, %v5446
  %v5448 = vpop.f32.mrf.mxu0
  %v5449 = vpop.f32.mrf.mxu0
  %v5450 = vadd.f32 0.0, %v5449
  %v5451 = vpop.f32.mrf.mxu0
  %5452 = vmatprep.mubr.bf16.mxu0 0
  %5453 = vmatmul.mubr.bf16.gmra.mxu0 %v2156
  %v5454 = vpop.f32.mrf.mxu0
  %v5455 = vadd.f32 0.0, %v5454
  %v5456 = vpop.f32.mrf.mxu0
  %v5457 = vpop.f32.mrf.mxu0
  %v5458 = vadd.f32 0.0, %v5457
  %v5459 = vpop.f32.mrf.mxu0
  %5460 = vmatprep.mubr.bf16.mxu0 0
  %5461 = vmatmul.mubr.bf16.gmra.mxu0 %v2157
  %v5462 = vpop.f32.mrf.mxu0
  %v5463 = vadd.f32 0.0, %v5462
  %v5464 = vpop.f32.mrf.mxu0
  %v5465 = vpop.f32.mrf.mxu0
  %v5466 = vadd.f32 0.0, %v5465
  %v5467 = vpop.f32.mrf.mxu0
  %5468 = vmatprep.mubr.bf16.mxu0 0
  %5469 = vmatmul.mubr.bf16.gmra.mxu0 %v2158
  %v5470 = vpop.f32.mrf.mxu0
  %v5471 = vadd.f32 0.0, %v5470
  %v5472 = vpop.f32.mrf.mxu0
  %v5473 = vpop.f32.mrf.mxu0
  %v5474 = vadd.f32 0.0, %v5473
  %v5475 = vpop.f32.mrf.mxu0
  %5476 = vmatprep.mubr.bf16.mxu0 0
  %5477 = vmatmul.mubr.bf16.gmra.mxu0 %v2159
  %v5478 = vpop.f32.mrf.mxu0
  %v5479 = vadd.f32 0.0, %v5478
  %v5480 = vpop.f32.mrf.mxu0
  %v5481 = vpop.f32.mrf.mxu0
  %v5482 = vadd.f32 0.0, %v5481
  %v5483 = vpop.f32.mrf.mxu0
  %5484 = vmatprep.mubr.bf16.mxu0 0
  %5485 = vmatmul.mubr.bf16.gmra.mxu0 %v2160
  %v5486 = vpop.f32.mrf.mxu0
  %v5487 = vadd.f32 0.0, %v5486
  %v5488 = vpop.f32.mrf.mxu0
  %v5489 = vpop.f32.mrf.mxu0
  %v5490 = vadd.f32 0.0, %v5489
  %v5491 = vpop.f32.mrf.mxu0
  %5492 = vmatprep.mubr.bf16.mxu0 0
  %5493 = vmatmul.mubr.bf16.gmra.mxu0 %v2161
  %v5494 = vpop.f32.mrf.mxu0
  %v5495 = vadd.f32 0.0, %v5494
  %v5496 = vpop.f32.mrf.mxu0
  %v5497 = vpop.f32.mrf.mxu0
  %v5498 = vadd.f32 0.0, %v5497
  %v5499 = vpop.f32.mrf.mxu0
  %5500 = vmatprep.mubr.bf16.mxu0 0
  %5501 = vmatmul.mubr.bf16.gmra.mxu0 %v2162
  %v5502 = vpop.f32.mrf.mxu0
  %v5503 = vadd.f32 0.0, %v5502
  %v5504 = vpop.f32.mrf.mxu0
  %v5505 = vpop.f32.mrf.mxu0
  %v5506 = vadd.f32 0.0, %v5505
  %v5507 = vpop.f32.mrf.mxu0
  %5508 = vmatprep.mubr.bf16.mxu0 0
  %5509 = vmatmul.mubr.bf16.gmra.mxu0 %v2163
  %v5510 = vpop.f32.mrf.mxu0
  %v5511 = vadd.f32 0.0, %v5510
  %v5512 = vpop.f32.mrf.mxu0
  %v5513 = vpop.f32.mrf.mxu0
  %v5514 = vadd.f32 0.0, %v5513
  %v5515 = vpop.f32.mrf.mxu0
  %5516 = vmatprep.mubr.bf16.mxu0 0
  %5517 = vmatmul.mubr.bf16.gmra.mxu0 %v2164
  %v5518 = vpop.f32.mrf.mxu0
  %v5519 = vadd.f32 0.0, %v5518
  %v5520 = vpop.f32.mrf.mxu0
  %v5521 = vpop.f32.mrf.mxu0
  %v5522 = vadd.f32 0.0, %v5521
  %v5523 = vpop.f32.mrf.mxu0
  %5524 = vmatprep.mubr.bf16.mxu0 0
  %5525 = vmatmul.mubr.bf16.gmra.mxu0 %v2165
  %v5526 = vpop.f32.mrf.mxu0
  %v5527 = vadd.f32 0.0, %v5526
  %v5528 = vpop.f32.mrf.mxu0
  %v5529 = vpop.f32.mrf.mxu0
  %v5530 = vadd.f32 0.0, %v5529
  %v5531 = vpop.f32.mrf.mxu0
  %5532 = vmatprep.mubr.bf16.mxu0 0
  %5533 = vmatmul.mubr.bf16.gmra.mxu0 %v2166
  %v5534 = vpop.f32.mrf.mxu0
  %v5535 = vadd.f32 0.0, %v5534
  %v5536 = vpop.f32.mrf.mxu0
  %v5537 = vpop.f32.mrf.mxu0
  %v5538 = vadd.f32 0.0, %v5537
  %v5539 = vpop.f32.mrf.mxu0
  %5540 = vmatprep.mubr.bf16.mxu0 0
  %5541 = vmatmul.mubr.bf16.gmra.mxu0 0
  %v5542 = vpop.f32.mrf.mxu0
  %v5543 = vadd.f32 0.0, %v5542
  %v5544 = vpop.f32.mrf.mxu0
  %v5545 = vpop.f32.mrf.mxu0
  %v5546 = vadd.f32 0.0, %v5545
  %v5547 = vpop.f32.mrf.mxu0
  %5548 = vdwg.mxu0
  %v5549 = vadd.f32 %v5132, %v5295
  %v5550 = vadd.f32 %v5133, %v5298
  %v5551 = vadd.f32 %v5134, %v5303
  %v5552 = vadd.f32 %v5135, %v5306
  %v5553 = vadd.f32 %v5136, %v5311
  %v5554 = vadd.f32 %v5137, %v5314
  %v5555 = vadd.f32 %v5138, %v5319
  %v5556 = vadd.f32 %v5139, %v5322
  %v5557 = vadd.f32 %v5140, %v5327
  %v5558 = vadd.f32 %v5141, %v5330
  %v5559 = vadd.f32 %v5142, %v5335
  %v5560 = vadd.f32 %v5143, %v5338
  %v5561 = vadd.f32 %v5144, %v5343
  %v5562 = vadd.f32 %v5145, %v5346
  %v5563 = vadd.f32 %v5146, %v5351
  %v5564 = vadd.f32 %v5147, %v5354
  %v5565 = vadd.f32 %v5148, %v5359
  %v5566 = vadd.f32 %v5149, %v5362
  %v5567 = vadd.f32 %v5150, %v5367
  %v5568 = vadd.f32 %v5151, %v5370
  %v5569 = vadd.f32 %v5152, %v5375
  %v5570 = vadd.f32 %v5153, %v5378
  %v5571 = vadd.f32 %v5154, %v5383
  %v5572 = vadd.f32 %v5155, %v5386
  %v5573 = vadd.f32 %v5156, %v5391
  %v5574 = vadd.f32 %v5157, %v5394
  %v5575 = vadd.f32 %v5158, %v5399
  %v5576 = vadd.f32 %v5159, %v5402
  %v5577 = vadd.f32 %v5160, %v5407
  %v5578 = vadd.f32 %v5161, %v5410
  %v5579 = vadd.f32 %v5162, %v5415
  %v5580 = vadd.f32 %v5163, %v5418
  %v5581 = vadd.f32 %v5164, %v5423
  %v5582 = vadd.f32 %v5165, %v5426
  %v5583 = vadd.f32 %v5166, %v5431
  %v5584 = vadd.f32 %v5167, %v5434
  %v5585 = vadd.f32 %v5168, %v5439
  %v5586 = vadd.f32 %v5169, %v5442
  %v5587 = vadd.f32 %v5170, %v5447
  %v5588 = vadd.f32 %v5171, %v5450
  %v5589 = vadd.f32 %v5172, %v5455
  %v5590 = vadd.f32 %v5173, %v5458
  %v5591 = vadd.f32 %v5174, %v5463
  %v5592 = vadd.f32 %v5175, %v5466
  %v5593 = vadd.f32 %v5176, %v5471
  %v5594 = vadd.f32 %v5177, %v5474
  %v5595 = vadd.f32 %v5178, %v5479
  %v5596 = vadd.f32 %v5179, %v5482
  %v5597 = vadd.f32 %v5180, %v5487
  %v5598 = vadd.f32 %v5181, %v5490
  %v5599 = vadd.f32 %v5182, %v5495
  %v5600 = vadd.f32 %v5183, %v5498
  %v5601 = vadd.f32 %v5184, %v5503
  %v5602 = vadd.f32 %v5185, %v5506
  %v5603 = vadd.f32 %v5186, %v5511
  %v5604 = vadd.f32 %v5187, %v5514
  %v5605 = vadd.f32 %v5188, %v5519
  %v5606 = vadd.f32 %v5189, %v5522
  %v5607 = vadd.f32 %v5190, %v5527
  %v5608 = vadd.f32 %v5191, %v5530
  %v5609 = vadd.f32 %v5192, %v5535
  %v5610 = vadd.f32 %v5193, %v5538
  %v5611 = vadd.f32 %v5194, %v5543
  %v5612 = vadd.f32 %v5195, %v5546
  %v5613 = vld [vmem:[%s4 + $0x1c0] sm:$0xf]
  %v5614 = vld [vmem:[%s4 + $0x1c4] sm:$0xf]
  %v5615 = vld [vmem:[%s4 + $0x1c8] sm:$0xf]
  %v5616 = vld [vmem:[%s4 + $0x1cc] sm:$0xf]
  %v5617 = vld [vmem:[%s4 + $0x1d0] sm:$0xf]
  %v5618 = vld [vmem:[%s4 + $0x1d4] sm:$0xf]
  %v5619 = vld [vmem:[%s4 + $0x1d8] sm:$0xf]
  %v5620 = vld [vmem:[%s4 + $0x1dc] sm:$0xf]
  %v5621 = vld [vmem:[%s4 + $0x1e0] sm:$0xf]
  %v5622 = vld [vmem:[%s4 + $0x1e4] sm:$0xf]
  %v5623 = vld [vmem:[%s4 + $0x1e8] sm:$0xf]
  %v5624 = vld [vmem:[%s4 + $0x1ec] sm:$0xf]
  %v5625 = vld [vmem:[%s4 + $0x1f0] sm:$0xf]
  %v5626 = vld [vmem:[%s4 + $0x1f4] sm:$0xf]
  %v5627 = vld [vmem:[%s4 + $0x1f8] sm:$0xf]
  %v5628 = vld [vmem:[%s4 + $0x1fc] sm:$0xf]
  %v5645 = vunpack.c.l.b16 %v5613
  %v5646 = vunpack.c.l.b16 %v5614
  %v5647 = vunpack.c.l.b16 %v5615
  %v5648 = vunpack.c.l.b16 %v5616
  %v5649 = vunpack.c.l.b16 %v5617
  %v5650 = vunpack.c.l.b16 %v5618
  %v5651 = vunpack.c.l.b16 %v5619
  %v5652 = vunpack.c.l.b16 %v5620
  %v5653 = vunpack.c.l.b16 %v5621
  %v5654 = vunpack.c.l.b16 %v5622
  %v5655 = vunpack.c.l.b16 %v5623
  %v5656 = vunpack.c.l.b16 %v5624
  %v5657 = vunpack.c.l.b16 %v5625
  %v5658 = vunpack.c.l.b16 %v5626
  %v5659 = vunpack.c.l.b16 %v5627
  %v5660 = vunpack.c.l.b16 %v5628
  %v5661 = vpack.c.b16 %v5646, %v5645
  %v5662 = vpack.c.b16 %v5648, %v5647
  %v5663 = vpack.c.b16 %v5650, %v5649
  %v5664 = vpack.c.b16 %v5652, %v5651
  %v5665 = vpack.c.b16 %v5654, %v5653
  %v5666 = vpack.c.b16 %v5656, %v5655
  %v5667 = vpack.c.b16 %v5658, %v5657
  %v5668 = vpack.c.b16 %v5660, %v5659
  %5677 = vmatprep.subr.bf16.mxu0 0
  %5678 = vmatpush1.bf16.msra.mxu0 %v5668
  %5679 = vmatprep.subr.bf16.mxu0 0
  %5680 = vmatpush1.bf16.msra.mxu0 %v5667
  %5681 = vmatprep.subr.bf16.mxu0 0
  %5682 = vmatpush1.bf16.msra.mxu0 %v5666
  %5683 = vmatprep.subr.bf16.mxu0 0
  %5684 = vmatpush1.bf16.msra.mxu0 %v5665
  %5685 = vmatprep.subr.bf16.mxu0 0
  %5686 = vmatpush1.bf16.msra.mxu0 %v5664
  %5687 = vmatprep.subr.bf16.mxu0 0
  %5688 = vmatpush1.bf16.msra.mxu0 %v5663
  %5689 = vmatprep.subr.bf16.mxu0 0
  %5690 = vmatpush1.bf16.msra.mxu0 %v5662
  %5691 = vmatprep.subr.bf16.mxu0 0
  %5692 = vmatpush1.bf16.msra.mxu0 %v5661
  %5693 = vmatprep.subr.bf16.mxu0 0
  %5694 = vmatpush2.bf16.msra.mxu0 0
  %5695 = vmatprep.subr.bf16.mxu0 0
  %5696 = vmatpush2.bf16.msra.mxu0 0
  %5697 = vmatprep.subr.bf16.mxu0 0
  %5698 = vmatpush2.bf16.msra.mxu0 0
  %5699 = vmatprep.subr.bf16.mxu0 0
  %5700 = vmatpush2.bf16.msra.mxu0 0
  %5701 = vmatprep.subr.bf16.mxu0 0
  %5702 = vmatpush2.bf16.msra.mxu0 0
  %5703 = vmatprep.subr.bf16.mxu0 0
  %5704 = vmatpush2.bf16.msra.mxu0 0
  %5705 = vmatprep.subr.bf16.mxu0 0
  %5706 = vmatpush2.bf16.msra.mxu0 0
  %5707 = vmatprep.subr.bf16.mxu0 0
  %5708 = vmatpush2.bf16.msra.mxu0 0
  %5709 = vmatprep.mubr.bf16.mxu0 0
  %5710 = vmatmul.mubr.bf16.gmra.mxu0 %v2247
  %v5711 = vpop.f32.mrf.mxu0
  %v5712 = vadd.f32 0.0, %v5711
  %v5713 = vpop.f32.mrf.mxu0
  %v5714 = vpop.f32.mrf.mxu0
  %v5715 = vadd.f32 0.0, %v5714
  %v5716 = vpop.f32.mrf.mxu0
  %5717 = vmatprep.mubr.bf16.mxu0 0
  %5718 = vmatmul.mubr.bf16.gmra.mxu0 %v2259
  %v5719 = vpop.f32.mrf.mxu0
  %v5720 = vadd.f32 0.0, %v5719
  %v5721 = vpop.f32.mrf.mxu0
  %v5722 = vpop.f32.mrf.mxu0
  %v5723 = vadd.f32 0.0, %v5722
  %v5724 = vpop.f32.mrf.mxu0
  %5725 = vmatprep.mubr.bf16.mxu0 0
  %5726 = vmatmul.mubr.bf16.gmra.mxu0 %v2271
  %v5727 = vpop.f32.mrf.mxu0
  %v5728 = vadd.f32 0.0, %v5727
  %v5729 = vpop.f32.mrf.mxu0
  %v5730 = vpop.f32.mrf.mxu0
  %v5731 = vadd.f32 0.0, %v5730
  %v5732 = vpop.f32.mrf.mxu0
  %5733 = vmatprep.mubr.bf16.mxu0 0
  %5734 = vmatmul.mubr.bf16.gmra.mxu0 %v2283
  %v5735 = vpop.f32.mrf.mxu0
  %v5736 = vadd.f32 0.0, %v5735
  %v5737 = vpop.f32.mrf.mxu0
  %v5738 = vpop.f32.mrf.mxu0
  %v5739 = vadd.f32 0.0, %v5738
  %v5740 = vpop.f32.mrf.mxu0
  %5741 = vmatprep.mubr.bf16.mxu0 0
  %5742 = vmatmul.mubr.bf16.gmra.mxu0 %v2295
  %v5743 = vpop.f32.mrf.mxu0
  %v5744 = vadd.f32 0.0, %v5743
  %v5745 = vpop.f32.mrf.mxu0
  %v5746 = vpop.f32.mrf.mxu0
  %v5747 = vadd.f32 0.0, %v5746
  %v5748 = vpop.f32.mrf.mxu0
  %5749 = vmatprep.mubr.bf16.mxu0 0
  %5750 = vmatmul.mubr.bf16.gmra.mxu0 %v2307
  %v5751 = vpop.f32.mrf.mxu0
  %v5752 = vadd.f32 0.0, %v5751
  %v5753 = vpop.f32.mrf.mxu0
  %v5754 = vpop.f32.mrf.mxu0
  %v5755 = vadd.f32 0.0, %v5754
  %v5756 = vpop.f32.mrf.mxu0
  %5757 = vmatprep.mubr.bf16.mxu0 0
  %5758 = vmatmul.mubr.bf16.gmra.mxu0 %v2319
  %v5759 = vpop.f32.mrf.mxu0
  %v5760 = vadd.f32 0.0, %v5759
  %v5761 = vpop.f32.mrf.mxu0
  %v5762 = vpop.f32.mrf.mxu0
  %v5763 = vadd.f32 0.0, %v5762
  %v5764 = vpop.f32.mrf.mxu0
  %5765 = vmatprep.mubr.bf16.mxu0 0
  %5766 = vmatmul.mubr.bf16.gmra.mxu0 %v2331
  %v5767 = vpop.f32.mrf.mxu0
  %v5768 = vadd.f32 0.0, %v5767
  %v5769 = vpop.f32.mrf.mxu0
  %v5770 = vpop.f32.mrf.mxu0
  %v5771 = vadd.f32 0.0, %v5770
  %v5772 = vpop.f32.mrf.mxu0
  %5773 = vmatprep.mubr.bf16.mxu0 0
  %5774 = vmatmul.mubr.bf16.gmra.mxu0 %v2343
  %v5775 = vpop.f32.mrf.mxu0
  %v5776 = vadd.f32 0.0, %v5775
  %v5777 = vpop.f32.mrf.mxu0
  %v5778 = vpop.f32.mrf.mxu0
  %v5779 = vadd.f32 0.0, %v5778
  %v5780 = vpop.f32.mrf.mxu0
  %5781 = vmatprep.mubr.bf16.mxu0 0
  %5782 = vmatmul.mubr.bf16.gmra.mxu0 %v2355
  %v5783 = vpop.f32.mrf.mxu0
  %v5784 = vadd.f32 0.0, %v5783
  %v5785 = vpop.f32.mrf.mxu0
  %v5786 = vpop.f32.mrf.mxu0
  %v5787 = vadd.f32 0.0, %v5786
  %v5788 = vpop.f32.mrf.mxu0
  %5789 = vmatprep.mubr.bf16.mxu0 0
  %5790 = vmatmul.mubr.bf16.gmra.mxu0 %v2367
  %v5791 = vpop.f32.mrf.mxu0
  %v5792 = vadd.f32 0.0, %v5791
  %v5793 = vpop.f32.mrf.mxu0
  %v5794 = vpop.f32.mrf.mxu0
  %v5795 = vadd.f32 0.0, %v5794
  %v5796 = vpop.f32.mrf.mxu0
  %5797 = vmatprep.mubr.bf16.mxu0 0
  %5798 = vmatmul.mubr.bf16.gmra.mxu0 %v2379
  %v5799 = vpop.f32.mrf.mxu0
  %v5800 = vadd.f32 0.0, %v5799
  %v5801 = vpop.f32.mrf.mxu0
  %v5802 = vpop.f32.mrf.mxu0
  %v5803 = vadd.f32 0.0, %v5802
  %v5804 = vpop.f32.mrf.mxu0
  %5805 = vmatprep.mubr.bf16.mxu0 0
  %5806 = vmatmul.mubr.bf16.gmra.mxu0 %v2391
  %v5807 = vpop.f32.mrf.mxu0
  %v5808 = vadd.f32 0.0, %v5807
  %v5809 = vpop.f32.mrf.mxu0
  %v5810 = vpop.f32.mrf.mxu0
  %v5811 = vadd.f32 0.0, %v5810
  %v5812 = vpop.f32.mrf.mxu0
  %5813 = vmatprep.mubr.bf16.mxu0 0
  %5814 = vmatmul.mubr.bf16.gmra.mxu0 %v2403
  %v5815 = vpop.f32.mrf.mxu0
  %v5816 = vadd.f32 0.0, %v5815
  %v5817 = vpop.f32.mrf.mxu0
  %v5818 = vpop.f32.mrf.mxu0
  %v5819 = vadd.f32 0.0, %v5818
  %v5820 = vpop.f32.mrf.mxu0
  %5821 = vmatprep.mubr.bf16.mxu0 0
  %5822 = vmatmul.mubr.bf16.gmra.mxu0 %v4335
  %v5823 = vpop.f32.mrf.mxu0
  %v5824 = vadd.f32 0.0, %v5823
  %v5825 = vpop.f32.mrf.mxu0
  %v5826 = vpop.f32.mrf.mxu0
  %v5827 = vadd.f32 0.0, %v5826
  %v5828 = vpop.f32.mrf.mxu0
  %5829 = vmatprep.mubr.bf16.mxu0 0
  %5830 = vmatmul.mubr.bf16.gmra.mxu0 %v2223
  %v5831 = vpop.f32.mrf.mxu0
  %v5832 = vadd.f32 0.0, %v5831
  %v5833 = vpop.f32.mrf.mxu0
  %v5834 = vpop.f32.mrf.mxu0
  %v5835 = vadd.f32 0.0, %v5834
  %v5836 = vpop.f32.mrf.mxu0
  %5837 = vmatprep.mubr.bf16.mxu0 0
  %5838 = vmatmul.mubr.bf16.gmra.mxu0 %v2427
  %v5839 = vpop.f32.mrf.mxu0
  %v5840 = vadd.f32 0.0, %v5839
  %v5841 = vpop.f32.mrf.mxu0
  %v5842 = vpop.f32.mrf.mxu0
  %v5843 = vadd.f32 0.0, %v5842
  %v5844 = vpop.f32.mrf.mxu0
  %5845 = vmatprep.mubr.bf16.mxu0 0
  %5846 = vmatmul.mubr.bf16.gmra.mxu0 %v2439
  %v5847 = vpop.f32.mrf.mxu0
  %v5848 = vadd.f32 0.0, %v5847
  %v5849 = vpop.f32.mrf.mxu0
  %v5850 = vpop.f32.mrf.mxu0
  %v5851 = vadd.f32 0.0, %v5850
  %v5852 = vpop.f32.mrf.mxu0
  %5853 = vmatprep.mubr.bf16.mxu0 0
  %5854 = vmatmul.mubr.bf16.gmra.mxu0 %v2451
  %v5855 = vpop.f32.mrf.mxu0
  %v5856 = vadd.f32 0.0, %v5855
  %v5857 = vpop.f32.mrf.mxu0
  %v5858 = vpop.f32.mrf.mxu0
  %v5859 = vadd.f32 0.0, %v5858
  %v5860 = vpop.f32.mrf.mxu0
  %5861 = vmatprep.mubr.bf16.mxu0 0
  %5862 = vmatmul.mubr.bf16.gmra.mxu0 %v2463
  %v5863 = vpop.f32.mrf.mxu0
  %v5864 = vadd.f32 0.0, %v5863
  %v5865 = vpop.f32.mrf.mxu0
  %v5866 = vpop.f32.mrf.mxu0
  %v5867 = vadd.f32 0.0, %v5866
  %v5868 = vpop.f32.mrf.mxu0
  %5869 = vmatprep.mubr.bf16.mxu0 0
  %5870 = vmatmul.mubr.bf16.gmra.mxu0 %v2475
  %v5871 = vpop.f32.mrf.mxu0
  %v5872 = vadd.f32 0.0, %v5871
  %v5873 = vpop.f32.mrf.mxu0
  %v5874 = vpop.f32.mrf.mxu0
  %v5875 = vadd.f32 0.0, %v5874
  %v5876 = vpop.f32.mrf.mxu0
  %5877 = vmatprep.mubr.bf16.mxu0 0
  %5878 = vmatmul.mubr.bf16.gmra.mxu0 %v2487
  %v5879 = vpop.f32.mrf.mxu0
  %v5880 = vadd.f32 0.0, %v5879
  %v5881 = vpop.f32.mrf.mxu0
  %v5882 = vpop.f32.mrf.mxu0
  %v5883 = vadd.f32 0.0, %v5882
  %v5884 = vpop.f32.mrf.mxu0
  %5885 = vmatprep.mubr.bf16.mxu0 0
  %5886 = vmatmul.mubr.bf16.gmra.mxu0 %v2499
  %v5887 = vpop.f32.mrf.mxu0
  %v5888 = vadd.f32 0.0, %v5887
  %v5889 = vpop.f32.mrf.mxu0
  %v5890 = vpop.f32.mrf.mxu0
  %v5891 = vadd.f32 0.0, %v5890
  %v5892 = vpop.f32.mrf.mxu0
  %5893 = vmatprep.mubr.bf16.mxu0 0
  %5894 = vmatmul.mubr.bf16.gmra.mxu0 %v2511
  %v5895 = vpop.f32.mrf.mxu0
  %v5896 = vadd.f32 0.0, %v5895
  %v5897 = vpop.f32.mrf.mxu0
  %v5898 = vpop.f32.mrf.mxu0
  %v5899 = vadd.f32 0.0, %v5898
  %v5900 = vpop.f32.mrf.mxu0
  %5901 = vmatprep.mubr.bf16.mxu0 0
  %5902 = vmatmul.mubr.bf16.gmra.mxu0 %v2523
  %v5903 = vpop.f32.mrf.mxu0
  %v5904 = vadd.f32 0.0, %v5903
  %v5905 = vpop.f32.mrf.mxu0
  %v5906 = vpop.f32.mrf.mxu0
  %v5907 = vadd.f32 0.0, %v5906
  %v5908 = vpop.f32.mrf.mxu0
  %5909 = vmatprep.mubr.bf16.mxu0 0
  %5910 = vmatmul.mubr.bf16.gmra.mxu0 %v2535
  %v5911 = vpop.f32.mrf.mxu0
  %v5912 = vadd.f32 0.0, %v5911
  %v5913 = vpop.f32.mrf.mxu0
  %v5914 = vpop.f32.mrf.mxu0
  %v5915 = vadd.f32 0.0, %v5914
  %v5916 = vpop.f32.mrf.mxu0
  %5917 = vmatprep.mubr.bf16.mxu0 0
  %5918 = vmatmul.mubr.bf16.gmra.mxu0 %v2547
  %v5919 = vpop.f32.mrf.mxu0
  %v5920 = vadd.f32 0.0, %v5919
  %v5921 = vpop.f32.mrf.mxu0
  %v5922 = vpop.f32.mrf.mxu0
  %v5923 = vadd.f32 0.0, %v5922
  %v5924 = vpop.f32.mrf.mxu0
  %5925 = vmatprep.mubr.bf16.mxu0 0
  %5926 = vmatmul.mubr.bf16.gmra.mxu0 %v2559
  %v5927 = vpop.f32.mrf.mxu0
  %v5928 = vadd.f32 0.0, %v5927
  %v5929 = vpop.f32.mrf.mxu0
  %v5930 = vpop.f32.mrf.mxu0
  %v5931 = vadd.f32 0.0, %v5930
  %v5932 = vpop.f32.mrf.mxu0
  %5933 = vmatprep.mubr.bf16.mxu0 0
  %5934 = vmatmul.mubr.bf16.gmra.mxu0 %v2571
  %v5935 = vpop.f32.mrf.mxu0
  %v5936 = vadd.f32 0.0, %v5935
  %v5937 = vpop.f32.mrf.mxu0
  %v5938 = vpop.f32.mrf.mxu0
  %v5939 = vadd.f32 0.0, %v5938
  %v5940 = vpop.f32.mrf.mxu0
  %5941 = vmatprep.mubr.bf16.mxu0 0
  %5942 = vmatmul.mubr.bf16.gmra.mxu0 %v2583
  %v5943 = vpop.f32.mrf.mxu0
  %v5944 = vadd.f32 0.0, %v5943
  %v5945 = vpop.f32.mrf.mxu0
  %v5946 = vpop.f32.mrf.mxu0
  %v5947 = vadd.f32 0.0, %v5946
  %v5948 = vpop.f32.mrf.mxu0
  %5949 = vmatprep.mubr.bf16.mxu0 0
  %5950 = vmatmul.mubr.bf16.gmra.mxu0 %v4347
  %v5951 = vpop.f32.mrf.mxu0
  %v5952 = vadd.f32 0.0, %v5951
  %v5953 = vpop.f32.mrf.mxu0
  %v5954 = vpop.f32.mrf.mxu0
  %v5955 = vadd.f32 0.0, %v5954
  %v5956 = vpop.f32.mrf.mxu0
  %5957 = vmatprep.mubr.bf16.mxu0 0
  %5958 = vmatmul.mubr.bf16.gmra.mxu0 %v2223
  %v5959 = vpop.f32.mrf.mxu0
  %v5960 = vadd.f32 0.0, %v5959
  %v5961 = vpop.f32.mrf.mxu0
  %v5962 = vpop.f32.mrf.mxu0
  %v5963 = vadd.f32 0.0, %v5962
  %v5964 = vpop.f32.mrf.mxu0
  %5965 = vdwg.mxu0
  %v5966 = vadd.f32 %v5549, %v5712
  %v5967 = vadd.f32 %v5550, %v5715
  %v5968 = vadd.f32 %v5551, %v5720
  %v5969 = vadd.f32 %v5552, %v5723
  %v5970 = vadd.f32 %v5553, %v5728
  %v5971 = vadd.f32 %v5554, %v5731
  %v5972 = vadd.f32 %v5555, %v5736
  %v5973 = vadd.f32 %v5556, %v5739
  %v5974 = vadd.f32 %v5557, %v5744
  %v5975 = vadd.f32 %v5558, %v5747
  %v5976 = vadd.f32 %v5559, %v5752
  %v5977 = vadd.f32 %v5560, %v5755
  %v5978 = vadd.f32 %v5561, %v5760
  %v5979 = vadd.f32 %v5562, %v5763
  %v5980 = vadd.f32 %v5563, %v5768
  %v5981 = vadd.f32 %v5564, %v5771
  %v5982 = vadd.f32 %v5565, %v5776
  %v5983 = vadd.f32 %v5566, %v5779
  %v5984 = vadd.f32 %v5567, %v5784
  %v5985 = vadd.f32 %v5568, %v5787
  %v5986 = vadd.f32 %v5569, %v5792
  %v5987 = vadd.f32 %v5570, %v5795
  %v5988 = vadd.f32 %v5571, %v5800
  %v5989 = vadd.f32 %v5572, %v5803
  %v5990 = vadd.f32 %v5573, %v5808
  %v5991 = vadd.f32 %v5574, %v5811
  %v5992 = vadd.f32 %v5575, %v5816
  %v5993 = vadd.f32 %v5576, %v5819
  %v5994 = vadd.f32 %v5577, %v5824
  %v5995 = vadd.f32 %v5578, %v5827
  %v5996 = vadd.f32 %v5579, %v5832
  %v5997 = vadd.f32 %v5580, %v5835
  %v5998 = vadd.f32 %v5581, %v5840
  %v5999 = vadd.f32 %v5582, %v5843
  %v6000 = vadd.f32 %v5583, %v5848
  %v6001 = vadd.f32 %v5584, %v5851
  %v6002 = vadd.f32 %v5585, %v5856
  %v6003 = vadd.f32 %v5586, %v5859
  %v6004 = vadd.f32 %v5587, %v5864
  %v6005 = vadd.f32 %v5588, %v5867
  %v6006 = vadd.f32 %v5589, %v5872
  %v6007 = vadd.f32 %v5590, %v5875
  %v6008 = vadd.f32 %v5591, %v5880
  %v6009 = vadd.f32 %v5592, %v5883
  %v6010 = vadd.f32 %v5593, %v5888
  %v6011 = vadd.f32 %v5594, %v5891
  %v6012 = vadd.f32 %v5595, %v5896
  %v6013 = vadd.f32 %v5596, %v5899
  %v6014 = vadd.f32 %v5597, %v5904
  %v6015 = vadd.f32 %v5598, %v5907
  %v6016 = vadd.f32 %v5599, %v5912
  %v6017 = vadd.f32 %v5600, %v5915
  %v6018 = vadd.f32 %v5601, %v5920
  %v6019 = vadd.f32 %v5602, %v5923
  %v6020 = vadd.f32 %v5603, %v5928
  %v6021 = vadd.f32 %v5604, %v5931
  %v6022 = vadd.f32 %v5605, %v5936
  %v6023 = vadd.f32 %v5606, %v5939
  %v6024 = vadd.f32 %v5607, %v5944
  %v6025 = vadd.f32 %v5608, %v5947
  %v6026 = vadd.f32 %v5609, %v5952
  %v6027 = vadd.f32 %v5610, %v5955
  %v6028 = vadd.f32 %v5611, %v5960
  %v6029 = vadd.f32 %v5612, %v5963
  %v6030 = vld [vmem:[%s4 + $0x200] sm:$0xf]
  %v6031 = vld [vmem:[%s4 + $0x204] sm:$0xf]
  %v6032 = vld [vmem:[%s4 + $0x208] sm:$0xf]
  %v6033 = vld [vmem:[%s4 + $0x20c] sm:$0xf]
  %v6034 = vld [vmem:[%s4 + $0x210] sm:$0xf]
  %v6035 = vld [vmem:[%s4 + $0x214] sm:$0xf]
  %v6036 = vld [vmem:[%s4 + $0x218] sm:$0xf]
  %v6037 = vld [vmem:[%s4 + $0x21c] sm:$0xf]
  %v6038 = vld [vmem:[%s4 + $0x220] sm:$0xf]
  %v6039 = vld [vmem:[%s4 + $0x224] sm:$0xf]
  %v6040 = vld [vmem:[%s4 + $0x228] sm:$0xf]
  %v6041 = vld [vmem:[%s4 + $0x22c] sm:$0xf]
  %v6042 = vld [vmem:[%s4 + $0x230] sm:$0xf]
  %v6043 = vld [vmem:[%s4 + $0x234] sm:$0xf]
  %v6044 = vld [vmem:[%s4 + $0x238] sm:$0xf]
  %v6045 = vld [vmem:[%s4 + $0x23c] sm:$0xf]
  %v6062 = vunpack.c.l.b16 %v6030
  %v6063 = vunpack.c.l.b16 %v6031
  %v6064 = vunpack.c.l.b16 %v6032
  %v6065 = vunpack.c.l.b16 %v6033
  %v6066 = vunpack.c.l.b16 %v6034
  %v6067 = vunpack.c.l.b16 %v6035
  %v6068 = vunpack.c.l.b16 %v6036
  %v6069 = vunpack.c.l.b16 %v6037
  %v6070 = vunpack.c.l.b16 %v6038
  %v6071 = vunpack.c.l.b16 %v6039
  %v6072 = vunpack.c.l.b16 %v6040
  %v6073 = vunpack.c.l.b16 %v6041
  %v6074 = vunpack.c.l.b16 %v6042
  %v6075 = vunpack.c.l.b16 %v6043
  %v6076 = vunpack.c.l.b16 %v6044
  %v6077 = vunpack.c.l.b16 %v6045
  %v6078 = vpack.c.b16 %v6063, %v6062
  %v6079 = vpack.c.b16 %v6065, %v6064
  %v6080 = vpack.c.b16 %v6067, %v6066
  %v6081 = vpack.c.b16 %v6069, %v6068
  %v6082 = vpack.c.b16 %v6071, %v6070
  %v6083 = vpack.c.b16 %v6073, %v6072
  %v6084 = vpack.c.b16 %v6075, %v6074
  %v6085 = vpack.c.b16 %v6077, %v6076
  %6094 = vmatprep.subr.bf16.mxu0 0
  %6095 = vmatpush1.bf16.msra.mxu0 %v6085
  %6096 = vmatprep.subr.bf16.mxu0 0
  %6097 = vmatpush1.bf16.msra.mxu0 %v6084
  %6098 = vmatprep.subr.bf16.mxu0 0
  %6099 = vmatpush1.bf16.msra.mxu0 %v6083
  %6100 = vmatprep.subr.bf16.mxu0 0
  %6101 = vmatpush1.bf16.msra.mxu0 %v6082
  %6102 = vmatprep.subr.bf16.mxu0 0
  %6103 = vmatpush1.bf16.msra.mxu0 %v6081
  %6104 = vmatprep.subr.bf16.mxu0 0
  %6105 = vmatpush1.bf16.msra.mxu0 %v6080
  %6106 = vmatprep.subr.bf16.mxu0 0
  %6107 = vmatpush1.bf16.msra.mxu0 %v6079
  %6108 = vmatprep.subr.bf16.mxu0 0
  %6109 = vmatpush1.bf16.msra.mxu0 %v6078
  %6110 = vmatprep.subr.bf16.mxu0 0
  %6111 = vmatpush2.bf16.msra.mxu0 0
  %6112 = vmatprep.subr.bf16.mxu0 0
  %6113 = vmatpush2.bf16.msra.mxu0 0
  %6114 = vmatprep.subr.bf16.mxu0 0
  %6115 = vmatpush2.bf16.msra.mxu0 0
  %6116 = vmatprep.subr.bf16.mxu0 0
  %6117 = vmatpush2.bf16.msra.mxu0 0
  %6118 = vmatprep.subr.bf16.mxu0 0
  %6119 = vmatpush2.bf16.msra.mxu0 0
  %6120 = vmatprep.subr.bf16.mxu0 0
  %6121 = vmatpush2.bf16.msra.mxu0 0
  %6122 = vmatprep.subr.bf16.mxu0 0
  %6123 = vmatpush2.bf16.msra.mxu0 0
  %6124 = vmatprep.subr.bf16.mxu0 0
  %6125 = vmatpush2.bf16.msra.mxu0 0
  %6126 = vmatprep.mubr.bf16.mxu0 0
  %6127 = vmatmul.mubr.bf16.gmra.mxu0 %v3374
  %v6128 = vpop.f32.mrf.mxu0
  %v6129 = vadd.f32 0.0, %v6128
  %v6130 = vpop.f32.mrf.mxu0
  %v6131 = vpop.f32.mrf.mxu0
  %v6132 = vadd.f32 0.0, %v6131
  %v6133 = vpop.f32.mrf.mxu0
  %6134 = vmatprep.mubr.bf16.mxu0 0
  %6135 = vmatmul.mubr.bf16.gmra.mxu0 %v3377
  %v6136 = vpop.f32.mrf.mxu0
  %v6137 = vadd.f32 0.0, %v6136
  %v6138 = vpop.f32.mrf.mxu0
  %v6139 = vpop.f32.mrf.mxu0
  %v6140 = vadd.f32 0.0, %v6139
  %v6141 = vpop.f32.mrf.mxu0
  %6142 = vmatprep.mubr.bf16.mxu0 0
  %6143 = vmatmul.mubr.bf16.gmra.mxu0 %v3380
  %v6144 = vpop.f32.mrf.mxu0
  %v6145 = vadd.f32 0.0, %v6144
  %v6146 = vpop.f32.mrf.mxu0
  %v6147 = vpop.f32.mrf.mxu0
  %v6148 = vadd.f32 0.0, %v6147
  %v6149 = vpop.f32.mrf.mxu0
  %6150 = vmatprep.mubr.bf16.mxu0 0
  %6151 = vmatmul.mubr.bf16.gmra.mxu0 %v3383
  %v6152 = vpop.f32.mrf.mxu0
  %v6153 = vadd.f32 0.0, %v6152
  %v6154 = vpop.f32.mrf.mxu0
  %v6155 = vpop.f32.mrf.mxu0
  %v6156 = vadd.f32 0.0, %v6155
  %v6157 = vpop.f32.mrf.mxu0
  %6158 = vmatprep.mubr.bf16.mxu0 0
  %6159 = vmatmul.mubr.bf16.gmra.mxu0 %v3386
  %v6160 = vpop.f32.mrf.mxu0
  %v6161 = vadd.f32 0.0, %v6160
  %v6162 = vpop.f32.mrf.mxu0
  %v6163 = vpop.f32.mrf.mxu0
  %v6164 = vadd.f32 0.0, %v6163
  %v6165 = vpop.f32.mrf.mxu0
  %6166 = vmatprep.mubr.bf16.mxu0 0
  %6167 = vmatmul.mubr.bf16.gmra.mxu0 %v3389
  %v6168 = vpop.f32.mrf.mxu0
  %v6169 = vadd.f32 0.0, %v6168
  %v6170 = vpop.f32.mrf.mxu0
  %v6171 = vpop.f32.mrf.mxu0
  %v6172 = vadd.f32 0.0, %v6171
  %v6173 = vpop.f32.mrf.mxu0
  %6174 = vmatprep.mubr.bf16.mxu0 0
  %6175 = vmatmul.mubr.bf16.gmra.mxu0 %v3392
  %v6176 = vpop.f32.mrf.mxu0
  %v6177 = vadd.f32 0.0, %v6176
  %v6178 = vpop.f32.mrf.mxu0
  %v6179 = vpop.f32.mrf.mxu0
  %v6180 = vadd.f32 0.0, %v6179
  %v6181 = vpop.f32.mrf.mxu0
  %6182 = vmatprep.mubr.bf16.mxu0 0
  %6183 = vmatmul.mubr.bf16.gmra.mxu0 %v3395
  %v6184 = vpop.f32.mrf.mxu0
  %v6185 = vadd.f32 0.0, %v6184
  %v6186 = vpop.f32.mrf.mxu0
  %v6187 = vpop.f32.mrf.mxu0
  %v6188 = vadd.f32 0.0, %v6187
  %v6189 = vpop.f32.mrf.mxu0
  %6190 = vmatprep.mubr.bf16.mxu0 0
  %6191 = vmatmul.mubr.bf16.gmra.mxu0 %v3398
  %v6192 = vpop.f32.mrf.mxu0
  %v6193 = vadd.f32 0.0, %v6192
  %v6194 = vpop.f32.mrf.mxu0
  %v6195 = vpop.f32.mrf.mxu0
  %v6196 = vadd.f32 0.0, %v6195
  %v6197 = vpop.f32.mrf.mxu0
  %6198 = vmatprep.mubr.bf16.mxu0 0
  %6199 = vmatmul.mubr.bf16.gmra.mxu0 %v3401
  %v6200 = vpop.f32.mrf.mxu0
  %v6201 = vadd.f32 0.0, %v6200
  %v6202 = vpop.f32.mrf.mxu0
  %v6203 = vpop.f32.mrf.mxu0
  %v6204 = vadd.f32 0.0, %v6203
  %v6205 = vpop.f32.mrf.mxu0
  %6206 = vmatprep.mubr.bf16.mxu0 0
  %6207 = vmatmul.mubr.bf16.gmra.mxu0 %v3404
  %v6208 = vpop.f32.mrf.mxu0
  %v6209 = vadd.f32 0.0, %v6208
  %v6210 = vpop.f32.mrf.mxu0
  %v6211 = vpop.f32.mrf.mxu0
  %v6212 = vadd.f32 0.0, %v6211
  %v6213 = vpop.f32.mrf.mxu0
  %6214 = vmatprep.mubr.bf16.mxu0 0
  %6215 = vmatmul.mubr.bf16.gmra.mxu0 %v3407
  %v6216 = vpop.f32.mrf.mxu0
  %v6217 = vadd.f32 0.0, %v6216
  %v6218 = vpop.f32.mrf.mxu0
  %v6219 = vpop.f32.mrf.mxu0
  %v6220 = vadd.f32 0.0, %v6219
  %v6221 = vpop.f32.mrf.mxu0
  %6222 = vmatprep.mubr.bf16.mxu0 0
  %6223 = vmatmul.mubr.bf16.gmra.mxu0 %v3410
  %v6224 = vpop.f32.mrf.mxu0
  %v6225 = vadd.f32 0.0, %v6224
  %v6226 = vpop.f32.mrf.mxu0
  %v6227 = vpop.f32.mrf.mxu0
  %v6228 = vadd.f32 0.0, %v6227
  %v6229 = vpop.f32.mrf.mxu0
  %6230 = vmatprep.mubr.bf16.mxu0 0
  %6231 = vmatmul.mubr.bf16.gmra.mxu0 %v3413
  %v6232 = vpop.f32.mrf.mxu0
  %v6233 = vadd.f32 0.0, %v6232
  %v6234 = vpop.f32.mrf.mxu0
  %v6235 = vpop.f32.mrf.mxu0
  %v6236 = vadd.f32 0.0, %v6235
  %v6237 = vpop.f32.mrf.mxu0
  %6238 = vmatprep.mubr.bf16.mxu0 0
  %6239 = vmatmul.mubr.bf16.gmra.mxu0 %v4773
  %v6240 = vpop.f32.mrf.mxu0
  %v6241 = vadd.f32 0.0, %v6240
  %v6242 = vpop.f32.mrf.mxu0
  %v6243 = vpop.f32.mrf.mxu0
  %v6244 = vadd.f32 0.0, %v6243
  %v6245 = vpop.f32.mrf.mxu0
  %6246 = vmatprep.mubr.bf16.mxu0 0
  %6247 = vmatmul.mubr.bf16.gmra.mxu0 %v3368
  %v6248 = vpop.f32.mrf.mxu0
  %v6249 = vadd.f32 0.0, %v6248
  %v6250 = vpop.f32.mrf.mxu0
  %v6251 = vpop.f32.mrf.mxu0
  %v6252 = vadd.f32 0.0, %v6251
  %v6253 = vpop.f32.mrf.mxu0
  %6254 = vmatprep.mubr.bf16.mxu0 0
  %6255 = vmatmul.mubr.bf16.gmra.mxu0 %v3419
  %v6256 = vpop.f32.mrf.mxu0
  %v6257 = vadd.f32 0.0, %v6256
  %v6258 = vpop.f32.mrf.mxu0
  %v6259 = vpop.f32.mrf.mxu0
  %v6260 = vadd.f32 0.0, %v6259
  %v6261 = vpop.f32.mrf.mxu0
  %6262 = vmatprep.mubr.bf16.mxu0 0
  %6263 = vmatmul.mubr.bf16.gmra.mxu0 %v3422
  %v6264 = vpop.f32.mrf.mxu0
  %v6265 = vadd.f32 0.0, %v6264
  %v6266 = vpop.f32.mrf.mxu0
  %v6267 = vpop.f32.mrf.mxu0
  %v6268 = vadd.f32 0.0, %v6267
  %v6269 = vpop.f32.mrf.mxu0
  %6270 = vmatprep.mubr.bf16.mxu0 0
  %6271 = vmatmul.mubr.bf16.gmra.mxu0 %v3425
  %v6272 = vpop.f32.mrf.mxu0
  %v6273 = vadd.f32 0.0, %v6272
  %v6274 = vpop.f32.mrf.mxu0
  %v6275 = vpop.f32.mrf.mxu0
  %v6276 = vadd.f32 0.0, %v6275
  %v6277 = vpop.f32.mrf.mxu0
  %6278 = vmatprep.mubr.bf16.mxu0 0
  %6279 = vmatmul.mubr.bf16.gmra.mxu0 %v3428
  %v6280 = vpop.f32.mrf.mxu0
  %v6281 = vadd.f32 0.0, %v6280
  %v6282 = vpop.f32.mrf.mxu0
  %v6283 = vpop.f32.mrf.mxu0
  %v6284 = vadd.f32 0.0, %v6283
  %v6285 = vpop.f32.mrf.mxu0
  %6286 = vmatprep.mubr.bf16.mxu0 0
  %6287 = vmatmul.mubr.bf16.gmra.mxu0 %v3431
  %v6288 = vpop.f32.mrf.mxu0
  %v6289 = vadd.f32 0.0, %v6288
  %v6290 = vpop.f32.mrf.mxu0
  %v6291 = vpop.f32.mrf.mxu0
  %v6292 = vadd.f32 0.0, %v6291
  %v6293 = vpop.f32.mrf.mxu0
  %6294 = vmatprep.mubr.bf16.mxu0 0
  %6295 = vmatmul.mubr.bf16.gmra.mxu0 %v3434
  %v6296 = vpop.f32.mrf.mxu0
  %v6297 = vadd.f32 0.0, %v6296
  %v6298 = vpop.f32.mrf.mxu0
  %v6299 = vpop.f32.mrf.mxu0
  %v6300 = vadd.f32 0.0, %v6299
  %v6301 = vpop.f32.mrf.mxu0
  %6302 = vmatprep.mubr.bf16.mxu0 0
  %6303 = vmatmul.mubr.bf16.gmra.mxu0 %v3437
  %v6304 = vpop.f32.mrf.mxu0
  %v6305 = vadd.f32 0.0, %v6304
  %v6306 = vpop.f32.mrf.mxu0
  %v6307 = vpop.f32.mrf.mxu0
  %v6308 = vadd.f32 0.0, %v6307
  %v6309 = vpop.f32.mrf.mxu0
  %6310 = vmatprep.mubr.bf16.mxu0 0
  %6311 = vmatmul.mubr.bf16.gmra.mxu0 %v3440
  %v6312 = vpop.f32.mrf.mxu0
  %v6313 = vadd.f32 0.0, %v6312
  %v6314 = vpop.f32.mrf.mxu0
  %v6315 = vpop.f32.mrf.mxu0
  %v6316 = vadd.f32 0.0, %v6315
  %v6317 = vpop.f32.mrf.mxu0
  %6318 = vmatprep.mubr.bf16.mxu0 0
  %6319 = vmatmul.mubr.bf16.gmra.mxu0 %v3443
  %v6320 = vpop.f32.mrf.mxu0
  %v6321 = vadd.f32 0.0, %v6320
  %v6322 = vpop.f32.mrf.mxu0
  %v6323 = vpop.f32.mrf.mxu0
  %v6324 = vadd.f32 0.0, %v6323
  %v6325 = vpop.f32.mrf.mxu0
  %6326 = vmatprep.mubr.bf16.mxu0 0
  %6327 = vmatmul.mubr.bf16.gmra.mxu0 %v3446
  %v6328 = vpop.f32.mrf.mxu0
  %v6329 = vadd.f32 0.0, %v6328
  %v6330 = vpop.f32.mrf.mxu0
  %v6331 = vpop.f32.mrf.mxu0
  %v6332 = vadd.f32 0.0, %v6331
  %v6333 = vpop.f32.mrf.mxu0
  %6334 = vmatprep.mubr.bf16.mxu0 0
  %6335 = vmatmul.mubr.bf16.gmra.mxu0 %v3449
  %v6336 = vpop.f32.mrf.mxu0
  %v6337 = vadd.f32 0.0, %v6336
  %v6338 = vpop.f32.mrf.mxu0
  %v6339 = vpop.f32.mrf.mxu0
  %v6340 = vadd.f32 0.0, %v6339
  %v6341 = vpop.f32.mrf.mxu0
  %6342 = vmatprep.mubr.bf16.mxu0 0
  %6343 = vmatmul.mubr.bf16.gmra.mxu0 %v3452
  %v6344 = vpop.f32.mrf.mxu0
  %v6345 = vadd.f32 0.0, %v6344
  %v6346 = vpop.f32.mrf.mxu0
  %v6347 = vpop.f32.mrf.mxu0
  %v6348 = vadd.f32 0.0, %v6347
  %v6349 = vpop.f32.mrf.mxu0
  %6350 = vmatprep.mubr.bf16.mxu0 0
  %6351 = vmatmul.mubr.bf16.gmra.mxu0 %v3455
  %v6352 = vpop.f32.mrf.mxu0
  %v6353 = vadd.f32 0.0, %v6352
  %v6354 = vpop.f32.mrf.mxu0
  %v6355 = vpop.f32.mrf.mxu0
  %v6356 = vadd.f32 0.0, %v6355
  %v6357 = vpop.f32.mrf.mxu0
  %6358 = vmatprep.mubr.bf16.mxu0 0
  %6359 = vmatmul.mubr.bf16.gmra.mxu0 %v3458
  %v6360 = vpop.f32.mrf.mxu0
  %v6361 = vadd.f32 0.0, %v6360
  %v6362 = vpop.f32.mrf.mxu0
  %v6363 = vpop.f32.mrf.mxu0
  %v6364 = vadd.f32 0.0, %v6363
  %v6365 = vpop.f32.mrf.mxu0
  %6366 = vmatprep.mubr.bf16.mxu0 0
  %6367 = vmatmul.mubr.bf16.gmra.mxu0 %v4776
  %v6368 = vpop.f32.mrf.mxu0
  %v6369 = vadd.f32 0.0, %v6368
  %v6370 = vpop.f32.mrf.mxu0
  %v6371 = vpop.f32.mrf.mxu0
  %v6372 = vadd.f32 0.0, %v6371
  %v6373 = vpop.f32.mrf.mxu0
  %6374 = vmatprep.mubr.bf16.mxu0 0
  %6375 = vmatmul.mubr.bf16.gmra.mxu0 %v3368
  %v6376 = vpop.f32.mrf.mxu0
  %v6377 = vadd.f32 0.0, %v6376
  %v6378 = vpop.f32.mrf.mxu0
  %v6379 = vpop.f32.mrf.mxu0
  %v6380 = vadd.f32 0.0, %v6379
  %v6381 = vpop.f32.mrf.mxu0
  %6382 = vdwg.mxu0
  %v6383 = vadd.f32 %v5966, %v6129
  %v6384 = vadd.f32 %v5967, %v6132
  %v6385 = vadd.f32 %v5968, %v6137
  %v6386 = vadd.f32 %v5969, %v6140
  %v6387 = vadd.f32 %v5970, %v6145
  %v6388 = vadd.f32 %v5971, %v6148
  %v6389 = vadd.f32 %v5972, %v6153
  %v6390 = vadd.f32 %v5973, %v6156
  %v6391 = vadd.f32 %v5974, %v6161
  %v6392 = vadd.f32 %v5975, %v6164
  %v6393 = vadd.f32 %v5976, %v6169
  %v6394 = vadd.f32 %v5977, %v6172
  %v6395 = vadd.f32 %v5978, %v6177
  %v6396 = vadd.f32 %v5979, %v6180
  %v6397 = vadd.f32 %v5980, %v6185
  %v6398 = vadd.f32 %v5981, %v6188
  %v6399 = vadd.f32 %v5982, %v6193
  %v6400 = vadd.f32 %v5983, %v6196
  %v6401 = vadd.f32 %v5984, %v6201
  %v6402 = vadd.f32 %v5985, %v6204
  %v6403 = vadd.f32 %v5986, %v6209
  %v6404 = vadd.f32 %v5987, %v6212
  %v6405 = vadd.f32 %v5988, %v6217
  %v6406 = vadd.f32 %v5989, %v6220
  %v6407 = vadd.f32 %v5990, %v6225
  %v6408 = vadd.f32 %v5991, %v6228
  %v6409 = vadd.f32 %v5992, %v6233
  %v6410 = vadd.f32 %v5993, %v6236
  %v6411 = vadd.f32 %v5994, %v6241
  %v6412 = vadd.f32 %v5995, %v6244
  %v6413 = vadd.f32 %v5996, %v6249
  %v6414 = vadd.f32 %v5997, %v6252
  %v6415 = vadd.f32 %v5998, %v6257
  %v6416 = vadd.f32 %v5999, %v6260
  %v6417 = vadd.f32 %v6000, %v6265
  %v6418 = vadd.f32 %v6001, %v6268
  %v6419 = vadd.f32 %v6002, %v6273
  %v6420 = vadd.f32 %v6003, %v6276
  %v6421 = vadd.f32 %v6004, %v6281
  %v6422 = vadd.f32 %v6005, %v6284
  %v6423 = vadd.f32 %v6006, %v6289
  %v6424 = vadd.f32 %v6007, %v6292
  %v6425 = vadd.f32 %v6008, %v6297
  %v6426 = vadd.f32 %v6009, %v6300
  %v6427 = vadd.f32 %v6010, %v6305
  %v6428 = vadd.f32 %v6011, %v6308
  %v6429 = vadd.f32 %v6012, %v6313
  %v6430 = vadd.f32 %v6013, %v6316
  %v6431 = vadd.f32 %v6014, %v6321
  %v6432 = vadd.f32 %v6015, %v6324
  %v6433 = vadd.f32 %v6016, %v6329
  %v6434 = vadd.f32 %v6017, %v6332
  %v6435 = vadd.f32 %v6018, %v6337
  %v6436 = vadd.f32 %v6019, %v6340
  %v6437 = vadd.f32 %v6020, %v6345
  %v6438 = vadd.f32 %v6021, %v6348
  %v6439 = vadd.f32 %v6022, %v6353
  %v6440 = vadd.f32 %v6023, %v6356
  %v6441 = vadd.f32 %v6024, %v6361
  %v6442 = vadd.f32 %v6025, %v6364
  %v6443 = vadd.f32 %v6026, %v6369
  %v6444 = vadd.f32 %v6027, %v6372
  %v6445 = vadd.f32 %v6028, %v6377
  %v6446 = vadd.f32 %v6029, %v6380
  %v6447 = vld [vmem:[%s5] sm:$0x1]
  %v6448 = vld [vmem:[%s6] sm:$0x1]
  %v6449 = vadd.f32 %v6383, %v6384
  %v6450 = vadd.f32 %v6449, %v6385
  %v6451 = vadd.f32 %v6450, %v6386
  %v6452 = vadd.f32 %v6451, %v6387
  %v6453 = vadd.f32 %v6452, %v6388
  %v6454 = vadd.f32 %v6453, %v6389
  %v6455 = vadd.f32 %v6454, %v6390
  %v6456 = vadd.f32 %v6455, %v6391
  %v6457 = vadd.f32 %v6456, %v6392
  %v6458 = vadd.f32 %v6457, %v6393
  %v6459 = vadd.f32 %v6458, %v6394
  %v6460 = vadd.f32 %v6459, %v6395
  %v6461 = vadd.f32 %v6460, %v6396
  %v6462 = vadd.f32 %v6461, %v6397
  %v6463 = vadd.f32 %v6462, %v6398
  %v6464 = vadd.f32 %v6463, %v6399
  %v6465 = vadd.f32 %v6464, %v6400
  %v6466 = vadd.f32 %v6465, %v6401
  %v6467 = vadd.f32 %v6466, %v6402
  %v6468 = vadd.f32 %v6467, %v6403
  %v6469 = vadd.f32 %v6468, %v6404
  %v6470 = vadd.f32 %v6469, %v6405
  %v6471 = vadd.f32 %v6470, %v6406
  %v6472 = vadd.f32 %v6471, %v6407
  %v6473 = vadd.f32 %v6472, %v6408
  %v6474 = vadd.f32 %v6473, %v6409
  %v6475 = vadd.f32 %v6474, %v6410
  %v6476 = vadd.f32 %v6475, %v6411
  %v6477 = vadd.f32 %v6476, %v6412
  %v6478 = vadd.f32 %v6477, %v6413
  %v6479 = vadd.f32 %v6478, %v6414
  %v6480 = vadd.f32 %v6479, %v6415
  %v6481 = vadd.f32 %v6480, %v6416
  %v6482 = vadd.f32 %v6481, %v6417
  %v6483 = vadd.f32 %v6482, %v6418
  %v6484 = vadd.f32 %v6483, %v6419
  %v6485 = vadd.f32 %v6484, %v6420
  %v6486 = vadd.f32 %v6485, %v6421
  %v6487 = vadd.f32 %v6486, %v6422
  %v6488 = vadd.f32 %v6487, %v6423
  %v6489 = vadd.f32 %v6488, %v6424
  %v6490 = vadd.f32 %v6489, %v6425
  %v6491 = vadd.f32 %v6490, %v6426
  %v6492 = vadd.f32 %v6491, %v6427
  %v6493 = vadd.f32 %v6492, %v6428
  %v6494 = vadd.f32 %v6493, %v6429
  %v6495 = vadd.f32 %v6494, %v6430
  %v6496 = vadd.f32 %v6495, %v6431
  %v6497 = vadd.f32 %v6496, %v6432
  %v6498 = vadd.f32 %v6497, %v6433
  %v6499 = vadd.f32 %v6498, %v6434
  %v6500 = vadd.f32 %v6499, %v6435
  %v6501 = vadd.f32 %v6500, %v6436
  %v6502 = vadd.f32 %v6501, %v6437
  %v6503 = vadd.f32 %v6502, %v6438
  %v6504 = vadd.f32 %v6503, %v6439
  %v6505 = vadd.f32 %v6504, %v6440
  %v6506 = vadd.f32 %v6505, %v6441
  %v6507 = vadd.f32 %v6506, %v6442
  %v6508 = vadd.f32 %v6507, %v6443
  %v6509 = vadd.f32 %v6508, %v6444
  %v6510 = vadd.f32 %v6509, %v6445
  %v6511 = vadd.f32 %v6510, %v6446
  %v6512 = vrot.slane %v6511, 4
  %v6513 = vadd.f32 %v6511, %v6512
  %v6514 = vrot.slane %v6513, 2
  %v6515 = vadd.f32 %v6513, %v6514
  %v6516 = vrot.slane %v6515, 1
  %v6517 = vadd.f32 %v6515, %v6516
  %v6518 = vmul.f32 %v6383, %v6383
  %v6519 = vmul.f32 %v6384, %v6384
  %v6520 = vmul.f32 %v6385, %v6385
  %v6521 = vmul.f32 %v6386, %v6386
  %v6522 = vmul.f32 %v6387, %v6387
  %v6523 = vmul.f32 %v6388, %v6388
  %v6524 = vmul.f32 %v6389, %v6389
  %v6525 = vmul.f32 %v6390, %v6390
  %v6526 = vmul.f32 %v6391, %v6391
  %v6527 = vmul.f32 %v6392, %v6392
  %v6528 = vmul.f32 %v6393, %v6393
  %v6529 = vmul.f32 %v6394, %v6394
  %v6530 = vmul.f32 %v6395, %v6395
  %v6531 = vmul.f32 %v6396, %v6396
  %v6532 = vmul.f32 %v6397, %v6397
  %v6533 = vmul.f32 %v6398, %v6398
  %v6534 = vmul.f32 %v6399, %v6399
  %v6535 = vmul.f32 %v6400, %v6400
  %v6536 = vmul.f32 %v6401, %v6401
  %v6537 = vmul.f32 %v6402, %v6402
  %v6538 = vmul.f32 %v6403, %v6403
  %v6539 = vmul.f32 %v6404, %v6404
  %v6540 = vmul.f32 %v6405, %v6405
  %v6541 = vmul.f32 %v6406, %v6406
  %v6542 = vmul.f32 %v6407, %v6407
  %v6543 = vmul.f32 %v6408, %v6408
  %v6544 = vmul.f32 %v6409, %v6409
  %v6545 = vmul.f32 %v6410, %v6410
  %v6546 = vmul.f32 %v6411, %v6411
  %v6547 = vmul.f32 %v6412, %v6412
  %v6548 = vmul.f32 %v6413, %v6413
  %v6549 = vmul.f32 %v6414, %v6414
  %v6550 = vmul.f32 %v6415, %v6415
  %v6551 = vmul.f32 %v6416, %v6416
  %v6552 = vmul.f32 %v6417, %v6417
  %v6553 = vmul.f32 %v6418, %v6418
  %v6554 = vmul.f32 %v6419, %v6419
  %v6555 = vmul.f32 %v6420, %v6420
  %v6556 = vmul.f32 %v6421, %v6421
  %v6557 = vmul.f32 %v6422, %v6422
  %v6558 = vmul.f32 %v6423, %v6423
  %v6559 = vmul.f32 %v6424, %v6424
  %v6560 = vmul.f32 %v6425, %v6425
  %v6561 = vmul.f32 %v6426, %v6426
  %v6562 = vmul.f32 %v6427, %v6427
  %v6563 = vmul.f32 %v6428, %v6428
  %v6564 = vmul.f32 %v6429, %v6429
  %v6565 = vmul.f32 %v6430, %v6430
  %v6566 = vmul.f32 %v6431, %v6431
  %v6567 = vmul.f32 %v6432, %v6432
  %v6568 = vmul.f32 %v6433, %v6433
  %v6569 = vmul.f32 %v6434, %v6434
  %v6570 = vmul.f32 %v6435, %v6435
  %v6571 = vmul.f32 %v6436, %v6436
  %v6572 = vmul.f32 %v6437, %v6437
  %v6573 = vmul.f32 %v6438, %v6438
  %v6574 = vmul.f32 %v6439, %v6439
  %v6575 = vmul.f32 %v6440, %v6440
  %v6576 = vmul.f32 %v6441, %v6441
  %v6577 = vmul.f32 %v6442, %v6442
  %v6578 = vmul.f32 %v6443, %v6443
  %v6579 = vmul.f32 %v6444, %v6444
  %v6580 = vmul.f32 %v6445, %v6445
  %v6581 = vmul.f32 %v6446, %v6446
  %v6582 = vadd.f32 %v6518, %v6519
  %v6583 = vadd.f32 %v6582, %v6520
  %v6584 = vadd.f32 %v6583, %v6521
  %v6585 = vadd.f32 %v6584, %v6522
  %v6586 = vadd.f32 %v6585, %v6523
  %v6587 = vadd.f32 %v6586, %v6524
  %v6588 = vadd.f32 %v6587, %v6525
  %v6589 = vadd.f32 %v6588, %v6526
  %v6590 = vadd.f32 %v6589, %v6527
  %v6591 = vadd.f32 %v6590, %v6528
  %v6592 = vadd.f32 %v6591, %v6529
  %v6593 = vadd.f32 %v6592, %v6530
  %v6594 = vadd.f32 %v6593, %v6531
  %v6595 = vadd.f32 %v6594, %v6532
  %v6596 = vadd.f32 %v6595, %v6533
  %v6597 = vadd.f32 %v6596, %v6534
  %v6598 = vadd.f32 %v6597, %v6535
  %v6599 = vadd.f32 %v6598, %v6536
  %v6600 = vadd.f32 %v6599, %v6537
  %v6601 = vadd.f32 %v6600, %v6538
  %v6602 = vadd.f32 %v6601, %v6539
  %v6603 = vadd.f32 %v6602, %v6540
  %v6604 = vadd.f32 %v6603, %v6541
  %v6605 = vadd.f32 %v6604, %v6542
  %v6606 = vadd.f32 %v6605, %v6543
  %v6607 = vadd.f32 %v6606, %v6544
  %v6608 = vadd.f32 %v6607, %v6545
  %v6609 = vadd.f32 %v6608, %v6546
  %v6610 = vadd.f32 %v6609, %v6547
  %v6611 = vadd.f32 %v6610, %v6548
  %v6612 = vadd.f32 %v6611, %v6549
  %v6613 = vadd.f32 %v6612, %v6550
  %v6614 = vadd.f32 %v6613, %v6551
  %v6615 = vadd.f32 %v6614, %v6552
  %v6616 = vadd.f32 %v6615, %v6553
  %v6617 = vadd.f32 %v6616, %v6554
  %v6618 = vadd.f32 %v6617, %v6555
  %v6619 = vadd.f32 %v6618, %v6556
  %v6620 = vadd.f32 %v6619, %v6557
  %v6621 = vadd.f32 %v6620, %v6558
  %v6622 = vadd.f32 %v6621, %v6559
  %v6623 = vadd.f32 %v6622, %v6560
  %v6624 = vadd.f32 %v6623, %v6561
  %v6625 = vadd.f32 %v6624, %v6562
  %v6626 = vadd.f32 %v6625, %v6563
  %v6627 = vadd.f32 %v6626, %v6564
  %v6628 = vadd.f32 %v6627, %v6565
  %v6629 = vadd.f32 %v6628, %v6566
  %v6630 = vadd.f32 %v6629, %v6567
  %v6631 = vadd.f32 %v6630, %v6568
  %v6632 = vadd.f32 %v6631, %v6569
  %v6633 = vadd.f32 %v6632, %v6570
  %v6634 = vadd.f32 %v6633, %v6571
  %v6635 = vadd.f32 %v6634, %v6572
  %v6636 = vadd.f32 %v6635, %v6573
  %v6637 = vadd.f32 %v6636, %v6574
  %v6638 = vadd.f32 %v6637, %v6575
  %v6639 = vadd.f32 %v6638, %v6576
  %v6640 = vadd.f32 %v6639, %v6577
  %v6641 = vadd.f32 %v6640, %v6578
  %v6642 = vadd.f32 %v6641, %v6579
  %v6643 = vadd.f32 %v6642, %v6580
  %v6644 = vadd.f32 %v6643, %v6581
  %v6645 = vrot.slane %v6644, 4
  %v6646 = vadd.f32 %v6644, %v6645
  %v6647 = vrot.slane %v6646, 2
  %v6648 = vadd.f32 %v6646, %v6647
  %v6649 = vrot.slane %v6648, 1
  %v6650 = vadd.f32 %v6648, %v6649
  %v6651 = vmul.f32 %v6517, 0.001953125
  %v6652 = vmul.f32 %v6650, 0.001953125
  %v6653 = vmul.f32 %v6651, %v6651
  %v6654 = vsub.f32 %v6652, %v6653
  %v6655 = vsub.f32 %v6383, %v6651
  %v6656 = vsub.f32 %v6384, %v6651
  %v6657 = vsub.f32 %v6385, %v6651
  %v6658 = vsub.f32 %v6386, %v6651
  %v6659 = vsub.f32 %v6387, %v6651
  %v6660 = vsub.f32 %v6388, %v6651
  %v6661 = vsub.f32 %v6389, %v6651
  %v6662 = vsub.f32 %v6390, %v6651
  %v6663 = vsub.f32 %v6391, %v6651
  %v6664 = vsub.f32 %v6392, %v6651
  %v6665 = vsub.f32 %v6393, %v6651
  %v6666 = vsub.f32 %v6394, %v6651
  %v6667 = vsub.f32 %v6395, %v6651
  %v6668 = vsub.f32 %v6396, %v6651
  %v6669 = vsub.f32 %v6397, %v6651
  %v6670 = vsub.f32 %v6398, %v6651
  %v6671 = vsub.f32 %v6399, %v6651
  %v6672 = vsub.f32 %v6400, %v6651
  %v6673 = vsub.f32 %v6401, %v6651
  %v6674 = vsub.f32 %v6402, %v6651
  %v6675 = vsub.f32 %v6403, %v6651
  %v6676 = vsub.f32 %v6404, %v6651
  %v6677 = vsub.f32 %v6405, %v6651
  %v6678 = vsub.f32 %v6406, %v6651
  %v6679 = vsub.f32 %v6407, %v6651
  %v6680 = vsub.f32 %v6408, %v6651
  %v6681 = vsub.f32 %v6409, %v6651
  %v6682 = vsub.f32 %v6410, %v6651
  %v6683 = vsub.f32 %v6411, %v6651
  %v6684 = vsub.f32 %v6412, %v6651
  %v6685 = vsub.f32 %v6413, %v6651
  %v6686 = vsub.f32 %v6414, %v6651
  %v6687 = vsub.f32 %v6415, %v6651
  %v6688 = vsub.f32 %v6416, %v6651
  %v6689 = vsub.f32 %v6417, %v6651
  %v6690 = vsub.f32 %v6418, %v6651
  %v6691 = vsub.f32 %v6419, %v6651
  %v6692 = vsub.f32 %v6420, %v6651
  %v6693 = vsub.f32 %v6421, %v6651
  %v6694 = vsub.f32 %v6422, %v6651
  %v6695 = vsub.f32 %v6423, %v6651
  %v6696 = vsub.f32 %v6424, %v6651
  %v6697 = vsub.f32 %v6425, %v6651
  %v6698 = vsub.f32 %v6426, %v6651
  %v6699 = vsub.f32 %v6427, %v6651
  %v6700 = vsub.f32 %v6428, %v6651
  %v6701 = vsub.f32 %v6429, %v6651
  %v6702 = vsub.f32 %v6430, %v6651
  %v6703 = vsub.f32 %v6431, %v6651
  %v6704 = vsub.f32 %v6432, %v6651
  %v6705 = vsub.f32 %v6433, %v6651
  %v6706 = vsub.f32 %v6434, %v6651
  %v6707 = vsub.f32 %v6435, %v6651
  %v6708 = vsub.f32 %v6436, %v6651
  %v6709 = vsub.f32 %v6437, %v6651
  %v6710 = vsub.f32 %v6438, %v6651
  %v6711 = vsub.f32 %v6439, %v6651
  %v6712 = vsub.f32 %v6440, %v6651
  %v6713 = vsub.f32 %v6441, %v6651
  %v6714 = vsub.f32 %v6442, %v6651
  %v6715 = vsub.f32 %v6443, %v6651
  %v6716 = vsub.f32 %v6444, %v6651
  %v6717 = vsub.f32 %v6445, %v6651
  %v6718 = vsub.f32 %v6446, %v6651
  %v6719 = vadd.f32 %v6654, 1e-05
  %v6720 = vrsqrt.pop %v6719
  %v6721 = vmul.f32 %v6655, %v6720
  %v6722 = vmul.f32 %v6656, %v6720
  %v6723 = vmul.f32 %v6657, %v6720
  %v6724 = vmul.f32 %v6658, %v6720
  %v6725 = vmul.f32 %v6659, %v6720
  %v6726 = vmul.f32 %v6660, %v6720
  %v6727 = vmul.f32 %v6661, %v6720
  %v6728 = vmul.f32 %v6662, %v6720
  %v6729 = vmul.f32 %v6663, %v6720
  %v6730 = vmul.f32 %v6664, %v6720
  %v6731 = vmul.f32 %v6665, %v6720
  %v6732 = vmul.f32 %v6666, %v6720
  %v6733 = vmul.f32 %v6667, %v6720
  %v6734 = vmul.f32 %v6668, %v6720
  %v6735 = vmul.f32 %v6669, %v6720
  %v6736 = vmul.f32 %v6670, %v6720
  %v6737 = vmul.f32 %v6671, %v6720
  %v6738 = vmul.f32 %v6672, %v6720
  %v6739 = vmul.f32 %v6673, %v6720
  %v6740 = vmul.f32 %v6674, %v6720
  %v6741 = vmul.f32 %v6675, %v6720
  %v6742 = vmul.f32 %v6676, %v6720
  %v6743 = vmul.f32 %v6677, %v6720
  %v6744 = vmul.f32 %v6678, %v6720
  %v6745 = vmul.f32 %v6679, %v6720
  %v6746 = vmul.f32 %v6680, %v6720
  %v6747 = vmul.f32 %v6681, %v6720
  %v6748 = vmul.f32 %v6682, %v6720
  %v6749 = vmul.f32 %v6683, %v6720
  %v6750 = vmul.f32 %v6684, %v6720
  %v6751 = vmul.f32 %v6685, %v6720
  %v6752 = vmul.f32 %v6686, %v6720
  %v6753 = vmul.f32 %v6687, %v6720
  %v6754 = vmul.f32 %v6688, %v6720
  %v6755 = vmul.f32 %v6689, %v6720
  %v6756 = vmul.f32 %v6690, %v6720
  %v6757 = vmul.f32 %v6691, %v6720
  %v6758 = vmul.f32 %v6692, %v6720
  %v6759 = vmul.f32 %v6693, %v6720
  %v6760 = vmul.f32 %v6694, %v6720
  %v6761 = vmul.f32 %v6695, %v6720
  %v6762 = vmul.f32 %v6696, %v6720
  %v6763 = vmul.f32 %v6697, %v6720
  %v6764 = vmul.f32 %v6698, %v6720
  %v6765 = vmul.f32 %v6699, %v6720
  %v6766 = vmul.f32 %v6700, %v6720
  %v6767 = vmul.f32 %v6701, %v6720
  %v6768 = vmul.f32 %v6702, %v6720
  %v6769 = vmul.f32 %v6703, %v6720
  %v6770 = vmul.f32 %v6704, %v6720
  %v6771 = vmul.f32 %v6705, %v6720
  %v6772 = vmul.f32 %v6706, %v6720
  %v6773 = vmul.f32 %v6707, %v6720
  %v6774 = vmul.f32 %v6708, %v6720
  %v6775 = vmul.f32 %v6709, %v6720
  %v6776 = vmul.f32 %v6710, %v6720
  %v6777 = vmul.f32 %v6711, %v6720
  %v6778 = vmul.f32 %v6712, %v6720
  %v6779 = vmul.f32 %v6713, %v6720
  %v6780 = vmul.f32 %v6714, %v6720
  %v6781 = vmul.f32 %v6715, %v6720
  %v6782 = vmul.f32 %v6716, %v6720
  %v6783 = vmul.f32 %v6717, %v6720
  %v6784 = vmul.f32 %v6718, %v6720
  %v6786 = vlaneseq
  %v6787 = vshrl.u32 %v6786, 7
  %v6788 = vsub.s32 0, %v6787
  %v6789 = vrot.slane %v6447, %v6788
  %v6791 = vmul.f32 %v6721, %v6789
  %v6792 = vmul.f32 %v6722, %v6789
  %v6793 = vmul.f32 %v6723, %v6789
  %v6794 = vmul.f32 %v6724, %v6789
  %v6795 = vmul.f32 %v6725, %v6789
  %v6796 = vmul.f32 %v6726, %v6789
  %v6797 = vmul.f32 %v6727, %v6789
  %v6798 = vmul.f32 %v6728, %v6789
  %v6799 = vmul.f32 %v6729, %v6789
  %v6800 = vmul.f32 %v6730, %v6789
  %v6801 = vmul.f32 %v6731, %v6789
  %v6802 = vmul.f32 %v6732, %v6789
  %v6803 = vmul.f32 %v6733, %v6789
  %v6804 = vmul.f32 %v6734, %v6789
  %v6805 = vmul.f32 %v6735, %v6789
  %v6806 = vmul.f32 %v6736, %v6789
  %v6807 = vmul.f32 %v6737, %v6789
  %v6808 = vmul.f32 %v6738, %v6789
  %v6809 = vmul.f32 %v6739, %v6789
  %v6810 = vmul.f32 %v6740, %v6789
  %v6811 = vmul.f32 %v6741, %v6789
  %v6812 = vmul.f32 %v6742, %v6789
  %v6813 = vmul.f32 %v6743, %v6789
  %v6814 = vmul.f32 %v6744, %v6789
  %v6815 = vmul.f32 %v6745, %v6789
  %v6816 = vmul.f32 %v6746, %v6789
  %v6817 = vmul.f32 %v6747, %v6789
  %v6818 = vmul.f32 %v6748, %v6789
  %v6819 = vmul.f32 %v6749, %v6789
  %v6820 = vmul.f32 %v6750, %v6789
  %v6821 = vmul.f32 %v6751, %v6789
  %v6822 = vmul.f32 %v6752, %v6789
  %v6823 = vmul.f32 %v6753, %v6789
  %v6824 = vmul.f32 %v6754, %v6789
  %v6825 = vmul.f32 %v6755, %v6789
  %v6826 = vmul.f32 %v6756, %v6789
  %v6827 = vmul.f32 %v6757, %v6789
  %v6828 = vmul.f32 %v6758, %v6789
  %v6829 = vmul.f32 %v6759, %v6789
  %v6830 = vmul.f32 %v6760, %v6789
  %v6831 = vmul.f32 %v6761, %v6789
  %v6832 = vmul.f32 %v6762, %v6789
  %v6833 = vmul.f32 %v6763, %v6789
  %v6834 = vmul.f32 %v6764, %v6789
  %v6835 = vmul.f32 %v6765, %v6789
  %v6836 = vmul.f32 %v6766, %v6789
  %v6837 = vmul.f32 %v6767, %v6789
  %v6838 = vmul.f32 %v6768, %v6789
  %v6839 = vmul.f32 %v6769, %v6789
  %v6840 = vmul.f32 %v6770, %v6789
  %v6841 = vmul.f32 %v6771, %v6789
  %v6842 = vmul.f32 %v6772, %v6789
  %v6843 = vmul.f32 %v6773, %v6789
  %v6844 = vmul.f32 %v6774, %v6789
  %v6845 = vmul.f32 %v6775, %v6789
  %v6846 = vmul.f32 %v6776, %v6789
  %v6847 = vmul.f32 %v6777, %v6789
  %v6848 = vmul.f32 %v6778, %v6789
  %v6849 = vmul.f32 %v6779, %v6789
  %v6850 = vmul.f32 %v6780, %v6789
  %v6851 = vmul.f32 %v6781, %v6789
  %v6852 = vmul.f32 %v6782, %v6789
  %v6853 = vmul.f32 %v6783, %v6789
  %v6854 = vmul.f32 %v6784, %v6789
  %v6856 = vlaneseq
  %v6857 = vshrl.u32 %v6856, 7
  %v6858 = vsub.s32 0, %v6857
  %v6859 = vrot.slane %v6448, %v6858
  %v6861 = vadd.f32 %v6791, %v6859
  %v6862 = vadd.f32 %v6792, %v6859
  %v6863 = vadd.f32 %v6793, %v6859
  %v6864 = vadd.f32 %v6794, %v6859
  %v6865 = vadd.f32 %v6795, %v6859
  %v6866 = vadd.f32 %v6796, %v6859
  %v6867 = vadd.f32 %v6797, %v6859
  %v6868 = vadd.f32 %v6798, %v6859
  %v6869 = vadd.f32 %v6799, %v6859
  %v6870 = vadd.f32 %v6800, %v6859
  %v6871 = vadd.f32 %v6801, %v6859
  %v6872 = vadd.f32 %v6802, %v6859
  %v6873 = vadd.f32 %v6803, %v6859
  %v6874 = vadd.f32 %v6804, %v6859
  %v6875 = vadd.f32 %v6805, %v6859
  %v6876 = vadd.f32 %v6806, %v6859
  %v6877 = vadd.f32 %v6807, %v6859
  %v6878 = vadd.f32 %v6808, %v6859
  %v6879 = vadd.f32 %v6809, %v6859
  %v6880 = vadd.f32 %v6810, %v6859
  %v6881 = vadd.f32 %v6811, %v6859
  %v6882 = vadd.f32 %v6812, %v6859
  %v6883 = vadd.f32 %v6813, %v6859
  %v6884 = vadd.f32 %v6814, %v6859
  %v6885 = vadd.f32 %v6815, %v6859
  %v6886 = vadd.f32 %v6816, %v6859
  %v6887 = vadd.f32 %v6817, %v6859
  %v6888 = vadd.f32 %v6818, %v6859
  %v6889 = vadd.f32 %v6819, %v6859
  %v6890 = vadd.f32 %v6820, %v6859
  %v6891 = vadd.f32 %v6821, %v6859
  %v6892 = vadd.f32 %v6822, %v6859
  %v6893 = vadd.f32 %v6823, %v6859
  %v6894 = vadd.f32 %v6824, %v6859
  %v6895 = vadd.f32 %v6825, %v6859
  %v6896 = vadd.f32 %v6826, %v6859
  %v6897 = vadd.f32 %v6827, %v6859
  %v6898 = vadd.f32 %v6828, %v6859
  %v6899 = vadd.f32 %v6829, %v6859
  %v6900 = vadd.f32 %v6830, %v6859
  %v6901 = vadd.f32 %v6831, %v6859
  %v6902 = vadd.f32 %v6832, %v6859
  %v6903 = vadd.f32 %v6833, %v6859
  %v6904 = vadd.f32 %v6834, %v6859
  %v6905 = vadd.f32 %v6835, %v6859
  %v6906 = vadd.f32 %v6836, %v6859
  %v6907 = vadd.f32 %v6837, %v6859
  %v6908 = vadd.f32 %v6838, %v6859
  %v6909 = vadd.f32 %v6839, %v6859
  %v6910 = vadd.f32 %v6840, %v6859
  %v6911 = vadd.f32 %v6841, %v6859
  %v6912 = vadd.f32 %v6842, %v6859
  %v6913 = vadd.f32 %v6843, %v6859
  %v6914 = vadd.f32 %v6844, %v6859
  %v6915 = vadd.f32 %v6845, %v6859
  %v6916 = vadd.f32 %v6846, %v6859
  %v6917 = vadd.f32 %v6847, %v6859
  %v6918 = vadd.f32 %v6848, %v6859
  %v6919 = vadd.f32 %v6849, %v6859
  %v6920 = vadd.f32 %v6850, %v6859
  %v6921 = vadd.f32 %v6851, %v6859
  %v6922 = vadd.f32 %v6852, %v6859
  %v6923 = vadd.f32 %v6853, %v6859
  %v6924 = vadd.f32 %v6854, %v6859
  %v6925 = vmax.f32 %v6861, 0.0
  %v6926 = vmax.f32 %v6862, 0.0
  %v6927 = vmax.f32 %v6863, 0.0
  %v6928 = vmax.f32 %v6864, 0.0
  %v6929 = vmax.f32 %v6865, 0.0
  %v6930 = vmax.f32 %v6866, 0.0
  %v6931 = vmax.f32 %v6867, 0.0
  %v6932 = vmax.f32 %v6868, 0.0
  %v6933 = vmax.f32 %v6869, 0.0
  %v6934 = vmax.f32 %v6870, 0.0
  %v6935 = vmax.f32 %v6871, 0.0
  %v6936 = vmax.f32 %v6872, 0.0
  %v6937 = vmax.f32 %v6873, 0.0
  %v6938 = vmax.f32 %v6874, 0.0
  %v6939 = vmax.f32 %v6875, 0.0
  %v6940 = vmax.f32 %v6876, 0.0
  %v6941 = vmax.f32 %v6877, 0.0
  %v6942 = vmax.f32 %v6878, 0.0
  %v6943 = vmax.f32 %v6879, 0.0
  %v6944 = vmax.f32 %v6880, 0.0
  %v6945 = vmax.f32 %v6881, 0.0
  %v6946 = vmax.f32 %v6882, 0.0
  %v6947 = vmax.f32 %v6883, 0.0
  %v6948 = vmax.f32 %v6884, 0.0
  %v6949 = vmax.f32 %v6885, 0.0
  %v6950 = vmax.f32 %v6886, 0.0
  %v6951 = vmax.f32 %v6887, 0.0
  %v6952 = vmax.f32 %v6888, 0.0
  %v6953 = vmax.f32 %v6889, 0.0
  %v6954 = vmax.f32 %v6890, 0.0
  %v6955 = vmax.f32 %v6891, 0.0
  %v6956 = vmax.f32 %v6892, 0.0
  %v6957 = vmax.f32 %v6893, 0.0
  %v6958 = vmax.f32 %v6894, 0.0
  %v6959 = vmax.f32 %v6895, 0.0
  %v6960 = vmax.f32 %v6896, 0.0
  %v6961 = vmax.f32 %v6897, 0.0
  %v6962 = vmax.f32 %v6898, 0.0
  %v6963 = vmax.f32 %v6899, 0.0
  %v6964 = vmax.f32 %v6900, 0.0
  %v6965 = vmax.f32 %v6901, 0.0
  %v6966 = vmax.f32 %v6902, 0.0
  %v6967 = vmax.f32 %v6903, 0.0
  %v6968 = vmax.f32 %v6904, 0.0
  %v6969 = vmax.f32 %v6905, 0.0
  %v6970 = vmax.f32 %v6906, 0.0
  %v6971 = vmax.f32 %v6907, 0.0
  %v6972 = vmax.f32 %v6908, 0.0
  %v6973 = vmax.f32 %v6909, 0.0
  %v6974 = vmax.f32 %v6910, 0.0
  %v6975 = vmax.f32 %v6911, 0.0
  %v6976 = vmax.f32 %v6912, 0.0
  %v6977 = vmax.f32 %v6913, 0.0
  %v6978 = vmax.f32 %v6914, 0.0
  %v6979 = vmax.f32 %v6915, 0.0
  %v6980 = vmax.f32 %v6916, 0.0
  %v6981 = vmax.f32 %v6917, 0.0
  %v6982 = vmax.f32 %v6918, 0.0
  %v6983 = vmax.f32 %v6919, 0.0
  %v6984 = vmax.f32 %v6920, 0.0
  %v6985 = vmax.f32 %v6921, 0.0
  %v6986 = vmax.f32 %v6922, 0.0
  %v6987 = vmax.f32 %v6923, 0.0
  %v6988 = vmax.f32 %v6924, 0.0
  %v6989 = vadd.f32 %v6925, %v1685
  %v6990 = vadd.f32 %v6926, %v1687
  %v6991 = vadd.f32 %v6927, %v1689
  %v6992 = vadd.f32 %v6928, %v1691
  %v6993 = vadd.f32 %v6929, %v1693
  %v6994 = vadd.f32 %v6930, %v1695
  %v6995 = vadd.f32 %v6931, %v1697
  %v6996 = vadd.f32 %v6932, %v1699
  %v6997 = vadd.f32 %v6933, %v1701
  %v6998 = vadd.f32 %v6934, %v1703
  %v6999 = vadd.f32 %v6935, %v1705
  %v7000 = vadd.f32 %v6936, %v1707
  %v7001 = vadd.f32 %v6937, %v1709
  %v7002 = vadd.f32 %v6938, %v1711
  %v7003 = vadd.f32 %v6939, %v1713
  %v7004 = vadd.f32 %v6940, %v1715
  %v7005 = vadd.f32 %v6941, %v1717
  %v7006 = vadd.f32 %v6942, %v1719
  %v7007 = vadd.f32 %v6943, %v1721
  %v7008 = vadd.f32 %v6944, %v1723
  %v7009 = vadd.f32 %v6945, %v1725
  %v7010 = vadd.f32 %v6946, %v1727
  %v7011 = vadd.f32 %v6947, %v1729
  %v7012 = vadd.f32 %v6948, %v1731
  %v7013 = vadd.f32 %v6949, %v1733
  %v7014 = vadd.f32 %v6950, %v1735
  %v7015 = vadd.f32 %v6951, %v1737
  %v7016 = vadd.f32 %v6952, %v1739
  %v7017 = vadd.f32 %v6953, %v1741
  %v7018 = vadd.f32 %v6954, %v1743
  %v7019 = vadd.f32 %v6955, %v1745
  %v7020 = vadd.f32 %v6956, %v1747
  %v7021 = vadd.f32 %v6957, %v1749
  %v7022 = vadd.f32 %v6958, %v1751
  %v7023 = vadd.f32 %v6959, %v1753
  %v7024 = vadd.f32 %v6960, %v1755
  %v7025 = vadd.f32 %v6961, %v1757
  %v7026 = vadd.f32 %v6962, %v1759
  %v7027 = vadd.f32 %v6963, %v1761
  %v7028 = vadd.f32 %v6964, %v1763
  %v7029 = vadd.f32 %v6965, %v1765
  %v7030 = vadd.f32 %v6966, %v1767
  %v7031 = vadd.f32 %v6967, %v1769
  %v7032 = vadd.f32 %v6968, %v1771
  %v7033 = vadd.f32 %v6969, %v1773
  %v7034 = vadd.f32 %v6970, %v1775
  %v7035 = vadd.f32 %v6971, %v1777
  %v7036 = vadd.f32 %v6972, %v1779
  %v7037 = vadd.f32 %v6973, %v1781
  %v7038 = vadd.f32 %v6974, %v1783
  %v7039 = vadd.f32 %v6975, %v1785
  %v7040 = vadd.f32 %v6976, %v1787
  %v7041 = vadd.f32 %v6977, %v1789
  %v7042 = vadd.f32 %v6978, %v1791
  %v7043 = vadd.f32 %v6979, %v1793
  %v7044 = vadd.f32 %v6980, %v1795
  %v7045 = vadd.f32 %v6981, %v1797
  %v7046 = vadd.f32 %v6982, %v1799
  %v7047 = vadd.f32 %v6983, %v1801
  %v7048 = vadd.f32 %v6984, %v1803
  %v7049 = vadd.f32 %v6985, %v1805
  %v7050 = vadd.f32 %v6986, %v1807
  %v7051 = vadd.f32 %v6987, %v1809
  %v7052 = vadd.f32 %v6988, %v1811
  %7053 = vst [vmem:[%s7] sm:$0xff] %v6989
  %7054 = vst [vmem:[%s7 + $0x8] sm:$0xff] %v6990
  %7055 = vst [vmem:[%s7 + $0x10] sm:$0xff] %v6991
  %7056 = vst [vmem:[%s7 + $0x18] sm:$0xff] %v6992
  %7057 = vst [vmem:[%s7 + $0x20] sm:$0xff] %v6993
  %7058 = vst [vmem:[%s7 + $0x28] sm:$0xff] %v6994
  %7059 = vst [vmem:[%s7 + $0x30] sm:$0xff] %v6995
  %7060 = vst [vmem:[%s7 + $0x38] sm:$0xff] %v6996
  %7061 = vst [vmem:[%s7 + $0x40] sm:$0xff] %v6997
  %7062 = vst [vmem:[%s7 + $0x48] sm:$0xff] %v6998
  %7063 = vst [vmem:[%s7 + $0x50] sm:$0xff] %v6999
  %7064 = vst [vmem:[%s7 + $0x58] sm:$0xff] %v7000
  %7065 = vst [vmem:[%s7 + $0x60] sm:$0xff] %v7001
  %7066 = vst [vmem:[%s7 + $0x68] sm:$0xff] %v7002
  %7067 = vst [vmem:[%s7 + $0x70] sm:$0xff] %v7003
  %7068 = vst [vmem:[%s7 + $0x78] sm:$0xff] %v7004
  %7069 = vst [vmem:[%s7 + $0x80] sm:$0xff] %v7005
  %7070 = vst [vmem:[%s7 + $0x88] sm:$0xff] %v7006
  %7071 = vst [vmem:[%s7 + $0x90] sm:$0xff] %v7007
  %7072 = vst [vmem:[%s7 + $0x98] sm:$0xff] %v7008
  %7073 = vst [vmem:[%s7 + $0xa0] sm:$0xff] %v7009
  %7074 = vst [vmem:[%s7 + $0xa8] sm:$0xff] %v7010
  %7075 = vst [vmem:[%s7 + $0xb0] sm:$0xff] %v7011
  %7076 = vst [vmem:[%s7 + $0xb8] sm:$0xff] %v7012
  %7077 = vst [vmem:[%s7 + $0xc0] sm:$0xff] %v7013
  %7078 = vst [vmem:[%s7 + $0xc8] sm:$0xff] %v7014
  %7079 = vst [vmem:[%s7 + $0xd0] sm:$0xff] %v7015
  %7080 = vst [vmem:[%s7 + $0xd8] sm:$0xff] %v7016
  %7081 = vst [vmem:[%s7 + $0xe0] sm:$0xff] %v7017
  %7082 = vst [vmem:[%s7 + $0xe8] sm:$0xff] %v7018
  %7083 = vst [vmem:[%s7 + $0xf0] sm:$0xff] %v7019
  %7084 = vst [vmem:[%s7 + $0xf8] sm:$0xff] %v7020
  %7085 = vst [vmem:[%s7 + $0x100] sm:$0xff] %v7021
  %7086 = vst [vmem:[%s7 + $0x108] sm:$0xff] %v7022
  %7087 = vst [vmem:[%s7 + $0x110] sm:$0xff] %v7023
  %7088 = vst [vmem:[%s7 + $0x118] sm:$0xff] %v7024
  %7089 = vst [vmem:[%s7 + $0x120] sm:$0xff] %v7025
  %7090 = vst [vmem:[%s7 + $0x128] sm:$0xff] %v7026
  %7091 = vst [vmem:[%s7 + $0x130] sm:$0xff] %v7027
  %7092 = vst [vmem:[%s7 + $0x138] sm:$0xff] %v7028
  %7093 = vst [vmem:[%s7 + $0x140] sm:$0xff] %v7029
  %7094 = vst [vmem:[%s7 + $0x148] sm:$0xff] %v7030
  %7095 = vst [vmem:[%s7 + $0x150] sm:$0xff] %v7031
  %7096 = vst [vmem:[%s7 + $0x158] sm:$0xff] %v7032
  %7097 = vst [vmem:[%s7 + $0x160] sm:$0xff] %v7033
  %7098 = vst [vmem:[%s7 + $0x168] sm:$0xff] %v7034
  %7099 = vst [vmem:[%s7 + $0x170] sm:$0xff] %v7035
  %7100 = vst [vmem:[%s7 + $0x178] sm:$0xff] %v7036
  %7101 = vst [vmem:[%s7 + $0x180] sm:$0xff] %v7037
  %7102 = vst [vmem:[%s7 + $0x188] sm:$0xff] %v7038
  %7103 = vst [vmem:[%s7 + $0x190] sm:$0xff] %v7039
  %7104 = vst [vmem:[%s7 + $0x198] sm:$0xff] %v7040
  %7105 = vst [vmem:[%s7 + $0x1a0] sm:$0xff] %v7041
  %7106 = vst [vmem:[%s7 + $0x1a8] sm:$0xff] %v7042
  %7107 = vst [vmem:[%s7 + $0x1b0] sm:$0xff] %v7043
  %7108 = vst [vmem:[%s7 + $0x1b8] sm:$0xff] %v7044
  %7109 = vst [vmem:[%s7 + $0x1c0] sm:$0xff] %v7045
  %7110 = vst [vmem:[%s7 + $0x1c8] sm:$0xff] %v7046
  %7111 = vst [vmem:[%s7 + $0x1d0] sm:$0xff] %v7047
  %7112 = vst [vmem:[%s7 + $0x1d8] sm:$0xff] %v7048
  %7113 = vst [vmem:[%s7 + $0x1e0] sm:$0xff] %v7049
  %7114 = vst [vmem:[%s7 + $0x1e8] sm:$0xff] %v7050
  %7115 = vst [vmem:[%s7 + $0x1f0] sm:$0xff] %v7051
  %7116 = vst [vmem:[%s7 + $0x1f8] sm:$0xff] %v7052
  // Predicated region
  $region30: #{bottleneck_pallas.1} parent=0 // pred_check
    _
  $region31: #{bottleneck_pallas.1} parent=0 // pred_check_branch
    %7118 = sbr.rel (0) target = $region33
  $region32: #{bottleneck_pallas.1} parent=0 // pred_region
    _
  $region33: #{bottleneck_pallas.1} parent=0 // pred_fallthru
    _
  // Predicated region
  $region34: #{bottleneck_pallas.1} parent=0 // pred_check
    _
  $region35: #{bottleneck_pallas.1} parent=0 // pred_check_branch
    %7120 = sbr.rel (0) target = $region37
  $region36: #{bottleneck_pallas.1} parent=0 // pred_region
    _
  $region37: #{bottleneck_pallas.1} parent=0 // pred_fallthru
    _

</llo_original>
